<compile_context>
chip_gen: v7x
topology: tpu7x:2x2x1
jax: 0.10.0
libtpu: 0.0.40
codegen_flags: <defaults>
</compile_context>

<pallas_src>
import functools
import math

import jax
import jax.numpy as jnp
import numpy as np
from jax.experimental import pallas as pl
from jax.experimental.pallas import tpu as pltpu


# ---------------------------------------------------------------------------
# Kernels
# ---------------------------------------------------------------------------
def _node_proj_kernel(x_ref, s1_ref, t1_ref, wqkv_ref, q_ref, kv_ref):
    """BN1_h (folded) -> fused Q|K|V projection for a tile of node rows."""
    f32 = jnp.float32
    hb = x_ref[...].astype(f32) * s1_ref[...] + t1_ref[...]          # h_in1
    qkv = jnp.dot(hb.astype(jnp.bfloat16), wqkv_ref[...],
                  preferred_element_type=f32)
    F = q_ref.shape[1]
    q_ref[...] = qkv[:, :F].astype(q_ref.dtype)
    kv_ref[...] = qkv[:, F:].astype(kv_ref.dtype)                    # [K|V]


def _edge_kernel(e_ref, kvg_ref, qg_ref,
                 s1_ref, t1_ref, we_ref, hsum_ref,
                 woe_ref, boe_ref, s2_ref, t2_ref,
                 wf1_ref, bf1_ref, wf2_ref, bf2_ref,
                 ef_ref, wv_ref, srep_ref, *, inv_sqrt_d, n_edges):
    """Per-edge attention + full edge output path for a tile of edge rows."""
    f32 = jnp.float32
    bf16 = jnp.bfloat16
    tile, F = e_ref.shape

    eb = e_ref[...].astype(f32) * s1_ref[...] + t1_ref[...]          # e_in1
    proj_e = jnp.dot(eb.astype(bf16), we_ref[...], preferred_element_type=f32)

    kg = kvg_ref[:, :F].astype(f32)
    vg = kvg_ref[:, F:].astype(f32)
    qg = qg_ref[...].astype(f32)

    # score = K[src] * Q[dst] / sqrt(D) * proj_e      (lane layout: H*D = F)
    score = kg * qg * inv_sqrt_d * proj_e

    # Per-head sum over D, broadcast back over D, via one bf16 MXU matmul with
    # a block-diagonal 0/1 matrix (exact in bf16), f32 accumulation.
    ssum = jnp.dot(score.astype(bf16), hsum_ref[...],
                   preferred_element_type=f32)
    s = jnp.exp(jnp.clip(ssum, -5.0, 5.0))                           # (TE, F)

    # In-kernel tail mask: padded edge rows scatter exact zeros into node 0.
    rows = pl.program_id(0) * tile + jax.lax.broadcasted_iota(
        jnp.int32, (tile, 1), 0)
    valid = (rows < n_edges).astype(f32)
    srep_ref[...] = (s * valid).astype(srep_ref.dtype)
    wv_ref[...] = (s * vg * valid).astype(wv_ref.dtype)              # s * V[src]

    # Edge output path: O_e -> residual -> BN2_e -> FFN_e -> residual
    e2 = jnp.dot(score.astype(bf16), woe_ref[...],
                 preferred_element_type=f32) + boe_ref[...]
    e2 = eb + e2
    e2 = e2 * s2_ref[...] + t2_ref[...]
    ff = jnp.dot(e2.astype(bf16), wf1_ref[...],
                 preferred_element_type=f32) + bf1_ref[...]
    ff = jnp.maximum(ff, 0.0)
    ff = jnp.dot(ff.astype(bf16), wf2_ref[...],
                 preferred_element_type=f32) + bf2_ref[...]
    ef_ref[...] = (e2 + ff).astype(ef_ref.dtype)


def _node_out_kernel(wv_ref, z_ref, h_ref, s1_ref, t1_ref,
                     woh_ref, boh_ref, s2_ref, t2_ref,
                     wf1_ref, bf1_ref, wf2_ref, bf2_ref, o_ref):
    """h_attn = wV/(z+1e-6) -> O_h -> residual -> BN2_h -> FFN_h -> residual."""
    f32 = jnp.float32
    bf16 = jnp.bfloat16

    hb = h_ref[...].astype(f32) * s1_ref[...] + t1_ref[...]          # h_in1 (recomputed)
    h_attn = wv_ref[...] * pl.reciprocal(z_ref[...] + 1e-6, approx=True)
    h2 = jnp.dot(h_attn.astype(bf16), woh_ref[...],
                 preferred_element_type=f32) + boh_ref[...]
    h2 = hb + h2
    h2 = h2 * s2_ref[...] + t2_ref[...]
    ff = jnp.dot(h2.astype(bf16), wf1_ref[...],
                 preferred_element_type=f32) + bf1_ref[...]
    ff = jnp.maximum(ff, 0.0)
    ff = jnp.dot(ff.astype(bf16), wf2_ref[...],
                 preferred_element_type=f32) + bf2_ref[...]
    o_ref[...] = (h2 + ff).astype(o_ref.dtype)


# ---------------------------------------------------------------------------
# Wrapper
# ---------------------------------------------------------------------------
def _ceil_to(n, t):
    return ((n + t - 1) // t) * t


@functools.partial(jax.jit, static_argnames=("num_heads", "tile"))
def graph_transformer_layer(h, e, src, dst, params, *, num_heads, tile=512):
    f32, bf16 = jnp.float32, jnp.bfloat16
    N, F_dim = h.shape
    E = e.shape[0]
    D = F_dim // num_heads

    Np = _ceil_to(N, tile)
    Ep = _ceil_to(E, tile)
    h_p = jnp.pad(h.astype(f32), ((0, Np - N), (0, 0)))
    e_p = jnp.pad(e.astype(f32), ((0, Ep - E), (0, 0)))
    src_p = jnp.pad(src, (0, Ep - E))
    dst_p = jnp.pad(dst, (0, Ep - E))

    cp = pltpu.CompilerParams(dimension_semantics=("parallel",),
                              vmem_limit_bytes=32 * 1024 * 1024)

    def row_spec(cols):
        return pl.BlockSpec((tile, cols), lambda i: (i, 0))

    def const_spec(arr):
        return pl.BlockSpec(arr.shape, lambda i: (0, 0))

    # ---------------- K1: node projections (bf16 Q / contiguous KV) ------
    q, kv = pl.pallas_call(
        _node_proj_kernel,
        grid=(Np // tile,),
        in_specs=[row_spec(F_dim),
                  const_spec(params["s1h"]), const_spec(params["t1h"]),
                  const_spec(params["wqkv"])],
        out_specs=(row_spec(F_dim), row_spec(2 * F_dim)),
        out_shape=(jax.ShapeDtypeStruct((Np, F_dim), bf16),
                   jax.ShapeDtypeStruct((Np, 2 * F_dim), bf16)),
        compiler_params=cp,
    )(h_p, params["s1h"], params["t1h"], params["wqkv"])

    # TODO(synk): data-dependent edge gather (KV[src], Q[dst]) stays in XLA;
    # arbitrary-index row gather has no clean static-BlockSpec equivalent.
    kvg = jnp.take(kv, src_p, axis=0)          # (Ep, 2F) bf16
    qg = jnp.take(q, dst_p, axis=0)            # (Ep, F)  bf16

    # ---------------- K2: edge attention + edge output path --------------
    edge_consts = [params["s1e"], params["t1e"], params["we"], params["hsum"],
                   params["woe"], params["boe"], params["s2e"], params["t2e"],
                   params["wfe1"], params["bfe1"], params["wfe2"], params["bfe2"]]

    e_final_p, wv_e, s_rep = pl.pallas_call(
        functools.partial(_edge_kernel, inv_sqrt_d=1.0 / math.sqrt(D),
                          n_edges=E),
        grid=(Ep // tile,),
        in_specs=[row_spec(F_dim), row_spec(2 * F_dim), row_spec(F_dim)]
                 + [const_spec(a) for a in edge_consts],
        out_specs=(row_spec(F_dim), row_spec(F_dim), row_spec(F_dim)),
        out_shape=(jax.ShapeDtypeStruct((Ep, F_dim), f32),
                   jax.ShapeDtypeStruct((Ep, F_dim), bf16),
                   jax.ShapeDtypeStruct((Ep, F_dim), bf16)),
        compiler_params=cp,
    )(e_p, kvg, qg, *edge_consts)

    # TODO(synk): duplicate-index scatter-add over destination nodes stays in
    # XLA; if profiling shows it dominating, pre-sort edges by dst and fuse a
    # Pallas segment-sum (PrefetchScalarGridSpec row offsets) into K3.
    wV = jnp.zeros((Np, F_dim), f32).at[dst_p].add(wv_e.astype(f32))
    z = jnp.zeros((Np, F_dim), f32).at[dst_p].add(s_rep.astype(f32))

    # ---------------- K3: node output path --------------------------------
    node_consts = [params["s1h"], params["t1h"],
                   params["woh"], params["boh"], params["s2h"], params["t2h"],
                   params["wfh1"], params["bfh1"], params["wfh2"], params["bfh2"]]

    h_final_p = pl.pallas_call(
        _node_out_kernel,
        grid=(Np // tile,),
        in_specs=[row_spec(F_dim)] * 3 + [const_spec(a) for a in node_consts],
        out_specs=row_spec(F_dim),
        out_shape=jax.ShapeDtypeStruct((Np, F_dim), f32),
        compiler_params=cp,
    )(wV, z, h_p, *node_consts)

    return h_final_p[:N], e_final_p[:E]


# ---------------------------------------------------------------------------
# Parameters (synthetic, PyTorch-style init; BN folded to scale/shift)
# ---------------------------------------------------------------------------
def make_params(dim, key):
    keys = iter(jax.random.split(key, 64))

    def linear(fin, fout, bias=True):
        bound = 1.0 / np.sqrt(fin)
        w = jax.random.uniform(next(keys), (fin, fout), jnp.float32, -bound, bound)
        b = (jax.random.uniform(next(keys), (1, fout), jnp.float32, -bound, bound)
             if bias else None)
        return w, b

    def bn_fold(f, eps=1e-5):
        gamma = 1.0 + 0.1 * jax.random.normal(next(keys), (f,), jnp.float32)
        beta = 0.1 * jax.random.normal(next(keys), (f,), jnp.float32)
        mean = 0.05 * jax.random.normal(next(keys), (f,), jnp.float32)
        var = 1.0 + 0.1 * jax.random.uniform(next(keys), (f,), jnp.float32)
        inv = gamma / jnp.sqrt(var + eps)
        return inv[None, :], (beta - mean * inv)[None, :]

    p = {}
    p["s1h"], p["t1h"] = bn_fold(dim)
    p["s1e"], p["t1e"] = bn_fold(dim)
    wq, _ = linear(dim, dim, bias=False)
    wk, _ = linear(dim, dim, bias=False)
    wv, _ = linear(dim, dim, bias=False)
    p["wqkv"] = jnp.concatenate([wq, wk, wv], axis=1)
    p["we"], _ = linear(dim, dim, bias=False)
    p["woh"], p["boh"] = linear(dim, dim)
    p["woe"], p["boe"] = linear(dim, dim)
    p["s2h"], p["t2h"] = bn_fold(dim)
    p["s2e"], p["t2e"] = bn_fold(dim)
    p["wfh1"], p["bfh1"] = linear(dim, 2 * dim)
    p["wfh2"], p["bfh2"] = linear(2 * dim, dim)
    p["wfe1"], p["bfe1"] = linear(dim, 2 * dim)
    p["wfe2"], p["bfe2"] = linear(2 * dim, dim)
    return p


def prepare_kernel_params(p, dim, num_heads):
    """One-time (outside jit) bf16 cast of matmul weights + head-sum matrix."""
    bf16 = jnp.bfloat16
    D = dim // num_heads
    head_ids = np.arange(dim) // D
    hsum = (head_ids[:, None] == head_ids[None, :]).astype(np.float32)

    kp = dict(p)
    for name in ("wqkv", "we", "woh", "woe", "wfh1", "wfh2", "wfe1", "wfe2"):
        kp[name] = p[name].astype(bf16)
    kp["hsum"] = jnp.asarray(hsum, bf16)          # 0/1 matrix, exact in bf16
    return kp


# ---------------------------------------------------------------------------
# Pure-JAX f32 reference (mirrors the PyTorch forward in eval mode)
# ---------------------------------------------------------------------------
def graph_transformer_ref(h, e, src, dst, p, num_heads):
    N, F_dim = h.shape
    E = e.shape[0]
    D = F_dim // num_heads

    hb = h * p["s1h"] + p["t1h"]
    eb = e * p["s1e"] + p["t1e"]
    qkv = hb @ p["wqkv"]
    q, k, v = qkv[:, :F_dim], qkv[:, F_dim:2 * F_dim], qkv[:, 2 * F_dim:]
    qh = q.reshape(N, num_heads, D)
    kh = k.reshape(N, num_heads, D)
    vh = v.reshape(N, num_heads, D)
    pe = (eb @ p["we"]).reshape(E, num_heads, D)

    score = kh[src] * qh[dst] / np.sqrt(D) * pe                      # (E,H,D)
    e_attn = score.reshape(E, F_dim)
    s = jnp.exp(jnp.clip(score.sum(-1, keepdims=True), -5.0, 5.0))   # (E,H,1)
    wV = jnp.zeros((N, num_heads, D), jnp.float32).at[dst].add(vh[src] * s)
    z = jnp.zeros((N, num_heads, 1), jnp.float32).at[dst].add(s)
    h_attn = (wV / (z + 1e-6)).reshape(N, F_dim)

    h2 = h_attn @ p["woh"] + p["boh"]
    h2 = hb + h2
    h2 = h2 * p["s2h"] + p["t2h"]
    h_out = h2 + (jnp.maximum(h2 @ p["wfh1"] + p["bfh1"], 0.0) @ p["wfh2"]
                  + p["bfh2"])

    e2 = e_attn @ p["woe"] + p["boe"]
    e2 = eb + e2
    e2 = e2 * p["s2e"] + p["t2e"]
    e_out = e2 + (jnp.maximum(e2 @ p["wfe1"] + p["bfe1"], 0.0) @ p["wfe2"]
                  + p["bfe2"])
    return h_out, e_out


if __name__ == "__main__":
    dim = 128          # in_dim == out_dim (required by residual/BN in the module)
    num_heads = 8      # head dim = 16
    n_nodes = 600      # -> 2 node grid steps at tile=512 (pad to 1024)
    n_edges = 2000     # -> 4 edge grid steps at tile=512 (pad to 2048, tail masked)

    key = jax.random.PRNGKey(0)
    kh, ke, ks, kd, kp = jax.random.split(key, 5)
    h = jax.random.normal(kh, (n_nodes, dim), jnp.float32)
    e = jax.random.normal(ke, (n_edges, dim), jnp.float32)
    src = jax.random.randint(ks, (n_edges,), 0, n_nodes, jnp.int32)
    dst = jax.random.randint(kd, (n_edges,), 0, n_nodes, jnp.int32)
    params = make_params(dim, kp)
    kparams = prepare_kernel_params(params, dim, num_heads)   # bf16 cast once, outside jit

    h_out, e_out = graph_transformer_layer(h, e, src, dst, kparams,
                                           num_heads=num_heads, tile=512)
    h_out, e_out = jax.block_until_ready((h_out, e_out))

    h_ref, e_ref = graph_transformer_ref(h, e, src, dst, params, num_heads)
    # bf16 matmul operands / intermediates (f32 accumulate) -> ~1e-2 tolerance.
    np.testing.assert_allclose(np.asarray(h_out), np.asarray(h_ref),
                               rtol=3e-2, atol=3e-2)
    np.testing.assert_allclose(np.asarray(e_out), np.asarray(e_ref),
                               rtol=3e-2, atol=3e-2)
    print("KERNEL_OK")
</pallas_src>

<mosaic_0001>
module attributes {stable_mosaic.version = 11 : i64} {
  func.func @_node_proj_kernel(%arg0: i32, %arg1: memref<512x128xf32, #tpu.memory_space<vmem>>, %arg2: memref<1x128xf32, #tpu.memory_space<vmem>>, %arg3: memref<1x128xf32, #tpu.memory_space<vmem>>, %arg4: memref<128x384xbf16, #tpu.memory_space<vmem>>, %arg5: memref<512x128xbf16, #tpu.memory_space<vmem>>, %arg6: memref<512x256xbf16, #tpu.memory_space<vmem>>) attributes {dimension_semantics = [#tpu.dimension_semantics<parallel>], iteration_bounds = array<i64: 2>, scalar_prefetch = 0 : i64, scratch_operands = 0 : i64, tpu.core_type = #tpu.core_type<tc>, window_params = [{transform_indices = @transform_0, window_bounds = array<i64: 512, 128>}, {pipeline_mode = #tpu.pipeline_mode<synchronous>, transform_indices = @transform_1, window_bounds = array<i64: 1, 128>}, {pipeline_mode = #tpu.pipeline_mode<synchronous>, transform_indices = @transform_2, window_bounds = array<i64: 1, 128>}, {pipeline_mode = #tpu.pipeline_mode<synchronous>, transform_indices = @transform_3, window_bounds = array<i64: 128, 384>}, {transform_indices = @transform_4, window_bounds = array<i64: 512, 128>}, {transform_indices = @transform_5, window_bounds = array<i64: 512, 256>}]} {
    %c0 = arith.constant 0 : index
    %c0_0 = arith.constant 0 : index
    %0 = vector.load %arg1[%c0, %c0_0] : memref<512x128xf32, #tpu.memory_space<vmem>>, vector<512x128xf32>
    %c0_1 = arith.constant 0 : index
    %c0_2 = arith.constant 0 : index
    %1 = vector.load %arg2[%c0_1, %c0_2] : memref<1x128xf32, #tpu.memory_space<vmem>>, vector<1x128xf32>
    %2 = vector.broadcast %1 : vector<1x128xf32> to vector<512x128xf32>
    %3 = arith.mulf %0, %2 : vector<512x128xf32>
    %c0_3 = arith.constant 0 : index
    %c0_4 = arith.constant 0 : index
    %4 = vector.load %arg3[%c0_3, %c0_4] : memref<1x128xf32, #tpu.memory_space<vmem>>, vector<1x128xf32>
    %5 = vector.broadcast %4 : vector<1x128xf32> to vector<512x128xf32>
    %6 = arith.addf %3, %5 : vector<512x128xf32>
    %7 = arith.truncf %6 : vector<512x128xf32> to vector<512x128xbf16>
    %c0_5 = arith.constant 0 : index
    %c0_6 = arith.constant 0 : index
    %8 = vector.load %arg4[%c0_5, %c0_6] : memref<128x384xbf16, #tpu.memory_space<vmem>>, vector<128x384xbf16>
    %cst = arith.constant dense<0.000000e+00> : vector<512x384xf32>
    %9 = tpu.matmul %7, %8, %cst {dimension_numbers = #tpu.dot_dimension_numbers<[1], [0], [0], [1], [0, 0, 1, 1], [], []>} : vector<512x128xbf16>, vector<128x384xbf16>, vector<512x384xf32> -> vector<512x384xf32>
    %10 = vector.extract_strided_slice %9 {offsets = [0, 0], sizes = [512, 128], strides = [1, 1]} : vector<512x384xf32> to vector<512x128xf32>
    %11 = arith.truncf %10 : vector<512x128xf32> to vector<512x128xbf16>
    %c0_7 = arith.constant 0 : index
    %c0_8 = arith.constant 0 : index
    %12 = vector.load %arg5[%c0_7, %c0_8] : memref<512x128xbf16, #tpu.memory_space<vmem>>, vector<512x128xbf16>
    tpu.vector_store %arg5[%c0_7, %c0_8], %11 {strides = array<i32>} : memref<512x128xbf16, #tpu.memory_space<vmem>>, vector<512x128xbf16>,
    %13 = vector.extract_strided_slice %9 {offsets = [0, 128], sizes = [512, 256], strides = [1, 1]} : vector<512x384xf32> to vector<512x256xf32>
    %14 = arith.truncf %13 : vector<512x256xf32> to vector<512x256xbf16>
    %c0_9 = arith.constant 0 : index
    %c0_10 = arith.constant 0 : index
    %15 = vector.load %arg6[%c0_9, %c0_10] : memref<512x256xbf16, #tpu.memory_space<vmem>>, vector<512x256xbf16>
    tpu.vector_store %arg6[%c0_9, %c0_10], %14 {strides = array<i32>} : memref<512x256xbf16, #tpu.memory_space<vmem>>, vector<512x256xbf16>,
    return
  }
  func.func @transform_0(%arg0: i32) -> (i32, i32) {
    %c0_i32 = arith.constant 0 : i32
    %c0_i32_0 = arith.constant 0 : i32
    return %arg0, %c0_i32 : i32, i32
  }
  func.func @transform_1(%arg0: i32) -> (i32, i32) {
    %c0_i32 = arith.constant 0 : i32
    %c0_i32_0 = arith.constant 0 : i32
    %c0_i32_1 = arith.constant 0 : i32
    return %c0_i32, %c0_i32_0 : i32, i32
  }
  func.func @transform_2(%arg0: i32) -> (i32, i32) {
    %c0_i32 = arith.constant 0 : i32
    %c0_i32_0 = arith.constant 0 : i32
    %c0_i32_1 = arith.constant 0 : i32
    return %c0_i32, %c0_i32_0 : i32, i32
  }
  func.func @transform_3(%arg0: i32) -> (i32, i32) {
    %c0_i32 = arith.constant 0 : i32
    %c0_i32_0 = arith.constant 0 : i32
    %c0_i32_1 = arith.constant 0 : i32
    return %c0_i32, %c0_i32_0 : i32, i32
  }
  func.func @transform_4(%arg0: i32) -> (i32, i32) {
    %c0_i32 = arith.constant 0 : i32
    %c0_i32_0 = arith.constant 0 : i32
    return %arg0, %c0_i32 : i32, i32
  }
  func.func @transform_5(%arg0: i32) -> (i32, i32) {
    %c0_i32 = arith.constant 0 : i32
    %c0_i32_0 = arith.constant 0 : i32
    return %arg0, %c0_i32 : i32, i32
  }
}

module attributes {stable_mosaic.version = 11 : i64} {
  func.func @_edge_kernel(%arg0: i32, %arg1: memref<512x128xf32, #tpu.memory_space<vmem>>, %arg2: memref<512x256xbf16, #tpu.memory_space<vmem>>, %arg3: memref<512x128xbf16, #tpu.memory_space<vmem>>, %arg4: memref<1x128xf32, #tpu.memory_space<vmem>>, %arg5: memref<1x128xf32, #tpu.memory_space<vmem>>, %arg6: memref<128x128xbf16, #tpu.memory_space<vmem>>, %arg7: memref<128x128xbf16, #tpu.memory_space<vmem>>, %arg8: memref<128x128xbf16, #tpu.memory_space<vmem>>, %arg9: memref<1x128xf32, #tpu.memory_space<vmem>>, %arg10: memref<1x128xf32, #tpu.memory_space<vmem>>, %arg11: memref<1x128xf32, #tpu.memory_space<vmem>>, %arg12: memref<128x256xbf16, #tpu.memory_space<vmem>>, %arg13: memref<1x256xf32, #tpu.memory_space<vmem>>, %arg14: memref<256x128xbf16, #tpu.memory_space<vmem>>, %arg15: memref<1x128xf32, #tpu.memory_space<vmem>>, %arg16: memref<512x128xf32, #tpu.memory_space<vmem>>, %arg17: memref<512x128xbf16, #tpu.memory_space<vmem>>, %arg18: memref<512x128xbf16, #tpu.memory_space<vmem>>) attributes {dimension_semantics = [#tpu.dimension_semantics<parallel>], iteration_bounds = array<i64: 4>, scalar_prefetch = 0 : i64, scratch_operands = 0 : i64, tpu.core_type = #tpu.core_type<tc>, window_params = [{transform_indices = @transform_0, window_bounds = array<i64: 512, 128>}, {transform_indices = @transform_1, window_bounds = array<i64: 512, 256>}, {transform_indices = @transform_2, window_bounds = array<i64: 512, 128>}, {pipeline_mode = #tpu.pipeline_mode<synchronous>, transform_indices = @transform_3, window_bounds = array<i64: 1, 128>}, {pipeline_mode = #tpu.pipeline_mode<synchronous>, transform_indices = @transform_4, window_bounds = array<i64: 1, 128>}, {pipeline_mode = #tpu.pipeline_mode<synchronous>, transform_indices = @transform_5, window_bounds = array<i64: 128, 128>}, {pipeline_mode = #tpu.pipeline_mode<synchronous>, transform_indices = @transform_6, window_bounds = array<i64: 128, 128>}, {pipeline_mode = #tpu.pipeline_mode<synchronous>, transform_indices = @transform_7, window_bounds = array<i64: 128, 128>}, {pipeline_mode = #tpu.pipeline_mode<synchronous>, transform_indices = @transform_8, window_bounds = array<i64: 1, 128>}, {pipeline_mode = #tpu.pipeline_mode<synchronous>, transform_indices = @transform_9, window_bounds = array<i64: 1, 128>}, {pipeline_mode = #tpu.pipeline_mode<synchronous>, transform_indices = @transform_10, window_bounds = array<i64: 1, 128>}, {pipeline_mode = #tpu.pipeline_mode<synchronous>, transform_indices = @transform_11, window_bounds = array<i64: 128, 256>}, {pipeline_mode = #tpu.pipeline_mode<synchronous>, transform_indices = @transform_12, window_bounds = array<i64: 1, 256>}, {pipeline_mode = #tpu.pipeline_mode<synchronous>, transform_indices = @transform_13, window_bounds = array<i64: 256, 128>}, {pipeline_mode = #tpu.pipeline_mode<synchronous>, transform_indices = @transform_14, window_bounds = array<i64: 1, 128>}, {transform_indices = @transform_15, window_bounds = array<i64: 512, 128>}, {transform_indices = @transform_16, window_bounds = array<i64: 512, 128>}, {transform_indices = @transform_17, window_bounds = array<i64: 512, 128>}]} {
    %c0 = arith.constant 0 : index
    %c0_0 = arith.constant 0 : index
    %0 = vector.load %arg1[%c0, %c0_0] : memref<512x128xf32, #tpu.memory_space<vmem>>, vector<512x128xf32>
    %c0_1 = arith.constant 0 : index
    %c0_2 = arith.constant 0 : index
    %1 = vector.load %arg4[%c0_1, %c0_2] : memref<1x128xf32, #tpu.memory_space<vmem>>, vector<1x128xf32>
    %2 = vector.broadcast %1 : vector<1x128xf32> to vector<512x128xf32>
    %3 = arith.mulf %0, %2 : vector<512x128xf32>
    %c0_3 = arith.constant 0 : index
    %c0_4 = arith.constant 0 : index
    %4 = vector.load %arg5[%c0_3, %c0_4] : memref<1x128xf32, #tpu.memory_space<vmem>>, vector<1x128xf32>
    %5 = vector.broadcast %4 : vector<1x128xf32> to vector<512x128xf32>
    %6 = arith.addf %3, %5 : vector<512x128xf32>
    %7 = arith.truncf %6 : vector<512x128xf32> to vector<512x128xbf16>
    %c0_5 = arith.constant 0 : index
    %c0_6 = arith.constant 0 : index
    %8 = vector.load %arg6[%c0_5, %c0_6] : memref<128x128xbf16, #tpu.memory_space<vmem>>, vector<128x128xbf16>
    %cst = arith.constant dense<0.000000e+00> : vector<512x128xf32>
    %9 = tpu.matmul %7, %8, %cst {dimension_numbers = #tpu.dot_dimension_numbers<[1], [0], [0], [1], [0, 0, 1, 1], [], []>} : vector<512x128xbf16>, vector<128x128xbf16>, vector<512x128xf32> -> vector<512x128xf32>
    %c0_7 = arith.constant 0 : index
    %c0_8 = arith.constant 0 : index
    %10 = vector.load %arg2[%c0_7, %c0_8] : memref<512x256xbf16, #tpu.memory_space<vmem>>, vector<512x128xbf16>
    %11 = arith.extf %10 : vector<512x128xbf16> to vector<512x128xf32>
    %c0_9 = arith.constant 0 : index
    %c128 = arith.constant 128 : index
    %12 = vector.load %arg2[%c0_9, %c128] : memref<512x256xbf16, #tpu.memory_space<vmem>>, vector<512x128xbf16>
    %13 = arith.extf %12 : vector<512x128xbf16> to vector<512x128xf32>
    %c0_10 = arith.constant 0 : index
    %c0_11 = arith.constant 0 : index
    %14 = vector.load %arg3[%c0_10, %c0_11] : memref<512x128xbf16, #tpu.memory_space<vmem>>, vector<512x128xbf16>
    %15 = arith.extf %14 : vector<512x128xbf16> to vector<512x128xf32>
    %16 = arith.mulf %11, %15 : vector<512x128xf32>
    %cst_12 = arith.constant 2.500000e-01 : f32
    %17 = vector.broadcast %cst_12 : f32 to vector<512x128xf32>
    %18 = arith.mulf %16, %17 : vector<512x128xf32>
    %19 = arith.mulf %18, %9 : vector<512x128xf32>
    %20 = arith.truncf %19 : vector<512x128xf32> to vector<512x128xbf16>
    %c0_13 = arith.constant 0 : index
    %c0_14 = arith.constant 0 : index
    %21 = vector.load %arg7[%c0_13, %c0_14] : memref<128x128xbf16, #tpu.memory_space<vmem>>, vector<128x128xbf16>
    %cst_15 = arith.constant dense<0.000000e+00> : vector<512x128xf32>
    %22 = tpu.matmul %20, %21, %cst_15 {dimension_numbers = #tpu.dot_dimension_numbers<[1], [0], [0], [1], [0, 0, 1, 1], [], []>} : vector<512x128xbf16>, vector<128x128xbf16>, vector<512x128xf32> -> vector<512x128xf32>
    %cst_16 = arith.constant -5.000000e+00 : f32
    %cst_17 = arith.constant 5.000000e+00 : f32
    %23 = vector.broadcast %cst_16 : f32 to vector<512x128xf32>
    %24 = arith.maximumf %23, %22 : vector<512x128xf32>
    %25 = vector.broadcast %cst_17 : f32 to vector<512x128xf32>
    %26 = arith.minimumf %25, %24 : vector<512x128xf32>
    %27 = math.exp %26 : vector<512x128xf32>
    %c512_i32 = arith.constant 512 : i32
    %28 = arith.muli %arg0, %c512_i32 : i32
    %29 = tpu.iota {dimensions = array<i32: 0>} : vector<512x1xi32>
    %30 = vector.broadcast %28 : i32 to vector<512x1xi32>
    %31 = arith.addi %30, %29 : vector<512x1xi32>
    %c2000_i32 = arith.constant 2000 : i32
    %32 = vector.broadcast %c2000_i32 : i32 to vector<512x1xi32>
    %33 = arith.cmpi slt, %31, %32 : vector<512x1xi32>
    %34 = arith.extui %33 : vector<512x1xi1> to vector<512x1xi32>
    %35 = arith.sitofp %34 : vector<512x1xi32> to vector<512x1xf32>
    %36 = vector.broadcast %35 : vector<512x1xf32> to vector<512x128xf32>
    %37 = arith.mulf %27, %36 : vector<512x128xf32>
    %38 = arith.truncf %37 : vector<512x128xf32> to vector<512x128xbf16>
    %c0_18 = arith.constant 0 : index
    %c0_19 = arith.constant 0 : index
    %39 = vector.load %arg18[%c0_18, %c0_19] : memref<512x128xbf16, #tpu.memory_space<vmem>>, vector<512x128xbf16>
    tpu.vector_store %arg18[%c0_18, %c0_19], %38 {strides = array<i32>} : memref<512x128xbf16, #tpu.memory_space<vmem>>, vector<512x128xbf16>,
    %40 = arith.mulf %27, %13 : vector<512x128xf32>
    %41 = vector.broadcast %35 : vector<512x1xf32> to vector<512x128xf32>
    %42 = arith.mulf %40, %41 : vector<512x128xf32>
    %43 = arith.truncf %42 : vector<512x128xf32> to vector<512x128xbf16>
    %c0_20 = arith.constant 0 : index
    %c0_21 = arith.constant 0 : index
    %44 = vector.load %arg17[%c0_20, %c0_21] : memref<512x128xbf16, #tpu.memory_space<vmem>>, vector<512x128xbf16>
    tpu.vector_store %arg17[%c0_20, %c0_21], %43 {strides = array<i32>} : memref<512x128xbf16, #tpu.memory_space<vmem>>, vector<512x128xbf16>,
    %45 = arith.truncf %19 : vector<512x128xf32> to vector<512x128xbf16>
    %c0_22 = arith.constant 0 : index
    %c0_23 = arith.constant 0 : index
    %46 = vector.load %arg8[%c0_22, %c0_23] : memref<128x128xbf16, #tpu.memory_space<vmem>>, vector<128x128xbf16>
    %cst_24 = arith.constant dense<0.000000e+00> : vector<512x128xf32>
    %47 = tpu.matmul %45, %46, %cst_24 {dimension_numbers = #tpu.dot_dimension_numbers<[1], [0], [0], [1], [0, 0, 1, 1], [], []>} : vector<512x128xbf16>, vector<128x128xbf16>, vector<512x128xf32> -> vector<512x128xf32>
    %c0_25 = arith.constant 0 : index
    %c0_26 = arith.constant 0 : index
    %48 = vector.load %arg9[%c0_25, %c0_26] : memref<1x128xf32, #tpu.memory_space<vmem>>, vector<1x128xf32>
    %49 = vector.broadcast %48 : vector<1x128xf32> to vector<512x128xf32>
    %50 = arith.addf %47, %49 : vector<512x128xf32>
    %51 = arith.addf %6, %50 : vector<512x128xf32>
    %c0_27 = arith.constant 0 : index
    %c0_28 = arith.constant 0 : index
    %52 = vector.load %arg10[%c0_27, %c0_28] : memref<1x128xf32, #tpu.memory_space<vmem>>, vector<1x128xf32>
    %53 = vector.broadcast %52 : vector<1x128xf32> to vector<512x128xf32>
    %54 = arith.mulf %51, %53 : vector<512x128xf32>
    %c0_29 = arith.constant 0 : index
    %c0_30 = arith.constant 0 : index
    %55 = vector.load %arg11[%c0_29, %c0_30] : memref<1x128xf32, #tpu.memory_space<vmem>>, vector<1x128xf32>
    %56 = vector.broadcast %55 : vector<1x128xf32> to vector<512x128xf32>
    %57 = arith.addf %54, %56 : vector<512x128xf32>
    %58 = arith.truncf %57 : vector<512x128xf32> to vector<512x128xbf16>
    %c0_31 = arith.constant 0 : index
    %c0_32 = arith.constant 0 : index
    %59 = vector.load %arg12[%c0_31, %c0_32] : memref<128x256xbf16, #tpu.memory_space<vmem>>, vector<128x256xbf16>
    %cst_33 = arith.constant dense<0.000000e+00> : vector<512x256xf32>
    %60 = tpu.matmul %58, %59, %cst_33 {dimension_numbers = #tpu.dot_dimension_numbers<[1], [0], [0], [1], [0, 0, 1, 1], [], []>} : vector<512x128xbf16>, vector<128x256xbf16>, vector<512x256xf32> -> vector<512x256xf32>
    %c0_34 = arith.constant 0 : index
    %c0_35 = arith.constant 0 : index
    %61 = vector.load %arg13[%c0_34, %c0_35] : memref<1x256xf32, #tpu.memory_space<vmem>>, vector<1x256xf32>
    %62 = vector.broadcast %61 : vector<1x256xf32> to vector<512x256xf32>
    %63 = arith.addf %60, %62 : vector<512x256xf32>
    %cst_36 = arith.constant 0.000000e+00 : f32
    %64 = vector.broadcast %cst_36 : f32 to vector<512x256xf32>
    %65 = arith.maximumf %63, %64 : vector<512x256xf32>
    %66 = arith.truncf %65 : vector<512x256xf32> to vector<512x256xbf16>
    %c0_37 = arith.constant 0 : index
    %c0_38 = arith.constant 0 : index
    %67 = vector.load %arg14[%c0_37, %c0_38] : memref<256x128xbf16, #tpu.memory_space<vmem>>, vector<256x128xbf16>
    %cst_39 = arith.constant dense<0.000000e+00> : vector<512x128xf32>
    %68 = tpu.matmul %66, %67, %cst_39 {dimension_numbers = #tpu.dot_dimension_numbers<[1], [0], [0], [1], [0, 0, 1, 1], [], []>} : vector<512x256xbf16>, vector<256x128xbf16>, vector<512x128xf32> -> vector<512x128xf32>
    %c0_40 = arith.constant 0 : index
    %c0_41 = arith.constant 0 : index
    %69 = vector.load %arg15[%c0_40, %c0_41] : memref<1x128xf32, #tpu.memory_space<vmem>>, vector<1x128xf32>
    %70 = vector.broadcast %69 : vector<1x128xf32> to vector<512x128xf32>
    %71 = arith.addf %68, %70 : vector<512x128xf32>
    %72 = arith.addf %57, %71 : vector<512x128xf32>
    %c0_42 = arith.constant 0 : index
    %c0_43 = arith.constant 0 : index
    %73 = vector.load %arg16[%c0_42, %c0_43] : memref<512x128xf32, #tpu.memory_space<vmem>>, vector<512x128xf32>
    tpu.vector_store %arg16[%c0_42, %c0_43], %72 {strides = array<i32>} : memref<512x128xf32, #tpu.memory_space<vmem>>, vector<512x128xf32>,
    return
  }
  func.func @transform_0(%arg0: i32) -> (i32, i32) {
    %c0_i32 = arith.constant 0 : i32
    %c0_i32_0 = arith.constant 0 : i32
    return %arg0, %c0_i32 : i32, i32
  }
  func.func @transform_1(%arg0: i32) -> (i32, i32) {
    %c0_i32 = arith.constant 0 : i32
    %c0_i32_0 = arith.constant 0 : i32
    return %arg0, %c0_i32 : i32, i32
  }
  func.func @transform_2(%arg0: i32) -> (i32, i32) {
    %c0_i32 = arith.constant 0 : i32
    %c0_i32_0 = arith.constant 0 : i32
    return %arg0, %c0_i32 : i32, i32
  }
  func.func @transform_3(%arg0: i32) -> (i32, i32) {
    %c0_i32 = arith.constant 0 : i32
    %c0_i32_0 = arith.constant 0 : i32
    %c0_i32_1 = arith.constant 0 : i32
    return %c0_i32, %c0_i32_0 : i32, i32
  }
  func.func @transform_4(%arg0: i32) -> (i32, i32) {
    %c0_i32 = arith.constant 0 : i32
    %c0_i32_0 = arith.constant 0 : i32
    %c0_i32_1 = arith.constant 0 : i32
    return %c0_i32, %c0_i32_0 : i32, i32
  }
  func.func @transform_5(%arg0: i32) -> (i32, i32) {
    %c0_i32 = arith.constant 0 : i32
    %c0_i32_0 = arith.constant 0 : i32
    %c0_i32_1 = arith.constant 0 : i32
    return %c0_i32, %c0_i32_0 : i32, i32
  }
  func.func @transform_6(%arg0: i32) -> (i32, i32) {
    %c0_i32 = arith.constant 0 : i32
    %c0_i32_0 = arith.constant 0 : i32
    %c0_i32_1 = arith.constant 0 : i32
    return %c0_i32, %c0_i32_0 : i32, i32
  }
  func.func @transform_7(%arg0: i32) -> (i32, i32) {
    %c0_i32 = arith.constant 0 : i32
    %c0_i32_0 = arith.constant 0 : i32
    %c0_i32_1 = arith.constant 0 : i32
    return %c0_i32, %c0_i32_0 : i32, i32
  }
  func.func @transform_8(%arg0: i32) -> (i32, i32) {
    %c0_i32 = arith.constant 0 : i32
    %c0_i32_0 = arith.constant 0 : i32
    %c0_i32_1 = arith.constant 0 : i32
    return %c0_i32, %c0_i32_0 : i32, i32
  }
  func.func @transform_9(%arg0: i32) -> (i32, i32) {
    %c0_i32 = arith.constant 0 : i32
    %c0_i32_0 = arith.constant 0 : i32
    %c0_i32_1 = arith.constant 0 : i32
    return %c0_i32, %c0_i32_0 : i32, i32
  }
  func.func @transform_10(%arg0: i32) -> (i32, i32) {
    %c0_i32 = arith.constant 0 : i32
    %c0_i32_0 = arith.constant 0 : i32
    %c0_i32_1 = arith.constant 0 : i32
    return %c0_i32, %c0_i32_0 : i32, i32
  }
  func.func @transform_11(%arg0: i32) -> (i32, i32) {
    %c0_i32 = arith.constant 0 : i32
    %c0_i32_0 = arith.constant 0 : i32
    %c0_i32_1 = arith.constant 0 : i32
    return %c0_i32, %c0_i32_0 : i32, i32
  }
  func.func @transform_12(%arg0: i32) -> (i32, i32) {
    %c0_i32 = arith.constant 0 : i32
    %c0_i32_0 = arith.constant 0 : i32
    %c0_i32_1 = arith.constant 0 : i32
    return %c0_i32, %c0_i32_0 : i32, i32
  }
  func.func @transform_13(%arg0: i32) -> (i32, i32) {
    %c0_i32 = arith.constant 0 : i32
    %c0_i32_0 = arith.constant 0 : i32
    %c0_i32_1 = arith.constant 0 : i32
    return %c0_i32, %c0_i32_0 : i32, i32
  }
  func.func @transform_14(%arg0: i32) -> (i32, i32) {
    %c0_i32 = arith.constant 0 : i32
    %c0_i32_0 = arith.constant 0 : i32
    %c0_i32_1 = arith.constant 0 : i32
    return %c0_i32, %c0_i32_0 : i32, i32
  }
  func.func @transform_15(%arg0: i32) -> (i32, i32) {
    %c0_i32 = arith.constant 0 : i32
    %c0_i32_0 = arith.constant 0 : i32
    return %arg0, %c0_i32 : i32, i32
  }
  func.func @transform_16(%arg0: i32) -> (i32, i32) {
    %c0_i32 = arith.constant 0 : i32
    %c0_i32_0 = arith.constant 0 : i32
    return %arg0, %c0_i32 : i32, i32
  }
  func.func @transform_17(%arg0: i32) -> (i32, i32) {
    %c0_i32 = arith.constant 0 : i32
    %c0_i32_0 = arith.constant 0 : i32
    return %arg0, %c0_i32 : i32, i32
  }
}

module attributes {stable_mosaic.version = 11 : i64} {
  func.func @_node_out_kernel(%arg0: i32, %arg1: memref<512x128xf32, #tpu.memory_space<vmem>>, %arg2: memref<512x128xf32, #tpu.memory_space<vmem>>, %arg3: memref<512x128xf32, #tpu.memory_space<vmem>>, %arg4: memref<1x128xf32, #tpu.memory_space<vmem>>, %arg5: memref<1x128xf32, #tpu.memory_space<vmem>>, %arg6: memref<128x128xbf16, #tpu.memory_space<vmem>>, %arg7: memref<1x128xf32, #tpu.memory_space<vmem>>, %arg8: memref<1x128xf32, #tpu.memory_space<vmem>>, %arg9: memref<1x128xf32, #tpu.memory_space<vmem>>, %arg10: memref<128x256xbf16, #tpu.memory_space<vmem>>, %arg11: memref<1x256xf32, #tpu.memory_space<vmem>>, %arg12: memref<256x128xbf16, #tpu.memory_space<vmem>>, %arg13: memref<1x128xf32, #tpu.memory_space<vmem>>, %arg14: memref<512x128xf32, #tpu.memory_space<vmem>>) attributes {dimension_semantics = [#tpu.dimension_semantics<parallel>], iteration_bounds = array<i64: 2>, scalar_prefetch = 0 : i64, scratch_operands = 0 : i64, tpu.core_type = #tpu.core_type<tc>, window_params = [{transform_indices = @transform_0, window_bounds = array<i64: 512, 128>}, {transform_indices = @transform_1, window_bounds = array<i64: 512, 128>}, {transform_indices = @transform_2, window_bounds = array<i64: 512, 128>}, {pipeline_mode = #tpu.pipeline_mode<synchronous>, transform_indices = @transform_3, window_bounds = array<i64: 1, 128>}, {pipeline_mode = #tpu.pipeline_mode<synchronous>, transform_indices = @transform_4, window_bounds = array<i64: 1, 128>}, {pipeline_mode = #tpu.pipeline_mode<synchronous>, transform_indices = @transform_5, window_bounds = array<i64: 128, 128>}, {pipeline_mode = #tpu.pipeline_mode<synchronous>, transform_indices = @transform_6, window_bounds = array<i64: 1, 128>}, {pipeline_mode = #tpu.pipeline_mode<synchronous>, transform_indices = @transform_7, window_bounds = array<i64: 1, 128>}, {pipeline_mode = #tpu.pipeline_mode<synchronous>, transform_indices = @transform_8, window_bounds = array<i64: 1, 128>}, {pipeline_mode = #tpu.pipeline_mode<synchronous>, transform_indices = @transform_9, window_bounds = array<i64: 128, 256>}, {pipeline_mode = #tpu.pipeline_mode<synchronous>, transform_indices = @transform_10, window_bounds = array<i64: 1, 256>}, {pipeline_mode = #tpu.pipeline_mode<synchronous>, transform_indices = @transform_11, window_bounds = array<i64: 256, 128>}, {pipeline_mode = #tpu.pipeline_mode<synchronous>, transform_indices = @transform_12, window_bounds = array<i64: 1, 128>}, {transform_indices = @transform_13, window_bounds = array<i64: 512, 128>}]} {
    %c0 = arith.constant 0 : index
    %c0_0 = arith.constant 0 : index
    %0 = vector.load %arg3[%c0, %c0_0] : memref<512x128xf32, #tpu.memory_space<vmem>>, vector<512x128xf32>
    %c0_1 = arith.constant 0 : index
    %c0_2 = arith.constant 0 : index
    %1 = vector.load %arg4[%c0_1, %c0_2] : memref<1x128xf32, #tpu.memory_space<vmem>>, vector<1x128xf32>
    %2 = vector.broadcast %1 : vector<1x128xf32> to vector<512x128xf32>
    %3 = arith.mulf %0, %2 : vector<512x128xf32>
    %c0_3 = arith.constant 0 : index
    %c0_4 = arith.constant 0 : index
    %4 = vector.load %arg5[%c0_3, %c0_4] : memref<1x128xf32, #tpu.memory_space<vmem>>, vector<1x128xf32>
    %5 = vector.broadcast %4 : vector<1x128xf32> to vector<512x128xf32>
    %6 = arith.addf %3, %5 : vector<512x128xf32>
    %c0_5 = arith.constant 0 : index
    %c0_6 = arith.constant 0 : index
    %7 = vector.load %arg1[%c0_5, %c0_6] : memref<512x128xf32, #tpu.memory_space<vmem>>, vector<512x128xf32>
    %c0_7 = arith.constant 0 : index
    %c0_8 = arith.constant 0 : index
    %8 = vector.load %arg2[%c0_7, %c0_8] : memref<512x128xf32, #tpu.memory_space<vmem>>, vector<512x128xf32>
    %cst = arith.constant 9.99999997E-7 : f32
    %9 = vector.broadcast %cst : f32 to vector<512x128xf32>
    %10 = arith.addf %8, %9 : vector<512x128xf32>
    %11 = tpu.reciprocal %10 {approx = true} : vector<512x128xf32> -> vector<512x128xf32>
    %12 = arith.mulf %7, %11 : vector<512x128xf32>
    %13 = arith.truncf %12 : vector<512x128xf32> to vector<512x128xbf16>
    %c0_9 = arith.constant 0 : index
    %c0_10 = arith.constant 0 : index
    %14 = vector.load %arg6[%c0_9, %c0_10] : memref<128x128xbf16, #tpu.memory_space<vmem>>, vector<128x128xbf16>
    %cst_11 = arith.constant dense<0.000000e+00> : vector<512x128xf32>
    %15 = tpu.matmul %13, %14, %cst_11 {dimension_numbers = #tpu.dot_dimension_numbers<[1], [0], [0], [1], [0, 0, 1, 1], [], []>} : vector<512x128xbf16>, vector<128x128xbf16>, vector<512x128xf32> -> vector<512x128xf32>
    %c0_12 = arith.constant 0 : index
    %c0_13 = arith.constant 0 : index
    %16 = vector.load %arg7[%c0_12, %c0_13] : memref<1x128xf32, #tpu.memory_space<vmem>>, vector<1x128xf32>
    %17 = vector.broadcast %16 : vector<1x128xf32> to vector<512x128xf32>
    %18 = arith.addf %15, %17 : vector<512x128xf32>
    %19 = arith.addf %6, %18 : vector<512x128xf32>
    %c0_14 = arith.constant 0 : index
    %c0_15 = arith.constant 0 : index
    %20 = vector.load %arg8[%c0_14, %c0_15] : memref<1x128xf32, #tpu.memory_space<vmem>>, vector<1x128xf32>
    %21 = vector.broadcast %20 : vector<1x128xf32> to vector<512x128xf32>
    %22 = arith.mulf %19, %21 : vector<512x128xf32>
    %c0_16 = arith.constant 0 : index
    %c0_17 = arith.constant 0 : index
    %23 = vector.load %arg9[%c0_16, %c0_17] : memref<1x128xf32, #tpu.memory_space<vmem>>, vector<1x128xf32>
    %24 = vector.broadcast %23 : vector<1x128xf32> to vector<512x128xf32>
    %25 = arith.addf %22, %24 : vector<512x128xf32>
    %26 = arith.truncf %25 : vector<512x128xf32> to vector<512x128xbf16>
    %c0_18 = arith.constant 0 : index
    %c0_19 = arith.constant 0 : index
    %27 = vector.load %arg10[%c0_18, %c0_19] : memref<128x256xbf16, #tpu.memory_space<vmem>>, vector<128x256xbf16>
    %cst_20 = arith.constant dense<0.000000e+00> : vector<512x256xf32>
    %28 = tpu.matmul %26, %27, %cst_20 {dimension_numbers = #tpu.dot_dimension_numbers<[1], [0], [0], [1], [0, 0, 1, 1], [], []>} : vector<512x128xbf16>, vector<128x256xbf16>, vector<512x256xf32> -> vector<512x256xf32>
    %c0_21 = arith.constant 0 : index
    %c0_22 = arith.constant 0 : index
    %29 = vector.load %arg11[%c0_21, %c0_22] : memref<1x256xf32, #tpu.memory_space<vmem>>, vector<1x256xf32>
    %30 = vector.broadcast %29 : vector<1x256xf32> to vector<512x256xf32>
    %31 = arith.addf %28, %30 : vector<512x256xf32>
    %cst_23 = arith.constant 0.000000e+00 : f32
    %32 = vector.broadcast %cst_23 : f32 to vector<512x256xf32>
    %33 = arith.maximumf %31, %32 : vector<512x256xf32>
    %34 = arith.truncf %33 : vector<512x256xf32> to vector<512x256xbf16>
    %c0_24 = arith.constant 0 : index
    %c0_25 = arith.constant 0 : index
    %35 = vector.load %arg12[%c0_24, %c0_25] : memref<256x128xbf16, #tpu.memory_space<vmem>>, vector<256x128xbf16>
    %cst_26 = arith.constant dense<0.000000e+00> : vector<512x128xf32>
    %36 = tpu.matmul %34, %35, %cst_26 {dimension_numbers = #tpu.dot_dimension_numbers<[1], [0], [0], [1], [0, 0, 1, 1], [], []>} : vector<512x256xbf16>, vector<256x128xbf16>, vector<512x128xf32> -> vector<512x128xf32>
    %c0_27 = arith.constant 0 : index
    %c0_28 = arith.constant 0 : index
    %37 = vector.load %arg13[%c0_27, %c0_28] : memref<1x128xf32, #tpu.memory_space<vmem>>, vector<1x128xf32>
    %38 = vector.broadcast %37 : vector<1x128xf32> to vector<512x128xf32>
    %39 = arith.addf %36, %38 : vector<512x128xf32>
    %40 = arith.addf %25, %39 : vector<512x128xf32>
    %c0_29 = arith.constant 0 : index
    %c0_30 = arith.constant 0 : index
    %41 = vector.load %arg14[%c0_29, %c0_30] : memref<512x128xf32, #tpu.memory_space<vmem>>, vector<512x128xf32>
    tpu.vector_store %arg14[%c0_29, %c0_30], %40 {strides = array<i32>} : memref<512x128xf32, #tpu.memory_space<vmem>>, vector<512x128xf32>,
    return
  }
  func.func @transform_0(%arg0: i32) -> (i32, i32) {
    %c0_i32 = arith.constant 0 : i32
    %c0_i32_0 = arith.constant 0 : i32
    return %arg0, %c0_i32 : i32, i32
  }
  func.func @transform_1(%arg0: i32) -> (i32, i32) {
    %c0_i32 = arith.constant 0 : i32
    %c0_i32_0 = arith.constant 0 : i32
    return %arg0, %c0_i32 : i32, i32
  }
  func.func @transform_2(%arg0: i32) -> (i32, i32) {
    %c0_i32 = arith.constant 0 : i32
    %c0_i32_0 = arith.constant 0 : i32
    return %arg0, %c0_i32 : i32, i32
  }
  func.func @transform_3(%arg0: i32) -> (i32, i32) {
    %c0_i32 = arith.constant 0 : i32
    %c0_i32_0 = arith.constant 0 : i32
    %c0_i32_1 = arith.constant 0 : i32
    return %c0_i32, %c0_i32_0 : i32, i32
  }
  func.func @transform_4(%arg0: i32) -> (i32, i32) {
    %c0_i32 = arith.constant 0 : i32
    %c0_i32_0 = arith.constant 0 : i32
    %c0_i32_1 = arith.constant 0 : i32
    return %c0_i32, %c0_i32_0 : i32, i32
  }
  func.func @transform_5(%arg0: i32) -> (i32, i32) {
    %c0_i32 = arith.constant 0 : i32
    %c0_i32_0 = arith.constant 0 : i32
    %c0_i32_1 = arith.constant 0 : i32
    return %c0_i32, %c0_i32_0 : i32, i32
  }
  func.func @transform_6(%arg0: i32) -> (i32, i32) {
    %c0_i32 = arith.constant 0 : i32
    %c0_i32_0 = arith.constant 0 : i32
    %c0_i32_1 = arith.constant 0 : i32
    return %c0_i32, %c0_i32_0 : i32, i32
  }
  func.func @transform_7(%arg0: i32) -> (i32, i32) {
    %c0_i32 = arith.constant 0 : i32
    %c0_i32_0 = arith.constant 0 : i32
    %c0_i32_1 = arith.constant 0 : i32
    return %c0_i32, %c0_i32_0 : i32, i32
  }
  func.func @transform_8(%arg0: i32) -> (i32, i32) {
    %c0_i32 = arith.constant 0 : i32
    %c0_i32_0 = arith.constant 0 : i32
    %c0_i32_1 = arith.constant 0 : i32
    return %c0_i32, %c0_i32_0 : i32, i32
  }
  func.func @transform_9(%arg0: i32) -> (i32, i32) {
    %c0_i32 = arith.constant 0 : i32
    %c0_i32_0 = arith.constant 0 : i32
    %c0_i32_1 = arith.constant 0 : i32
    return %c0_i32, %c0_i32_0 : i32, i32
  }
  func.func @transform_10(%arg0: i32) -> (i32, i32) {
    %c0_i32 = arith.constant 0 : i32
    %c0_i32_0 = arith.constant 0 : i32
    %c0_i32_1 = arith.constant 0 : i32
    return %c0_i32, %c0_i32_0 : i32, i32
  }
  func.func @transform_11(%arg0: i32) -> (i32, i32) {
    %c0_i32 = arith.constant 0 : i32
    %c0_i32_0 = arith.constant 0 : i32
    %c0_i32_1 = arith.constant 0 : i32
    return %c0_i32, %c0_i32_0 : i32, i32
  }
  func.func @transform_12(%arg0: i32) -> (i32, i32) {
    %c0_i32 = arith.constant 0 : i32
    %c0_i32_0 = arith.constant 0 : i32
    %c0_i32_1 = arith.constant 0 : i32
    return %c0_i32, %c0_i32_0 : i32, i32
  }
  func.func @transform_13(%arg0: i32) -> (i32, i32) {
    %c0_i32 = arith.constant 0 : i32
    %c0_i32_0 = arith.constant 0 : i32
    return %arg0, %c0_i32 : i32, i32
  }
}

</mosaic_0001>

<llo_original>
// kernel: graph_transformer_layer.3
$region0: #{graph_transformer_layer.3}
  #allocation0 [shape = 'u32[]', space=smem, size = 0x4, offset = 0x4, fixed_abs, tag = 'smem constant byte address 0x4 - core index']
  #allocation1 [shape = 'u32[144,128]{1,0:T(1,128)}', space=vmem, size = 0x12000, scoped, tag = 'internal scratch']
  %s0 = inlined_call_operand.vmem [shape: f32[1024,128], index: 0, kind: input, shape index: {}]
  %s1 = inlined_call_operand.vmem [shape: f32[1,128], index: 1, kind: input, shape index: {}]
  %s2 = inlined_call_operand.vmem [shape: f32[1,128], index: 2, kind: input, shape index: {}]
  %s3 = inlined_call_operand.vmem [shape: bf16[128,384], index: 3, kind: input, shape index: {}]
  %s4 = inlined_call_operand.vmem [shape: bf16[1024,128], index: 4, kind: output, shape index: {0}]
  %s5 = inlined_call_operand.vmem [shape: bf16[1024,256], index: 5, kind: output, shape index: {1}]
  %6 = xla_tuple %s4, %s5
  %s7 = sld [smem:[#allocation0]]
  $region57: #{graph_transformer_layer.3} parent=0
    _
  %s9 = ssub.s32 1, %s7
  %s10 = scalar_select 0, %s9, %s7
  loop: start=0, step=1, limit=4
  $region2: #{graph_transformer_layer.3} parent=0 // loop_pre_header
    _
  $region3: #{graph_transformer_layer.3} parent=0 // loop_header
    %s12 = sphi 0, %s16
    %p13 = scmp.ge.s32.totalorder %s12, 4
    %s22 = sphi 0, %s24
    %s25 = sphi 0, %s22
    %s26 = sphi 0, %s25
    %s42 = sphi 0, %s26
    %s46 = sphi 0, %s46
    %s48 = sphi 0, %s46
    %s49 = sphi 0, %s48
    %s63 = sphi 0, %s49
    %s67 = sphi 0, %s67
    %s69 = sphi 0, %s67
    %s70 = sphi 0, %s69
    %s84 = sphi 0, %s70
    %s88 = sphi 0, %s88
    %s90 = sphi 0, %s88
    %s91 = sphi 0, %s90
    %s105 = sphi 0, %s91
    %s111 = sphi 0, %s113
    %s114 = sphi 0, %s111
    %s115 = sphi 0, %s114
    %s131 = sphi 0, %s115
    %s137 = sphi 0, %s139
    %s140 = sphi 0, %s137
    %s141 = sphi 0, %s140
    %s157 = sphi 0, %s141
  $region4: #{graph_transformer_layer.3} parent=0 // loop_header_branch
    %15 = sbr.rel (%p13) target = $region8
  $region5: #{graph_transformer_layer.3} parent=0 // loop_body
    %s17 = ssub.s32 %s12, 1
    %s18 = ssub.s32 %s12, 2
    %s19 = sadd.s32 %s12, 1
    %s20 = ssub.s32 %s12, %s19
    %p21 = scmp.eq.s32.totalorder %s20, 0
    %s23 = sadd.s32 %s22, 1
    %s24 = scalar_select %p21, %s22, %s23
    %p27 = pneg %p21
    %p28 = scmp.eq.s32.totalorder %s12, 1
    %p29 = por %p27, %p28
    %p30 = scmp.ne.s32.totalorder %s22, %s25
    %p31 = scmp.eq.s32.totalorder %s12, 0
    %p32 = por %p30, %p31
    %p33 = scmp.ne.s32.totalorder %s22, %s25
    %p34 = scmp.eq.s32.totalorder %s17, 1
    %p35 = por %p33, %p34
    %p36 = scmp.ne.s32.totalorder %s25, %s26
    %p37 = scmp.eq.s32.totalorder %s17, 0
    %p38 = por %p36, %p37
    %p39 = scmp.ne.s32.totalorder %s25, %s26
    %p40 = scmp.eq.s32.totalorder %s18, 1
    %p41 = por %p39, %p40
    %p43 = scmp.ne.s32.totalorder %s26, %s42
    %p44 = scmp.eq.s32.totalorder %s18, 0
    %p45 = por %p43, %p44
    %s47 = sadd.s32 %s46, 1
    %p50 = scmp.eq.s32.totalorder %s12, 1
    %p51 = scmp.ne.s32.totalorder %s46, %s48
    %p52 = scmp.eq.s32.totalorder %s12, 0
    %p53 = por %p51, %p52
    %p54 = scmp.ne.s32.totalorder %s46, %s48
    %p55 = scmp.eq.s32.totalorder %s17, 1
    %p56 = por %p54, %p55
    %p57 = scmp.ne.s32.totalorder %s48, %s49
    %p58 = scmp.eq.s32.totalorder %s17, 0
    %p59 = por %p57, %p58
    %p60 = scmp.ne.s32.totalorder %s48, %s49
    %p61 = scmp.eq.s32.totalorder %s18, 1
    %p62 = por %p60, %p61
    %p64 = scmp.ne.s32.totalorder %s49, %s63
    %p65 = scmp.eq.s32.totalorder %s18, 0
    %p66 = por %p64, %p65
    %s68 = sadd.s32 %s67, 1
    %p71 = scmp.eq.s32.totalorder %s12, 1
    %p72 = scmp.ne.s32.totalorder %s67, %s69
    %p73 = scmp.eq.s32.totalorder %s12, 0
    %p74 = por %p72, %p73
    %p75 = scmp.ne.s32.totalorder %s67, %s69
    %p76 = scmp.eq.s32.totalorder %s17, 1
    %p77 = por %p75, %p76
    %p78 = scmp.ne.s32.totalorder %s69, %s70
    %p79 = scmp.eq.s32.totalorder %s17, 0
    %p80 = por %p78, %p79
    %p81 = scmp.ne.s32.totalorder %s69, %s70
    %p82 = scmp.eq.s32.totalorder %s18, 1
    %p83 = por %p81, %p82
    %p85 = scmp.ne.s32.totalorder %s70, %s84
    %p86 = scmp.eq.s32.totalorder %s18, 0
    %p87 = por %p85, %p86
    %s89 = sadd.s32 %s88, 1
    %p92 = scmp.eq.s32.totalorder %s12, 1
    %p93 = scmp.ne.s32.totalorder %s88, %s90
    %p94 = scmp.eq.s32.totalorder %s12, 0
    %p95 = por %p93, %p94
    %p96 = scmp.ne.s32.totalorder %s88, %s90
    %p97 = scmp.eq.s32.totalorder %s17, 1
    %p98 = por %p96, %p97
    %p99 = scmp.ne.s32.totalorder %s90, %s91
    %p100 = scmp.eq.s32.totalorder %s17, 0
    %p101 = por %p99, %p100
    %p102 = scmp.ne.s32.totalorder %s90, %s91
    %p103 = scmp.eq.s32.totalorder %s18, 1
    %p104 = por %p102, %p103
    %p106 = scmp.ne.s32.totalorder %s91, %s105
    %p107 = scmp.eq.s32.totalorder %s18, 0
    %p108 = por %p106, %p107
    %s109 = ssub.s32 %s12, %s19
    %p110 = scmp.eq.s32.totalorder %s109, 0
    %s112 = sadd.s32 %s111, 1
    %s113 = scalar_select %p110, %s111, %s112
    %p116 = pneg %p110
    %p117 = scmp.eq.s32.totalorder %s12, 1
    %p118 = por %p116, %p117
    %p119 = scmp.ne.s32.totalorder %s111, %s114
    %p120 = scmp.eq.s32.totalorder %s12, 0
    %p121 = por %p119, %p120
    %p122 = scmp.ne.s32.totalorder %s111, %s114
    %p123 = scmp.eq.s32.totalorder %s17, 1
    %p124 = por %p122, %p123
    %p125 = scmp.ne.s32.totalorder %s114, %s115
    %p126 = scmp.eq.s32.totalorder %s17, 0
    %p127 = por %p125, %p126
    %p128 = scmp.ne.s32.totalorder %s114, %s115
    %p129 = scmp.eq.s32.totalorder %s18, 1
    %p130 = por %p128, %p129
    %p132 = scmp.ne.s32.totalorder %s115, %s131
    %p133 = scmp.eq.s32.totalorder %s18, 0
    %p134 = por %p132, %p133
    %s135 = ssub.s32 %s12, %s19
    %p136 = scmp.eq.s32.totalorder %s135, 0
    %s138 = sadd.s32 %s137, 1
    %s139 = scalar_select %p136, %s137, %s138
    %p142 = pneg %p136
    %p143 = scmp.eq.s32.totalorder %s12, 1
    %p144 = por %p142, %p143
    %p145 = scmp.ne.s32.totalorder %s137, %s140
    %p146 = scmp.eq.s32.totalorder %s12, 0
    %p147 = por %p145, %p146
    %p148 = scmp.ne.s32.totalorder %s137, %s140
    %p149 = scmp.eq.s32.totalorder %s17, 1
    %p150 = por %p148, %p149
    %p151 = scmp.ne.s32.totalorder %s140, %s141
    %p152 = scmp.eq.s32.totalorder %s17, 0
    %p153 = por %p151, %p152
    %p154 = scmp.ne.s32.totalorder %s140, %s141
    %p155 = scmp.eq.s32.totalorder %s18, 1
    %p156 = por %p154, %p155
    %p158 = scmp.ne.s32.totalorder %s141, %s157
    %p159 = scmp.eq.s32.totalorder %s18, 0
    %p160 = por %p158, %p159
    %p161 = scmp.le.s32.totalorder 1, %s12
    %p162 = scmp.lt.s32.totalorder %s12, 3
    %p163 = pnand %p161, %p162
    %p164 = pneg %p163
    // Predicated region
    $region9: #{graph_transformer_layer.3} parent=5 // pred_check
      _
    $region10: #{graph_transformer_layer.3} parent=5 // pred_check_branch
      %166 = sbr.rel (%p163) target = $region12
    $region11: #{graph_transformer_layer.3} parent=5 // pred_region
      %s167 = ssub.s32 %s12, 1
      // Predicated region
      $region13: #{graph_transformer_layer.3} parent=11 // pred_check
        %p168 = pneg %p59
      $region14: #{graph_transformer_layer.3} parent=11 // pred_check_branch
        %170 = sbr.rel (%p168) target = $region16
      $region15: #{graph_transformer_layer.3} parent=11 // pred_region
        _
      $region16: #{graph_transformer_layer.3} parent=11 // pred_fallthru
        _
      // Predicated region
      $region17: #{graph_transformer_layer.3} parent=11 // pred_check
        %p171 = pneg %p80
      $region18: #{graph_transformer_layer.3} parent=11 // pred_check_branch
        %173 = sbr.rel (%p171) target = $region20
      $region19: #{graph_transformer_layer.3} parent=11 // pred_region
        _
      $region20: #{graph_transformer_layer.3} parent=11 // pred_fallthru
        _
      // Predicated region
      $region21: #{graph_transformer_layer.3} parent=11 // pred_check
        %p174 = pneg %p101
      $region22: #{graph_transformer_layer.3} parent=11 // pred_check_branch
        %176 = sbr.rel (%p174) target = $region24
      $region23: #{graph_transformer_layer.3} parent=11 // pred_region
        _
      $region24: #{graph_transformer_layer.3} parent=11 // pred_fallthru
        _
    $region12: #{graph_transformer_layer.3} parent=5 // pred_fallthru
      _
    %p177 = scmp.lt.s32.totalorder %s12, 2
    // Predicated region
    $region25: #{graph_transformer_layer.3} parent=5 // pred_check
      %p178 = pneg %p177
    $region26: #{graph_transformer_layer.3} parent=5 // pred_check_branch
      %180 = sbr.rel (%p178) target = $region28
    $region27: #{graph_transformer_layer.3} parent=5 // pred_region
      // Predicated region
      $region29: #{graph_transformer_layer.3} parent=27 // pred_check
        %p181 = pneg %p32
      $region30: #{graph_transformer_layer.3} parent=27 // pred_check_branch
        %183 = sbr.rel (%p181) target = $region32
      $region31: #{graph_transformer_layer.3} parent=27 // pred_region
        %s184 = smul.u32 64, %s12
        %p185 = scmp.lt.s32.totalorder %s184, 127
        %s186 = scalar_select %p185, %s184, 127
        %s187 = smul.addr %s186, 8
        %s188 = scalar_lea.vmem %s0, %s187
        %s189 = smul.u32 64, %s12
      $region32: #{graph_transformer_layer.3} parent=27 // pred_fallthru
        _
    $region28: #{graph_transformer_layer.3} parent=5 // pred_fallthru
      _
    %p190 = scmp.le.s32.totalorder 1, %s12
    %p191 = scmp.lt.s32.totalorder %s12, 3
    %p192 = pnand %p190, %p191
    %p193 = pneg %p192
    // Predicated region
    $region33: #{graph_transformer_layer.3} parent=5 // pred_check
      _
    $region34: #{graph_transformer_layer.3} parent=5 // pred_check_branch
      %195 = sbr.rel (%p192) target = $region36
    $region35: #{graph_transformer_layer.3} parent=5 // pred_region
      %s196 = ssub.s32 %s12, 1
      %s197 = smul.u32 64, %s17
      %p198 = scmp.lt.s32.totalorder %s197, 127
      %s199 = scalar_select %p198, %s197, 127
      %s200 = smul.addr %s199, 8
      %s201 = scalar_lea.vmem %s0, %s200
      %p202 = pneg %p38
      %p203 = pneg %p35
      %p204 = pneg %p59
      %p205 = pneg %p56
      %p206 = pneg %p80
      %p207 = pneg %p77
      %p208 = pneg %p101
      %p209 = pneg %p98
      %p210 = pneg %p127
      %p211 = pneg %p124
      %s212 = smul.u32 64, %s17
      %p213 = scmp.lt.s32.totalorder %s212, 127
      %s214 = scalar_select %p213, %s212, 127
      %s215 = smul.addr %s214, 4
      %s216 = scalar_lea.vmem %s4, %s215
      %p217 = pneg %p153
      %p218 = pneg %p150
      %s219 = smul.u32 64, %s17
      %p220 = scmp.lt.s32.totalorder %s219, 127
      %s221 = scalar_select %p220, %s219, 127
      %s222 = smul.addr %s221, 2
      %s223 = smul.addr %s222, 4
      %s224 = scalar_lea.vmem %s5, %s223
      %s225 = smul.u32 64, %s17
      %p226 = scmp.lt.s32.totalorder %s225, 127
      %s227 = scalar_select %p226, %s225, 127
      %s228 = smul.addr %s227, 8
      %s229 = scalar_lea.vmem %s0, %s228
      %s230 = smul.u32 64, %s17
      %s231 = smul.u32 64, %s17
      %p232 = scmp.lt.s32.totalorder %s231, 127
      %s233 = scalar_select %p232, %s231, 127
      %s234 = smul.addr %s233, 4
      %s235 = scalar_lea.vmem %s4, %s234
      %s236 = smul.u32 64, %s17
      %s237 = smul.u32 64, %s17
      %p238 = scmp.lt.s32.totalorder %s237, 127
      %s239 = scalar_select %p238, %s237, 127
      %s240 = smul.addr %s239, 2
      %s241 = smul.addr %s240, 4
      %s242 = scalar_lea.vmem %s5, %s241
      %s243 = smul.u32 64, %s17
      %v245 = vld [vmem:[%s229] sm:$0xff]
      %v246 = vld [vmem:[%s229 + $0x8] sm:$0xff]
      %v247 = vld [vmem:[%s229 + $0x10] sm:$0xff]
      %v248 = vld [vmem:[%s229 + $0x18] sm:$0xff]
      %v249 = vld [vmem:[%s229 + $0x20] sm:$0xff]
      %v250 = vld [vmem:[%s229 + $0x28] sm:$0xff]
      %v251 = vld [vmem:[%s229 + $0x30] sm:$0xff]
      %v252 = vld [vmem:[%s229 + $0x38] sm:$0xff]
      %v253 = vld [vmem:[%s229 + $0x40] sm:$0xff]
      %v254 = vld [vmem:[%s229 + $0x48] sm:$0xff]
      %v255 = vld [vmem:[%s229 + $0x50] sm:$0xff]
      %v256 = vld [vmem:[%s229 + $0x58] sm:$0xff]
      %v257 = vld [vmem:[%s229 + $0x60] sm:$0xff]
      %v258 = vld [vmem:[%s229 + $0x68] sm:$0xff]
      %v259 = vld [vmem:[%s229 + $0x70] sm:$0xff]
      %v260 = vld [vmem:[%s229 + $0x78] sm:$0xff]
      %v261 = vld [vmem:[%s229 + $0x80] sm:$0xff]
      %v262 = vld [vmem:[%s229 + $0x88] sm:$0xff]
      %v263 = vld [vmem:[%s229 + $0x90] sm:$0xff]
      %v264 = vld [vmem:[%s229 + $0x98] sm:$0xff]
      %v265 = vld [vmem:[%s229 + $0xa0] sm:$0xff]
      %v266 = vld [vmem:[%s229 + $0xa8] sm:$0xff]
      %v267 = vld [vmem:[%s229 + $0xb0] sm:$0xff]
      %v268 = vld [vmem:[%s229 + $0xb8] sm:$0xff]
      %v269 = vld [vmem:[%s229 + $0xc0] sm:$0xff]
      %v270 = vld [vmem:[%s229 + $0xc8] sm:$0xff]
      %v271 = vld [vmem:[%s229 + $0xd0] sm:$0xff]
      %v272 = vld [vmem:[%s229 + $0xd8] sm:$0xff]
      %v273 = vld [vmem:[%s229 + $0xe0] sm:$0xff]
      %v274 = vld [vmem:[%s229 + $0xe8] sm:$0xff]
      %v275 = vld [vmem:[%s229 + $0xf0] sm:$0xff]
      %v276 = vld [vmem:[%s229 + $0xf8] sm:$0xff]
      %v277 = vld [vmem:[%s229 + $0x100] sm:$0xff]
      %v278 = vld [vmem:[%s229 + $0x108] sm:$0xff]
      %v279 = vld [vmem:[%s229 + $0x110] sm:$0xff]
      %v280 = vld [vmem:[%s229 + $0x118] sm:$0xff]
      %v281 = vld [vmem:[%s229 + $0x120] sm:$0xff]
      %v282 = vld [vmem:[%s229 + $0x128] sm:$0xff]
      %v283 = vld [vmem:[%s229 + $0x130] sm:$0xff]
      %v284 = vld [vmem:[%s229 + $0x138] sm:$0xff]
      %v285 = vld [vmem:[%s229 + $0x140] sm:$0xff]
      %v286 = vld [vmem:[%s229 + $0x148] sm:$0xff]
      %v287 = vld [vmem:[%s229 + $0x150] sm:$0xff]
      %v288 = vld [vmem:[%s229 + $0x158] sm:$0xff]
      %v289 = vld [vmem:[%s229 + $0x160] sm:$0xff]
      %v290 = vld [vmem:[%s229 + $0x168] sm:$0xff]
      %v291 = vld [vmem:[%s229 + $0x170] sm:$0xff]
      %v292 = vld [vmem:[%s229 + $0x178] sm:$0xff]
      %v293 = vld [vmem:[%s229 + $0x180] sm:$0xff]
      %v294 = vld [vmem:[%s229 + $0x188] sm:$0xff]
      %v295 = vld [vmem:[%s229 + $0x190] sm:$0xff]
      %v296 = vld [vmem:[%s229 + $0x198] sm:$0xff]
      %v297 = vld [vmem:[%s229 + $0x1a0] sm:$0xff]
      %v298 = vld [vmem:[%s229 + $0x1a8] sm:$0xff]
      %v299 = vld [vmem:[%s229 + $0x1b0] sm:$0xff]
      %v300 = vld [vmem:[%s229 + $0x1b8] sm:$0xff]
      %v301 = vld [vmem:[%s229 + $0x1c0] sm:$0xff]
      %v302 = vld [vmem:[%s229 + $0x1c8] sm:$0xff]
      %v303 = vld [vmem:[%s229 + $0x1d0] sm:$0xff]
      %v304 = vld [vmem:[%s229 + $0x1d8] sm:$0xff]
      %v305 = vld [vmem:[%s229 + $0x1e0] sm:$0xff]
      %v306 = vld [vmem:[%s229 + $0x1e8] sm:$0xff]
      %v307 = vld [vmem:[%s229 + $0x1f0] sm:$0xff]
      %v308 = vld [vmem:[%s229 + $0x1f8] sm:$0xff]
      %v309 = vld [vmem:[%s1] sm:$0x1]
      %v311 = vlaneseq
      %v312 = vshrl.u32 %v311, 7
      %v313 = vsub.s32 0, %v312
      %v314 = vrot.slane %v309, %v313
      %v316 = vmul.f32 %v245, %v314
      %v317 = vmul.f32 %v246, %v314
      %v318 = vmul.f32 %v247, %v314
      %v319 = vmul.f32 %v248, %v314
      %v320 = vmul.f32 %v249, %v314
      %v321 = vmul.f32 %v250, %v314
      %v322 = vmul.f32 %v251, %v314
      %v323 = vmul.f32 %v252, %v314
      %v324 = vmul.f32 %v253, %v314
      %v325 = vmul.f32 %v254, %v314
      %v326 = vmul.f32 %v255, %v314
      %v327 = vmul.f32 %v256, %v314
      %v328 = vmul.f32 %v257, %v314
      %v329 = vmul.f32 %v258, %v314
      %v330 = vmul.f32 %v259, %v314
      %v331 = vmul.f32 %v260, %v314
      %v332 = vmul.f32 %v261, %v314
      %v333 = vmul.f32 %v262, %v314
      %v334 = vmul.f32 %v263, %v314
      %v335 = vmul.f32 %v264, %v314
      %v336 = vmul.f32 %v265, %v314
      %v337 = vmul.f32 %v266, %v314
      %v338 = vmul.f32 %v267, %v314
      %v339 = vmul.f32 %v268, %v314
      %v340 = vmul.f32 %v269, %v314
      %v341 = vmul.f32 %v270, %v314
      %v342 = vmul.f32 %v271, %v314
      %v343 = vmul.f32 %v272, %v314
      %v344 = vmul.f32 %v273, %v314
      %v345 = vmul.f32 %v274, %v314
      %v346 = vmul.f32 %v275, %v314
      %v347 = vmul.f32 %v276, %v314
      %v348 = vmul.f32 %v277, %v314
      %v349 = vmul.f32 %v278, %v314
      %v350 = vmul.f32 %v279, %v314
      %v351 = vmul.f32 %v280, %v314
      %v352 = vmul.f32 %v281, %v314
      %v353 = vmul.f32 %v282, %v314
      %v354 = vmul.f32 %v283, %v314
      %v355 = vmul.f32 %v284, %v314
      %v356 = vmul.f32 %v285, %v314
      %v357 = vmul.f32 %v286, %v314
      %v358 = vmul.f32 %v287, %v314
      %v359 = vmul.f32 %v288, %v314
      %v360 = vmul.f32 %v289, %v314
      %v361 = vmul.f32 %v290, %v314
      %v362 = vmul.f32 %v291, %v314
      %v363 = vmul.f32 %v292, %v314
      %v364 = vmul.f32 %v293, %v314
      %v365 = vmul.f32 %v294, %v314
      %v366 = vmul.f32 %v295, %v314
      %v367 = vmul.f32 %v296, %v314
      %v368 = vmul.f32 %v297, %v314
      %v369 = vmul.f32 %v298, %v314
      %v370 = vmul.f32 %v299, %v314
      %v371 = vmul.f32 %v300, %v314
      %v372 = vmul.f32 %v301, %v314
      %v373 = vmul.f32 %v302, %v314
      %v374 = vmul.f32 %v303, %v314
      %v375 = vmul.f32 %v304, %v314
      %v376 = vmul.f32 %v305, %v314
      %v377 = vmul.f32 %v306, %v314
      %v378 = vmul.f32 %v307, %v314
      %v379 = vmul.f32 %v308, %v314
      %v380 = vld [vmem:[%s2] sm:$0x1]
      %v382 = vlaneseq
      %v383 = vshrl.u32 %v382, 7
      %v384 = vsub.s32 0, %v383
      %v385 = vrot.slane %v380, %v384
      %v387 = vadd.f32 %v316, %v385
      %v388 = vadd.f32 %v317, %v385
      %v389 = vadd.f32 %v318, %v385
      %v390 = vadd.f32 %v319, %v385
      %v391 = vadd.f32 %v320, %v385
      %v392 = vadd.f32 %v321, %v385
      %v393 = vadd.f32 %v322, %v385
      %v394 = vadd.f32 %v323, %v385
      %v395 = vadd.f32 %v324, %v385
      %v396 = vadd.f32 %v325, %v385
      %v397 = vadd.f32 %v326, %v385
      %v398 = vadd.f32 %v327, %v385
      %v399 = vadd.f32 %v328, %v385
      %v400 = vadd.f32 %v329, %v385
      %v401 = vadd.f32 %v330, %v385
      %v402 = vadd.f32 %v331, %v385
      %v403 = vadd.f32 %v332, %v385
      %v404 = vadd.f32 %v333, %v385
      %v405 = vadd.f32 %v334, %v385
      %v406 = vadd.f32 %v335, %v385
      %v407 = vadd.f32 %v336, %v385
      %v408 = vadd.f32 %v337, %v385
      %v409 = vadd.f32 %v338, %v385
      %v410 = vadd.f32 %v339, %v385
      %v411 = vadd.f32 %v340, %v385
      %v412 = vadd.f32 %v341, %v385
      %v413 = vadd.f32 %v342, %v385
      %v414 = vadd.f32 %v343, %v385
      %v415 = vadd.f32 %v344, %v385
      %v416 = vadd.f32 %v345, %v385
      %v417 = vadd.f32 %v346, %v385
      %v418 = vadd.f32 %v347, %v385
      %v419 = vadd.f32 %v348, %v385
      %v420 = vadd.f32 %v349, %v385
      %v421 = vadd.f32 %v350, %v385
      %v422 = vadd.f32 %v351, %v385
      %v423 = vadd.f32 %v352, %v385
      %v424 = vadd.f32 %v353, %v385
      %v425 = vadd.f32 %v354, %v385
      %v426 = vadd.f32 %v355, %v385
      %v427 = vadd.f32 %v356, %v385
      %v428 = vadd.f32 %v357, %v385
      %v429 = vadd.f32 %v358, %v385
      %v430 = vadd.f32 %v359, %v385
      %v431 = vadd.f32 %v360, %v385
      %v432 = vadd.f32 %v361, %v385
      %v433 = vadd.f32 %v362, %v385
      %v434 = vadd.f32 %v363, %v385
      %v435 = vadd.f32 %v364, %v385
      %v436 = vadd.f32 %v365, %v385
      %v437 = vadd.f32 %v366, %v385
      %v438 = vadd.f32 %v367, %v385
      %v439 = vadd.f32 %v368, %v385
      %v440 = vadd.f32 %v369, %v385
      %v441 = vadd.f32 %v370, %v385
      %v442 = vadd.f32 %v371, %v385
      %v443 = vadd.f32 %v372, %v385
      %v444 = vadd.f32 %v373, %v385
      %v445 = vadd.f32 %v374, %v385
      %v446 = vadd.f32 %v375, %v385
      %v447 = vadd.f32 %v376, %v385
      %v448 = vadd.f32 %v377, %v385
      %v449 = vadd.f32 %v378, %v385
      %v450 = vadd.f32 %v379, %v385
      %v451 = vpack.c.bf16 %v388, %v387
      %v452 = vpack.c.bf16 %v390, %v389
      %v453 = vpack.c.bf16 %v392, %v391
      %v454 = vpack.c.bf16 %v394, %v393
      %v455 = vpack.c.bf16 %v396, %v395
      %v456 = vpack.c.bf16 %v398, %v397
      %v457 = vpack.c.bf16 %v400, %v399
      %v458 = vpack.c.bf16 %v402, %v401
      %v459 = vpack.c.bf16 %v404, %v403
      %v460 = vpack.c.bf16 %v406, %v405
      %v461 = vpack.c.bf16 %v408, %v407
      %v462 = vpack.c.bf16 %v410, %v409
      %v463 = vpack.c.bf16 %v412, %v411
      %v464 = vpack.c.bf16 %v414, %v413
      %v465 = vpack.c.bf16 %v416, %v415
      %v466 = vpack.c.bf16 %v418, %v417
      %v467 = vpack.c.bf16 %v420, %v419
      %v468 = vpack.c.bf16 %v422, %v421
      %v469 = vpack.c.bf16 %v424, %v423
      %v470 = vpack.c.bf16 %v426, %v425
      %v471 = vpack.c.bf16 %v428, %v427
      %v472 = vpack.c.bf16 %v430, %v429
      %v473 = vpack.c.bf16 %v432, %v431
      %v474 = vpack.c.bf16 %v434, %v433
      %v475 = vpack.c.bf16 %v436, %v435
      %v476 = vpack.c.bf16 %v438, %v437
      %v477 = vpack.c.bf16 %v440, %v439
      %v478 = vpack.c.bf16 %v442, %v441
      %v479 = vpack.c.bf16 %v444, %v443
      %v480 = vpack.c.bf16 %v446, %v445
      %v481 = vpack.c.bf16 %v448, %v447
      %v482 = vpack.c.bf16 %v450, %v449
      %v483 = vld [vmem:[%s3] sm:$0xff]
      %v484 = vld [vmem:[%s3 + $0x8] sm:$0xf]
      %v485 = vld [vmem:[%s3 + $0xc] sm:$0xff]
      %v486 = vld [vmem:[%s3 + $0x14] sm:$0xf]
      %v487 = vld [vmem:[%s3 + $0x18] sm:$0xff]
      %v488 = vld [vmem:[%s3 + $0x20] sm:$0xf]
      %v489 = vld [vmem:[%s3 + $0x24] sm:$0xff]
      %v490 = vld [vmem:[%s3 + $0x2c] sm:$0xf]
      %v491 = vld [vmem:[%s3 + $0x30] sm:$0xff]
      %v492 = vld [vmem:[%s3 + $0x38] sm:$0xf]
      %v493 = vld [vmem:[%s3 + $0x3c] sm:$0xff]
      %v494 = vld [vmem:[%s3 + $0x44] sm:$0xf]
      %v495 = vld [vmem:[%s3 + $0x48] sm:$0xff]
      %v496 = vld [vmem:[%s3 + $0x50] sm:$0xf]
      %v497 = vld [vmem:[%s3 + $0x54] sm:$0xff]
      %v498 = vld [vmem:[%s3 + $0x5c] sm:$0xf]
      %v499 = vld [vmem:[%s3 + $0x60] sm:$0xff]
      %v500 = vld [vmem:[%s3 + $0x68] sm:$0xf]
      %v501 = vld [vmem:[%s3 + $0x6c] sm:$0xff]
      %v502 = vld [vmem:[%s3 + $0x74] sm:$0xf]
      %v503 = vld [vmem:[%s3 + $0x78] sm:$0xff]
      %v504 = vld [vmem:[%s3 + $0x80] sm:$0xf]
      %v505 = vld [vmem:[%s3 + $0x84] sm:$0xff]
      %v506 = vld [vmem:[%s3 + $0x8c] sm:$0xf]
      %v507 = vld [vmem:[%s3 + $0x90] sm:$0xff]
      %v508 = vld [vmem:[%s3 + $0x98] sm:$0xf]
      %v509 = vld [vmem:[%s3 + $0x9c] sm:$0xff]
      %v510 = vld [vmem:[%s3 + $0xa4] sm:$0xf]
      %v511 = vld [vmem:[%s3 + $0xa8] sm:$0xff]
      %v512 = vld [vmem:[%s3 + $0xb0] sm:$0xf]
      %v513 = vld [vmem:[%s3 + $0xb4] sm:$0xff]
      %v514 = vld [vmem:[%s3 + $0xbc] sm:$0xf]
      %v547 = vunpack.c.l.b16 %v483
      %v548 = vunpack.c.h.b16 %v483
      %v549 = vunpack.c.l.b16 %v484
      %v550 = vunpack.c.l.b16 %v485
      %v551 = vunpack.c.h.b16 %v485
      %v552 = vunpack.c.l.b16 %v486
      %v553 = vunpack.c.l.b16 %v487
      %v554 = vunpack.c.h.b16 %v487
      %v555 = vunpack.c.l.b16 %v488
      %v556 = vunpack.c.l.b16 %v489
      %v557 = vunpack.c.h.b16 %v489
      %v558 = vunpack.c.l.b16 %v490
      %v559 = vunpack.c.l.b16 %v491
      %v560 = vunpack.c.h.b16 %v491
      %v561 = vunpack.c.l.b16 %v492
      %v562 = vunpack.c.l.b16 %v493
      %v563 = vunpack.c.h.b16 %v493
      %v564 = vunpack.c.l.b16 %v494
      %v565 = vunpack.c.l.b16 %v495
      %v566 = vunpack.c.h.b16 %v495
      %v567 = vunpack.c.l.b16 %v496
      %v568 = vunpack.c.l.b16 %v497
      %v569 = vunpack.c.h.b16 %v497
      %v570 = vunpack.c.l.b16 %v498
      %v571 = vunpack.c.l.b16 %v499
      %v572 = vunpack.c.h.b16 %v499
      %v573 = vunpack.c.l.b16 %v500
      %v574 = vunpack.c.l.b16 %v501
      %v575 = vunpack.c.h.b16 %v501
      %v576 = vunpack.c.l.b16 %v502
      %v577 = vunpack.c.l.b16 %v503
      %v578 = vunpack.c.h.b16 %v503
      %v579 = vunpack.c.l.b16 %v504
      %v580 = vunpack.c.l.b16 %v505
      %v581 = vunpack.c.h.b16 %v505
      %v582 = vunpack.c.l.b16 %v506
      %v583 = vunpack.c.l.b16 %v507
      %v584 = vunpack.c.h.b16 %v507
      %v585 = vunpack.c.l.b16 %v508
      %v586 = vunpack.c.l.b16 %v509
      %v587 = vunpack.c.h.b16 %v509
      %v588 = vunpack.c.l.b16 %v510
      %v589 = vunpack.c.l.b16 %v511
      %v590 = vunpack.c.h.b16 %v511
      %v591 = vunpack.c.l.b16 %v512
      %v592 = vunpack.c.l.b16 %v513
      %v593 = vunpack.c.h.b16 %v513
      %v594 = vunpack.c.l.b16 %v514
      %v595 = vpack.c.b16 %v550, %v547
      %v596 = vpack.c.b16 %v551, %v548
      %v597 = vpack.c.b16 %v552, %v549
      %v598 = vpack.c.b16 %v556, %v553
      %v599 = vpack.c.b16 %v557, %v554
      %v600 = vpack.c.b16 %v558, %v555
      %v601 = vpack.c.b16 %v562, %v559
      %v602 = vpack.c.b16 %v563, %v560
      %v603 = vpack.c.b16 %v564, %v561
      %v604 = vpack.c.b16 %v568, %v565
      %v605 = vpack.c.b16 %v569, %v566
      %v606 = vpack.c.b16 %v570, %v567
      %v607 = vpack.c.b16 %v574, %v571
      %v608 = vpack.c.b16 %v575, %v572
      %v609 = vpack.c.b16 %v576, %v573
      %v610 = vpack.c.b16 %v580, %v577
      %v611 = vpack.c.b16 %v581, %v578
      %v612 = vpack.c.b16 %v582, %v579
      %v613 = vpack.c.b16 %v586, %v583
      %v614 = vpack.c.b16 %v587, %v584
      %v615 = vpack.c.b16 %v588, %v585
      %v616 = vpack.c.b16 %v592, %v589
      %v617 = vpack.c.b16 %v593, %v590
      %v618 = vpack.c.b16 %v594, %v591
      %643 = vmatprep.subr.bf16.mxu0 %v596
      %644 = vmatpush1.bf16.msra.mxu0 %v595
      %645 = vmatprep.subr.bf16.mxu0 %v599
      %646 = vmatpush1.bf16.msra.mxu0 %v598
      %647 = vmatprep.subr.bf16.mxu0 %v602
      %648 = vmatpush1.bf16.msra.mxu0 %v601
      %649 = vmatprep.subr.bf16.mxu0 %v605
      %650 = vmatpush1.bf16.msra.mxu0 %v604
      %651 = vmatprep.subr.bf16.mxu0 %v608
      %652 = vmatpush1.bf16.msra.mxu0 %v607
      %653 = vmatprep.subr.bf16.mxu0 %v611
      %654 = vmatpush1.bf16.msra.mxu0 %v610
      %655 = vmatprep.subr.bf16.mxu0 %v614
      %656 = vmatpush1.bf16.msra.mxu0 %v613
      %657 = vmatprep.subr.bf16.mxu0 %v617
      %658 = vmatpush1.bf16.msra.mxu0 %v616
      %659 = vmatprep.subr.bf16.mxu0 0
      %660 = vmatpush1.bf16.msra.mxu0 0
      %661 = vmatprep.subr.bf16.mxu0 0
      %662 = vmatpush1.bf16.msra.mxu0 0
      %663 = vmatprep.subr.bf16.mxu0 0
      %664 = vmatpush1.bf16.msra.mxu0 0
      %665 = vmatprep.subr.bf16.mxu0 0
      %666 = vmatpush1.bf16.msra.mxu0 0
      %667 = vmatprep.subr.bf16.mxu0 0
      %668 = vmatpush1.bf16.msra.mxu0 0
      %669 = vmatprep.subr.bf16.mxu0 0
      %670 = vmatpush1.bf16.msra.mxu0 0
      %671 = vmatprep.subr.bf16.mxu0 0
      %672 = vmatpush1.bf16.msra.mxu0 0
      %673 = vmatprep.subr.bf16.mxu0 0
      %674 = vmatpush1.bf16.msra.mxu0 0
      %675 = vmatprep.mubr.bf16.mxu0 0
      %676 = vmatmul.mubr.bf16.gmra.mrb[0].mxu0 %v451
      %v677 = vpop.f32.mrb[0].mxu0
      %v678 = vadd.f32 0.0, %v677
      %v679 = vpop.f32.mrb[0].mxu0
      %v680 = vadd.f32 0.0, %v679
      %v681 = vpop.f32.mrb[0].mxu0
      %v682 = vadd.f32 0.0, %v681
      %v683 = vpop.f32.mrb[0].mxu0
      %v684 = vadd.f32 0.0, %v683
      %685 = vmatprep.mubr.bf16.mxu0 0
      %686 = vmatmul.mubr.bf16.gmra.mrb[0].mxu0 %v452
      %v687 = vpop.f32.mrb[0].mxu0
      %v688 = vadd.f32 0.0, %v687
      %v689 = vpop.f32.mrb[0].mxu0
      %v690 = vadd.f32 0.0, %v689
      %v691 = vpop.f32.mrb[0].mxu0
      %v692 = vadd.f32 0.0, %v691
      %v693 = vpop.f32.mrb[0].mxu0
      %v694 = vadd.f32 0.0, %v693
      %695 = vmatprep.mubr.bf16.mxu0 0
      %696 = vmatmul.mubr.bf16.gmra.mrb[0].mxu0 %v453
      %v697 = vpop.f32.mrb[0].mxu0
      %v698 = vadd.f32 0.0, %v697
      %v699 = vpop.f32.mrb[0].mxu0
      %v700 = vadd.f32 0.0, %v699
      %v701 = vpop.f32.mrb[0].mxu0
      %v702 = vadd.f32 0.0, %v701
      %v703 = vpop.f32.mrb[0].mxu0
      %v704 = vadd.f32 0.0, %v703
      %705 = vmatprep.mubr.bf16.mxu0 0
      %706 = vmatmul.mubr.bf16.gmra.mrb[0].mxu0 %v454
      %v707 = vpop.f32.mrb[0].mxu0
      %v708 = vadd.f32 0.0, %v707
      %v709 = vpop.f32.mrb[0].mxu0
      %v710 = vadd.f32 0.0, %v709
      %v711 = vpop.f32.mrb[0].mxu0
      %v712 = vadd.f32 0.0, %v711
      %v713 = vpop.f32.mrb[0].mxu0
      %v714 = vadd.f32 0.0, %v713
      %715 = vmatprep.mubr.bf16.mxu0 0
      %716 = vmatmul.mubr.bf16.gmra.mrb[0].mxu0 %v455
      %v717 = vpop.f32.mrb[0].mxu0
      %v718 = vadd.f32 0.0, %v717
      %v719 = vpop.f32.mrb[0].mxu0
      %v720 = vadd.f32 0.0, %v719
      %v721 = vpop.f32.mrb[0].mxu0
      %v722 = vadd.f32 0.0, %v721
      %v723 = vpop.f32.mrb[0].mxu0
      %v724 = vadd.f32 0.0, %v723
      %725 = vmatprep.mubr.bf16.mxu0 0
      %726 = vmatmul.mubr.bf16.gmra.mrb[0].mxu0 %v456
      %v727 = vpop.f32.mrb[0].mxu0
      %v728 = vadd.f32 0.0, %v727
      %v729 = vpop.f32.mrb[0].mxu0
      %v730 = vadd.f32 0.0, %v729
      %v731 = vpop.f32.mrb[0].mxu0
      %v732 = vadd.f32 0.0, %v731
      %v733 = vpop.f32.mrb[0].mxu0
      %v734 = vadd.f32 0.0, %v733
      %735 = vmatprep.mubr.bf16.mxu0 0
      %736 = vmatmul.mubr.bf16.gmra.mrb[0].mxu0 %v457
      %v737 = vpop.f32.mrb[0].mxu0
      %v738 = vadd.f32 0.0, %v737
      %v739 = vpop.f32.mrb[0].mxu0
      %v740 = vadd.f32 0.0, %v739
      %v741 = vpop.f32.mrb[0].mxu0
      %v742 = vadd.f32 0.0, %v741
      %v743 = vpop.f32.mrb[0].mxu0
      %v744 = vadd.f32 0.0, %v743
      %745 = vmatprep.mubr.bf16.mxu0 0
      %746 = vmatmul.mubr.bf16.gmra.mrb[0].mxu0 %v458
      %v747 = vpop.f32.mrb[0].mxu0
      %v748 = vadd.f32 0.0, %v747
      %v749 = vpop.f32.mrb[0].mxu0
      %v750 = vadd.f32 0.0, %v749
      %v751 = vpop.f32.mrb[0].mxu0
      %v752 = vadd.f32 0.0, %v751
      %v753 = vpop.f32.mrb[0].mxu0
      %v754 = vadd.f32 0.0, %v753
      %755 = vmatprep.mubr.bf16.mxu0 0
      %756 = vmatmul.mubr.bf16.gmra.mrb[0].mxu0 %v459
      %v757 = vpop.f32.mrb[0].mxu0
      %v758 = vadd.f32 0.0, %v757
      %v759 = vpop.f32.mrb[0].mxu0
      %v760 = vadd.f32 0.0, %v759
      %v761 = vpop.f32.mrb[0].mxu0
      %v762 = vadd.f32 0.0, %v761
      %v763 = vpop.f32.mrb[0].mxu0
      %v764 = vadd.f32 0.0, %v763
      %765 = vmatprep.mubr.bf16.mxu0 0
      %766 = vmatmul.mubr.bf16.gmra.mrb[0].mxu0 %v460
      %v767 = vpop.f32.mrb[0].mxu0
      %v768 = vadd.f32 0.0, %v767
      %v769 = vpop.f32.mrb[0].mxu0
      %v770 = vadd.f32 0.0, %v769
      %v771 = vpop.f32.mrb[0].mxu0
      %v772 = vadd.f32 0.0, %v771
      %v773 = vpop.f32.mrb[0].mxu0
      %v774 = vadd.f32 0.0, %v773
      %775 = vmatprep.mubr.bf16.mxu0 0
      %776 = vmatmul.mubr.bf16.gmra.mrb[0].mxu0 %v461
      %v777 = vpop.f32.mrb[0].mxu0
      %v778 = vadd.f32 0.0, %v777
      %v779 = vpop.f32.mrb[0].mxu0
      %v780 = vadd.f32 0.0, %v779
      %v781 = vpop.f32.mrb[0].mxu0
      %v782 = vadd.f32 0.0, %v781
      %v783 = vpop.f32.mrb[0].mxu0
      %v784 = vadd.f32 0.0, %v783
      %785 = vmatprep.mubr.bf16.mxu0 0
      %786 = vmatmul.mubr.bf16.gmra.mrb[0].mxu0 %v462
      %v787 = vpop.f32.mrb[0].mxu0
      %v788 = vadd.f32 0.0, %v787
      %v789 = vpop.f32.mrb[0].mxu0
      %v790 = vadd.f32 0.0, %v789
      %v791 = vpop.f32.mrb[0].mxu0
      %v792 = vadd.f32 0.0, %v791
      %v793 = vpop.f32.mrb[0].mxu0
      %v794 = vadd.f32 0.0, %v793
      %795 = vmatprep.mubr.bf16.mxu0 0
      %796 = vmatmul.mubr.bf16.gmra.mrb[0].mxu0 %v463
      %v797 = vpop.f32.mrb[0].mxu0
      %v798 = vadd.f32 0.0, %v797
      %v799 = vpop.f32.mrb[0].mxu0
      %v800 = vadd.f32 0.0, %v799
      %v801 = vpop.f32.mrb[0].mxu0
      %v802 = vadd.f32 0.0, %v801
      %v803 = vpop.f32.mrb[0].mxu0
      %v804 = vadd.f32 0.0, %v803
      %805 = vmatprep.mubr.bf16.mxu0 0
      %806 = vmatmul.mubr.bf16.gmra.mrb[0].mxu0 %v464
      %v807 = vpop.f32.mrb[0].mxu0
      %v808 = vadd.f32 0.0, %v807
      %v809 = vpop.f32.mrb[0].mxu0
      %v810 = vadd.f32 0.0, %v809
      %v811 = vpop.f32.mrb[0].mxu0
      %v812 = vadd.f32 0.0, %v811
      %v813 = vpop.f32.mrb[0].mxu0
      %v814 = vadd.f32 0.0, %v813
      %815 = vmatprep.mubr.bf16.mxu0 0
      %816 = vmatmul.mubr.bf16.gmra.mrb[0].mxu0 %v465
      %v817 = vpop.f32.mrb[0].mxu0
      %v818 = vadd.f32 0.0, %v817
      %v819 = vpop.f32.mrb[0].mxu0
      %v820 = vadd.f32 0.0, %v819
      %v821 = vpop.f32.mrb[0].mxu0
      %v822 = vadd.f32 0.0, %v821
      %v823 = vpop.f32.mrb[0].mxu0
      %v824 = vadd.f32 0.0, %v823
      %825 = vmatprep.mubr.bf16.mxu0 0
      %826 = vmatmul.mubr.bf16.gmra.mrb[0].mxu0 %v466
      %v827 = vpop.f32.mrb[0].mxu0
      %v828 = vadd.f32 0.0, %v827
      %v829 = vpop.f32.mrb[0].mxu0
      %v830 = vadd.f32 0.0, %v829
      %v831 = vpop.f32.mrb[0].mxu0
      %v832 = vadd.f32 0.0, %v831
      %v833 = vpop.f32.mrb[0].mxu0
      %v834 = vadd.f32 0.0, %v833
      %835 = vmatprep.mubr.bf16.mxu0 0
      %836 = vmatmul.mubr.bf16.gmra.mrb[0].mxu0 %v467
      %v837 = vpop.f32.mrb[0].mxu0
      %v838 = vadd.f32 0.0, %v837
      %v839 = vpop.f32.mrb[0].mxu0
      %v840 = vadd.f32 0.0, %v839
      %v841 = vpop.f32.mrb[0].mxu0
      %v842 = vadd.f32 0.0, %v841
      %v843 = vpop.f32.mrb[0].mxu0
      %v844 = vadd.f32 0.0, %v843
      %845 = vmatprep.mubr.bf16.mxu0 0
      %846 = vmatmul.mubr.bf16.gmra.mrb[0].mxu0 %v468
      %v847 = vpop.f32.mrb[0].mxu0
      %v848 = vadd.f32 0.0, %v847
      %v849 = vpop.f32.mrb[0].mxu0
      %v850 = vadd.f32 0.0, %v849
      %v851 = vpop.f32.mrb[0].mxu0
      %v852 = vadd.f32 0.0, %v851
      %v853 = vpop.f32.mrb[0].mxu0
      %v854 = vadd.f32 0.0, %v853
      %855 = vmatprep.mubr.bf16.mxu0 0
      %856 = vmatmul.mubr.bf16.gmra.mrb[0].mxu0 %v469
      %v857 = vpop.f32.mrb[0].mxu0
      %v858 = vadd.f32 0.0, %v857
      %v859 = vpop.f32.mrb[0].mxu0
      %v860 = vadd.f32 0.0, %v859
      %v861 = vpop.f32.mrb[0].mxu0
      %v862 = vadd.f32 0.0, %v861
      %v863 = vpop.f32.mrb[0].mxu0
      %v864 = vadd.f32 0.0, %v863
      %865 = vmatprep.mubr.bf16.mxu0 0
      %866 = vmatmul.mubr.bf16.gmra.mrb[0].mxu0 %v470
      %v867 = vpop.f32.mrb[0].mxu0
      %v868 = vadd.f32 0.0, %v867
      %v869 = vpop.f32.mrb[0].mxu0
      %v870 = vadd.f32 0.0, %v869
      %v871 = vpop.f32.mrb[0].mxu0
      %v872 = vadd.f32 0.0, %v871
      %v873 = vpop.f32.mrb[0].mxu0
      %v874 = vadd.f32 0.0, %v873
      %875 = vmatprep.mubr.bf16.mxu0 0
      %876 = vmatmul.mubr.bf16.gmra.mrb[0].mxu0 %v471
      %v877 = vpop.f32.mrb[0].mxu0
      %v878 = vadd.f32 0.0, %v877
      %v879 = vpop.f32.mrb[0].mxu0
      %v880 = vadd.f32 0.0, %v879
      %v881 = vpop.f32.mrb[0].mxu0
      %v882 = vadd.f32 0.0, %v881
      %v883 = vpop.f32.mrb[0].mxu0
      %v884 = vadd.f32 0.0, %v883
      %885 = vmatprep.mubr.bf16.mxu0 0
      %886 = vmatmul.mubr.bf16.gmra.mrb[0].mxu0 %v472
      %v887 = vpop.f32.mrb[0].mxu0
      %v888 = vadd.f32 0.0, %v887
      %v889 = vpop.f32.mrb[0].mxu0
      %v890 = vadd.f32 0.0, %v889
      %v891 = vpop.f32.mrb[0].mxu0
      %v892 = vadd.f32 0.0, %v891
      %v893 = vpop.f32.mrb[0].mxu0
      %v894 = vadd.f32 0.0, %v893
      %895 = vmatprep.mubr.bf16.mxu0 0
      %896 = vmatmul.mubr.bf16.gmra.mrb[0].mxu0 %v473
      %v897 = vpop.f32.mrb[0].mxu0
      %v898 = vadd.f32 0.0, %v897
      %v899 = vpop.f32.mrb[0].mxu0
      %v900 = vadd.f32 0.0, %v899
      %v901 = vpop.f32.mrb[0].mxu0
      %v902 = vadd.f32 0.0, %v901
      %v903 = vpop.f32.mrb[0].mxu0
      %v904 = vadd.f32 0.0, %v903
      %905 = vmatprep.mubr.bf16.mxu0 0
      %906 = vmatmul.mubr.bf16.gmra.mrb[0].mxu0 %v474
      %v907 = vpop.f32.mrb[0].mxu0
      %v908 = vadd.f32 0.0, %v907
      %v909 = vpop.f32.mrb[0].mxu0
      %v910 = vadd.f32 0.0, %v909
      %v911 = vpop.f32.mrb[0].mxu0
      %v912 = vadd.f32 0.0, %v911
      %v913 = vpop.f32.mrb[0].mxu0
      %v914 = vadd.f32 0.0, %v913
      %915 = vmatprep.mubr.bf16.mxu0 0
      %916 = vmatmul.mubr.bf16.gmra.mrb[0].mxu0 %v475
      %v917 = vpop.f32.mrb[0].mxu0
      %v918 = vadd.f32 0.0, %v917
      %v919 = vpop.f32.mrb[0].mxu0
      %v920 = vadd.f32 0.0, %v919
      %v921 = vpop.f32.mrb[0].mxu0
      %v922 = vadd.f32 0.0, %v921
      %v923 = vpop.f32.mrb[0].mxu0
      %v924 = vadd.f32 0.0, %v923
      %925 = vmatprep.mubr.bf16.mxu0 0
      %926 = vmatmul.mubr.bf16.gmra.mrb[0].mxu0 %v476
      %v927 = vpop.f32.mrb[0].mxu0
      %v928 = vadd.f32 0.0, %v927
      %v929 = vpop.f32.mrb[0].mxu0
      %v930 = vadd.f32 0.0, %v929
      %v931 = vpop.f32.mrb[0].mxu0
      %v932 = vadd.f32 0.0, %v931
      %v933 = vpop.f32.mrb[0].mxu0
      %v934 = vadd.f32 0.0, %v933
      %935 = vmatprep.mubr.bf16.mxu0 0
      %936 = vmatmul.mubr.bf16.gmra.mrb[0].mxu0 %v477
      %v937 = vpop.f32.mrb[0].mxu0
      %v938 = vadd.f32 0.0, %v937
      %v939 = vpop.f32.mrb[0].mxu0
      %v940 = vadd.f32 0.0, %v939
      %v941 = vpop.f32.mrb[0].mxu0
      %v942 = vadd.f32 0.0, %v941
      %v943 = vpop.f32.mrb[0].mxu0
      %v944 = vadd.f32 0.0, %v943
      %945 = vmatprep.mubr.bf16.mxu0 0
      %946 = vmatmul.mubr.bf16.gmra.mrb[0].mxu0 %v478
      %v947 = vpop.f32.mrb[0].mxu0
      %v948 = vadd.f32 0.0, %v947
      %v949 = vpop.f32.mrb[0].mxu0
      %v950 = vadd.f32 0.0, %v949
      %v951 = vpop.f32.mrb[0].mxu0
      %v952 = vadd.f32 0.0, %v951
      %v953 = vpop.f32.mrb[0].mxu0
      %v954 = vadd.f32 0.0, %v953
      %955 = vmatprep.mubr.bf16.mxu0 0
      %956 = vmatmul.mubr.bf16.gmra.mrb[0].mxu0 %v479
      %v957 = vpop.f32.mrb[0].mxu0
      %v958 = vadd.f32 0.0, %v957
      %v959 = vpop.f32.mrb[0].mxu0
      %v960 = vadd.f32 0.0, %v959
      %v961 = vpop.f32.mrb[0].mxu0
      %v962 = vadd.f32 0.0, %v961
      %v963 = vpop.f32.mrb[0].mxu0
      %v964 = vadd.f32 0.0, %v963
      %965 = vmatprep.mubr.bf16.mxu0 0
      %966 = vmatmul.mubr.bf16.gmra.mrb[0].mxu0 %v480
      %v967 = vpop.f32.mrb[0].mxu0
      %v968 = vadd.f32 0.0, %v967
      %v969 = vpop.f32.mrb[0].mxu0
      %v970 = vadd.f32 0.0, %v969
      %v971 = vpop.f32.mrb[0].mxu0
      %v972 = vadd.f32 0.0, %v971
      %v973 = vpop.f32.mrb[0].mxu0
      %v974 = vadd.f32 0.0, %v973
      %975 = vmatprep.mubr.bf16.mxu0 0
      %976 = vmatmul.mubr.bf16.gmra.mrb[0].mxu0 %v481
      %v977 = vpop.f32.mrb[0].mxu0
      %v978 = vadd.f32 0.0, %v977
      %v979 = vpop.f32.mrb[0].mxu0
      %v980 = vadd.f32 0.0, %v979
      %v981 = vpop.f32.mrb[0].mxu0
      %v982 = vadd.f32 0.0, %v981
      %v983 = vpop.f32.mrb[0].mxu0
      %v984 = vadd.f32 0.0, %v983
      %985 = vmatprep.mubr.bf16.mxu0 0
      %986 = vmatmul.mubr.bf16.gmra.mrb[0].mxu0 %v482
      %v987 = vpop.f32.mrb[0].mxu0
      %v988 = vadd.f32 0.0, %v987
      %v989 = vpop.f32.mrb[0].mxu0
      %v990 = vadd.f32 0.0, %v989
      %v991 = vpop.f32.mrb[0].mxu0
      %v992 = vadd.f32 0.0, %v991
      %v993 = vpop.f32.mrb[0].mxu0
      %v994 = vadd.f32 0.0, %v993
      %995 = vdwg.mxu0
      %996 = vmatprep.subr.bf16.mxu0 0
      %997 = vmatpush1.bf16.msra.mxu0 %v597
      %998 = vmatprep.subr.bf16.mxu0 0
      %999 = vmatpush1.bf16.msra.mxu0 %v600
      %1000 = vmatprep.subr.bf16.mxu0 0
      %1001 = vmatpush1.bf16.msra.mxu0 %v603
      %1002 = vmatprep.subr.bf16.mxu0 0
      %1003 = vmatpush1.bf16.msra.mxu0 %v606
      %1004 = vmatprep.subr.bf16.mxu0 0
      %1005 = vmatpush1.bf16.msra.mxu0 %v609
      %1006 = vmatprep.subr.bf16.mxu0 0
      %1007 = vmatpush1.bf16.msra.mxu0 %v612
      %1008 = vmatprep.subr.bf16.mxu0 0
      %1009 = vmatpush1.bf16.msra.mxu0 %v615
      %1010 = vmatprep.subr.bf16.mxu0 0
      %1011 = vmatpush1.bf16.msra.mxu0 %v618
      %1012 = vmatprep.subr.bf16.mxu0 0
      %1013 = vmatpush1.bf16.msra.mxu0 0
      %1014 = vmatprep.subr.bf16.mxu0 0
      %1015 = vmatpush1.bf16.msra.mxu0 0
      %1016 = vmatprep.subr.bf16.mxu0 0
      %1017 = vmatpush1.bf16.msra.mxu0 0
      %1018 = vmatprep.subr.bf16.mxu0 0
      %1019 = vmatpush1.bf16.msra.mxu0 0
      %1020 = vmatprep.subr.bf16.mxu0 0
      %1021 = vmatpush1.bf16.msra.mxu0 0
      %1022 = vmatprep.subr.bf16.mxu0 0
      %1023 = vmatpush1.bf16.msra.mxu0 0
      %1024 = vmatprep.subr.bf16.mxu0 0
      %1025 = vmatpush1.bf16.msra.mxu0 0
      %1026 = vmatprep.subr.bf16.mxu0 0
      %1027 = vmatpush1.bf16.msra.mxu0 0
      %1028 = vmatprep.mubr.bf16.mxu0 0
      %1029 = vmatmul.mubr.bf16.gmra.mrb[0].mxu0 %v451
      %v1030 = vpop.f32.mrb[0].mxu0
      %v1031 = vadd.f32 0.0, %v1030
      %v1032 = vpop.f32.mrb[0].mxu0
      %v1033 = vpop.f32.mrb[0].mxu0
      %v1034 = vadd.f32 0.0, %v1033
      %v1035 = vpop.f32.mrb[0].mxu0
      %1036 = vmatprep.mubr.bf16.mxu0 0
      %1037 = vmatmul.mubr.bf16.gmra.mrb[0].mxu0 %v452
      %v1038 = vpop.f32.mrb[0].mxu0
      %v1039 = vadd.f32 0.0, %v1038
      %v1040 = vpop.f32.mrb[0].mxu0
      %v1041 = vpop.f32.mrb[0].mxu0
      %v1042 = vadd.f32 0.0, %v1041
      %v1043 = vpop.f32.mrb[0].mxu0
      %1044 = vmatprep.mubr.bf16.mxu0 0
      %1045 = vmatmul.mubr.bf16.gmra.mrb[0].mxu0 %v453
      %v1046 = vpop.f32.mrb[0].mxu0
      %v1047 = vadd.f32 0.0, %v1046
      %v1048 = vpop.f32.mrb[0].mxu0
      %v1049 = vpop.f32.mrb[0].mxu0
      %v1050 = vadd.f32 0.0, %v1049
      %v1051 = vpop.f32.mrb[0].mxu0
      %1052 = vmatprep.mubr.bf16.mxu0 0
      %1053 = vmatmul.mubr.bf16.gmra.mrb[0].mxu0 %v454
      %v1054 = vpop.f32.mrb[0].mxu0
      %v1055 = vadd.f32 0.0, %v1054
      %v1056 = vpop.f32.mrb[0].mxu0
      %v1057 = vpop.f32.mrb[0].mxu0
      %v1058 = vadd.f32 0.0, %v1057
      %v1059 = vpop.f32.mrb[0].mxu0
      %1060 = vmatprep.mubr.bf16.mxu0 0
      %1061 = vmatmul.mubr.bf16.gmra.mrb[0].mxu0 %v455
      %v1062 = vpop.f32.mrb[0].mxu0
      %v1063 = vadd.f32 0.0, %v1062
      %v1064 = vpop.f32.mrb[0].mxu0
      %v1065 = vpop.f32.mrb[0].mxu0
      %v1066 = vadd.f32 0.0, %v1065
      %v1067 = vpop.f32.mrb[0].mxu0
      %1068 = vmatprep.mubr.bf16.mxu0 0
      %1069 = vmatmul.mubr.bf16.gmra.mrb[0].mxu0 %v456
      %v1070 = vpop.f32.mrb[0].mxu0
      %v1071 = vadd.f32 0.0, %v1070
      %v1072 = vpop.f32.mrb[0].mxu0
      %v1073 = vpop.f32.mrb[0].mxu0
      %v1074 = vadd.f32 0.0, %v1073
      %v1075 = vpop.f32.mrb[0].mxu0
      %1076 = vmatprep.mubr.bf16.mxu0 0
      %1077 = vmatmul.mubr.bf16.gmra.mrb[0].mxu0 %v457
      %v1078 = vpop.f32.mrb[0].mxu0
      %v1079 = vadd.f32 0.0, %v1078
      %v1080 = vpop.f32.mrb[0].mxu0
      %v1081 = vpop.f32.mrb[0].mxu0
      %v1082 = vadd.f32 0.0, %v1081
      %v1083 = vpop.f32.mrb[0].mxu0
      %1084 = vmatprep.mubr.bf16.mxu0 0
      %1085 = vmatmul.mubr.bf16.gmra.mrb[0].mxu0 %v458
      %v1086 = vpop.f32.mrb[0].mxu0
      %v1087 = vadd.f32 0.0, %v1086
      %v1088 = vpop.f32.mrb[0].mxu0
      %v1089 = vpop.f32.mrb[0].mxu0
      %v1090 = vadd.f32 0.0, %v1089
      %v1091 = vpop.f32.mrb[0].mxu0
      %1092 = vmatprep.mubr.bf16.mxu0 0
      %1093 = vmatmul.mubr.bf16.gmra.mrb[0].mxu0 %v459
      %v1094 = vpop.f32.mrb[0].mxu0
      %v1095 = vadd.f32 0.0, %v1094
      %v1096 = vpop.f32.mrb[0].mxu0
      %v1097 = vpop.f32.mrb[0].mxu0
      %v1098 = vadd.f32 0.0, %v1097
      %v1099 = vpop.f32.mrb[0].mxu0
      %1100 = vmatprep.mubr.bf16.mxu0 0
      %1101 = vmatmul.mubr.bf16.gmra.mrb[0].mxu0 %v460
      %v1102 = vpop.f32.mrb[0].mxu0
      %v1103 = vadd.f32 0.0, %v1102
      %v1104 = vpop.f32.mrb[0].mxu0
      %v1105 = vpop.f32.mrb[0].mxu0
      %v1106 = vadd.f32 0.0, %v1105
      %v1107 = vpop.f32.mrb[0].mxu0
      %1108 = vmatprep.mubr.bf16.mxu0 0
      %1109 = vmatmul.mubr.bf16.gmra.mrb[0].mxu0 %v461
      %v1110 = vpop.f32.mrb[0].mxu0
      %v1111 = vadd.f32 0.0, %v1110
      %v1112 = vpop.f32.mrb[0].mxu0
      %v1113 = vpop.f32.mrb[0].mxu0
      %v1114 = vadd.f32 0.0, %v1113
      %v1115 = vpop.f32.mrb[0].mxu0
      %1116 = vmatprep.mubr.bf16.mxu0 0
      %1117 = vmatmul.mubr.bf16.gmra.mrb[0].mxu0 %v462
      %v1118 = vpop.f32.mrb[0].mxu0
      %v1119 = vadd.f32 0.0, %v1118
      %v1120 = vpop.f32.mrb[0].mxu0
      %v1121 = vpop.f32.mrb[0].mxu0
      %v1122 = vadd.f32 0.0, %v1121
      %v1123 = vpop.f32.mrb[0].mxu0
      %1124 = vmatprep.mubr.bf16.mxu0 0
      %1125 = vmatmul.mubr.bf16.gmra.mrb[0].mxu0 %v463
      %v1126 = vpop.f32.mrb[0].mxu0
      %v1127 = vadd.f32 0.0, %v1126
      %v1128 = vpop.f32.mrb[0].mxu0
      %v1129 = vpop.f32.mrb[0].mxu0
      %v1130 = vadd.f32 0.0, %v1129
      %v1131 = vpop.f32.mrb[0].mxu0
      %1132 = vmatprep.mubr.bf16.mxu0 0
      %1133 = vmatmul.mubr.bf16.gmra.mrb[0].mxu0 %v464
      %v1134 = vpop.f32.mrb[0].mxu0
      %v1135 = vadd.f32 0.0, %v1134
      %v1136 = vpop.f32.mrb[0].mxu0
      %v1137 = vpop.f32.mrb[0].mxu0
      %v1138 = vadd.f32 0.0, %v1137
      %v1139 = vpop.f32.mrb[0].mxu0
      %1140 = vmatprep.mubr.bf16.mxu0 0
      %1141 = vmatmul.mubr.bf16.gmra.mrb[0].mxu0 %v465
      %v1142 = vpop.f32.mrb[0].mxu0
      %v1143 = vadd.f32 0.0, %v1142
      %v1144 = vpop.f32.mrb[0].mxu0
      %v1145 = vpop.f32.mrb[0].mxu0
      %v1146 = vadd.f32 0.0, %v1145
      %v1147 = vpop.f32.mrb[0].mxu0
      %1148 = vmatprep.mubr.bf16.mxu0 0
      %1149 = vmatmul.mubr.bf16.gmra.mrb[0].mxu0 %v466
      %v1150 = vpop.f32.mrb[0].mxu0
      %v1151 = vadd.f32 0.0, %v1150
      %v1152 = vpop.f32.mrb[0].mxu0
      %v1153 = vpop.f32.mrb[0].mxu0
      %v1154 = vadd.f32 0.0, %v1153
      %v1155 = vpop.f32.mrb[0].mxu0
      %1156 = vmatprep.mubr.bf16.mxu0 0
      %1157 = vmatmul.mubr.bf16.gmra.mrb[0].mxu0 %v467
      %v1158 = vpop.f32.mrb[0].mxu0
      %v1159 = vadd.f32 0.0, %v1158
      %v1160 = vpop.f32.mrb[0].mxu0
      %v1161 = vpop.f32.mrb[0].mxu0
      %v1162 = vadd.f32 0.0, %v1161
      %v1163 = vpop.f32.mrb[0].mxu0
      %1164 = vmatprep.mubr.bf16.mxu0 0
      %1165 = vmatmul.mubr.bf16.gmra.mrb[0].mxu0 %v468
      %v1166 = vpop.f32.mrb[0].mxu0
      %v1167 = vadd.f32 0.0, %v1166
      %v1168 = vpop.f32.mrb[0].mxu0
      %v1169 = vpop.f32.mrb[0].mxu0
      %v1170 = vadd.f32 0.0, %v1169
      %v1171 = vpop.f32.mrb[0].mxu0
      %1172 = vmatprep.mubr.bf16.mxu0 0
      %1173 = vmatmul.mubr.bf16.gmra.mrb[0].mxu0 %v469
      %v1174 = vpop.f32.mrb[0].mxu0
      %v1175 = vadd.f32 0.0, %v1174
      %v1176 = vpop.f32.mrb[0].mxu0
      %v1177 = vpop.f32.mrb[0].mxu0
      %v1178 = vadd.f32 0.0, %v1177
      %v1179 = vpop.f32.mrb[0].mxu0
      %1180 = vmatprep.mubr.bf16.mxu0 0
      %1181 = vmatmul.mubr.bf16.gmra.mrb[0].mxu0 %v470
      %v1182 = vpop.f32.mrb[0].mxu0
      %v1183 = vadd.f32 0.0, %v1182
      %v1184 = vpop.f32.mrb[0].mxu0
      %v1185 = vpop.f32.mrb[0].mxu0
      %v1186 = vadd.f32 0.0, %v1185
      %v1187 = vpop.f32.mrb[0].mxu0
      %1188 = vmatprep.mubr.bf16.mxu0 0
      %1189 = vmatmul.mubr.bf16.gmra.mrb[0].mxu0 %v471
      %v1190 = vpop.f32.mrb[0].mxu0
      %v1191 = vadd.f32 0.0, %v1190
      %v1192 = vpop.f32.mrb[0].mxu0
      %v1193 = vpop.f32.mrb[0].mxu0
      %v1194 = vadd.f32 0.0, %v1193
      %v1195 = vpop.f32.mrb[0].mxu0
      %1196 = vmatprep.mubr.bf16.mxu0 0
      %1197 = vmatmul.mubr.bf16.gmra.mrb[0].mxu0 %v472
      %v1198 = vpop.f32.mrb[0].mxu0
      %v1199 = vadd.f32 0.0, %v1198
      %v1200 = vpop.f32.mrb[0].mxu0
      %v1201 = vpop.f32.mrb[0].mxu0
      %v1202 = vadd.f32 0.0, %v1201
      %v1203 = vpop.f32.mrb[0].mxu0
      %1204 = vmatprep.mubr.bf16.mxu0 0
      %1205 = vmatmul.mubr.bf16.gmra.mrb[0].mxu0 %v473
      %v1206 = vpop.f32.mrb[0].mxu0
      %v1207 = vadd.f32 0.0, %v1206
      %v1208 = vpop.f32.mrb[0].mxu0
      %v1209 = vpop.f32.mrb[0].mxu0
      %v1210 = vadd.f32 0.0, %v1209
      %v1211 = vpop.f32.mrb[0].mxu0
      %1212 = vmatprep.mubr.bf16.mxu0 0
      %1213 = vmatmul.mubr.bf16.gmra.mrb[0].mxu0 %v474
      %v1214 = vpop.f32.mrb[0].mxu0
      %v1215 = vadd.f32 0.0, %v1214
      %v1216 = vpop.f32.mrb[0].mxu0
      %v1217 = vpop.f32.mrb[0].mxu0
      %v1218 = vadd.f32 0.0, %v1217
      %v1219 = vpop.f32.mrb[0].mxu0
      %1220 = vmatprep.mubr.bf16.mxu0 0
      %1221 = vmatmul.mubr.bf16.gmra.mrb[0].mxu0 %v475
      %v1222 = vpop.f32.mrb[0].mxu0
      %v1223 = vadd.f32 0.0, %v1222
      %v1224 = vpop.f32.mrb[0].mxu0
      %v1225 = vpop.f32.mrb[0].mxu0
      %v1226 = vadd.f32 0.0, %v1225
      %v1227 = vpop.f32.mrb[0].mxu0
      %1228 = vmatprep.mubr.bf16.mxu0 0
      %1229 = vmatmul.mubr.bf16.gmra.mrb[0].mxu0 %v476
      %v1230 = vpop.f32.mrb[0].mxu0
      %v1231 = vadd.f32 0.0, %v1230
      %v1232 = vpop.f32.mrb[0].mxu0
      %v1233 = vpop.f32.mrb[0].mxu0
      %v1234 = vadd.f32 0.0, %v1233
      %v1235 = vpop.f32.mrb[0].mxu0
      %1236 = vmatprep.mubr.bf16.mxu0 0
      %1237 = vmatmul.mubr.bf16.gmra.mrb[0].mxu0 %v477
      %v1238 = vpop.f32.mrb[0].mxu0
      %v1239 = vadd.f32 0.0, %v1238
      %v1240 = vpop.f32.mrb[0].mxu0
      %v1241 = vpop.f32.mrb[0].mxu0
      %v1242 = vadd.f32 0.0, %v1241
      %v1243 = vpop.f32.mrb[0].mxu0
      %1244 = vmatprep.mubr.bf16.mxu0 0
      %1245 = vmatmul.mubr.bf16.gmra.mrb[0].mxu0 %v478
      %v1246 = vpop.f32.mrb[0].mxu0
      %v1247 = vadd.f32 0.0, %v1246
      %v1248 = vpop.f32.mrb[0].mxu0
      %v1249 = vpop.f32.mrb[0].mxu0
      %v1250 = vadd.f32 0.0, %v1249
      %v1251 = vpop.f32.mrb[0].mxu0
      %1252 = vmatprep.mubr.bf16.mxu0 0
      %1253 = vmatmul.mubr.bf16.gmra.mrb[0].mxu0 %v479
      %v1254 = vpop.f32.mrb[0].mxu0
      %v1255 = vadd.f32 0.0, %v1254
      %v1256 = vpop.f32.mrb[0].mxu0
      %v1257 = vpop.f32.mrb[0].mxu0
      %v1258 = vadd.f32 0.0, %v1257
      %v1259 = vpop.f32.mrb[0].mxu0
      %1260 = vmatprep.mubr.bf16.mxu0 0
      %1261 = vmatmul.mubr.bf16.gmra.mrb[0].mxu0 %v480
      %v1262 = vpop.f32.mrb[0].mxu0
      %v1263 = vadd.f32 0.0, %v1262
      %v1264 = vpop.f32.mrb[0].mxu0
      %v1265 = vpop.f32.mrb[0].mxu0
      %v1266 = vadd.f32 0.0, %v1265
      %v1267 = vpop.f32.mrb[0].mxu0
      %1268 = vmatprep.mubr.bf16.mxu0 0
      %1269 = vmatmul.mubr.bf16.gmra.mrb[0].mxu0 %v481
      %v1270 = vpop.f32.mrb[0].mxu0
      %v1271 = vadd.f32 0.0, %v1270
      %v1272 = vpop.f32.mrb[0].mxu0
      %v1273 = vpop.f32.mrb[0].mxu0
      %v1274 = vadd.f32 0.0, %v1273
      %v1275 = vpop.f32.mrb[0].mxu0
      %1276 = vmatprep.mubr.bf16.mxu0 0
      %1277 = vmatmul.mubr.bf16.gmra.mrb[0].mxu0 %v482
      %v1278 = vpop.f32.mrb[0].mxu0
      %v1279 = vadd.f32 0.0, %v1278
      %v1280 = vpop.f32.mrb[0].mxu0
      %v1281 = vpop.f32.mrb[0].mxu0
      %v1282 = vadd.f32 0.0, %v1281
      %v1283 = vpop.f32.mrb[0].mxu0
      %1284 = vdwg.mxu0
      %v1285 = vpack.c.bf16 %v682, %v678
      %v1286 = vpack.c.bf16 %v692, %v688
      %v1287 = vpack.c.bf16 %v702, %v698
      %v1288 = vpack.c.bf16 %v712, %v708
      %v1289 = vpack.c.bf16 %v722, %v718
      %v1290 = vpack.c.bf16 %v732, %v728
      %v1291 = vpack.c.bf16 %v742, %v738
      %v1292 = vpack.c.bf16 %v752, %v748
      %v1293 = vpack.c.bf16 %v762, %v758
      %v1294 = vpack.c.bf16 %v772, %v768
      %v1295 = vpack.c.bf16 %v782, %v778
      %v1296 = vpack.c.bf16 %v792, %v788
      %v1297 = vpack.c.bf16 %v802, %v798
      %v1298 = vpack.c.bf16 %v812, %v808
      %v1299 = vpack.c.bf16 %v822, %v818
      %v1300 = vpack.c.bf16 %v832, %v828
      %v1301 = vpack.c.bf16 %v842, %v838
      %v1302 = vpack.c.bf16 %v852, %v848
      %v1303 = vpack.c.bf16 %v862, %v858
      %v1304 = vpack.c.bf16 %v872, %v868
      %v1305 = vpack.c.bf16 %v882, %v878
      %v1306 = vpack.c.bf16 %v892, %v888
      %v1307 = vpack.c.bf16 %v902, %v898
      %v1308 = vpack.c.bf16 %v912, %v908
      %v1309 = vpack.c.bf16 %v922, %v918
      %v1310 = vpack.c.bf16 %v932, %v928
      %v1311 = vpack.c.bf16 %v942, %v938
      %v1312 = vpack.c.bf16 %v952, %v948
      %v1313 = vpack.c.bf16 %v962, %v958
      %v1314 = vpack.c.bf16 %v972, %v968
      %v1315 = vpack.c.bf16 %v982, %v978
      %v1316 = vpack.c.bf16 %v992, %v988
      %v1349 = vunpack.c.l.b16 %v1285
      %v1350 = vunpack.c.h.b16 %v1285
      %v1351 = vunpack.c.l.b16 %v1286
      %v1352 = vunpack.c.h.b16 %v1286
      %v1353 = vunpack.c.l.b16 %v1287
      %v1354 = vunpack.c.h.b16 %v1287
      %v1355 = vunpack.c.l.b16 %v1288
      %v1356 = vunpack.c.h.b16 %v1288
      %v1357 = vunpack.c.l.b16 %v1289
      %v1358 = vunpack.c.h.b16 %v1289
      %v1359 = vunpack.c.l.b16 %v1290
      %v1360 = vunpack.c.h.b16 %v1290
      %v1361 = vunpack.c.l.b16 %v1291
      %v1362 = vunpack.c.h.b16 %v1291
      %v1363 = vunpack.c.l.b16 %v1292
      %v1364 = vunpack.c.h.b16 %v1292
      %v1365 = vunpack.c.l.b16 %v1293
      %v1366 = vunpack.c.h.b16 %v1293
      %v1367 = vunpack.c.l.b16 %v1294
      %v1368 = vunpack.c.h.b16 %v1294
      %v1369 = vunpack.c.l.b16 %v1295
      %v1370 = vunpack.c.h.b16 %v1295
      %v1371 = vunpack.c.l.b16 %v1296
      %v1372 = vunpack.c.h.b16 %v1296
      %v1373 = vunpack.c.l.b16 %v1297
      %v1374 = vunpack.c.h.b16 %v1297
      %v1375 = vunpack.c.l.b16 %v1298
      %v1376 = vunpack.c.h.b16 %v1298
      %v1377 = vunpack.c.l.b16 %v1299
      %v1378 = vunpack.c.h.b16 %v1299
      %v1379 = vunpack.c.l.b16 %v1300
      %v1380 = vunpack.c.h.b16 %v1300
      %v1381 = vunpack.c.l.b16 %v1301
      %v1382 = vunpack.c.h.b16 %v1301
      %v1383 = vunpack.c.l.b16 %v1302
      %v1384 = vunpack.c.h.b16 %v1302
      %v1385 = vunpack.c.l.b16 %v1303
      %v1386 = vunpack.c.h.b16 %v1303
      %v1387 = vunpack.c.l.b16 %v1304
      %v1388 = vunpack.c.h.b16 %v1304
      %v1389 = vunpack.c.l.b16 %v1305
      %v1390 = vunpack.c.h.b16 %v1305
      %v1391 = vunpack.c.l.b16 %v1306
      %v1392 = vunpack.c.h.b16 %v1306
      %v1393 = vunpack.c.l.b16 %v1307
      %v1394 = vunpack.c.h.b16 %v1307
      %v1395 = vunpack.c.l.b16 %v1308
      %v1396 = vunpack.c.h.b16 %v1308
      %v1397 = vunpack.c.l.b16 %v1309
      %v1398 = vunpack.c.h.b16 %v1309
      %v1399 = vunpack.c.l.b16 %v1310
      %v1400 = vunpack.c.h.b16 %v1310
      %v1401 = vunpack.c.l.b16 %v1311
      %v1402 = vunpack.c.h.b16 %v1311
      %v1403 = vunpack.c.l.b16 %v1312
      %v1404 = vunpack.c.h.b16 %v1312
      %v1405 = vunpack.c.l.b16 %v1313
      %v1406 = vunpack.c.h.b16 %v1313
      %v1407 = vunpack.c.l.b16 %v1314
      %v1408 = vunpack.c.h.b16 %v1314
      %v1409 = vunpack.c.l.b16 %v1315
      %v1410 = vunpack.c.h.b16 %v1315
      %v1411 = vunpack.c.l.b16 %v1316
      %v1412 = vunpack.c.h.b16 %v1316
      %v1413 = vpack.c.b16 %v1349, %v1349
      %v1414 = vpack.c.b16 %v1350, %v1350
      %v1415 = vpack.c.b16 %v1351, %v1351
      %v1416 = vpack.c.b16 %v1352, %v1352
      %v1417 = vpack.c.b16 %v1353, %v1353
      %v1418 = vpack.c.b16 %v1354, %v1354
      %v1419 = vpack.c.b16 %v1355, %v1355
      %v1420 = vpack.c.b16 %v1356, %v1356
      %v1421 = vpack.c.b16 %v1357, %v1357
      %v1422 = vpack.c.b16 %v1358, %v1358
      %v1423 = vpack.c.b16 %v1359, %v1359
      %v1424 = vpack.c.b16 %v1360, %v1360
      %v1425 = vpack.c.b16 %v1361, %v1361
      %v1426 = vpack.c.b16 %v1362, %v1362
      %v1427 = vpack.c.b16 %v1363, %v1363
      %v1428 = vpack.c.b16 %v1364, %v1364
      %v1429 = vpack.c.b16 %v1365, %v1365
      %v1430 = vpack.c.b16 %v1366, %v1366
      %v1431 = vpack.c.b16 %v1367, %v1367
      %v1432 = vpack.c.b16 %v1368, %v1368
      %v1433 = vpack.c.b16 %v1369, %v1369
      %v1434 = vpack.c.b16 %v1370, %v1370
      %v1435 = vpack.c.b16 %v1371, %v1371
      %v1436 = vpack.c.b16 %v1372, %v1372
      %v1437 = vpack.c.b16 %v1373, %v1373
      %v1438 = vpack.c.b16 %v1374, %v1374
      %v1439 = vpack.c.b16 %v1375, %v1375
      %v1440 = vpack.c.b16 %v1376, %v1376
      %v1441 = vpack.c.b16 %v1377, %v1377
      %v1442 = vpack.c.b16 %v1378, %v1378
      %v1443 = vpack.c.b16 %v1379, %v1379
      %v1444 = vpack.c.b16 %v1380, %v1380
      %v1445 = vpack.c.b16 %v1381, %v1381
      %v1446 = vpack.c.b16 %v1382, %v1382
      %v1447 = vpack.c.b16 %v1383, %v1383
      %v1448 = vpack.c.b16 %v1384, %v1384
      %v1449 = vpack.c.b16 %v1385, %v1385
      %v1450 = vpack.c.b16 %v1386, %v1386
      %v1451 = vpack.c.b16 %v1387, %v1387
      %v1452 = vpack.c.b16 %v1388, %v1388
      %v1453 = vpack.c.b16 %v1389, %v1389
      %v1454 = vpack.c.b16 %v1390, %v1390
      %v1455 = vpack.c.b16 %v1391, %v1391
      %v1456 = vpack.c.b16 %v1392, %v1392
      %v1457 = vpack.c.b16 %v1393, %v1393
      %v1458 = vpack.c.b16 %v1394, %v1394
      %v1459 = vpack.c.b16 %v1395, %v1395
      %v1460 = vpack.c.b16 %v1396, %v1396
      %v1461 = vpack.c.b16 %v1397, %v1397
      %v1462 = vpack.c.b16 %v1398, %v1398
      %v1463 = vpack.c.b16 %v1399, %v1399
      %v1464 = vpack.c.b16 %v1400, %v1400
      %v1465 = vpack.c.b16 %v1401, %v1401
      %v1466 = vpack.c.b16 %v1402, %v1402
      %v1467 = vpack.c.b16 %v1403, %v1403
      %v1468 = vpack.c.b16 %v1404, %v1404
      %v1469 = vpack.c.b16 %v1405, %v1405
      %v1470 = vpack.c.b16 %v1406, %v1406
      %v1471 = vpack.c.b16 %v1407, %v1407
      %v1472 = vpack.c.b16 %v1408, %v1408
      %v1473 = vpack.c.b16 %v1409, %v1409
      %v1474 = vpack.c.b16 %v1410, %v1410
      %v1475 = vpack.c.b16 %v1411, %v1411
      %v1476 = vpack.c.b16 %v1412, %v1412
      %1541 = vst [vmem:[%s235] sm:$0xf] %v1413
      %1542 = vst [vmem:[%s235 + $0x4] sm:$0xf] %v1414
      %1543 = vst [vmem:[%s235 + $0x8] sm:$0xf] %v1415
      %1544 = vst [vmem:[%s235 + $0xc] sm:$0xf] %v1416
      %1545 = vst [vmem:[%s235 + $0x10] sm:$0xf] %v1417
      %1546 = vst [vmem:[%s235 + $0x14] sm:$0xf] %v1418
      %1547 = vst [vmem:[%s235 + $0x18] sm:$0xf] %v1419
      %1548 = vst [vmem:[%s235 + $0x1c] sm:$0xf] %v1420
      %1549 = vst [vmem:[%s235 + $0x20] sm:$0xf] %v1421
      %1550 = vst [vmem:[%s235 + $0x24] sm:$0xf] %v1422
      %1551 = vst [vmem:[%s235 + $0x28] sm:$0xf] %v1423
      %1552 = vst [vmem:[%s235 + $0x2c] sm:$0xf] %v1424
      %1553 = vst [vmem:[%s235 + $0x30] sm:$0xf] %v1425
      %1554 = vst [vmem:[%s235 + $0x34] sm:$0xf] %v1426
      %1555 = vst [vmem:[%s235 + $0x38] sm:$0xf] %v1427
      %1556 = vst [vmem:[%s235 + $0x3c] sm:$0xf] %v1428
      %1557 = vst [vmem:[%s235 + $0x40] sm:$0xf] %v1429
      %1558 = vst [vmem:[%s235 + $0x44] sm:$0xf] %v1430
      %1559 = vst [vmem:[%s235 + $0x48] sm:$0xf] %v1431
      %1560 = vst [vmem:[%s235 + $0x4c] sm:$0xf] %v1432
      %1561 = vst [vmem:[%s235 + $0x50] sm:$0xf] %v1433
      %1562 = vst [vmem:[%s235 + $0x54] sm:$0xf] %v1434
      %1563 = vst [vmem:[%s235 + $0x58] sm:$0xf] %v1435
      %1564 = vst [vmem:[%s235 + $0x5c] sm:$0xf] %v1436
      %1565 = vst [vmem:[%s235 + $0x60] sm:$0xf] %v1437
      %1566 = vst [vmem:[%s235 + $0x64] sm:$0xf] %v1438
      %1567 = vst [vmem:[%s235 + $0x68] sm:$0xf] %v1439
      %1568 = vst [vmem:[%s235 + $0x6c] sm:$0xf] %v1440
      %1569 = vst [vmem:[%s235 + $0x70] sm:$0xf] %v1441
      %1570 = vst [vmem:[%s235 + $0x74] sm:$0xf] %v1442
      %1571 = vst [vmem:[%s235 + $0x78] sm:$0xf] %v1443
      %1572 = vst [vmem:[%s235 + $0x7c] sm:$0xf] %v1444
      %1573 = vst [vmem:[%s235 + $0x80] sm:$0xf] %v1445
      %1574 = vst [vmem:[%s235 + $0x84] sm:$0xf] %v1446
      %1575 = vst [vmem:[%s235 + $0x88] sm:$0xf] %v1447
      %1576 = vst [vmem:[%s235 + $0x8c] sm:$0xf] %v1448
      %1577 = vst [vmem:[%s235 + $0x90] sm:$0xf] %v1449
      %1578 = vst [vmem:[%s235 + $0x94] sm:$0xf] %v1450
      %1579 = vst [vmem:[%s235 + $0x98] sm:$0xf] %v1451
      %1580 = vst [vmem:[%s235 + $0x9c] sm:$0xf] %v1452
      %1581 = vst [vmem:[%s235 + $0xa0] sm:$0xf] %v1453
      %1582 = vst [vmem:[%s235 + $0xa4] sm:$0xf] %v1454
      %1583 = vst [vmem:[%s235 + $0xa8] sm:$0xf] %v1455
      %1584 = vst [vmem:[%s235 + $0xac] sm:$0xf] %v1456
      %1585 = vst [vmem:[%s235 + $0xb0] sm:$0xf] %v1457
      %1586 = vst [vmem:[%s235 + $0xb4] sm:$0xf] %v1458
      %1587 = vst [vmem:[%s235 + $0xb8] sm:$0xf] %v1459
      %1588 = vst [vmem:[%s235 + $0xbc] sm:$0xf] %v1460
      %1589 = vst [vmem:[%s235 + $0xc0] sm:$0xf] %v1461
      %1590 = vst [vmem:[%s235 + $0xc4] sm:$0xf] %v1462
      %1591 = vst [vmem:[%s235 + $0xc8] sm:$0xf] %v1463
      %1592 = vst [vmem:[%s235 + $0xcc] sm:$0xf] %v1464
      %1593 = vst [vmem:[%s235 + $0xd0] sm:$0xf] %v1465
      %1594 = vst [vmem:[%s235 + $0xd4] sm:$0xf] %v1466
      %1595 = vst [vmem:[%s235 + $0xd8] sm:$0xf] %v1467
      %1596 = vst [vmem:[%s235 + $0xdc] sm:$0xf] %v1468
      %1597 = vst [vmem:[%s235 + $0xe0] sm:$0xf] %v1469
      %1598 = vst [vmem:[%s235 + $0xe4] sm:$0xf] %v1470
      %1599 = vst [vmem:[%s235 + $0xe8] sm:$0xf] %v1471
      %1600 = vst [vmem:[%s235 + $0xec] sm:$0xf] %v1472
      %1601 = vst [vmem:[%s235 + $0xf0] sm:$0xf] %v1473
      %1602 = vst [vmem:[%s235 + $0xf4] sm:$0xf] %v1474
      %1603 = vst [vmem:[%s235 + $0xf8] sm:$0xf] %v1475
      %1604 = vst [vmem:[%s235 + $0xfc] sm:$0xf] %v1476
      %v1605 = vpack.c.bf16 %v684, %v680
      %v1606 = vpack.c.bf16 %v1034, %v1031
      %v1607 = vpack.c.bf16 %v694, %v690
      %v1608 = vpack.c.bf16 %v1042, %v1039
      %v1609 = vpack.c.bf16 %v704, %v700
      %v1610 = vpack.c.bf16 %v1050, %v1047
      %v1611 = vpack.c.bf16 %v714, %v710
      %v1612 = vpack.c.bf16 %v1058, %v1055
      %v1613 = vpack.c.bf16 %v724, %v720
      %v1614 = vpack.c.bf16 %v1066, %v1063
      %v1615 = vpack.c.bf16 %v734, %v730
      %v1616 = vpack.c.bf16 %v1074, %v1071
      %v1617 = vpack.c.bf16 %v744, %v740
      %v1618 = vpack.c.bf16 %v1082, %v1079
      %v1619 = vpack.c.bf16 %v754, %v750
      %v1620 = vpack.c.bf16 %v1090, %v1087
      %v1621 = vpack.c.bf16 %v764, %v760
      %v1622 = vpack.c.bf16 %v1098, %v1095
      %v1623 = vpack.c.bf16 %v774, %v770
      %v1624 = vpack.c.bf16 %v1106, %v1103
      %v1625 = vpack.c.bf16 %v784, %v780
      %v1626 = vpack.c.bf16 %v1114, %v1111
      %v1627 = vpack.c.bf16 %v794, %v790
      %v1628 = vpack.c.bf16 %v1122, %v1119
      %v1629 = vpack.c.bf16 %v804, %v800
      %v1630 = vpack.c.bf16 %v1130, %v1127
      %v1631 = vpack.c.bf16 %v814, %v810
      %v1632 = vpack.c.bf16 %v1138, %v1135
      %v1633 = vpack.c.bf16 %v824, %v820
      %v1634 = vpack.c.bf16 %v1146, %v1143
      %v1635 = vpack.c.bf16 %v834, %v830
      %v1636 = vpack.c.bf16 %v1154, %v1151
      %v1637 = vpack.c.bf16 %v844, %v840
      %v1638 = vpack.c.bf16 %v1162, %v1159
      %v1639 = vpack.c.bf16 %v854, %v850
      %v1640 = vpack.c.bf16 %v1170, %v1167
      %v1641 = vpack.c.bf16 %v864, %v860
      %v1642 = vpack.c.bf16 %v1178, %v1175
      %v1643 = vpack.c.bf16 %v874, %v870
      %v1644 = vpack.c.bf16 %v1186, %v1183
      %v1645 = vpack.c.bf16 %v884, %v880
      %v1646 = vpack.c.bf16 %v1194, %v1191
      %v1647 = vpack.c.bf16 %v894, %v890
      %v1648 = vpack.c.bf16 %v1202, %v1199
      %v1649 = vpack.c.bf16 %v904, %v900
      %v1650 = vpack.c.bf16 %v1210, %v1207
      %v1651 = vpack.c.bf16 %v914, %v910
      %v1652 = vpack.c.bf16 %v1218, %v1215
      %v1653 = vpack.c.bf16 %v924, %v920
      %v1654 = vpack.c.bf16 %v1226, %v1223
      %v1655 = vpack.c.bf16 %v934, %v930
      %v1656 = vpack.c.bf16 %v1234, %v1231
      %v1657 = vpack.c.bf16 %v944, %v940
      %v1658 = vpack.c.bf16 %v1242, %v1239
      %v1659 = vpack.c.bf16 %v954, %v950
      %v1660 = vpack.c.bf16 %v1250, %v1247
      %v1661 = vpack.c.bf16 %v964, %v960
      %v1662 = vpack.c.bf16 %v1258, %v1255
      %v1663 = vpack.c.bf16 %v974, %v970
      %v1664 = vpack.c.bf16 %v1266, %v1263
      %v1665 = vpack.c.bf16 %v984, %v980
      %v1666 = vpack.c.bf16 %v1274, %v1271
      %v1667 = vpack.c.bf16 %v994, %v990
      %v1668 = vpack.c.bf16 %v1282, %v1279
      %v1733 = vunpack.c.l.b16 %v1605
      %v1734 = vunpack.c.l.b16 %v1606
      %v1735 = vunpack.c.h.b16 %v1605
      %v1736 = vunpack.c.h.b16 %v1606
      %v1737 = vunpack.c.l.b16 %v1607
      %v1738 = vunpack.c.l.b16 %v1608
      %v1739 = vunpack.c.h.b16 %v1607
      %v1740 = vunpack.c.h.b16 %v1608
      %v1741 = vunpack.c.l.b16 %v1609
      %v1742 = vunpack.c.l.b16 %v1610
      %v1743 = vunpack.c.h.b16 %v1609
      %v1744 = vunpack.c.h.b16 %v1610
      %v1745 = vunpack.c.l.b16 %v1611
      %v1746 = vunpack.c.l.b16 %v1612
      %v1747 = vunpack.c.h.b16 %v1611
      %v1748 = vunpack.c.h.b16 %v1612
      %v1749 = vunpack.c.l.b16 %v1613
      %v1750 = vunpack.c.l.b16 %v1614
      %v1751 = vunpack.c.h.b16 %v1613
      %v1752 = vunpack.c.h.b16 %v1614
      %v1753 = vunpack.c.l.b16 %v1615
      %v1754 = vunpack.c.l.b16 %v1616
      %v1755 = vunpack.c.h.b16 %v1615
      %v1756 = vunpack.c.h.b16 %v1616
      %v1757 = vunpack.c.l.b16 %v1617
      %v1758 = vunpack.c.l.b16 %v1618
      %v1759 = vunpack.c.h.b16 %v1617
      %v1760 = vunpack.c.h.b16 %v1618
      %v1761 = vunpack.c.l.b16 %v1619
      %v1762 = vunpack.c.l.b16 %v1620
      %v1763 = vunpack.c.h.b16 %v1619
      %v1764 = vunpack.c.h.b16 %v1620
      %v1765 = vunpack.c.l.b16 %v1621
      %v1766 = vunpack.c.l.b16 %v1622
      %v1767 = vunpack.c.h.b16 %v1621
      %v1768 = vunpack.c.h.b16 %v1622
      %v1769 = vunpack.c.l.b16 %v1623
      %v1770 = vunpack.c.l.b16 %v1624
      %v1771 = vunpack.c.h.b16 %v1623
      %v1772 = vunpack.c.h.b16 %v1624
      %v1773 = vunpack.c.l.b16 %v1625
      %v1774 = vunpack.c.l.b16 %v1626
      %v1775 = vunpack.c.h.b16 %v1625
      %v1776 = vunpack.c.h.b16 %v1626
      %v1777 = vunpack.c.l.b16 %v1627
      %v1778 = vunpack.c.l.b16 %v1628
      %v1779 = vunpack.c.h.b16 %v1627
      %v1780 = vunpack.c.h.b16 %v1628
      %v1781 = vunpack.c.l.b16 %v1629
      %v1782 = vunpack.c.l.b16 %v1630
      %v1783 = vunpack.c.h.b16 %v1629
      %v1784 = vunpack.c.h.b16 %v1630
      %v1785 = vunpack.c.l.b16 %v1631
      %v1786 = vunpack.c.l.b16 %v1632
      %v1787 = vunpack.c.h.b16 %v1631
      %v1788 = vunpack.c.h.b16 %v1632
      %v1789 = vunpack.c.l.b16 %v1633
      %v1790 = vunpack.c.l.b16 %v1634
      %v1791 = vunpack.c.h.b16 %v1633
      %v1792 = vunpack.c.h.b16 %v1634
      %v1793 = vunpack.c.l.b16 %v1635
      %v1794 = vunpack.c.l.b16 %v1636
      %v1795 = vunpack.c.h.b16 %v1635
      %v1796 = vunpack.c.h.b16 %v1636
      %v1797 = vunpack.c.l.b16 %v1637
      %v1798 = vunpack.c.l.b16 %v1638
      %v1799 = vunpack.c.h.b16 %v1637
      %v1800 = vunpack.c.h.b16 %v1638
      %v1801 = vunpack.c.l.b16 %v1639
      %v1802 = vunpack.c.l.b16 %v1640
      %v1803 = vunpack.c.h.b16 %v1639
      %v1804 = vunpack.c.h.b16 %v1640
      %v1805 = vunpack.c.l.b16 %v1641
      %v1806 = vunpack.c.l.b16 %v1642
      %v1807 = vunpack.c.h.b16 %v1641
      %v1808 = vunpack.c.h.b16 %v1642
      %v1809 = vunpack.c.l.b16 %v1643
      %v1810 = vunpack.c.l.b16 %v1644
      %v1811 = vunpack.c.h.b16 %v1643
      %v1812 = vunpack.c.h.b16 %v1644
      %v1813 = vunpack.c.l.b16 %v1645
      %v1814 = vunpack.c.l.b16 %v1646
      %v1815 = vunpack.c.h.b16 %v1645
      %v1816 = vunpack.c.h.b16 %v1646
      %v1817 = vunpack.c.l.b16 %v1647
      %v1818 = vunpack.c.l.b16 %v1648
      %v1819 = vunpack.c.h.b16 %v1647
      %v1820 = vunpack.c.h.b16 %v1648
      %v1821 = vunpack.c.l.b16 %v1649
      %v1822 = vunpack.c.l.b16 %v1650
      %v1823 = vunpack.c.h.b16 %v1649
      %v1824 = vunpack.c.h.b16 %v1650
      %v1825 = vunpack.c.l.b16 %v1651
      %v1826 = vunpack.c.l.b16 %v1652
      %v1827 = vunpack.c.h.b16 %v1651
      %v1828 = vunpack.c.h.b16 %v1652
      %v1829 = vunpack.c.l.b16 %v1653
      %v1830 = vunpack.c.l.b16 %v1654
      %v1831 = vunpack.c.h.b16 %v1653
      %v1832 = vunpack.c.h.b16 %v1654
      %v1833 = vunpack.c.l.b16 %v1655
      %v1834 = vunpack.c.l.b16 %v1656
      %v1835 = vunpack.c.h.b16 %v1655
      %v1836 = vunpack.c.h.b16 %v1656
      %v1837 = vunpack.c.l.b16 %v1657
      %v1838 = vunpack.c.l.b16 %v1658
      %v1839 = vunpack.c.h.b16 %v1657
      %v1840 = vunpack.c.h.b16 %v1658
      %v1841 = vunpack.c.l.b16 %v1659
      %v1842 = vunpack.c.l.b16 %v1660
      %v1843 = vunpack.c.h.b16 %v1659
      %v1844 = vunpack.c.h.b16 %v1660
      %v1845 = vunpack.c.l.b16 %v1661
      %v1846 = vunpack.c.l.b16 %v1662
      %v1847 = vunpack.c.h.b16 %v1661
      %v1848 = vunpack.c.h.b16 %v1662
      %v1849 = vunpack.c.l.b16 %v1663
      %v1850 = vunpack.c.l.b16 %v1664
      %v1851 = vunpack.c.h.b16 %v1663
      %v1852 = vunpack.c.h.b16 %v1664
      %v1853 = vunpack.c.l.b16 %v1665
      %v1854 = vunpack.c.l.b16 %v1666
      %v1855 = vunpack.c.h.b16 %v1665
      %v1856 = vunpack.c.h.b16 %v1666
      %v1857 = vunpack.c.l.b16 %v1667
      %v1858 = vunpack.c.l.b16 %v1668
      %v1859 = vunpack.c.h.b16 %v1667
      %v1860 = vunpack.c.h.b16 %v1668
      %v1861 = vpack.c.b16 %v1734, %v1733
      %v1862 = vpack.c.b16 %v1736, %v1735
      %v1863 = vpack.c.b16 %v1738, %v1737
      %v1864 = vpack.c.b16 %v1740, %v1739
      %v1865 = vpack.c.b16 %v1742, %v1741
      %v1866 = vpack.c.b16 %v1744, %v1743
      %v1867 = vpack.c.b16 %v1746, %v1745
      %v1868 = vpack.c.b16 %v1748, %v1747
      %v1869 = vpack.c.b16 %v1750, %v1749
      %v1870 = vpack.c.b16 %v1752, %v1751
      %v1871 = vpack.c.b16 %v1754, %v1753
      %v1872 = vpack.c.b16 %v1756, %v1755
      %v1873 = vpack.c.b16 %v1758, %v1757
      %v1874 = vpack.c.b16 %v1760, %v1759
      %v1875 = vpack.c.b16 %v1762, %v1761
      %v1876 = vpack.c.b16 %v1764, %v1763
      %v1877 = vpack.c.b16 %v1766, %v1765
      %v1878 = vpack.c.b16 %v1768, %v1767
      %v1879 = vpack.c.b16 %v1770, %v1769
      %v1880 = vpack.c.b16 %v1772, %v1771
      %v1881 = vpack.c.b16 %v1774, %v1773
      %v1882 = vpack.c.b16 %v1776, %v1775
      %v1883 = vpack.c.b16 %v1778, %v1777
      %v1884 = vpack.c.b16 %v1780, %v1779
      %v1885 = vpack.c.b16 %v1782, %v1781
      %v1886 = vpack.c.b16 %v1784, %v1783
      %v1887 = vpack.c.b16 %v1786, %v1785
      %v1888 = vpack.c.b16 %v1788, %v1787
      %v1889 = vpack.c.b16 %v1790, %v1789
      %v1890 = vpack.c.b16 %v1792, %v1791
      %v1891 = vpack.c.b16 %v1794, %v1793
      %v1892 = vpack.c.b16 %v1796, %v1795
      %v1893 = vpack.c.b16 %v1798, %v1797
      %v1894 = vpack.c.b16 %v1800, %v1799
      %v1895 = vpack.c.b16 %v1802, %v1801
      %v1896 = vpack.c.b16 %v1804, %v1803
      %v1897 = vpack.c.b16 %v1806, %v1805
      %v1898 = vpack.c.b16 %v1808, %v1807
      %v1899 = vpack.c.b16 %v1810, %v1809
      %v1900 = vpack.c.b16 %v1812, %v1811
      %v1901 = vpack.c.b16 %v1814, %v1813
      %v1902 = vpack.c.b16 %v1816, %v1815
      %v1903 = vpack.c.b16 %v1818, %v1817
      %v1904 = vpack.c.b16 %v1820, %v1819
      %v1905 = vpack.c.b16 %v1822, %v1821
      %v1906 = vpack.c.b16 %v1824, %v1823
      %v1907 = vpack.c.b16 %v1826, %v1825
      %v1908 = vpack.c.b16 %v1828, %v1827
      %v1909 = vpack.c.b16 %v1830, %v1829
      %v1910 = vpack.c.b16 %v1832, %v1831
      %v1911 = vpack.c.b16 %v1834, %v1833
      %v1912 = vpack.c.b16 %v1836, %v1835
      %v1913 = vpack.c.b16 %v1838, %v1837
      %v1914 = vpack.c.b16 %v1840, %v1839
      %v1915 = vpack.c.b16 %v1842, %v1841
      %v1916 = vpack.c.b16 %v1844, %v1843
      %v1917 = vpack.c.b16 %v1846, %v1845
      %v1918 = vpack.c.b16 %v1848, %v1847
      %v1919 = vpack.c.b16 %v1850, %v1849
      %v1920 = vpack.c.b16 %v1852, %v1851
      %v1921 = vpack.c.b16 %v1854, %v1853
      %v1922 = vpack.c.b16 %v1856, %v1855
      %v1923 = vpack.c.b16 %v1858, %v1857
      %v1924 = vpack.c.b16 %v1860, %v1859
      %1989 = vst [vmem:[%s242] sm:$0xff] %v1861
      %1990 = vst [vmem:[%s242 + $0x8] sm:$0xff] %v1862
      %1991 = vst [vmem:[%s242 + $0x10] sm:$0xff] %v1863
      %1992 = vst [vmem:[%s242 + $0x18] sm:$0xff] %v1864
      %1993 = vst [vmem:[%s242 + $0x20] sm:$0xff] %v1865
      %1994 = vst [vmem:[%s242 + $0x28] sm:$0xff] %v1866
      %1995 = vst [vmem:[%s242 + $0x30] sm:$0xff] %v1867
      %1996 = vst [vmem:[%s242 + $0x38] sm:$0xff] %v1868
      %1997 = vst [vmem:[%s242 + $0x40] sm:$0xff] %v1869
      %1998 = vst [vmem:[%s242 + $0x48] sm:$0xff] %v1870
      %1999 = vst [vmem:[%s242 + $0x50] sm:$0xff] %v1871
      %2000 = vst [vmem:[%s242 + $0x58] sm:$0xff] %v1872
      %2001 = vst [vmem:[%s242 + $0x60] sm:$0xff] %v1873
      %2002 = vst [vmem:[%s242 + $0x68] sm:$0xff] %v1874
      %2003 = vst [vmem:[%s242 + $0x70] sm:$0xff] %v1875
      %2004 = vst [vmem:[%s242 + $0x78] sm:$0xff] %v1876
      %2005 = vst [vmem:[%s242 + $0x80] sm:$0xff] %v1877
      %2006 = vst [vmem:[%s242 + $0x88] sm:$0xff] %v1878
      %2007 = vst [vmem:[%s242 + $0x90] sm:$0xff] %v1879
      %2008 = vst [vmem:[%s242 + $0x98] sm:$0xff] %v1880
      %2009 = vst [vmem:[%s242 + $0xa0] sm:$0xff] %v1881
      %2010 = vst [vmem:[%s242 + $0xa8] sm:$0xff] %v1882
      %2011 = vst [vmem:[%s242 + $0xb0] sm:$0xff] %v1883
      %2012 = vst [vmem:[%s242 + $0xb8] sm:$0xff] %v1884
      %2013 = vst [vmem:[%s242 + $0xc0] sm:$0xff] %v1885
      %2014 = vst [vmem:[%s242 + $0xc8] sm:$0xff] %v1886
      %2015 = vst [vmem:[%s242 + $0xd0] sm:$0xff] %v1887
      %2016 = vst [vmem:[%s242 + $0xd8] sm:$0xff] %v1888
      %2017 = vst [vmem:[%s242 + $0xe0] sm:$0xff] %v1889
      %2018 = vst [vmem:[%s242 + $0xe8] sm:$0xff] %v1890
      %2019 = vst [vmem:[%s242 + $0xf0] sm:$0xff] %v1891
      %2020 = vst [vmem:[%s242 + $0xf8] sm:$0xff] %v1892
      %2021 = vst [vmem:[%s242 + $0x100] sm:$0xff] %v1893
      %2022 = vst [vmem:[%s242 + $0x108] sm:$0xff] %v1894
      %2023 = vst [vmem:[%s242 + $0x110] sm:$0xff] %v1895
      %2024 = vst [vmem:[%s242 + $0x118] sm:$0xff] %v1896
      %2025 = vst [vmem:[%s242 + $0x120] sm:$0xff] %v1897
      %2026 = vst [vmem:[%s242 + $0x128] sm:$0xff] %v1898
      %2027 = vst [vmem:[%s242 + $0x130] sm:$0xff] %v1899
      %2028 = vst [vmem:[%s242 + $0x138] sm:$0xff] %v1900
      %2029 = vst [vmem:[%s242 + $0x140] sm:$0xff] %v1901
      %2030 = vst [vmem:[%s242 + $0x148] sm:$0xff] %v1902
      %2031 = vst [vmem:[%s242 + $0x150] sm:$0xff] %v1903
      %2032 = vst [vmem:[%s242 + $0x158] sm:$0xff] %v1904
      %2033 = vst [vmem:[%s242 + $0x160] sm:$0xff] %v1905
      %2034 = vst [vmem:[%s242 + $0x168] sm:$0xff] %v1906
      %2035 = vst [vmem:[%s242 + $0x170] sm:$0xff] %v1907
      %2036 = vst [vmem:[%s242 + $0x178] sm:$0xff] %v1908
      %2037 = vst [vmem:[%s242 + $0x180] sm:$0xff] %v1909
      %2038 = vst [vmem:[%s242 + $0x188] sm:$0xff] %v1910
      %2039 = vst [vmem:[%s242 + $0x190] sm:$0xff] %v1911
      %2040 = vst [vmem:[%s242 + $0x198] sm:$0xff] %v1912
      %2041 = vst [vmem:[%s242 + $0x1a0] sm:$0xff] %v1913
      %2042 = vst [vmem:[%s242 + $0x1a8] sm:$0xff] %v1914
      %2043 = vst [vmem:[%s242 + $0x1b0] sm:$0xff] %v1915
      %2044 = vst [vmem:[%s242 + $0x1b8] sm:$0xff] %v1916
      %2045 = vst [vmem:[%s242 + $0x1c0] sm:$0xff] %v1917
      %2046 = vst [vmem:[%s242 + $0x1c8] sm:$0xff] %v1918
      %2047 = vst [vmem:[%s242 + $0x1d0] sm:$0xff] %v1919
      %2048 = vst [vmem:[%s242 + $0x1d8] sm:$0xff] %v1920
      %2049 = vst [vmem:[%s242 + $0x1e0] sm:$0xff] %v1921
      %2050 = vst [vmem:[%s242 + $0x1e8] sm:$0xff] %v1922
      %2051 = vst [vmem:[%s242 + $0x1f0] sm:$0xff] %v1923
      %2052 = vst [vmem:[%s242 + $0x1f8] sm:$0xff] %v1924
      %s2053 = smul.u32 64, %s17
      %p2054 = scmp.lt.s32.totalorder %s2053, 127
      %s2055 = scalar_select %p2054, %s2053, 127
      %s2056 = smul.addr %s2055, 4
      %s2057 = scalar_lea.vmem %s4, %s2056
      %s2058 = smul.u32 64, %s17
      %p2059 = scmp.lt.s32.totalorder %s2058, 127
      %s2060 = scalar_select %p2059, %s2058, 127
      %s2061 = smul.addr %s2060, 2
      %s2062 = smul.addr %s2061, 4
      %s2063 = scalar_lea.vmem %s5, %s2062
      // Predicated region
      $region37: #{graph_transformer_layer.3} parent=35 // pred_check
        %p2064 = pneg %p124
      $region38: #{graph_transformer_layer.3} parent=35 // pred_check_branch
        %2066 = sbr.rel (%p2064) target = $region40
      $region39: #{graph_transformer_layer.3} parent=35 // pred_region
        %s2067 = smul.u32 64, %s17
      $region40: #{graph_transformer_layer.3} parent=35 // pred_fallthru
        _
      // Predicated region
      $region41: #{graph_transformer_layer.3} parent=35 // pred_check
        %p2068 = pneg %p150
      $region42: #{graph_transformer_layer.3} parent=35 // pred_check_branch
        %2070 = sbr.rel (%p2068) target = $region44
      $region43: #{graph_transformer_layer.3} parent=35 // pred_region
        %s2071 = smul.u32 64, %s17
      $region44: #{graph_transformer_layer.3} parent=35 // pred_fallthru
        _
    $region36: #{graph_transformer_layer.3} parent=5 // pred_fallthru
      _
    %p2072 = scmp.le.s32.totalorder 2, %s12
    // Predicated region
    $region45: #{graph_transformer_layer.3} parent=5 // pred_check
      %p2073 = pneg %p2072
    $region46: #{graph_transformer_layer.3} parent=5 // pred_check_branch
      %2075 = sbr.rel (%p2073) target = $region48
    $region47: #{graph_transformer_layer.3} parent=5 // pred_region
      %s2076 = ssub.s32 %s12, 2
      // Predicated region
      $region49: #{graph_transformer_layer.3} parent=47 // pred_check
        %p2077 = pneg %p130
      $region50: #{graph_transformer_layer.3} parent=47 // pred_check_branch
        %2079 = sbr.rel (%p2077) target = $region52
      $region51: #{graph_transformer_layer.3} parent=47 // pred_region
        %s2080 = smul.u32 64, %s18
        %p2081 = scmp.lt.s32.totalorder %s2080, 127
        %s2082 = scalar_select %p2081, %s2080, 127
        %s2083 = smul.addr %s2082, 4
        %s2084 = scalar_lea.vmem %s4, %s2083
      $region52: #{graph_transformer_layer.3} parent=47 // pred_fallthru
        _
      // Predicated region
      $region53: #{graph_transformer_layer.3} parent=47 // pred_check
        %p2085 = pneg %p156
      $region54: #{graph_transformer_layer.3} parent=47 // pred_check_branch
        %2087 = sbr.rel (%p2085) target = $region56
      $region55: #{graph_transformer_layer.3} parent=47 // pred_region
        %s2088 = smul.u32 64, %s18
        %p2089 = scmp.lt.s32.totalorder %s2088, 127
        %s2090 = scalar_select %p2089, %s2088, 127
        %s2091 = smul.addr %s2090, 2
        %s2092 = smul.addr %s2091, 4
        %s2093 = scalar_lea.vmem %s5, %s2092
      $region56: #{graph_transformer_layer.3} parent=47 // pred_fallthru
        _
    $region48: #{graph_transformer_layer.3} parent=5 // pred_fallthru
      _
  $region6: #{graph_transformer_layer.3} parent=0 // loop_footer
    %s16 = sadd.s32 1, %s12
  $region7: #{graph_transformer_layer.3} parent=0 // loop_footer_branch
    %11 = sbr.rel target = $region3
  $region8: #{graph_transformer_layer.3} parent=0 // loop_exit
    _

// kernel: graph_transformer_layer.5
$region0: #{graph_transformer_layer.5}
  #allocation0 [shape = 'u32[]', space=smem, size = 0x4, offset = 0x4, fixed_abs, tag = 'smem constant byte address 0x4 - core index']
  #allocation1 [shape = 'u32[144,128]{1,0:T(1,128)}', space=vmem, size = 0x12000, scoped, tag = 'internal scratch']
  %s0 = inlined_call_operand.vmem [shape: f32[1024,128], index: 0, kind: input, shape index: {}]
  %s1 = inlined_call_operand.vmem [shape: f32[1024,128], index: 1, kind: input, shape index: {}]
  %s2 = inlined_call_operand.vmem [shape: f32[1024,128], index: 2, kind: input, shape index: {}]
  %s3 = inlined_call_operand.vmem [shape: f32[1,128], index: 3, kind: input, shape index: {}]
  %s4 = inlined_call_operand.vmem [shape: f32[1,128], index: 4, kind: input, shape index: {}]
  %s5 = inlined_call_operand.vmem [shape: bf16[128,128], index: 5, kind: input, shape index: {}]
  %s6 = inlined_call_operand.vmem [shape: f32[1,128], index: 6, kind: input, shape index: {}]
  %s7 = inlined_call_operand.vmem [shape: f32[1,128], index: 7, kind: input, shape index: {}]
  %s8 = inlined_call_operand.vmem [shape: f32[1,128], index: 8, kind: input, shape index: {}]
  %s9 = inlined_call_operand.vmem [shape: bf16[128,256], index: 9, kind: input, shape index: {}]
  %s10 = inlined_call_operand.vmem [shape: f32[1,256], index: 10, kind: input, shape index: {}]
  %s11 = inlined_call_operand.vmem [shape: bf16[256,128], index: 11, kind: input, shape index: {}]
  %s12 = inlined_call_operand.vmem [shape: f32[1,128], index: 12, kind: input, shape index: {}]
  %s13 = inlined_call_operand.vmem [shape: f32[1024,128], index: 13, kind: output, shape index: {}]
  %s14 = sld [smem:[#allocation0]]
  $region85: #{graph_transformer_layer.5} parent=0
    _
  %s16 = ssub.s32 1, %s14
  %s17 = scalar_select 0, %s16, %s14
  loop: start=0, step=1, limit=4
  $region2: #{graph_transformer_layer.5} parent=0 // loop_pre_header
    _
  $region3: #{graph_transformer_layer.5} parent=0 // loop_header
    %s19 = sphi 0, %s23
    %p20 = scmp.ge.s32.totalorder %s19, 4
    %s29 = sphi 0, %s31
    %s32 = sphi 0, %s29
    %s33 = sphi 0, %s32
    %s49 = sphi 0, %s33
    %s55 = sphi 0, %s57
    %s58 = sphi 0, %s55
    %s59 = sphi 0, %s58
    %s75 = sphi 0, %s59
    %s81 = sphi 0, %s83
    %s84 = sphi 0, %s81
    %s85 = sphi 0, %s84
    %s101 = sphi 0, %s85
    %s105 = sphi 0, %s105
    %s107 = sphi 0, %s105
    %s108 = sphi 0, %s107
    %s122 = sphi 0, %s108
    %s126 = sphi 0, %s126
    %s128 = sphi 0, %s126
    %s129 = sphi 0, %s128
    %s143 = sphi 0, %s129
    %s147 = sphi 0, %s147
    %s149 = sphi 0, %s147
    %s150 = sphi 0, %s149
    %s164 = sphi 0, %s150
    %s168 = sphi 0, %s168
    %s170 = sphi 0, %s168
    %s171 = sphi 0, %s170
    %s185 = sphi 0, %s171
    %s189 = sphi 0, %s189
    %s191 = sphi 0, %s189
    %s192 = sphi 0, %s191
    %s206 = sphi 0, %s192
    %s210 = sphi 0, %s210
    %s212 = sphi 0, %s210
    %s213 = sphi 0, %s212
    %s227 = sphi 0, %s213
    %s231 = sphi 0, %s231
    %s233 = sphi 0, %s231
    %s234 = sphi 0, %s233
    %s248 = sphi 0, %s234
    %s252 = sphi 0, %s252
    %s254 = sphi 0, %s252
    %s255 = sphi 0, %s254
    %s269 = sphi 0, %s255
    %s273 = sphi 0, %s273
    %s275 = sphi 0, %s273
    %s276 = sphi 0, %s275
    %s290 = sphi 0, %s276
    %s294 = sphi 0, %s294
    %s296 = sphi 0, %s294
    %s297 = sphi 0, %s296
    %s311 = sphi 0, %s297
    %s317 = sphi 0, %s319
    %s320 = sphi 0, %s317
    %s321 = sphi 0, %s320
    %s337 = sphi 0, %s321
  $region4: #{graph_transformer_layer.5} parent=0 // loop_header_branch
    %22 = sbr.rel (%p20) target = $region8
  $region5: #{graph_transformer_layer.5} parent=0 // loop_body
    %s24 = ssub.s32 %s19, 1
    %s25 = ssub.s32 %s19, 2
    %s26 = sadd.s32 %s19, 1
    %s27 = ssub.s32 %s19, %s26
    %p28 = scmp.eq.s32.totalorder %s27, 0
    %s30 = sadd.s32 %s29, 1
    %s31 = scalar_select %p28, %s29, %s30
    %p34 = pneg %p28
    %p35 = scmp.eq.s32.totalorder %s19, 1
    %p36 = por %p34, %p35
    %p37 = scmp.ne.s32.totalorder %s29, %s32
    %p38 = scmp.eq.s32.totalorder %s19, 0
    %p39 = por %p37, %p38
    %p40 = scmp.ne.s32.totalorder %s29, %s32
    %p41 = scmp.eq.s32.totalorder %s24, 1
    %p42 = por %p40, %p41
    %p43 = scmp.ne.s32.totalorder %s32, %s33
    %p44 = scmp.eq.s32.totalorder %s24, 0
    %p45 = por %p43, %p44
    %p46 = scmp.ne.s32.totalorder %s32, %s33
    %p47 = scmp.eq.s32.totalorder %s25, 1
    %p48 = por %p46, %p47
    %p50 = scmp.ne.s32.totalorder %s33, %s49
    %p51 = scmp.eq.s32.totalorder %s25, 0
    %p52 = por %p50, %p51
    %s53 = ssub.s32 %s19, %s26
    %p54 = scmp.eq.s32.totalorder %s53, 0
    %s56 = sadd.s32 %s55, 1
    %s57 = scalar_select %p54, %s55, %s56
    %p60 = pneg %p54
    %p61 = scmp.eq.s32.totalorder %s19, 1
    %p62 = por %p60, %p61
    %p63 = scmp.ne.s32.totalorder %s55, %s58
    %p64 = scmp.eq.s32.totalorder %s19, 0
    %p65 = por %p63, %p64
    %p66 = scmp.ne.s32.totalorder %s55, %s58
    %p67 = scmp.eq.s32.totalorder %s24, 1
    %p68 = por %p66, %p67
    %p69 = scmp.ne.s32.totalorder %s58, %s59
    %p70 = scmp.eq.s32.totalorder %s24, 0
    %p71 = por %p69, %p70
    %p72 = scmp.ne.s32.totalorder %s58, %s59
    %p73 = scmp.eq.s32.totalorder %s25, 1
    %p74 = por %p72, %p73
    %p76 = scmp.ne.s32.totalorder %s59, %s75
    %p77 = scmp.eq.s32.totalorder %s25, 0
    %p78 = por %p76, %p77
    %s79 = ssub.s32 %s19, %s26
    %p80 = scmp.eq.s32.totalorder %s79, 0
    %s82 = sadd.s32 %s81, 1
    %s83 = scalar_select %p80, %s81, %s82
    %p86 = pneg %p80
    %p87 = scmp.eq.s32.totalorder %s19, 1
    %p88 = por %p86, %p87
    %p89 = scmp.ne.s32.totalorder %s81, %s84
    %p90 = scmp.eq.s32.totalorder %s19, 0
    %p91 = por %p89, %p90
    %p92 = scmp.ne.s32.totalorder %s81, %s84
    %p93 = scmp.eq.s32.totalorder %s24, 1
    %p94 = por %p92, %p93
    %p95 = scmp.ne.s32.totalorder %s84, %s85
    %p96 = scmp.eq.s32.totalorder %s24, 0
    %p97 = por %p95, %p96
    %p98 = scmp.ne.s32.totalorder %s84, %s85
    %p99 = scmp.eq.s32.totalorder %s25, 1
    %p100 = por %p98, %p99
    %p102 = scmp.ne.s32.totalorder %s85, %s101
    %p103 = scmp.eq.s32.totalorder %s25, 0
    %p104 = por %p102, %p103
    %s106 = sadd.s32 %s105, 1
    %p109 = scmp.eq.s32.totalorder %s19, 1
    %p110 = scmp.ne.s32.totalorder %s105, %s107
    %p111 = scmp.eq.s32.totalorder %s19, 0
    %p112 = por %p110, %p111
    %p113 = scmp.ne.s32.totalorder %s105, %s107
    %p114 = scmp.eq.s32.totalorder %s24, 1
    %p115 = por %p113, %p114
    %p116 = scmp.ne.s32.totalorder %s107, %s108
    %p117 = scmp.eq.s32.totalorder %s24, 0
    %p118 = por %p116, %p117
    %p119 = scmp.ne.s32.totalorder %s107, %s108
    %p120 = scmp.eq.s32.totalorder %s25, 1
    %p121 = por %p119, %p120
    %p123 = scmp.ne.s32.totalorder %s108, %s122
    %p124 = scmp.eq.s32.totalorder %s25, 0
    %p125 = por %p123, %p124
    %s127 = sadd.s32 %s126, 1
    %p130 = scmp.eq.s32.totalorder %s19, 1
    %p131 = scmp.ne.s32.totalorder %s126, %s128
    %p132 = scmp.eq.s32.totalorder %s19, 0
    %p133 = por %p131, %p132
    %p134 = scmp.ne.s32.totalorder %s126, %s128
    %p135 = scmp.eq.s32.totalorder %s24, 1
    %p136 = por %p134, %p135
    %p137 = scmp.ne.s32.totalorder %s128, %s129
    %p138 = scmp.eq.s32.totalorder %s24, 0
    %p139 = por %p137, %p138
    %p140 = scmp.ne.s32.totalorder %s128, %s129
    %p141 = scmp.eq.s32.totalorder %s25, 1
    %p142 = por %p140, %p141
    %p144 = scmp.ne.s32.totalorder %s129, %s143
    %p145 = scmp.eq.s32.totalorder %s25, 0
    %p146 = por %p144, %p145
    %s148 = sadd.s32 %s147, 1
    %p151 = scmp.eq.s32.totalorder %s19, 1
    %p152 = scmp.ne.s32.totalorder %s147, %s149
    %p153 = scmp.eq.s32.totalorder %s19, 0
    %p154 = por %p152, %p153
    %p155 = scmp.ne.s32.totalorder %s147, %s149
    %p156 = scmp.eq.s32.totalorder %s24, 1
    %p157 = por %p155, %p156
    %p158 = scmp.ne.s32.totalorder %s149, %s150
    %p159 = scmp.eq.s32.totalorder %s24, 0
    %p160 = por %p158, %p159
    %p161 = scmp.ne.s32.totalorder %s149, %s150
    %p162 = scmp.eq.s32.totalorder %s25, 1
    %p163 = por %p161, %p162
    %p165 = scmp.ne.s32.totalorder %s150, %s164
    %p166 = scmp.eq.s32.totalorder %s25, 0
    %p167 = por %p165, %p166
    %s169 = sadd.s32 %s168, 1
    %p172 = scmp.eq.s32.totalorder %s19, 1
    %p173 = scmp.ne.s32.totalorder %s168, %s170
    %p174 = scmp.eq.s32.totalorder %s19, 0
    %p175 = por %p173, %p174
    %p176 = scmp.ne.s32.totalorder %s168, %s170
    %p177 = scmp.eq.s32.totalorder %s24, 1
    %p178 = por %p176, %p177
    %p179 = scmp.ne.s32.totalorder %s170, %s171
    %p180 = scmp.eq.s32.totalorder %s24, 0
    %p181 = por %p179, %p180
    %p182 = scmp.ne.s32.totalorder %s170, %s171
    %p183 = scmp.eq.s32.totalorder %s25, 1
    %p184 = por %p182, %p183
    %p186 = scmp.ne.s32.totalorder %s171, %s185
    %p187 = scmp.eq.s32.totalorder %s25, 0
    %p188 = por %p186, %p187
    %s190 = sadd.s32 %s189, 1
    %p193 = scmp.eq.s32.totalorder %s19, 1
    %p194 = scmp.ne.s32.totalorder %s189, %s191
    %p195 = scmp.eq.s32.totalorder %s19, 0
    %p196 = por %p194, %p195
    %p197 = scmp.ne.s32.totalorder %s189, %s191
    %p198 = scmp.eq.s32.totalorder %s24, 1
    %p199 = por %p197, %p198
    %p200 = scmp.ne.s32.totalorder %s191, %s192
    %p201 = scmp.eq.s32.totalorder %s24, 0
    %p202 = por %p200, %p201
    %p203 = scmp.ne.s32.totalorder %s191, %s192
    %p204 = scmp.eq.s32.totalorder %s25, 1
    %p205 = por %p203, %p204
    %p207 = scmp.ne.s32.totalorder %s192, %s206
    %p208 = scmp.eq.s32.totalorder %s25, 0
    %p209 = por %p207, %p208
    %s211 = sadd.s32 %s210, 1
    %p214 = scmp.eq.s32.totalorder %s19, 1
    %p215 = scmp.ne.s32.totalorder %s210, %s212
    %p216 = scmp.eq.s32.totalorder %s19, 0
    %p217 = por %p215, %p216
    %p218 = scmp.ne.s32.totalorder %s210, %s212
    %p219 = scmp.eq.s32.totalorder %s24, 1
    %p220 = por %p218, %p219
    %p221 = scmp.ne.s32.totalorder %s212, %s213
    %p222 = scmp.eq.s32.totalorder %s24, 0
    %p223 = por %p221, %p222
    %p224 = scmp.ne.s32.totalorder %s212, %s213
    %p225 = scmp.eq.s32.totalorder %s25, 1
    %p226 = por %p224, %p225
    %p228 = scmp.ne.s32.totalorder %s213, %s227
    %p229 = scmp.eq.s32.totalorder %s25, 0
    %p230 = por %p228, %p229
    %s232 = sadd.s32 %s231, 1
    %p235 = scmp.eq.s32.totalorder %s19, 1
    %p236 = scmp.ne.s32.totalorder %s231, %s233
    %p237 = scmp.eq.s32.totalorder %s19, 0
    %p238 = por %p236, %p237
    %p239 = scmp.ne.s32.totalorder %s231, %s233
    %p240 = scmp.eq.s32.totalorder %s24, 1
    %p241 = por %p239, %p240
    %p242 = scmp.ne.s32.totalorder %s233, %s234
    %p243 = scmp.eq.s32.totalorder %s24, 0
    %p244 = por %p242, %p243
    %p245 = scmp.ne.s32.totalorder %s233, %s234
    %p246 = scmp.eq.s32.totalorder %s25, 1
    %p247 = por %p245, %p246
    %p249 = scmp.ne.s32.totalorder %s234, %s248
    %p250 = scmp.eq.s32.totalorder %s25, 0
    %p251 = por %p249, %p250
    %s253 = sadd.s32 %s252, 1
    %p256 = scmp.eq.s32.totalorder %s19, 1
    %p257 = scmp.ne.s32.totalorder %s252, %s254
    %p258 = scmp.eq.s32.totalorder %s19, 0
    %p259 = por %p257, %p258
    %p260 = scmp.ne.s32.totalorder %s252, %s254
    %p261 = scmp.eq.s32.totalorder %s24, 1
    %p262 = por %p260, %p261
    %p263 = scmp.ne.s32.totalorder %s254, %s255
    %p264 = scmp.eq.s32.totalorder %s24, 0
    %p265 = por %p263, %p264
    %p266 = scmp.ne.s32.totalorder %s254, %s255
    %p267 = scmp.eq.s32.totalorder %s25, 1
    %p268 = por %p266, %p267
    %p270 = scmp.ne.s32.totalorder %s255, %s269
    %p271 = scmp.eq.s32.totalorder %s25, 0
    %p272 = por %p270, %p271
    %s274 = sadd.s32 %s273, 1
    %p277 = scmp.eq.s32.totalorder %s19, 1
    %p278 = scmp.ne.s32.totalorder %s273, %s275
    %p279 = scmp.eq.s32.totalorder %s19, 0
    %p280 = por %p278, %p279
    %p281 = scmp.ne.s32.totalorder %s273, %s275
    %p282 = scmp.eq.s32.totalorder %s24, 1
    %p283 = por %p281, %p282
    %p284 = scmp.ne.s32.totalorder %s275, %s276
    %p285 = scmp.eq.s32.totalorder %s24, 0
    %p286 = por %p284, %p285
    %p287 = scmp.ne.s32.totalorder %s275, %s276
    %p288 = scmp.eq.s32.totalorder %s25, 1
    %p289 = por %p287, %p288
    %p291 = scmp.ne.s32.totalorder %s276, %s290
    %p292 = scmp.eq.s32.totalorder %s25, 0
    %p293 = por %p291, %p292
    %s295 = sadd.s32 %s294, 1
    %p298 = scmp.eq.s32.totalorder %s19, 1
    %p299 = scmp.ne.s32.totalorder %s294, %s296
    %p300 = scmp.eq.s32.totalorder %s19, 0
    %p301 = por %p299, %p300
    %p302 = scmp.ne.s32.totalorder %s294, %s296
    %p303 = scmp.eq.s32.totalorder %s24, 1
    %p304 = por %p302, %p303
    %p305 = scmp.ne.s32.totalorder %s296, %s297
    %p306 = scmp.eq.s32.totalorder %s24, 0
    %p307 = por %p305, %p306
    %p308 = scmp.ne.s32.totalorder %s296, %s297
    %p309 = scmp.eq.s32.totalorder %s25, 1
    %p310 = por %p308, %p309
    %p312 = scmp.ne.s32.totalorder %s297, %s311
    %p313 = scmp.eq.s32.totalorder %s25, 0
    %p314 = por %p312, %p313
    %s315 = ssub.s32 %s19, %s26
    %p316 = scmp.eq.s32.totalorder %s315, 0
    %s318 = sadd.s32 %s317, 1
    %s319 = scalar_select %p316, %s317, %s318
    %p322 = pneg %p316
    %p323 = scmp.eq.s32.totalorder %s19, 1
    %p324 = por %p322, %p323
    %p325 = scmp.ne.s32.totalorder %s317, %s320
    %p326 = scmp.eq.s32.totalorder %s19, 0
    %p327 = por %p325, %p326
    %p328 = scmp.ne.s32.totalorder %s317, %s320
    %p329 = scmp.eq.s32.totalorder %s24, 1
    %p330 = por %p328, %p329
    %p331 = scmp.ne.s32.totalorder %s320, %s321
    %p332 = scmp.eq.s32.totalorder %s24, 0
    %p333 = por %p331, %p332
    %p334 = scmp.ne.s32.totalorder %s320, %s321
    %p335 = scmp.eq.s32.totalorder %s25, 1
    %p336 = por %p334, %p335
    %p338 = scmp.ne.s32.totalorder %s321, %s337
    %p339 = scmp.eq.s32.totalorder %s25, 0
    %p340 = por %p338, %p339
    %p341 = scmp.le.s32.totalorder 1, %s19
    %p342 = scmp.lt.s32.totalorder %s19, 3
    %p343 = pnand %p341, %p342
    %p344 = pneg %p343
    // Predicated region
    $region9: #{graph_transformer_layer.5} parent=5 // pred_check
      _
    $region10: #{graph_transformer_layer.5} parent=5 // pred_check_branch
      %346 = sbr.rel (%p343) target = $region12
    $region11: #{graph_transformer_layer.5} parent=5 // pred_region
      %s347 = ssub.s32 %s19, 1
      // Predicated region
      $region13: #{graph_transformer_layer.5} parent=11 // pred_check
        %p348 = pneg %p118
      $region14: #{graph_transformer_layer.5} parent=11 // pred_check_branch
        %350 = sbr.rel (%p348) target = $region16
      $region15: #{graph_transformer_layer.5} parent=11 // pred_region
        _
      $region16: #{graph_transformer_layer.5} parent=11 // pred_fallthru
        _
      // Predicated region
      $region17: #{graph_transformer_layer.5} parent=11 // pred_check
        %p351 = pneg %p139
      $region18: #{graph_transformer_layer.5} parent=11 // pred_check_branch
        %353 = sbr.rel (%p351) target = $region20
      $region19: #{graph_transformer_layer.5} parent=11 // pred_region
        _
      $region20: #{graph_transformer_layer.5} parent=11 // pred_fallthru
        _
      // Predicated region
      $region21: #{graph_transformer_layer.5} parent=11 // pred_check
        %p354 = pneg %p160
      $region22: #{graph_transformer_layer.5} parent=11 // pred_check_branch
        %356 = sbr.rel (%p354) target = $region24
      $region23: #{graph_transformer_layer.5} parent=11 // pred_region
        _
      $region24: #{graph_transformer_layer.5} parent=11 // pred_fallthru
        _
      // Predicated region
      $region25: #{graph_transformer_layer.5} parent=11 // pred_check
        %p357 = pneg %p181
      $region26: #{graph_transformer_layer.5} parent=11 // pred_check_branch
        %359 = sbr.rel (%p357) target = $region28
      $region27: #{graph_transformer_layer.5} parent=11 // pred_region
        _
      $region28: #{graph_transformer_layer.5} parent=11 // pred_fallthru
        _
      // Predicated region
      $region29: #{graph_transformer_layer.5} parent=11 // pred_check
        %p360 = pneg %p202
      $region30: #{graph_transformer_layer.5} parent=11 // pred_check_branch
        %362 = sbr.rel (%p360) target = $region32
      $region31: #{graph_transformer_layer.5} parent=11 // pred_region
        _
      $region32: #{graph_transformer_layer.5} parent=11 // pred_fallthru
        _
      // Predicated region
      $region33: #{graph_transformer_layer.5} parent=11 // pred_check
        %p363 = pneg %p223
      $region34: #{graph_transformer_layer.5} parent=11 // pred_check_branch
        %365 = sbr.rel (%p363) target = $region36
      $region35: #{graph_transformer_layer.5} parent=11 // pred_region
        _
      $region36: #{graph_transformer_layer.5} parent=11 // pred_fallthru
        _
      // Predicated region
      $region37: #{graph_transformer_layer.5} parent=11 // pred_check
        %p366 = pneg %p244
      $region38: #{graph_transformer_layer.5} parent=11 // pred_check_branch
        %368 = sbr.rel (%p366) target = $region40
      $region39: #{graph_transformer_layer.5} parent=11 // pred_region
        _
      $region40: #{graph_transformer_layer.5} parent=11 // pred_fallthru
        _
      // Predicated region
      $region41: #{graph_transformer_layer.5} parent=11 // pred_check
        %p369 = pneg %p265
      $region42: #{graph_transformer_layer.5} parent=11 // pred_check_branch
        %371 = sbr.rel (%p369) target = $region44
      $region43: #{graph_transformer_layer.5} parent=11 // pred_region
        _
      $region44: #{graph_transformer_layer.5} parent=11 // pred_fallthru
        _
      // Predicated region
      $region45: #{graph_transformer_layer.5} parent=11 // pred_check
        %p372 = pneg %p286
      $region46: #{graph_transformer_layer.5} parent=11 // pred_check_branch
        %374 = sbr.rel (%p372) target = $region48
      $region47: #{graph_transformer_layer.5} parent=11 // pred_region
        _
      $region48: #{graph_transformer_layer.5} parent=11 // pred_fallthru
        _
      // Predicated region
      $region49: #{graph_transformer_layer.5} parent=11 // pred_check
        %p375 = pneg %p307
      $region50: #{graph_transformer_layer.5} parent=11 // pred_check_branch
        %377 = sbr.rel (%p375) target = $region52
      $region51: #{graph_transformer_layer.5} parent=11 // pred_region
        _
      $region52: #{graph_transformer_layer.5} parent=11 // pred_fallthru
        _
    $region12: #{graph_transformer_layer.5} parent=5 // pred_fallthru
      _
    %p378 = scmp.lt.s32.totalorder %s19, 2
    // Predicated region
    $region53: #{graph_transformer_layer.5} parent=5 // pred_check
      %p379 = pneg %p378
    $region54: #{graph_transformer_layer.5} parent=5 // pred_check_branch
      %381 = sbr.rel (%p379) target = $region56
    $region55: #{graph_transformer_layer.5} parent=5 // pred_region
      // Predicated region
      $region57: #{graph_transformer_layer.5} parent=55 // pred_check
        %p382 = pneg %p39
      $region58: #{graph_transformer_layer.5} parent=55 // pred_check_branch
        %384 = sbr.rel (%p382) target = $region60
      $region59: #{graph_transformer_layer.5} parent=55 // pred_region
        %s385 = smul.u32 64, %s19
        %p386 = scmp.lt.s32.totalorder %s385, 127
        %s387 = scalar_select %p386, %s385, 127
        %s388 = smul.addr %s387, 8
        %s389 = scalar_lea.vmem %s0, %s388
        %s390 = smul.u32 64, %s19
      $region60: #{graph_transformer_layer.5} parent=55 // pred_fallthru
        _
      // Predicated region
      $region61: #{graph_transformer_layer.5} parent=55 // pred_check
        %p391 = pneg %p65
      $region62: #{graph_transformer_layer.5} parent=55 // pred_check_branch
        %393 = sbr.rel (%p391) target = $region64
      $region63: #{graph_transformer_layer.5} parent=55 // pred_region
        %s394 = smul.u32 64, %s19
        %p395 = scmp.lt.s32.totalorder %s394, 127
        %s396 = scalar_select %p395, %s394, 127
        %s397 = smul.addr %s396, 8
        %s398 = scalar_lea.vmem %s1, %s397
        %s399 = smul.u32 64, %s19
      $region64: #{graph_transformer_layer.5} parent=55 // pred_fallthru
        _
      // Predicated region
      $region65: #{graph_transformer_layer.5} parent=55 // pred_check
        %p400 = pneg %p91
      $region66: #{graph_transformer_layer.5} parent=55 // pred_check_branch
        %402 = sbr.rel (%p400) target = $region68
      $region67: #{graph_transformer_layer.5} parent=55 // pred_region
        %s403 = smul.u32 64, %s19
        %p404 = scmp.lt.s32.totalorder %s403, 127
        %s405 = scalar_select %p404, %s403, 127
        %s406 = smul.addr %s405, 8
        %s407 = scalar_lea.vmem %s2, %s406
        %s408 = smul.u32 64, %s19
      $region68: #{graph_transformer_layer.5} parent=55 // pred_fallthru
        _
    $region56: #{graph_transformer_layer.5} parent=5 // pred_fallthru
      _
    %p409 = scmp.le.s32.totalorder 1, %s19
    %p410 = scmp.lt.s32.totalorder %s19, 3
    %p411 = pnand %p409, %p410
    %p412 = pneg %p411
    // Predicated region
    $region69: #{graph_transformer_layer.5} parent=5 // pred_check
      _
    $region70: #{graph_transformer_layer.5} parent=5 // pred_check_branch
      %414 = sbr.rel (%p411) target = $region72
    $region71: #{graph_transformer_layer.5} parent=5 // pred_region
      %s415 = ssub.s32 %s19, 1
      %s416 = smul.u32 64, %s24
      %p417 = scmp.lt.s32.totalorder %s416, 127
      %s418 = scalar_select %p417, %s416, 127
      %s419 = smul.addr %s418, 8
      %s420 = scalar_lea.vmem %s0, %s419
      %p421 = pneg %p45
      %p422 = pneg %p42
      %s423 = smul.u32 64, %s24
      %p424 = scmp.lt.s32.totalorder %s423, 127
      %s425 = scalar_select %p424, %s423, 127
      %s426 = smul.addr %s425, 8
      %s427 = scalar_lea.vmem %s1, %s426
      %p428 = pneg %p71
      %p429 = pneg %p68
      %s430 = smul.u32 64, %s24
      %p431 = scmp.lt.s32.totalorder %s430, 127
      %s432 = scalar_select %p431, %s430, 127
      %s433 = smul.addr %s432, 8
      %s434 = scalar_lea.vmem %s2, %s433
      %p435 = pneg %p97
      %p436 = pneg %p94
      %p437 = pneg %p118
      %p438 = pneg %p115
      %p439 = pneg %p139
      %p440 = pneg %p136
      %p441 = pneg %p160
      %p442 = pneg %p157
      %p443 = pneg %p181
      %p444 = pneg %p178
      %p445 = pneg %p202
      %p446 = pneg %p199
      %p447 = pneg %p223
      %p448 = pneg %p220
      %p449 = pneg %p244
      %p450 = pneg %p241
      %p451 = pneg %p265
      %p452 = pneg %p262
      %p453 = pneg %p286
      %p454 = pneg %p283
      %p455 = pneg %p307
      %p456 = pneg %p304
      %p457 = pneg %p333
      %p458 = pneg %p330
      %s459 = smul.u32 64, %s24
      %p460 = scmp.lt.s32.totalorder %s459, 127
      %s461 = scalar_select %p460, %s459, 127
      %s462 = smul.addr %s461, 8
      %s463 = scalar_lea.vmem %s13, %s462
      %s464 = smul.u32 64, %s24
      %p465 = scmp.lt.s32.totalorder %s464, 127
      %s466 = scalar_select %p465, %s464, 127
      %s467 = smul.addr %s466, 8
      %s468 = scalar_lea.vmem %s0, %s467
      %s469 = smul.u32 64, %s24
      %s470 = smul.u32 64, %s24
      %p471 = scmp.lt.s32.totalorder %s470, 127
      %s472 = scalar_select %p471, %s470, 127
      %s473 = smul.addr %s472, 8
      %s474 = scalar_lea.vmem %s1, %s473
      %s475 = smul.u32 64, %s24
      %s476 = smul.u32 64, %s24
      %p477 = scmp.lt.s32.totalorder %s476, 127
      %s478 = scalar_select %p477, %s476, 127
      %s479 = smul.addr %s478, 8
      %s480 = scalar_lea.vmem %s2, %s479
      %s481 = smul.u32 64, %s24
      %s482 = smul.u32 64, %s24
      %p483 = scmp.lt.s32.totalorder %s482, 127
      %s484 = scalar_select %p483, %s482, 127
      %s485 = smul.addr %s484, 8
      %s486 = scalar_lea.vmem %s13, %s485
      %s487 = smul.u32 64, %s24
      %v489 = vld [vmem:[%s480] sm:$0xff]
      %v490 = vld [vmem:[%s480 + $0x8] sm:$0xff]
      %v491 = vld [vmem:[%s480 + $0x10] sm:$0xff]
      %v492 = vld [vmem:[%s480 + $0x18] sm:$0xff]
      %v493 = vld [vmem:[%s480 + $0x20] sm:$0xff]
      %v494 = vld [vmem:[%s480 + $0x28] sm:$0xff]
      %v495 = vld [vmem:[%s480 + $0x30] sm:$0xff]
      %v496 = vld [vmem:[%s480 + $0x38] sm:$0xff]
      %v497 = vld [vmem:[%s480 + $0x40] sm:$0xff]
      %v498 = vld [vmem:[%s480 + $0x48] sm:$0xff]
      %v499 = vld [vmem:[%s480 + $0x50] sm:$0xff]
      %v500 = vld [vmem:[%s480 + $0x58] sm:$0xff]
      %v501 = vld [vmem:[%s480 + $0x60] sm:$0xff]
      %v502 = vld [vmem:[%s480 + $0x68] sm:$0xff]
      %v503 = vld [vmem:[%s480 + $0x70] sm:$0xff]
      %v504 = vld [vmem:[%s480 + $0x78] sm:$0xff]
      %v505 = vld [vmem:[%s480 + $0x80] sm:$0xff]
      %v506 = vld [vmem:[%s480 + $0x88] sm:$0xff]
      %v507 = vld [vmem:[%s480 + $0x90] sm:$0xff]
      %v508 = vld [vmem:[%s480 + $0x98] sm:$0xff]
      %v509 = vld [vmem:[%s480 + $0xa0] sm:$0xff]
      %v510 = vld [vmem:[%s480 + $0xa8] sm:$0xff]
      %v511 = vld [vmem:[%s480 + $0xb0] sm:$0xff]
      %v512 = vld [vmem:[%s480 + $0xb8] sm:$0xff]
      %v513 = vld [vmem:[%s480 + $0xc0] sm:$0xff]
      %v514 = vld [vmem:[%s480 + $0xc8] sm:$0xff]
      %v515 = vld [vmem:[%s480 + $0xd0] sm:$0xff]
      %v516 = vld [vmem:[%s480 + $0xd8] sm:$0xff]
      %v517 = vld [vmem:[%s480 + $0xe0] sm:$0xff]
      %v518 = vld [vmem:[%s480 + $0xe8] sm:$0xff]
      %v519 = vld [vmem:[%s480 + $0xf0] sm:$0xff]
      %v520 = vld [vmem:[%s480 + $0xf8] sm:$0xff]
      %v521 = vld [vmem:[%s480 + $0x100] sm:$0xff]
      %v522 = vld [vmem:[%s480 + $0x108] sm:$0xff]
      %v523 = vld [vmem:[%s480 + $0x110] sm:$0xff]
      %v524 = vld [vmem:[%s480 + $0x118] sm:$0xff]
      %v525 = vld [vmem:[%s480 + $0x120] sm:$0xff]
      %v526 = vld [vmem:[%s480 + $0x128] sm:$0xff]
      %v527 = vld [vmem:[%s480 + $0x130] sm:$0xff]
      %v528 = vld [vmem:[%s480 + $0x138] sm:$0xff]
      %v529 = vld [vmem:[%s480 + $0x140] sm:$0xff]
      %v530 = vld [vmem:[%s480 + $0x148] sm:$0xff]
      %v531 = vld [vmem:[%s480 + $0x150] sm:$0xff]
      %v532 = vld [vmem:[%s480 + $0x158] sm:$0xff]
      %v533 = vld [vmem:[%s480 + $0x160] sm:$0xff]
      %v534 = vld [vmem:[%s480 + $0x168] sm:$0xff]
      %v535 = vld [vmem:[%s480 + $0x170] sm:$0xff]
      %v536 = vld [vmem:[%s480 + $0x178] sm:$0xff]
      %v537 = vld [vmem:[%s480 + $0x180] sm:$0xff]
      %v538 = vld [vmem:[%s480 + $0x188] sm:$0xff]
      %v539 = vld [vmem:[%s480 + $0x190] sm:$0xff]
      %v540 = vld [vmem:[%s480 + $0x198] sm:$0xff]
      %v541 = vld [vmem:[%s480 + $0x1a0] sm:$0xff]
      %v542 = vld [vmem:[%s480 + $0x1a8] sm:$0xff]
      %v543 = vld [vmem:[%s480 + $0x1b0] sm:$0xff]
      %v544 = vld [vmem:[%s480 + $0x1b8] sm:$0xff]
      %v545 = vld [vmem:[%s480 + $0x1c0] sm:$0xff]
      %v546 = vld [vmem:[%s480 + $0x1c8] sm:$0xff]
      %v547 = vld [vmem:[%s480 + $0x1d0] sm:$0xff]
      %v548 = vld [vmem:[%s480 + $0x1d8] sm:$0xff]
      %v549 = vld [vmem:[%s480 + $0x1e0] sm:$0xff]
      %v550 = vld [vmem:[%s480 + $0x1e8] sm:$0xff]
      %v551 = vld [vmem:[%s480 + $0x1f0] sm:$0xff]
      %v552 = vld [vmem:[%s480 + $0x1f8] sm:$0xff]
      %v553 = vld [vmem:[%s3] sm:$0x1]
      %v555 = vlaneseq
      %v556 = vshrl.u32 %v555, 7
      %v557 = vsub.s32 0, %v556
      %v558 = vrot.slane %v553, %v557
      %v560 = vmul.f32 %v489, %v558
      %v561 = vmul.f32 %v490, %v558
      %v562 = vmul.f32 %v491, %v558
      %v563 = vmul.f32 %v492, %v558
      %v564 = vmul.f32 %v493, %v558
      %v565 = vmul.f32 %v494, %v558
      %v566 = vmul.f32 %v495, %v558
      %v567 = vmul.f32 %v496, %v558
      %v568 = vmul.f32 %v497, %v558
      %v569 = vmul.f32 %v498, %v558
      %v570 = vmul.f32 %v499, %v558
      %v571 = vmul.f32 %v500, %v558
      %v572 = vmul.f32 %v501, %v558
      %v573 = vmul.f32 %v502, %v558
      %v574 = vmul.f32 %v503, %v558
      %v575 = vmul.f32 %v504, %v558
      %v576 = vmul.f32 %v505, %v558
      %v577 = vmul.f32 %v506, %v558
      %v578 = vmul.f32 %v507, %v558
      %v579 = vmul.f32 %v508, %v558
      %v580 = vmul.f32 %v509, %v558
      %v581 = vmul.f32 %v510, %v558
      %v582 = vmul.f32 %v511, %v558
      %v583 = vmul.f32 %v512, %v558
      %v584 = vmul.f32 %v513, %v558
      %v585 = vmul.f32 %v514, %v558
      %v586 = vmul.f32 %v515, %v558
      %v587 = vmul.f32 %v516, %v558
      %v588 = vmul.f32 %v517, %v558
      %v589 = vmul.f32 %v518, %v558
      %v590 = vmul.f32 %v519, %v558
      %v591 = vmul.f32 %v520, %v558
      %v592 = vmul.f32 %v521, %v558
      %v593 = vmul.f32 %v522, %v558
      %v594 = vmul.f32 %v523, %v558
      %v595 = vmul.f32 %v524, %v558
      %v596 = vmul.f32 %v525, %v558
      %v597 = vmul.f32 %v526, %v558
      %v598 = vmul.f32 %v527, %v558
      %v599 = vmul.f32 %v528, %v558
      %v600 = vmul.f32 %v529, %v558
      %v601 = vmul.f32 %v530, %v558
      %v602 = vmul.f32 %v531, %v558
      %v603 = vmul.f32 %v532, %v558
      %v604 = vmul.f32 %v533, %v558
      %v605 = vmul.f32 %v534, %v558
      %v606 = vmul.f32 %v535, %v558
      %v607 = vmul.f32 %v536, %v558
      %v608 = vmul.f32 %v537, %v558
      %v609 = vmul.f32 %v538, %v558
      %v610 = vmul.f32 %v539, %v558
      %v611 = vmul.f32 %v540, %v558
      %v612 = vmul.f32 %v541, %v558
      %v613 = vmul.f32 %v542, %v558
      %v614 = vmul.f32 %v543, %v558
      %v615 = vmul.f32 %v544, %v558
      %v616 = vmul.f32 %v545, %v558
      %v617 = vmul.f32 %v546, %v558
      %v618 = vmul.f32 %v547, %v558
      %v619 = vmul.f32 %v548, %v558
      %v620 = vmul.f32 %v549, %v558
      %v621 = vmul.f32 %v550, %v558
      %v622 = vmul.f32 %v551, %v558
      %v623 = vmul.f32 %v552, %v558
      %v624 = vld [vmem:[%s4] sm:$0x1]
      %v626 = vlaneseq
      %v627 = vshrl.u32 %v626, 7
      %v628 = vsub.s32 0, %v627
      %v629 = vrot.slane %v624, %v628
      %v631 = vadd.f32 %v560, %v629
      %v632 = vadd.f32 %v561, %v629
      %v633 = vadd.f32 %v562, %v629
      %v634 = vadd.f32 %v563, %v629
      %v635 = vadd.f32 %v564, %v629
      %v636 = vadd.f32 %v565, %v629
      %v637 = vadd.f32 %v566, %v629
      %v638 = vadd.f32 %v567, %v629
      %v639 = vadd.f32 %v568, %v629
      %v640 = vadd.f32 %v569, %v629
      %v641 = vadd.f32 %v570, %v629
      %v642 = vadd.f32 %v571, %v629
      %v643 = vadd.f32 %v572, %v629
      %v644 = vadd.f32 %v573, %v629
      %v645 = vadd.f32 %v574, %v629
      %v646 = vadd.f32 %v575, %v629
      %v647 = vadd.f32 %v576, %v629
      %v648 = vadd.f32 %v577, %v629
      %v649 = vadd.f32 %v578, %v629
      %v650 = vadd.f32 %v579, %v629
      %v651 = vadd.f32 %v580, %v629
      %v652 = vadd.f32 %v581, %v629
      %v653 = vadd.f32 %v582, %v629
      %v654 = vadd.f32 %v583, %v629
      %v655 = vadd.f32 %v584, %v629
      %v656 = vadd.f32 %v585, %v629
      %v657 = vadd.f32 %v586, %v629
      %v658 = vadd.f32 %v587, %v629
      %v659 = vadd.f32 %v588, %v629
      %v660 = vadd.f32 %v589, %v629
      %v661 = vadd.f32 %v590, %v629
      %v662 = vadd.f32 %v591, %v629
      %v663 = vadd.f32 %v592, %v629
      %v664 = vadd.f32 %v593, %v629
      %v665 = vadd.f32 %v594, %v629
      %v666 = vadd.f32 %v595, %v629
      %v667 = vadd.f32 %v596, %v629
      %v668 = vadd.f32 %v597, %v629
      %v669 = vadd.f32 %v598, %v629
      %v670 = vadd.f32 %v599, %v629
      %v671 = vadd.f32 %v600, %v629
      %v672 = vadd.f32 %v601, %v629
      %v673 = vadd.f32 %v602, %v629
      %v674 = vadd.f32 %v603, %v629
      %v675 = vadd.f32 %v604, %v629
      %v676 = vadd.f32 %v605, %v629
      %v677 = vadd.f32 %v606, %v629
      %v678 = vadd.f32 %v607, %v629
      %v679 = vadd.f32 %v608, %v629
      %v680 = vadd.f32 %v609, %v629
      %v681 = vadd.f32 %v610, %v629
      %v682 = vadd.f32 %v611, %v629
      %v683 = vadd.f32 %v612, %v629
      %v684 = vadd.f32 %v613, %v629
      %v685 = vadd.f32 %v614, %v629
      %v686 = vadd.f32 %v615, %v629
      %v687 = vadd.f32 %v616, %v629
      %v688 = vadd.f32 %v617, %v629
      %v689 = vadd.f32 %v618, %v629
      %v690 = vadd.f32 %v619, %v629
      %v691 = vadd.f32 %v620, %v629
      %v692 = vadd.f32 %v621, %v629
      %v693 = vadd.f32 %v622, %v629
      %v694 = vadd.f32 %v623, %v629
      %v695 = vld [vmem:[%s468] sm:$0xff]
      %v696 = vld [vmem:[%s468 + $0x8] sm:$0xff]
      %v697 = vld [vmem:[%s468 + $0x10] sm:$0xff]
      %v698 = vld [vmem:[%s468 + $0x18] sm:$0xff]
      %v699 = vld [vmem:[%s468 + $0x20] sm:$0xff]
      %v700 = vld [vmem:[%s468 + $0x28] sm:$0xff]
      %v701 = vld [vmem:[%s468 + $0x30] sm:$0xff]
      %v702 = vld [vmem:[%s468 + $0x38] sm:$0xff]
      %v703 = vld [vmem:[%s468 + $0x40] sm:$0xff]
      %v704 = vld [vmem:[%s468 + $0x48] sm:$0xff]
      %v705 = vld [vmem:[%s468 + $0x50] sm:$0xff]
      %v706 = vld [vmem:[%s468 + $0x58] sm:$0xff]
      %v707 = vld [vmem:[%s468 + $0x60] sm:$0xff]
      %v708 = vld [vmem:[%s468 + $0x68] sm:$0xff]
      %v709 = vld [vmem:[%s468 + $0x70] sm:$0xff]
      %v710 = vld [vmem:[%s468 + $0x78] sm:$0xff]
      %v711 = vld [vmem:[%s468 + $0x80] sm:$0xff]
      %v712 = vld [vmem:[%s468 + $0x88] sm:$0xff]
      %v713 = vld [vmem:[%s468 + $0x90] sm:$0xff]
      %v714 = vld [vmem:[%s468 + $0x98] sm:$0xff]
      %v715 = vld [vmem:[%s468 + $0xa0] sm:$0xff]
      %v716 = vld [vmem:[%s468 + $0xa8] sm:$0xff]
      %v717 = vld [vmem:[%s468 + $0xb0] sm:$0xff]
      %v718 = vld [vmem:[%s468 + $0xb8] sm:$0xff]
      %v719 = vld [vmem:[%s468 + $0xc0] sm:$0xff]
      %v720 = vld [vmem:[%s468 + $0xc8] sm:$0xff]
      %v721 = vld [vmem:[%s468 + $0xd0] sm:$0xff]
      %v722 = vld [vmem:[%s468 + $0xd8] sm:$0xff]
      %v723 = vld [vmem:[%s468 + $0xe0] sm:$0xff]
      %v724 = vld [vmem:[%s468 + $0xe8] sm:$0xff]
      %v725 = vld [vmem:[%s468 + $0xf0] sm:$0xff]
      %v726 = vld [vmem:[%s468 + $0xf8] sm:$0xff]
      %v727 = vld [vmem:[%s468 + $0x100] sm:$0xff]
      %v728 = vld [vmem:[%s468 + $0x108] sm:$0xff]
      %v729 = vld [vmem:[%s468 + $0x110] sm:$0xff]
      %v730 = vld [vmem:[%s468 + $0x118] sm:$0xff]
      %v731 = vld [vmem:[%s468 + $0x120] sm:$0xff]
      %v732 = vld [vmem:[%s468 + $0x128] sm:$0xff]
      %v733 = vld [vmem:[%s468 + $0x130] sm:$0xff]
      %v734 = vld [vmem:[%s468 + $0x138] sm:$0xff]
      %v735 = vld [vmem:[%s468 + $0x140] sm:$0xff]
      %v736 = vld [vmem:[%s468 + $0x148] sm:$0xff]
      %v737 = vld [vmem:[%s468 + $0x150] sm:$0xff]
      %v738 = vld [vmem:[%s468 + $0x158] sm:$0xff]
      %v739 = vld [vmem:[%s468 + $0x160] sm:$0xff]
      %v740 = vld [vmem:[%s468 + $0x168] sm:$0xff]
      %v741 = vld [vmem:[%s468 + $0x170] sm:$0xff]
      %v742 = vld [vmem:[%s468 + $0x178] sm:$0xff]
      %v743 = vld [vmem:[%s468 + $0x180] sm:$0xff]
      %v744 = vld [vmem:[%s468 + $0x188] sm:$0xff]
      %v745 = vld [vmem:[%s468 + $0x190] sm:$0xff]
      %v746 = vld [vmem:[%s468 + $0x198] sm:$0xff]
      %v747 = vld [vmem:[%s468 + $0x1a0] sm:$0xff]
      %v748 = vld [vmem:[%s468 + $0x1a8] sm:$0xff]
      %v749 = vld [vmem:[%s468 + $0x1b0] sm:$0xff]
      %v750 = vld [vmem:[%s468 + $0x1b8] sm:$0xff]
      %v751 = vld [vmem:[%s468 + $0x1c0] sm:$0xff]
      %v752 = vld [vmem:[%s468 + $0x1c8] sm:$0xff]
      %v753 = vld [vmem:[%s468 + $0x1d0] sm:$0xff]
      %v754 = vld [vmem:[%s468 + $0x1d8] sm:$0xff]
      %v755 = vld [vmem:[%s468 + $0x1e0] sm:$0xff]
      %v756 = vld [vmem:[%s468 + $0x1e8] sm:$0xff]
      %v757 = vld [vmem:[%s468 + $0x1f0] sm:$0xff]
      %v758 = vld [vmem:[%s468 + $0x1f8] sm:$0xff]
      %v759 = vld [vmem:[%s474] sm:$0xff]
      %v760 = vld [vmem:[%s474 + $0x8] sm:$0xff]
      %v761 = vld [vmem:[%s474 + $0x10] sm:$0xff]
      %v762 = vld [vmem:[%s474 + $0x18] sm:$0xff]
      %v763 = vld [vmem:[%s474 + $0x20] sm:$0xff]
      %v764 = vld [vmem:[%s474 + $0x28] sm:$0xff]
      %v765 = vld [vmem:[%s474 + $0x30] sm:$0xff]
      %v766 = vld [vmem:[%s474 + $0x38] sm:$0xff]
      %v767 = vld [vmem:[%s474 + $0x40] sm:$0xff]
      %v768 = vld [vmem:[%s474 + $0x48] sm:$0xff]
      %v769 = vld [vmem:[%s474 + $0x50] sm:$0xff]
      %v770 = vld [vmem:[%s474 + $0x58] sm:$0xff]
      %v771 = vld [vmem:[%s474 + $0x60] sm:$0xff]
      %v772 = vld [vmem:[%s474 + $0x68] sm:$0xff]
      %v773 = vld [vmem:[%s474 + $0x70] sm:$0xff]
      %v774 = vld [vmem:[%s474 + $0x78] sm:$0xff]
      %v775 = vld [vmem:[%s474 + $0x80] sm:$0xff]
      %v776 = vld [vmem:[%s474 + $0x88] sm:$0xff]
      %v777 = vld [vmem:[%s474 + $0x90] sm:$0xff]
      %v778 = vld [vmem:[%s474 + $0x98] sm:$0xff]
      %v779 = vld [vmem:[%s474 + $0xa0] sm:$0xff]
      %v780 = vld [vmem:[%s474 + $0xa8] sm:$0xff]
      %v781 = vld [vmem:[%s474 + $0xb0] sm:$0xff]
      %v782 = vld [vmem:[%s474 + $0xb8] sm:$0xff]
      %v783 = vld [vmem:[%s474 + $0xc0] sm:$0xff]
      %v784 = vld [vmem:[%s474 + $0xc8] sm:$0xff]
      %v785 = vld [vmem:[%s474 + $0xd0] sm:$0xff]
      %v786 = vld [vmem:[%s474 + $0xd8] sm:$0xff]
      %v787 = vld [vmem:[%s474 + $0xe0] sm:$0xff]
      %v788 = vld [vmem:[%s474 + $0xe8] sm:$0xff]
      %v789 = vld [vmem:[%s474 + $0xf0] sm:$0xff]
      %v790 = vld [vmem:[%s474 + $0xf8] sm:$0xff]
      %v791 = vld [vmem:[%s474 + $0x100] sm:$0xff]
      %v792 = vld [vmem:[%s474 + $0x108] sm:$0xff]
      %v793 = vld [vmem:[%s474 + $0x110] sm:$0xff]
      %v794 = vld [vmem:[%s474 + $0x118] sm:$0xff]
      %v795 = vld [vmem:[%s474 + $0x120] sm:$0xff]
      %v796 = vld [vmem:[%s474 + $0x128] sm:$0xff]
      %v797 = vld [vmem:[%s474 + $0x130] sm:$0xff]
      %v798 = vld [vmem:[%s474 + $0x138] sm:$0xff]
      %v799 = vld [vmem:[%s474 + $0x140] sm:$0xff]
      %v800 = vld [vmem:[%s474 + $0x148] sm:$0xff]
      %v801 = vld [vmem:[%s474 + $0x150] sm:$0xff]
      %v802 = vld [vmem:[%s474 + $0x158] sm:$0xff]
      %v803 = vld [vmem:[%s474 + $0x160] sm:$0xff]
      %v804 = vld [vmem:[%s474 + $0x168] sm:$0xff]
      %v805 = vld [vmem:[%s474 + $0x170] sm:$0xff]
      %v806 = vld [vmem:[%s474 + $0x178] sm:$0xff]
      %v807 = vld [vmem:[%s474 + $0x180] sm:$0xff]
      %v808 = vld [vmem:[%s474 + $0x188] sm:$0xff]
      %v809 = vld [vmem:[%s474 + $0x190] sm:$0xff]
      %v810 = vld [vmem:[%s474 + $0x198] sm:$0xff]
      %v811 = vld [vmem:[%s474 + $0x1a0] sm:$0xff]
      %v812 = vld [vmem:[%s474 + $0x1a8] sm:$0xff]
      %v813 = vld [vmem:[%s474 + $0x1b0] sm:$0xff]
      %v814 = vld [vmem:[%s474 + $0x1b8] sm:$0xff]
      %v815 = vld [vmem:[%s474 + $0x1c0] sm:$0xff]
      %v816 = vld [vmem:[%s474 + $0x1c8] sm:$0xff]
      %v817 = vld [vmem:[%s474 + $0x1d0] sm:$0xff]
      %v818 = vld [vmem:[%s474 + $0x1d8] sm:$0xff]
      %v819 = vld [vmem:[%s474 + $0x1e0] sm:$0xff]
      %v820 = vld [vmem:[%s474 + $0x1e8] sm:$0xff]
      %v821 = vld [vmem:[%s474 + $0x1f0] sm:$0xff]
      %v822 = vld [vmem:[%s474 + $0x1f8] sm:$0xff]
      %v823 = vadd.f32 %v759, 1e-06
      %v824 = vadd.f32 %v760, 1e-06
      %v825 = vadd.f32 %v761, 1e-06
      %v826 = vadd.f32 %v762, 1e-06
      %v827 = vadd.f32 %v763, 1e-06
      %v828 = vadd.f32 %v764, 1e-06
      %v829 = vadd.f32 %v765, 1e-06
      %v830 = vadd.f32 %v766, 1e-06
      %v831 = vadd.f32 %v767, 1e-06
      %v832 = vadd.f32 %v768, 1e-06
      %v833 = vadd.f32 %v769, 1e-06
      %v834 = vadd.f32 %v770, 1e-06
      %v835 = vadd.f32 %v771, 1e-06
      %v836 = vadd.f32 %v772, 1e-06
      %v837 = vadd.f32 %v773, 1e-06
      %v838 = vadd.f32 %v774, 1e-06
      %v839 = vadd.f32 %v775, 1e-06
      %v840 = vadd.f32 %v776, 1e-06
      %v841 = vadd.f32 %v777, 1e-06
      %v842 = vadd.f32 %v778, 1e-06
      %v843 = vadd.f32 %v779, 1e-06
      %v844 = vadd.f32 %v780, 1e-06
      %v845 = vadd.f32 %v781, 1e-06
      %v846 = vadd.f32 %v782, 1e-06
      %v847 = vadd.f32 %v783, 1e-06
      %v848 = vadd.f32 %v784, 1e-06
      %v849 = vadd.f32 %v785, 1e-06
      %v850 = vadd.f32 %v786, 1e-06
      %v851 = vadd.f32 %v787, 1e-06
      %v852 = vadd.f32 %v788, 1e-06
      %v853 = vadd.f32 %v789, 1e-06
      %v854 = vadd.f32 %v790, 1e-06
      %v855 = vadd.f32 %v791, 1e-06
      %v856 = vadd.f32 %v792, 1e-06
      %v857 = vadd.f32 %v793, 1e-06
      %v858 = vadd.f32 %v794, 1e-06
      %v859 = vadd.f32 %v795, 1e-06
      %v860 = vadd.f32 %v796, 1e-06
      %v861 = vadd.f32 %v797, 1e-06
      %v862 = vadd.f32 %v798, 1e-06
      %v863 = vadd.f32 %v799, 1e-06
      %v864 = vadd.f32 %v800, 1e-06
      %v865 = vadd.f32 %v801, 1e-06
      %v866 = vadd.f32 %v802, 1e-06
      %v867 = vadd.f32 %v803, 1e-06
      %v868 = vadd.f32 %v804, 1e-06
      %v869 = vadd.f32 %v805, 1e-06
      %v870 = vadd.f32 %v806, 1e-06
      %v871 = vadd.f32 %v807, 1e-06
      %v872 = vadd.f32 %v808, 1e-06
      %v873 = vadd.f32 %v809, 1e-06
      %v874 = vadd.f32 %v810, 1e-06
      %v875 = vadd.f32 %v811, 1e-06
      %v876 = vadd.f32 %v812, 1e-06
      %v877 = vadd.f32 %v813, 1e-06
      %v878 = vadd.f32 %v814, 1e-06
      %v879 = vadd.f32 %v815, 1e-06
      %v880 = vadd.f32 %v816, 1e-06
      %v881 = vadd.f32 %v817, 1e-06
      %v882 = vadd.f32 %v818, 1e-06
      %v883 = vadd.f32 %v819, 1e-06
      %v884 = vadd.f32 %v820, 1e-06
      %v885 = vadd.f32 %v821, 1e-06
      %v886 = vadd.f32 %v822, 1e-06
      %v887 = vrcp.pop %v823
      %v888 = vrcp.pop %v824
      %v889 = vrcp.pop %v825
      %v890 = vrcp.pop %v826
      %v891 = vrcp.pop %v827
      %v892 = vrcp.pop %v828
      %v893 = vrcp.pop %v829
      %v894 = vrcp.pop %v830
      %v895 = vrcp.pop %v831
      %v896 = vrcp.pop %v832
      %v897 = vrcp.pop %v833
      %v898 = vrcp.pop %v834
      %v899 = vrcp.pop %v835
      %v900 = vrcp.pop %v836
      %v901 = vrcp.pop %v837
      %v902 = vrcp.pop %v838
      %v903 = vrcp.pop %v839
      %v904 = vrcp.pop %v840
      %v905 = vrcp.pop %v841
      %v906 = vrcp.pop %v842
      %v907 = vrcp.pop %v843
      %v908 = vrcp.pop %v844
      %v909 = vrcp.pop %v845
      %v910 = vrcp.pop %v846
      %v911 = vrcp.pop %v847
      %v912 = vrcp.pop %v848
      %v913 = vrcp.pop %v849
      %v914 = vrcp.pop %v850
      %v915 = vrcp.pop %v851
      %v916 = vrcp.pop %v852
      %v917 = vrcp.pop %v853
      %v918 = vrcp.pop %v854
      %v919 = vrcp.pop %v855
      %v920 = vrcp.pop %v856
      %v921 = vrcp.pop %v857
      %v922 = vrcp.pop %v858
      %v923 = vrcp.pop %v859
      %v924 = vrcp.pop %v860
      %v925 = vrcp.pop %v861
      %v926 = vrcp.pop %v862
      %v927 = vrcp.pop %v863
      %v928 = vrcp.pop %v864
      %v929 = vrcp.pop %v865
      %v930 = vrcp.pop %v866
      %v931 = vrcp.pop %v867
      %v932 = vrcp.pop %v868
      %v933 = vrcp.pop %v869
      %v934 = vrcp.pop %v870
      %v935 = vrcp.pop %v871
      %v936 = vrcp.pop %v872
      %v937 = vrcp.pop %v873
      %v938 = vrcp.pop %v874
      %v939 = vrcp.pop %v875
      %v940 = vrcp.pop %v876
      %v941 = vrcp.pop %v877
      %v942 = vrcp.pop %v878
      %v943 = vrcp.pop %v879
      %v944 = vrcp.pop %v880
      %v945 = vrcp.pop %v881
      %v946 = vrcp.pop %v882
      %v947 = vrcp.pop %v883
      %v948 = vrcp.pop %v884
      %v949 = vrcp.pop %v885
      %v950 = vrcp.pop %v886
      %v951 = vmul.f32 %v695, %v887
      %v952 = vmul.f32 %v696, %v888
      %v953 = vmul.f32 %v697, %v889
      %v954 = vmul.f32 %v698, %v890
      %v955 = vmul.f32 %v699, %v891
      %v956 = vmul.f32 %v700, %v892
      %v957 = vmul.f32 %v701, %v893
      %v958 = vmul.f32 %v702, %v894
      %v959 = vmul.f32 %v703, %v895
      %v960 = vmul.f32 %v704, %v896
      %v961 = vmul.f32 %v705, %v897
      %v962 = vmul.f32 %v706, %v898
      %v963 = vmul.f32 %v707, %v899
      %v964 = vmul.f32 %v708, %v900
      %v965 = vmul.f32 %v709, %v901
      %v966 = vmul.f32 %v710, %v902
      %v967 = vmul.f32 %v711, %v903
      %v968 = vmul.f32 %v712, %v904
      %v969 = vmul.f32 %v713, %v905
      %v970 = vmul.f32 %v714, %v906
      %v971 = vmul.f32 %v715, %v907
      %v972 = vmul.f32 %v716, %v908
      %v973 = vmul.f32 %v717, %v909
      %v974 = vmul.f32 %v718, %v910
      %v975 = vmul.f32 %v719, %v911
      %v976 = vmul.f32 %v720, %v912
      %v977 = vmul.f32 %v721, %v913
      %v978 = vmul.f32 %v722, %v914
      %v979 = vmul.f32 %v723, %v915
      %v980 = vmul.f32 %v724, %v916
      %v981 = vmul.f32 %v725, %v917
      %v982 = vmul.f32 %v726, %v918
      %v983 = vmul.f32 %v727, %v919
      %v984 = vmul.f32 %v728, %v920
      %v985 = vmul.f32 %v729, %v921
      %v986 = vmul.f32 %v730, %v922
      %v987 = vmul.f32 %v731, %v923
      %v988 = vmul.f32 %v732, %v924
      %v989 = vmul.f32 %v733, %v925
      %v990 = vmul.f32 %v734, %v926
      %v991 = vmul.f32 %v735, %v927
      %v992 = vmul.f32 %v736, %v928
      %v993 = vmul.f32 %v737, %v929
      %v994 = vmul.f32 %v738, %v930
      %v995 = vmul.f32 %v739, %v931
      %v996 = vmul.f32 %v740, %v932
      %v997 = vmul.f32 %v741, %v933
      %v998 = vmul.f32 %v742, %v934
      %v999 = vmul.f32 %v743, %v935
      %v1000 = vmul.f32 %v744, %v936
      %v1001 = vmul.f32 %v745, %v937
      %v1002 = vmul.f32 %v746, %v938
      %v1003 = vmul.f32 %v747, %v939
      %v1004 = vmul.f32 %v748, %v940
      %v1005 = vmul.f32 %v749, %v941
      %v1006 = vmul.f32 %v750, %v942
      %v1007 = vmul.f32 %v751, %v943
      %v1008 = vmul.f32 %v752, %v944
      %v1009 = vmul.f32 %v753, %v945
      %v1010 = vmul.f32 %v754, %v946
      %v1011 = vmul.f32 %v755, %v947
      %v1012 = vmul.f32 %v756, %v948
      %v1013 = vmul.f32 %v757, %v949
      %v1014 = vmul.f32 %v758, %v950
      %v1015 = vpack.c.bf16 %v952, %v951
      %v1016 = vpack.c.bf16 %v954, %v953
      %v1017 = vpack.c.bf16 %v956, %v955
      %v1018 = vpack.c.bf16 %v958, %v957
      %v1019 = vpack.c.bf16 %v960, %v959
      %v1020 = vpack.c.bf16 %v962, %v961
      %v1021 = vpack.c.bf16 %v964, %v963
      %v1022 = vpack.c.bf16 %v966, %v965
      %v1023 = vpack.c.bf16 %v968, %v967
      %v1024 = vpack.c.bf16 %v970, %v969
      %v1025 = vpack.c.bf16 %v972, %v971
      %v1026 = vpack.c.bf16 %v974, %v973
      %v1027 = vpack.c.bf16 %v976, %v975
      %v1028 = vpack.c.bf16 %v978, %v977
      %v1029 = vpack.c.bf16 %v980, %v979
      %v1030 = vpack.c.bf16 %v982, %v981
      %v1031 = vpack.c.bf16 %v984, %v983
      %v1032 = vpack.c.bf16 %v986, %v985
      %v1033 = vpack.c.bf16 %v988, %v987
      %v1034 = vpack.c.bf16 %v990, %v989
      %v1035 = vpack.c.bf16 %v992, %v991
      %v1036 = vpack.c.bf16 %v994, %v993
      %v1037 = vpack.c.bf16 %v996, %v995
      %v1038 = vpack.c.bf16 %v998, %v997
      %v1039 = vpack.c.bf16 %v1000, %v999
      %v1040 = vpack.c.bf16 %v1002, %v1001
      %v1041 = vpack.c.bf16 %v1004, %v1003
      %v1042 = vpack.c.bf16 %v1006, %v1005
      %v1043 = vpack.c.bf16 %v1008, %v1007
      %v1044 = vpack.c.bf16 %v1010, %v1009
      %v1045 = vpack.c.bf16 %v1012, %v1011
      %v1046 = vpack.c.bf16 %v1014, %v1013
      %v1047 = vld [vmem:[%s5] sm:$0xf]
      %v1048 = vld [vmem:[%s5 + $0x4] sm:$0xf]
      %v1049 = vld [vmem:[%s5 + $0x8] sm:$0xf]
      %v1050 = vld [vmem:[%s5 + $0xc] sm:$0xf]
      %v1051 = vld [vmem:[%s5 + $0x10] sm:$0xf]
      %v1052 = vld [vmem:[%s5 + $0x14] sm:$0xf]
      %v1053 = vld [vmem:[%s5 + $0x18] sm:$0xf]
      %v1054 = vld [vmem:[%s5 + $0x1c] sm:$0xf]
      %v1055 = vld [vmem:[%s5 + $0x20] sm:$0xf]
      %v1056 = vld [vmem:[%s5 + $0x24] sm:$0xf]
      %v1057 = vld [vmem:[%s5 + $0x28] sm:$0xf]
      %v1058 = vld [vmem:[%s5 + $0x2c] sm:$0xf]
      %v1059 = vld [vmem:[%s5 + $0x30] sm:$0xf]
      %v1060 = vld [vmem:[%s5 + $0x34] sm:$0xf]
      %v1061 = vld [vmem:[%s5 + $0x38] sm:$0xf]
      %v1062 = vld [vmem:[%s5 + $0x3c] sm:$0xf]
      %v1063 = vld [vmem:[%s6] sm:$0x1]
      %v1065 = vlaneseq
      %v1066 = vshrl.u32 %v1065, 7
      %v1067 = vsub.s32 0, %v1066
      %v1068 = vrot.slane %v1063, %v1067
      %v1086 = vunpack.c.l.b16 %v1047
      %v1087 = vunpack.c.l.b16 %v1048
      %v1088 = vunpack.c.l.b16 %v1049
      %v1089 = vunpack.c.l.b16 %v1050
      %v1090 = vunpack.c.l.b16 %v1051
      %v1091 = vunpack.c.l.b16 %v1052
      %v1092 = vunpack.c.l.b16 %v1053
      %v1093 = vunpack.c.l.b16 %v1054
      %v1094 = vunpack.c.l.b16 %v1055
      %v1095 = vunpack.c.l.b16 %v1056
      %v1096 = vunpack.c.l.b16 %v1057
      %v1097 = vunpack.c.l.b16 %v1058
      %v1098 = vunpack.c.l.b16 %v1059
      %v1099 = vunpack.c.l.b16 %v1060
      %v1100 = vunpack.c.l.b16 %v1061
      %v1101 = vunpack.c.l.b16 %v1062
      %v1102 = vpack.c.b16 %v1087, %v1086
      %v1103 = vpack.c.b16 %v1089, %v1088
      %v1104 = vpack.c.b16 %v1091, %v1090
      %v1105 = vpack.c.b16 %v1093, %v1092
      %v1106 = vpack.c.b16 %v1095, %v1094
      %v1107 = vpack.c.b16 %v1097, %v1096
      %v1108 = vpack.c.b16 %v1099, %v1098
      %v1109 = vpack.c.b16 %v1101, %v1100
      %1118 = vmatprep.subr.bf16.mxu0 0
      %1119 = vmatpush1.bf16.msra.mxu0 %v1102
      %1120 = vmatprep.subr.bf16.mxu0 0
      %1121 = vmatpush1.bf16.msra.mxu0 %v1103
      %1122 = vmatprep.subr.bf16.mxu0 0
      %1123 = vmatpush1.bf16.msra.mxu0 %v1104
      %1124 = vmatprep.subr.bf16.mxu0 0
      %1125 = vmatpush1.bf16.msra.mxu0 %v1105
      %1126 = vmatprep.subr.bf16.mxu0 0
      %1127 = vmatpush1.bf16.msra.mxu0 %v1106
      %1128 = vmatprep.subr.bf16.mxu0 0
      %1129 = vmatpush1.bf16.msra.mxu0 %v1107
      %1130 = vmatprep.subr.bf16.mxu0 0
      %1131 = vmatpush1.bf16.msra.mxu0 %v1108
      %1132 = vmatprep.subr.bf16.mxu0 0
      %1133 = vmatpush1.bf16.msra.mxu0 %v1109
      %1134 = vmatprep.subr.bf16.mxu0 0
      %1135 = vmatpush1.bf16.msra.mxu0 0
      %1136 = vmatprep.subr.bf16.mxu0 0
      %1137 = vmatpush1.bf16.msra.mxu0 0
      %1138 = vmatprep.subr.bf16.mxu0 0
      %1139 = vmatpush1.bf16.msra.mxu0 0
      %1140 = vmatprep.subr.bf16.mxu0 0
      %1141 = vmatpush1.bf16.msra.mxu0 0
      %1142 = vmatprep.subr.bf16.mxu0 0
      %1143 = vmatpush1.bf16.msra.mxu0 0
      %1144 = vmatprep.subr.bf16.mxu0 0
      %1145 = vmatpush1.bf16.msra.mxu0 0
      %1146 = vmatprep.subr.bf16.mxu0 0
      %1147 = vmatpush1.bf16.msra.mxu0 0
      %1148 = vmatprep.subr.bf16.mxu0 0
      %1149 = vmatpush1.bf16.msra.mxu0 0
      %1150 = vmatprep.mubr.bf16.mxu0 0
      %1151 = vmatmul.mubr.bf16.gmra.mrb[0].mxu0 %v1015
      %v1152 = vpop.f32.mrb[0].mxu0
      %v1153 = vadd.f32 %v1068, %v1152
      %v1154 = vpop.f32.mrb[0].mxu0
      %v1155 = vpop.f32.mrb[0].mxu0
      %v1156 = vadd.f32 %v1068, %v1155
      %v1157 = vpop.f32.mrb[0].mxu0
      %1158 = vmatprep.mubr.bf16.mxu0 0
      %1159 = vmatmul.mubr.bf16.gmra.mrb[0].mxu0 %v1016
      %v1160 = vpop.f32.mrb[0].mxu0
      %v1161 = vadd.f32 %v1068, %v1160
      %v1162 = vpop.f32.mrb[0].mxu0
      %v1163 = vpop.f32.mrb[0].mxu0
      %v1164 = vadd.f32 %v1068, %v1163
      %v1165 = vpop.f32.mrb[0].mxu0
      %1166 = vmatprep.mubr.bf16.mxu0 0
      %1167 = vmatmul.mubr.bf16.gmra.mrb[0].mxu0 %v1017
      %v1168 = vpop.f32.mrb[0].mxu0
      %v1169 = vadd.f32 %v1068, %v1168
      %v1170 = vpop.f32.mrb[0].mxu0
      %v1171 = vpop.f32.mrb[0].mxu0
      %v1172 = vadd.f32 %v1068, %v1171
      %v1173 = vpop.f32.mrb[0].mxu0
      %1174 = vmatprep.mubr.bf16.mxu0 0
      %1175 = vmatmul.mubr.bf16.gmra.mrb[0].mxu0 %v1018
      %v1176 = vpop.f32.mrb[0].mxu0
      %v1177 = vadd.f32 %v1068, %v1176
      %v1178 = vpop.f32.mrb[0].mxu0
      %v1179 = vpop.f32.mrb[0].mxu0
      %v1180 = vadd.f32 %v1068, %v1179
      %v1181 = vpop.f32.mrb[0].mxu0
      %1182 = vmatprep.mubr.bf16.mxu0 0
      %1183 = vmatmul.mubr.bf16.gmra.mrb[0].mxu0 %v1019
      %v1184 = vpop.f32.mrb[0].mxu0
      %v1185 = vadd.f32 %v1068, %v1184
      %v1186 = vpop.f32.mrb[0].mxu0
      %v1187 = vpop.f32.mrb[0].mxu0
      %v1188 = vadd.f32 %v1068, %v1187
      %v1189 = vpop.f32.mrb[0].mxu0
      %1190 = vmatprep.mubr.bf16.mxu0 0
      %1191 = vmatmul.mubr.bf16.gmra.mrb[0].mxu0 %v1020
      %v1192 = vpop.f32.mrb[0].mxu0
      %v1193 = vadd.f32 %v1068, %v1192
      %v1194 = vpop.f32.mrb[0].mxu0
      %v1195 = vpop.f32.mrb[0].mxu0
      %v1196 = vadd.f32 %v1068, %v1195
      %v1197 = vpop.f32.mrb[0].mxu0
      %1198 = vmatprep.mubr.bf16.mxu0 0
      %1199 = vmatmul.mubr.bf16.gmra.mrb[0].mxu0 %v1021
      %v1200 = vpop.f32.mrb[0].mxu0
      %v1201 = vadd.f32 %v1068, %v1200
      %v1202 = vpop.f32.mrb[0].mxu0
      %v1203 = vpop.f32.mrb[0].mxu0
      %v1204 = vadd.f32 %v1068, %v1203
      %v1205 = vpop.f32.mrb[0].mxu0
      %1206 = vmatprep.mubr.bf16.mxu0 0
      %1207 = vmatmul.mubr.bf16.gmra.mrb[0].mxu0 %v1022
      %v1208 = vpop.f32.mrb[0].mxu0
      %v1209 = vadd.f32 %v1068, %v1208
      %v1210 = vpop.f32.mrb[0].mxu0
      %v1211 = vpop.f32.mrb[0].mxu0
      %v1212 = vadd.f32 %v1068, %v1211
      %v1213 = vpop.f32.mrb[0].mxu0
      %1214 = vmatprep.mubr.bf16.mxu0 0
      %1215 = vmatmul.mubr.bf16.gmra.mrb[0].mxu0 %v1023
      %v1216 = vpop.f32.mrb[0].mxu0
      %v1217 = vadd.f32 %v1068, %v1216
      %v1218 = vpop.f32.mrb[0].mxu0
      %v1219 = vpop.f32.mrb[0].mxu0
      %v1220 = vadd.f32 %v1068, %v1219
      %v1221 = vpop.f32.mrb[0].mxu0
      %1222 = vmatprep.mubr.bf16.mxu0 0
      %1223 = vmatmul.mubr.bf16.gmra.mrb[0].mxu0 %v1024
      %v1224 = vpop.f32.mrb[0].mxu0
      %v1225 = vadd.f32 %v1068, %v1224
      %v1226 = vpop.f32.mrb[0].mxu0
      %v1227 = vpop.f32.mrb[0].mxu0
      %v1228 = vadd.f32 %v1068, %v1227
      %v1229 = vpop.f32.mrb[0].mxu0
      %1230 = vmatprep.mubr.bf16.mxu0 0
      %1231 = vmatmul.mubr.bf16.gmra.mrb[0].mxu0 %v1025
      %v1232 = vpop.f32.mrb[0].mxu0
      %v1233 = vadd.f32 %v1068, %v1232
      %v1234 = vpop.f32.mrb[0].mxu0
      %v1235 = vpop.f32.mrb[0].mxu0
      %v1236 = vadd.f32 %v1068, %v1235
      %v1237 = vpop.f32.mrb[0].mxu0
      %1238 = vmatprep.mubr.bf16.mxu0 0
      %1239 = vmatmul.mubr.bf16.gmra.mrb[0].mxu0 %v1026
      %v1240 = vpop.f32.mrb[0].mxu0
      %v1241 = vadd.f32 %v1068, %v1240
      %v1242 = vpop.f32.mrb[0].mxu0
      %v1243 = vpop.f32.mrb[0].mxu0
      %v1244 = vadd.f32 %v1068, %v1243
      %v1245 = vpop.f32.mrb[0].mxu0
      %1246 = vmatprep.mubr.bf16.mxu0 0
      %1247 = vmatmul.mubr.bf16.gmra.mrb[0].mxu0 %v1027
      %v1248 = vpop.f32.mrb[0].mxu0
      %v1249 = vadd.f32 %v1068, %v1248
      %v1250 = vpop.f32.mrb[0].mxu0
      %v1251 = vpop.f32.mrb[0].mxu0
      %v1252 = vadd.f32 %v1068, %v1251
      %v1253 = vpop.f32.mrb[0].mxu0
      %1254 = vmatprep.mubr.bf16.mxu0 0
      %1255 = vmatmul.mubr.bf16.gmra.mrb[0].mxu0 %v1028
      %v1256 = vpop.f32.mrb[0].mxu0
      %v1257 = vadd.f32 %v1068, %v1256
      %v1258 = vpop.f32.mrb[0].mxu0
      %v1259 = vpop.f32.mrb[0].mxu0
      %v1260 = vadd.f32 %v1068, %v1259
      %v1261 = vpop.f32.mrb[0].mxu0
      %1262 = vmatprep.mubr.bf16.mxu0 0
      %1263 = vmatmul.mubr.bf16.gmra.mrb[0].mxu0 %v1029
      %v1264 = vpop.f32.mrb[0].mxu0
      %v1265 = vadd.f32 %v1068, %v1264
      %v1266 = vpop.f32.mrb[0].mxu0
      %v1267 = vpop.f32.mrb[0].mxu0
      %v1268 = vadd.f32 %v1068, %v1267
      %v1269 = vpop.f32.mrb[0].mxu0
      %1270 = vmatprep.mubr.bf16.mxu0 0
      %1271 = vmatmul.mubr.bf16.gmra.mrb[0].mxu0 %v1030
      %v1272 = vpop.f32.mrb[0].mxu0
      %v1273 = vadd.f32 %v1068, %v1272
      %v1274 = vpop.f32.mrb[0].mxu0
      %v1275 = vpop.f32.mrb[0].mxu0
      %v1276 = vadd.f32 %v1068, %v1275
      %v1277 = vpop.f32.mrb[0].mxu0
      %1278 = vmatprep.mubr.bf16.mxu0 0
      %1279 = vmatmul.mubr.bf16.gmra.mrb[0].mxu0 %v1031
      %v1280 = vpop.f32.mrb[0].mxu0
      %v1281 = vadd.f32 %v1068, %v1280
      %v1282 = vpop.f32.mrb[0].mxu0
      %v1283 = vpop.f32.mrb[0].mxu0
      %v1284 = vadd.f32 %v1068, %v1283
      %v1285 = vpop.f32.mrb[0].mxu0
      %1286 = vmatprep.mubr.bf16.mxu0 0
      %1287 = vmatmul.mubr.bf16.gmra.mrb[0].mxu0 %v1032
      %v1288 = vpop.f32.mrb[0].mxu0
      %v1289 = vadd.f32 %v1068, %v1288
      %v1290 = vpop.f32.mrb[0].mxu0
      %v1291 = vpop.f32.mrb[0].mxu0
      %v1292 = vadd.f32 %v1068, %v1291
      %v1293 = vpop.f32.mrb[0].mxu0
      %1294 = vmatprep.mubr.bf16.mxu0 0
      %1295 = vmatmul.mubr.bf16.gmra.mrb[0].mxu0 %v1033
      %v1296 = vpop.f32.mrb[0].mxu0
      %v1297 = vadd.f32 %v1068, %v1296
      %v1298 = vpop.f32.mrb[0].mxu0
      %v1299 = vpop.f32.mrb[0].mxu0
      %v1300 = vadd.f32 %v1068, %v1299
      %v1301 = vpop.f32.mrb[0].mxu0
      %1302 = vmatprep.mubr.bf16.mxu0 0
      %1303 = vmatmul.mubr.bf16.gmra.mrb[0].mxu0 %v1034
      %v1304 = vpop.f32.mrb[0].mxu0
      %v1305 = vadd.f32 %v1068, %v1304
      %v1306 = vpop.f32.mrb[0].mxu0
      %v1307 = vpop.f32.mrb[0].mxu0
      %v1308 = vadd.f32 %v1068, %v1307
      %v1309 = vpop.f32.mrb[0].mxu0
      %1310 = vmatprep.mubr.bf16.mxu0 0
      %1311 = vmatmul.mubr.bf16.gmra.mrb[0].mxu0 %v1035
      %v1312 = vpop.f32.mrb[0].mxu0
      %v1313 = vadd.f32 %v1068, %v1312
      %v1314 = vpop.f32.mrb[0].mxu0
      %v1315 = vpop.f32.mrb[0].mxu0
      %v1316 = vadd.f32 %v1068, %v1315
      %v1317 = vpop.f32.mrb[0].mxu0
      %1318 = vmatprep.mubr.bf16.mxu0 0
      %1319 = vmatmul.mubr.bf16.gmra.mrb[0].mxu0 %v1036
      %v1320 = vpop.f32.mrb[0].mxu0
      %v1321 = vadd.f32 %v1068, %v1320
      %v1322 = vpop.f32.mrb[0].mxu0
      %v1323 = vpop.f32.mrb[0].mxu0
      %v1324 = vadd.f32 %v1068, %v1323
      %v1325 = vpop.f32.mrb[0].mxu0
      %1326 = vmatprep.mubr.bf16.mxu0 0
      %1327 = vmatmul.mubr.bf16.gmra.mrb[0].mxu0 %v1037
      %v1328 = vpop.f32.mrb[0].mxu0
      %v1329 = vadd.f32 %v1068, %v1328
      %v1330 = vpop.f32.mrb[0].mxu0
      %v1331 = vpop.f32.mrb[0].mxu0
      %v1332 = vadd.f32 %v1068, %v1331
      %v1333 = vpop.f32.mrb[0].mxu0
      %1334 = vmatprep.mubr.bf16.mxu0 0
      %1335 = vmatmul.mubr.bf16.gmra.mrb[0].mxu0 %v1038
      %v1336 = vpop.f32.mrb[0].mxu0
      %v1337 = vadd.f32 %v1068, %v1336
      %v1338 = vpop.f32.mrb[0].mxu0
      %v1339 = vpop.f32.mrb[0].mxu0
      %v1340 = vadd.f32 %v1068, %v1339
      %v1341 = vpop.f32.mrb[0].mxu0
      %1342 = vmatprep.mubr.bf16.mxu0 0
      %1343 = vmatmul.mubr.bf16.gmra.mrb[0].mxu0 %v1039
      %v1344 = vpop.f32.mrb[0].mxu0
      %v1345 = vadd.f32 %v1068, %v1344
      %v1346 = vpop.f32.mrb[0].mxu0
      %v1347 = vpop.f32.mrb[0].mxu0
      %v1348 = vadd.f32 %v1068, %v1347
      %v1349 = vpop.f32.mrb[0].mxu0
      %1350 = vmatprep.mubr.bf16.mxu0 0
      %1351 = vmatmul.mubr.bf16.gmra.mrb[0].mxu0 %v1040
      %v1352 = vpop.f32.mrb[0].mxu0
      %v1353 = vadd.f32 %v1068, %v1352
      %v1354 = vpop.f32.mrb[0].mxu0
      %v1355 = vpop.f32.mrb[0].mxu0
      %v1356 = vadd.f32 %v1068, %v1355
      %v1357 = vpop.f32.mrb[0].mxu0
      %1358 = vmatprep.mubr.bf16.mxu0 0
      %1359 = vmatmul.mubr.bf16.gmra.mrb[0].mxu0 %v1041
      %v1360 = vpop.f32.mrb[0].mxu0
      %v1361 = vadd.f32 %v1068, %v1360
      %v1362 = vpop.f32.mrb[0].mxu0
      %v1363 = vpop.f32.mrb[0].mxu0
      %v1364 = vadd.f32 %v1068, %v1363
      %v1365 = vpop.f32.mrb[0].mxu0
      %1366 = vmatprep.mubr.bf16.mxu0 0
      %1367 = vmatmul.mubr.bf16.gmra.mrb[0].mxu0 %v1042
      %v1368 = vpop.f32.mrb[0].mxu0
      %v1369 = vadd.f32 %v1068, %v1368
      %v1370 = vpop.f32.mrb[0].mxu0
      %v1371 = vpop.f32.mrb[0].mxu0
      %v1372 = vadd.f32 %v1068, %v1371
      %v1373 = vpop.f32.mrb[0].mxu0
      %1374 = vmatprep.mubr.bf16.mxu0 0
      %1375 = vmatmul.mubr.bf16.gmra.mrb[0].mxu0 %v1043
      %v1376 = vpop.f32.mrb[0].mxu0
      %v1377 = vadd.f32 %v1068, %v1376
      %v1378 = vpop.f32.mrb[0].mxu0
      %v1379 = vpop.f32.mrb[0].mxu0
      %v1380 = vadd.f32 %v1068, %v1379
      %v1381 = vpop.f32.mrb[0].mxu0
      %1382 = vmatprep.mubr.bf16.mxu0 0
      %1383 = vmatmul.mubr.bf16.gmra.mrb[0].mxu0 %v1044
      %v1384 = vpop.f32.mrb[0].mxu0
      %v1385 = vadd.f32 %v1068, %v1384
      %v1386 = vpop.f32.mrb[0].mxu0
      %v1387 = vpop.f32.mrb[0].mxu0
      %v1388 = vadd.f32 %v1068, %v1387
      %v1389 = vpop.f32.mrb[0].mxu0
      %1390 = vmatprep.mubr.bf16.mxu0 0
      %1391 = vmatmul.mubr.bf16.gmra.mrb[0].mxu0 %v1045
      %v1392 = vpop.f32.mrb[0].mxu0
      %v1393 = vadd.f32 %v1068, %v1392
      %v1394 = vpop.f32.mrb[0].mxu0
      %v1395 = vpop.f32.mrb[0].mxu0
      %v1396 = vadd.f32 %v1068, %v1395
      %v1397 = vpop.f32.mrb[0].mxu0
      %1398 = vmatprep.mubr.bf16.mxu0 0
      %1399 = vmatmul.mubr.bf16.gmra.mrb[0].mxu0 %v1046
      %v1400 = vpop.f32.mrb[0].mxu0
      %v1401 = vadd.f32 %v1068, %v1400
      %v1402 = vpop.f32.mrb[0].mxu0
      %v1403 = vpop.f32.mrb[0].mxu0
      %v1404 = vadd.f32 %v1068, %v1403
      %v1405 = vpop.f32.mrb[0].mxu0
      %1406 = vdwg.mxu0
      %v1407 = vadd.f32 %v631, %v1153
      %v1408 = vadd.f32 %v632, %v1156
      %v1409 = vadd.f32 %v633, %v1161
      %v1410 = vadd.f32 %v634, %v1164
      %v1411 = vadd.f32 %v635, %v1169
      %v1412 = vadd.f32 %v636, %v1172
      %v1413 = vadd.f32 %v637, %v1177
      %v1414 = vadd.f32 %v638, %v1180
      %v1415 = vadd.f32 %v639, %v1185
      %v1416 = vadd.f32 %v640, %v1188
      %v1417 = vadd.f32 %v641, %v1193
      %v1418 = vadd.f32 %v642, %v1196
      %v1419 = vadd.f32 %v643, %v1201
      %v1420 = vadd.f32 %v644, %v1204
      %v1421 = vadd.f32 %v645, %v1209
      %v1422 = vadd.f32 %v646, %v1212
      %v1423 = vadd.f32 %v647, %v1217
      %v1424 = vadd.f32 %v648, %v1220
      %v1425 = vadd.f32 %v649, %v1225
      %v1426 = vadd.f32 %v650, %v1228
      %v1427 = vadd.f32 %v651, %v1233
      %v1428 = vadd.f32 %v652, %v1236
      %v1429 = vadd.f32 %v653, %v1241
      %v1430 = vadd.f32 %v654, %v1244
      %v1431 = vadd.f32 %v655, %v1249
      %v1432 = vadd.f32 %v656, %v1252
      %v1433 = vadd.f32 %v657, %v1257
      %v1434 = vadd.f32 %v658, %v1260
      %v1435 = vadd.f32 %v659, %v1265
      %v1436 = vadd.f32 %v660, %v1268
      %v1437 = vadd.f32 %v661, %v1273
      %v1438 = vadd.f32 %v662, %v1276
      %v1439 = vadd.f32 %v663, %v1281
      %v1440 = vadd.f32 %v664, %v1284
      %v1441 = vadd.f32 %v665, %v1289
      %v1442 = vadd.f32 %v666, %v1292
      %v1443 = vadd.f32 %v667, %v1297
      %v1444 = vadd.f32 %v668, %v1300
      %v1445 = vadd.f32 %v669, %v1305
      %v1446 = vadd.f32 %v670, %v1308
      %v1447 = vadd.f32 %v671, %v1313
      %v1448 = vadd.f32 %v672, %v1316
      %v1449 = vadd.f32 %v673, %v1321
      %v1450 = vadd.f32 %v674, %v1324
      %v1451 = vadd.f32 %v675, %v1329
      %v1452 = vadd.f32 %v676, %v1332
      %v1453 = vadd.f32 %v677, %v1337
      %v1454 = vadd.f32 %v678, %v1340
      %v1455 = vadd.f32 %v679, %v1345
      %v1456 = vadd.f32 %v680, %v1348
      %v1457 = vadd.f32 %v681, %v1353
      %v1458 = vadd.f32 %v682, %v1356
      %v1459 = vadd.f32 %v683, %v1361
      %v1460 = vadd.f32 %v684, %v1364
      %v1461 = vadd.f32 %v685, %v1369
      %v1462 = vadd.f32 %v686, %v1372
      %v1463 = vadd.f32 %v687, %v1377
      %v1464 = vadd.f32 %v688, %v1380
      %v1465 = vadd.f32 %v689, %v1385
      %v1466 = vadd.f32 %v690, %v1388
      %v1467 = vadd.f32 %v691, %v1393
      %v1468 = vadd.f32 %v692, %v1396
      %v1469 = vadd.f32 %v693, %v1401
      %v1470 = vadd.f32 %v694, %v1404
      %v1471 = vld [vmem:[%s7] sm:$0x1]
      %v1473 = vlaneseq
      %v1474 = vshrl.u32 %v1473, 7
      %v1475 = vsub.s32 0, %v1474
      %v1476 = vrot.slane %v1471, %v1475
      %v1478 = vmul.f32 %v1407, %v1476
      %v1479 = vmul.f32 %v1408, %v1476
      %v1480 = vmul.f32 %v1409, %v1476
      %v1481 = vmul.f32 %v1410, %v1476
      %v1482 = vmul.f32 %v1411, %v1476
      %v1483 = vmul.f32 %v1412, %v1476
      %v1484 = vmul.f32 %v1413, %v1476
      %v1485 = vmul.f32 %v1414, %v1476
      %v1486 = vmul.f32 %v1415, %v1476
      %v1487 = vmul.f32 %v1416, %v1476
      %v1488 = vmul.f32 %v1417, %v1476
      %v1489 = vmul.f32 %v1418, %v1476
      %v1490 = vmul.f32 %v1419, %v1476
      %v1491 = vmul.f32 %v1420, %v1476
      %v1492 = vmul.f32 %v1421, %v1476
      %v1493 = vmul.f32 %v1422, %v1476
      %v1494 = vmul.f32 %v1423, %v1476
      %v1495 = vmul.f32 %v1424, %v1476
      %v1496 = vmul.f32 %v1425, %v1476
      %v1497 = vmul.f32 %v1426, %v1476
      %v1498 = vmul.f32 %v1427, %v1476
      %v1499 = vmul.f32 %v1428, %v1476
      %v1500 = vmul.f32 %v1429, %v1476
      %v1501 = vmul.f32 %v1430, %v1476
      %v1502 = vmul.f32 %v1431, %v1476
      %v1503 = vmul.f32 %v1432, %v1476
      %v1504 = vmul.f32 %v1433, %v1476
      %v1505 = vmul.f32 %v1434, %v1476
      %v1506 = vmul.f32 %v1435, %v1476
      %v1507 = vmul.f32 %v1436, %v1476
      %v1508 = vmul.f32 %v1437, %v1476
      %v1509 = vmul.f32 %v1438, %v1476
      %v1510 = vmul.f32 %v1439, %v1476
      %v1511 = vmul.f32 %v1440, %v1476
      %v1512 = vmul.f32 %v1441, %v1476
      %v1513 = vmul.f32 %v1442, %v1476
      %v1514 = vmul.f32 %v1443, %v1476
      %v1515 = vmul.f32 %v1444, %v1476
      %v1516 = vmul.f32 %v1445, %v1476
      %v1517 = vmul.f32 %v1446, %v1476
      %v1518 = vmul.f32 %v1447, %v1476
      %v1519 = vmul.f32 %v1448, %v1476
      %v1520 = vmul.f32 %v1449, %v1476
      %v1521 = vmul.f32 %v1450, %v1476
      %v1522 = vmul.f32 %v1451, %v1476
      %v1523 = vmul.f32 %v1452, %v1476
      %v1524 = vmul.f32 %v1453, %v1476
      %v1525 = vmul.f32 %v1454, %v1476
      %v1526 = vmul.f32 %v1455, %v1476
      %v1527 = vmul.f32 %v1456, %v1476
      %v1528 = vmul.f32 %v1457, %v1476
      %v1529 = vmul.f32 %v1458, %v1476
      %v1530 = vmul.f32 %v1459, %v1476
      %v1531 = vmul.f32 %v1460, %v1476
      %v1532 = vmul.f32 %v1461, %v1476
      %v1533 = vmul.f32 %v1462, %v1476
      %v1534 = vmul.f32 %v1463, %v1476
      %v1535 = vmul.f32 %v1464, %v1476
      %v1536 = vmul.f32 %v1465, %v1476
      %v1537 = vmul.f32 %v1466, %v1476
      %v1538 = vmul.f32 %v1467, %v1476
      %v1539 = vmul.f32 %v1468, %v1476
      %v1540 = vmul.f32 %v1469, %v1476
      %v1541 = vmul.f32 %v1470, %v1476
      %v1542 = vld [vmem:[%s8] sm:$0x1]
      %v1544 = vlaneseq
      %v1545 = vshrl.u32 %v1544, 7
      %v1546 = vsub.s32 0, %v1545
      %v1547 = vrot.slane %v1542, %v1546
      %v1549 = vadd.f32 %v1478, %v1547
      %v1550 = vadd.f32 %v1479, %v1547
      %v1551 = vadd.f32 %v1480, %v1547
      %v1552 = vadd.f32 %v1481, %v1547
      %v1553 = vadd.f32 %v1482, %v1547
      %v1554 = vadd.f32 %v1483, %v1547
      %v1555 = vadd.f32 %v1484, %v1547
      %v1556 = vadd.f32 %v1485, %v1547
      %v1557 = vadd.f32 %v1486, %v1547
      %v1558 = vadd.f32 %v1487, %v1547
      %v1559 = vadd.f32 %v1488, %v1547
      %v1560 = vadd.f32 %v1489, %v1547
      %v1561 = vadd.f32 %v1490, %v1547
      %v1562 = vadd.f32 %v1491, %v1547
      %v1563 = vadd.f32 %v1492, %v1547
      %v1564 = vadd.f32 %v1493, %v1547
      %v1565 = vadd.f32 %v1494, %v1547
      %v1566 = vadd.f32 %v1495, %v1547
      %v1567 = vadd.f32 %v1496, %v1547
      %v1568 = vadd.f32 %v1497, %v1547
      %v1569 = vadd.f32 %v1498, %v1547
      %v1570 = vadd.f32 %v1499, %v1547
      %v1571 = vadd.f32 %v1500, %v1547
      %v1572 = vadd.f32 %v1501, %v1547
      %v1573 = vadd.f32 %v1502, %v1547
      %v1574 = vadd.f32 %v1503, %v1547
      %v1575 = vadd.f32 %v1504, %v1547
      %v1576 = vadd.f32 %v1505, %v1547
      %v1577 = vadd.f32 %v1506, %v1547
      %v1578 = vadd.f32 %v1507, %v1547
      %v1579 = vadd.f32 %v1508, %v1547
      %v1580 = vadd.f32 %v1509, %v1547
      %v1581 = vadd.f32 %v1510, %v1547
      %v1582 = vadd.f32 %v1511, %v1547
      %v1583 = vadd.f32 %v1512, %v1547
      %v1584 = vadd.f32 %v1513, %v1547
      %v1585 = vadd.f32 %v1514, %v1547
      %v1586 = vadd.f32 %v1515, %v1547
      %v1587 = vadd.f32 %v1516, %v1547
      %v1588 = vadd.f32 %v1517, %v1547
      %v1589 = vadd.f32 %v1518, %v1547
      %v1590 = vadd.f32 %v1519, %v1547
      %v1591 = vadd.f32 %v1520, %v1547
      %v1592 = vadd.f32 %v1521, %v1547
      %v1593 = vadd.f32 %v1522, %v1547
      %v1594 = vadd.f32 %v1523, %v1547
      %v1595 = vadd.f32 %v1524, %v1547
      %v1596 = vadd.f32 %v1525, %v1547
      %v1597 = vadd.f32 %v1526, %v1547
      %v1598 = vadd.f32 %v1527, %v1547
      %v1599 = vadd.f32 %v1528, %v1547
      %v1600 = vadd.f32 %v1529, %v1547
      %v1601 = vadd.f32 %v1530, %v1547
      %v1602 = vadd.f32 %v1531, %v1547
      %v1603 = vadd.f32 %v1532, %v1547
      %v1604 = vadd.f32 %v1533, %v1547
      %v1605 = vadd.f32 %v1534, %v1547
      %v1606 = vadd.f32 %v1535, %v1547
      %v1607 = vadd.f32 %v1536, %v1547
      %v1608 = vadd.f32 %v1537, %v1547
      %v1609 = vadd.f32 %v1538, %v1547
      %v1610 = vadd.f32 %v1539, %v1547
      %v1611 = vadd.f32 %v1540, %v1547
      %v1612 = vadd.f32 %v1541, %v1547
      %v1613 = vpack.c.bf16 %v1550, %v1549
      %v1614 = vpack.c.bf16 %v1552, %v1551
      %v1615 = vpack.c.bf16 %v1554, %v1553
      %v1616 = vpack.c.bf16 %v1556, %v1555
      %v1617 = vpack.c.bf16 %v1558, %v1557
      %v1618 = vpack.c.bf16 %v1560, %v1559
      %v1619 = vpack.c.bf16 %v1562, %v1561
      %v1620 = vpack.c.bf16 %v1564, %v1563
      %v1621 = vpack.c.bf16 %v1566, %v1565
      %v1622 = vpack.c.bf16 %v1568, %v1567
      %v1623 = vpack.c.bf16 %v1570, %v1569
      %v1624 = vpack.c.bf16 %v1572, %v1571
      %v1625 = vpack.c.bf16 %v1574, %v1573
      %v1626 = vpack.c.bf16 %v1576, %v1575
      %v1627 = vpack.c.bf16 %v1578, %v1577
      %v1628 = vpack.c.bf16 %v1580, %v1579
      %v1629 = vpack.c.bf16 %v1582, %v1581
      %v1630 = vpack.c.bf16 %v1584, %v1583
      %v1631 = vpack.c.bf16 %v1586, %v1585
      %v1632 = vpack.c.bf16 %v1588, %v1587
      %v1633 = vpack.c.bf16 %v1590, %v1589
      %v1634 = vpack.c.bf16 %v1592, %v1591
      %v1635 = vpack.c.bf16 %v1594, %v1593
      %v1636 = vpack.c.bf16 %v1596, %v1595
      %v1637 = vpack.c.bf16 %v1598, %v1597
      %v1638 = vpack.c.bf16 %v1600, %v1599
      %v1639 = vpack.c.bf16 %v1602, %v1601
      %v1640 = vpack.c.bf16 %v1604, %v1603
      %v1641 = vpack.c.bf16 %v1606, %v1605
      %v1642 = vpack.c.bf16 %v1608, %v1607
      %v1643 = vpack.c.bf16 %v1610, %v1609
      %v1644 = vpack.c.bf16 %v1612, %v1611
      %v1645 = vld [vmem:[%s9] sm:$0xff]
      %v1646 = vld [vmem:[%s9 + $0x8] sm:$0xff]
      %v1647 = vld [vmem:[%s9 + $0x10] sm:$0xff]
      %v1648 = vld [vmem:[%s9 + $0x18] sm:$0xff]
      %v1649 = vld [vmem:[%s9 + $0x20] sm:$0xff]
      %v1650 = vld [vmem:[%s9 + $0x28] sm:$0xff]
      %v1651 = vld [vmem:[%s9 + $0x30] sm:$0xff]
      %v1652 = vld [vmem:[%s9 + $0x38] sm:$0xff]
      %v1653 = vld [vmem:[%s9 + $0x40] sm:$0xff]
      %v1654 = vld [vmem:[%s9 + $0x48] sm:$0xff]
      %v1655 = vld [vmem:[%s9 + $0x50] sm:$0xff]
      %v1656 = vld [vmem:[%s9 + $0x58] sm:$0xff]
      %v1657 = vld [vmem:[%s9 + $0x60] sm:$0xff]
      %v1658 = vld [vmem:[%s9 + $0x68] sm:$0xff]
      %v1659 = vld [vmem:[%s9 + $0x70] sm:$0xff]
      %v1660 = vld [vmem:[%s9 + $0x78] sm:$0xff]
      %v1661 = vld [vmem:[%s10] sm:$0x3]
      %v1663 = vlaneseq
      %v1664 = vshrl.u32 %v1663, 7
      %v1665 = vsub.s32 0, %v1664
      %v1666 = vrot.slane %v1661, %v1665
      %v1667 = vlaneseq
      %v1668 = vshrl.u32 %v1667, 7
      %v1669 = vsub.s32 1, %v1668
      %v1670 = vrot.slane %v1661, %v1669
      %v1689 = vunpack.c.l.b16 %v1645
      %v1690 = vunpack.c.h.b16 %v1645
      %v1691 = vunpack.c.l.b16 %v1646
      %v1692 = vunpack.c.h.b16 %v1646
      %v1693 = vunpack.c.l.b16 %v1647
      %v1694 = vunpack.c.h.b16 %v1647
      %v1695 = vunpack.c.l.b16 %v1648
      %v1696 = vunpack.c.h.b16 %v1648
      %v1697 = vunpack.c.l.b16 %v1649
      %v1698 = vunpack.c.h.b16 %v1649
      %v1699 = vunpack.c.l.b16 %v1650
      %v1700 = vunpack.c.h.b16 %v1650
      %v1701 = vunpack.c.l.b16 %v1651
      %v1702 = vunpack.c.h.b16 %v1651
      %v1703 = vunpack.c.l.b16 %v1652
      %v1704 = vunpack.c.h.b16 %v1652
      %v1705 = vunpack.c.l.b16 %v1653
      %v1706 = vunpack.c.h.b16 %v1653
      %v1707 = vunpack.c.l.b16 %v1654
      %v1708 = vunpack.c.h.b16 %v1654
      %v1709 = vunpack.c.l.b16 %v1655
      %v1710 = vunpack.c.h.b16 %v1655
      %v1711 = vunpack.c.l.b16 %v1656
      %v1712 = vunpack.c.h.b16 %v1656
      %v1713 = vunpack.c.l.b16 %v1657
      %v1714 = vunpack.c.h.b16 %v1657
      %v1715 = vunpack.c.l.b16 %v1658
      %v1716 = vunpack.c.h.b16 %v1658
      %v1717 = vunpack.c.l.b16 %v1659
      %v1718 = vunpack.c.h.b16 %v1659
      %v1719 = vunpack.c.l.b16 %v1660
      %v1720 = vunpack.c.h.b16 %v1660
      %v1721 = vpack.c.b16 %v1691, %v1689
      %v1722 = vpack.c.b16 %v1692, %v1690
      %v1723 = vpack.c.b16 %v1695, %v1693
      %v1724 = vpack.c.b16 %v1696, %v1694
      %v1725 = vpack.c.b16 %v1699, %v1697
      %v1726 = vpack.c.b16 %v1700, %v1698
      %v1727 = vpack.c.b16 %v1703, %v1701
      %v1728 = vpack.c.b16 %v1704, %v1702
      %v1729 = vpack.c.b16 %v1707, %v1705
      %v1730 = vpack.c.b16 %v1708, %v1706
      %v1731 = vpack.c.b16 %v1711, %v1709
      %v1732 = vpack.c.b16 %v1712, %v1710
      %v1733 = vpack.c.b16 %v1715, %v1713
      %v1734 = vpack.c.b16 %v1716, %v1714
      %v1735 = vpack.c.b16 %v1719, %v1717
      %v1736 = vpack.c.b16 %v1720, %v1718
      %1753 = vmatprep.subr.bf16.mxu0 %v1722
      %1754 = vmatpush1.bf16.msra.mxu0 %v1721
      %1755 = vmatprep.subr.bf16.mxu0 %v1724
      %1756 = vmatpush1.bf16.msra.mxu0 %v1723
      %1757 = vmatprep.subr.bf16.mxu0 %v1726
      %1758 = vmatpush1.bf16.msra.mxu0 %v1725
      %1759 = vmatprep.subr.bf16.mxu0 %v1728
      %1760 = vmatpush1.bf16.msra.mxu0 %v1727
      %1761 = vmatprep.subr.bf16.mxu0 %v1730
      %1762 = vmatpush1.bf16.msra.mxu0 %v1729
      %1763 = vmatprep.subr.bf16.mxu0 %v1732
      %1764 = vmatpush1.bf16.msra.mxu0 %v1731
      %1765 = vmatprep.subr.bf16.mxu0 %v1734
      %1766 = vmatpush1.bf16.msra.mxu0 %v1733
      %1767 = vmatprep.subr.bf16.mxu0 %v1736
      %1768 = vmatpush1.bf16.msra.mxu0 %v1735
      %1769 = vmatprep.subr.bf16.mxu0 0
      %1770 = vmatpush1.bf16.msra.mxu0 0
      %1771 = vmatprep.subr.bf16.mxu0 0
      %1772 = vmatpush1.bf16.msra.mxu0 0
      %1773 = vmatprep.subr.bf16.mxu0 0
      %1774 = vmatpush1.bf16.msra.mxu0 0
      %1775 = vmatprep.subr.bf16.mxu0 0
      %1776 = vmatpush1.bf16.msra.mxu0 0
      %1777 = vmatprep.subr.bf16.mxu0 0
      %1778 = vmatpush1.bf16.msra.mxu0 0
      %1779 = vmatprep.subr.bf16.mxu0 0
      %1780 = vmatpush1.bf16.msra.mxu0 0
      %1781 = vmatprep.subr.bf16.mxu0 0
      %1782 = vmatpush1.bf16.msra.mxu0 0
      %1783 = vmatprep.subr.bf16.mxu0 0
      %1784 = vmatpush1.bf16.msra.mxu0 0
      %1785 = vmatprep.mubr.bf16.mxu0 0
      %1786 = vmatmul.mubr.bf16.gmra.mrb[0].mxu0 %v1613
      %v1787 = vpop.f32.mrb[0].mxu0
      %v1788 = vadd.f32 %v1666, %v1787
      %v1789 = vpop.f32.mrb[0].mxu0
      %v1790 = vadd.f32 %v1670, %v1789
      %v1791 = vpop.f32.mrb[0].mxu0
      %v1792 = vadd.f32 %v1666, %v1791
      %v1793 = vpop.f32.mrb[0].mxu0
      %v1794 = vadd.f32 %v1670, %v1793
      %1795 = vmatprep.mubr.bf16.mxu0 0
      %1796 = vmatmul.mubr.bf16.gmra.mrb[0].mxu0 %v1614
      %v1797 = vpop.f32.mrb[0].mxu0
      %v1798 = vadd.f32 %v1666, %v1797
      %v1799 = vpop.f32.mrb[0].mxu0
      %v1800 = vadd.f32 %v1670, %v1799
      %v1801 = vpop.f32.mrb[0].mxu0
      %v1802 = vadd.f32 %v1666, %v1801
      %v1803 = vpop.f32.mrb[0].mxu0
      %v1804 = vadd.f32 %v1670, %v1803
      %1805 = vmatprep.mubr.bf16.mxu0 0
      %1806 = vmatmul.mubr.bf16.gmra.mrb[0].mxu0 %v1615
      %v1807 = vpop.f32.mrb[0].mxu0
      %v1808 = vadd.f32 %v1666, %v1807
      %v1809 = vpop.f32.mrb[0].mxu0
      %v1810 = vadd.f32 %v1670, %v1809
      %v1811 = vpop.f32.mrb[0].mxu0
      %v1812 = vadd.f32 %v1666, %v1811
      %v1813 = vpop.f32.mrb[0].mxu0
      %v1814 = vadd.f32 %v1670, %v1813
      %1815 = vmatprep.mubr.bf16.mxu0 0
      %1816 = vmatmul.mubr.bf16.gmra.mrb[0].mxu0 %v1616
      %v1817 = vpop.f32.mrb[0].mxu0
      %v1818 = vadd.f32 %v1666, %v1817
      %v1819 = vpop.f32.mrb[0].mxu0
      %v1820 = vadd.f32 %v1670, %v1819
      %v1821 = vpop.f32.mrb[0].mxu0
      %v1822 = vadd.f32 %v1666, %v1821
      %v1823 = vpop.f32.mrb[0].mxu0
      %v1824 = vadd.f32 %v1670, %v1823
      %1825 = vmatprep.mubr.bf16.mxu0 0
      %1826 = vmatmul.mubr.bf16.gmra.mrb[0].mxu0 %v1617
      %v1827 = vpop.f32.mrb[0].mxu0
      %v1828 = vadd.f32 %v1666, %v1827
      %v1829 = vpop.f32.mrb[0].mxu0
      %v1830 = vadd.f32 %v1670, %v1829
      %v1831 = vpop.f32.mrb[0].mxu0
      %v1832 = vadd.f32 %v1666, %v1831
      %v1833 = vpop.f32.mrb[0].mxu0
      %v1834 = vadd.f32 %v1670, %v1833
      %1835 = vmatprep.mubr.bf16.mxu0 0
      %1836 = vmatmul.mubr.bf16.gmra.mrb[0].mxu0 %v1618
      %v1837 = vpop.f32.mrb[0].mxu0
      %v1838 = vadd.f32 %v1666, %v1837
      %v1839 = vpop.f32.mrb[0].mxu0
      %v1840 = vadd.f32 %v1670, %v1839
      %v1841 = vpop.f32.mrb[0].mxu0
      %v1842 = vadd.f32 %v1666, %v1841
      %v1843 = vpop.f32.mrb[0].mxu0
      %v1844 = vadd.f32 %v1670, %v1843
      %1845 = vmatprep.mubr.bf16.mxu0 0
      %1846 = vmatmul.mubr.bf16.gmra.mrb[0].mxu0 %v1619
      %v1847 = vpop.f32.mrb[0].mxu0
      %v1848 = vadd.f32 %v1666, %v1847
      %v1849 = vpop.f32.mrb[0].mxu0
      %v1850 = vadd.f32 %v1670, %v1849
      %v1851 = vpop.f32.mrb[0].mxu0
      %v1852 = vadd.f32 %v1666, %v1851
      %v1853 = vpop.f32.mrb[0].mxu0
      %v1854 = vadd.f32 %v1670, %v1853
      %1855 = vmatprep.mubr.bf16.mxu0 0
      %1856 = vmatmul.mubr.bf16.gmra.mrb[0].mxu0 %v1620
      %v1857 = vpop.f32.mrb[0].mxu0
      %v1858 = vadd.f32 %v1666, %v1857
      %v1859 = vpop.f32.mrb[0].mxu0
      %v1860 = vadd.f32 %v1670, %v1859
      %v1861 = vpop.f32.mrb[0].mxu0
      %v1862 = vadd.f32 %v1666, %v1861
      %v1863 = vpop.f32.mrb[0].mxu0
      %v1864 = vadd.f32 %v1670, %v1863
      %1865 = vmatprep.mubr.bf16.mxu0 0
      %1866 = vmatmul.mubr.bf16.gmra.mrb[0].mxu0 %v1621
      %v1867 = vpop.f32.mrb[0].mxu0
      %v1868 = vadd.f32 %v1666, %v1867
      %v1869 = vpop.f32.mrb[0].mxu0
      %v1870 = vadd.f32 %v1670, %v1869
      %v1871 = vpop.f32.mrb[0].mxu0
      %v1872 = vadd.f32 %v1666, %v1871
      %v1873 = vpop.f32.mrb[0].mxu0
      %v1874 = vadd.f32 %v1670, %v1873
      %1875 = vmatprep.mubr.bf16.mxu0 0
      %1876 = vmatmul.mubr.bf16.gmra.mrb[0].mxu0 %v1622
      %v1877 = vpop.f32.mrb[0].mxu0
      %v1878 = vadd.f32 %v1666, %v1877
      %v1879 = vpop.f32.mrb[0].mxu0
      %v1880 = vadd.f32 %v1670, %v1879
      %v1881 = vpop.f32.mrb[0].mxu0
      %v1882 = vadd.f32 %v1666, %v1881
      %v1883 = vpop.f32.mrb[0].mxu0
      %v1884 = vadd.f32 %v1670, %v1883
      %1885 = vmatprep.mubr.bf16.mxu0 0
      %1886 = vmatmul.mubr.bf16.gmra.mrb[0].mxu0 %v1623
      %v1887 = vpop.f32.mrb[0].mxu0
      %v1888 = vadd.f32 %v1666, %v1887
      %v1889 = vpop.f32.mrb[0].mxu0
      %v1890 = vadd.f32 %v1670, %v1889
      %v1891 = vpop.f32.mrb[0].mxu0
      %v1892 = vadd.f32 %v1666, %v1891
      %v1893 = vpop.f32.mrb[0].mxu0
      %v1894 = vadd.f32 %v1670, %v1893
      %1895 = vmatprep.mubr.bf16.mxu0 0
      %1896 = vmatmul.mubr.bf16.gmra.mrb[0].mxu0 %v1624
      %v1897 = vpop.f32.mrb[0].mxu0
      %v1898 = vadd.f32 %v1666, %v1897
      %v1899 = vpop.f32.mrb[0].mxu0
      %v1900 = vadd.f32 %v1670, %v1899
      %v1901 = vpop.f32.mrb[0].mxu0
      %v1902 = vadd.f32 %v1666, %v1901
      %v1903 = vpop.f32.mrb[0].mxu0
      %v1904 = vadd.f32 %v1670, %v1903
      %1905 = vmatprep.mubr.bf16.mxu0 0
      %1906 = vmatmul.mubr.bf16.gmra.mrb[0].mxu0 %v1625
      %v1907 = vpop.f32.mrb[0].mxu0
      %v1908 = vadd.f32 %v1666, %v1907
      %v1909 = vpop.f32.mrb[0].mxu0
      %v1910 = vadd.f32 %v1670, %v1909
      %v1911 = vpop.f32.mrb[0].mxu0
      %v1912 = vadd.f32 %v1666, %v1911
      %v1913 = vpop.f32.mrb[0].mxu0
      %v1914 = vadd.f32 %v1670, %v1913
      %1915 = vmatprep.mubr.bf16.mxu0 0
      %1916 = vmatmul.mubr.bf16.gmra.mrb[0].mxu0 %v1626
      %v1917 = vpop.f32.mrb[0].mxu0
      %v1918 = vadd.f32 %v1666, %v1917
      %v1919 = vpop.f32.mrb[0].mxu0
      %v1920 = vadd.f32 %v1670, %v1919
      %v1921 = vpop.f32.mrb[0].mxu0
      %v1922 = vadd.f32 %v1666, %v1921
      %v1923 = vpop.f32.mrb[0].mxu0
      %v1924 = vadd.f32 %v1670, %v1923
      %1925 = vmatprep.mubr.bf16.mxu0 0
      %1926 = vmatmul.mubr.bf16.gmra.mrb[0].mxu0 %v1627
      %v1927 = vpop.f32.mrb[0].mxu0
      %v1928 = vadd.f32 %v1666, %v1927
      %v1929 = vpop.f32.mrb[0].mxu0
      %v1930 = vadd.f32 %v1670, %v1929
      %v1931 = vpop.f32.mrb[0].mxu0
      %v1932 = vadd.f32 %v1666, %v1931
      %v1933 = vpop.f32.mrb[0].mxu0
      %v1934 = vadd.f32 %v1670, %v1933
      %1935 = vmatprep.mubr.bf16.mxu0 0
      %1936 = vmatmul.mubr.bf16.gmra.mrb[0].mxu0 %v1628
      %v1937 = vpop.f32.mrb[0].mxu0
      %v1938 = vadd.f32 %v1666, %v1937
      %v1939 = vpop.f32.mrb[0].mxu0
      %v1940 = vadd.f32 %v1670, %v1939
      %v1941 = vpop.f32.mrb[0].mxu0
      %v1942 = vadd.f32 %v1666, %v1941
      %v1943 = vpop.f32.mrb[0].mxu0
      %v1944 = vadd.f32 %v1670, %v1943
      %1945 = vmatprep.mubr.bf16.mxu0 0
      %1946 = vmatmul.mubr.bf16.gmra.mrb[0].mxu0 %v1629
      %v1947 = vpop.f32.mrb[0].mxu0
      %v1948 = vadd.f32 %v1666, %v1947
      %v1949 = vpop.f32.mrb[0].mxu0
      %v1950 = vadd.f32 %v1670, %v1949
      %v1951 = vpop.f32.mrb[0].mxu0
      %v1952 = vadd.f32 %v1666, %v1951
      %v1953 = vpop.f32.mrb[0].mxu0
      %v1954 = vadd.f32 %v1670, %v1953
      %1955 = vmatprep.mubr.bf16.mxu0 0
      %1956 = vmatmul.mubr.bf16.gmra.mrb[0].mxu0 %v1630
      %v1957 = vpop.f32.mrb[0].mxu0
      %v1958 = vadd.f32 %v1666, %v1957
      %v1959 = vpop.f32.mrb[0].mxu0
      %v1960 = vadd.f32 %v1670, %v1959
      %v1961 = vpop.f32.mrb[0].mxu0
      %v1962 = vadd.f32 %v1666, %v1961
      %v1963 = vpop.f32.mrb[0].mxu0
      %v1964 = vadd.f32 %v1670, %v1963
      %1965 = vmatprep.mubr.bf16.mxu0 0
      %1966 = vmatmul.mubr.bf16.gmra.mrb[0].mxu0 %v1631
      %v1967 = vpop.f32.mrb[0].mxu0
      %v1968 = vadd.f32 %v1666, %v1967
      %v1969 = vpop.f32.mrb[0].mxu0
      %v1970 = vadd.f32 %v1670, %v1969
      %v1971 = vpop.f32.mrb[0].mxu0
      %v1972 = vadd.f32 %v1666, %v1971
      %v1973 = vpop.f32.mrb[0].mxu0
      %v1974 = vadd.f32 %v1670, %v1973
      %1975 = vmatprep.mubr.bf16.mxu0 0
      %1976 = vmatmul.mubr.bf16.gmra.mrb[0].mxu0 %v1632
      %v1977 = vpop.f32.mrb[0].mxu0
      %v1978 = vadd.f32 %v1666, %v1977
      %v1979 = vpop.f32.mrb[0].mxu0
      %v1980 = vadd.f32 %v1670, %v1979
      %v1981 = vpop.f32.mrb[0].mxu0
      %v1982 = vadd.f32 %v1666, %v1981
      %v1983 = vpop.f32.mrb[0].mxu0
      %v1984 = vadd.f32 %v1670, %v1983
      %1985 = vmatprep.mubr.bf16.mxu0 0
      %1986 = vmatmul.mubr.bf16.gmra.mrb[0].mxu0 %v1633
      %v1987 = vpop.f32.mrb[0].mxu0
      %v1988 = vadd.f32 %v1666, %v1987
      %v1989 = vpop.f32.mrb[0].mxu0
      %v1990 = vadd.f32 %v1670, %v1989
      %v1991 = vpop.f32.mrb[0].mxu0
      %v1992 = vadd.f32 %v1666, %v1991
      %v1993 = vpop.f32.mrb[0].mxu0
      %v1994 = vadd.f32 %v1670, %v1993
      %1995 = vmatprep.mubr.bf16.mxu0 0
      %1996 = vmatmul.mubr.bf16.gmra.mrb[0].mxu0 %v1634
      %v1997 = vpop.f32.mrb[0].mxu0
      %v1998 = vadd.f32 %v1666, %v1997
      %v1999 = vpop.f32.mrb[0].mxu0
      %v2000 = vadd.f32 %v1670, %v1999
      %v2001 = vpop.f32.mrb[0].mxu0
      %v2002 = vadd.f32 %v1666, %v2001
      %v2003 = vpop.f32.mrb[0].mxu0
      %v2004 = vadd.f32 %v1670, %v2003
      %2005 = vmatprep.mubr.bf16.mxu0 0
      %2006 = vmatmul.mubr.bf16.gmra.mrb[0].mxu0 %v1635
      %v2007 = vpop.f32.mrb[0].mxu0
      %v2008 = vadd.f32 %v1666, %v2007
      %v2009 = vpop.f32.mrb[0].mxu0
      %v2010 = vadd.f32 %v1670, %v2009
      %v2011 = vpop.f32.mrb[0].mxu0
      %v2012 = vadd.f32 %v1666, %v2011
      %v2013 = vpop.f32.mrb[0].mxu0
      %v2014 = vadd.f32 %v1670, %v2013
      %2015 = vmatprep.mubr.bf16.mxu0 0
      %2016 = vmatmul.mubr.bf16.gmra.mrb[0].mxu0 %v1636
      %v2017 = vpop.f32.mrb[0].mxu0
      %v2018 = vadd.f32 %v1666, %v2017
      %v2019 = vpop.f32.mrb[0].mxu0
      %v2020 = vadd.f32 %v1670, %v2019
      %v2021 = vpop.f32.mrb[0].mxu0
      %v2022 = vadd.f32 %v1666, %v2021
      %v2023 = vpop.f32.mrb[0].mxu0
      %v2024 = vadd.f32 %v1670, %v2023
      %2025 = vmatprep.mubr.bf16.mxu0 0
      %2026 = vmatmul.mubr.bf16.gmra.mrb[0].mxu0 %v1637
      %v2027 = vpop.f32.mrb[0].mxu0
      %v2028 = vadd.f32 %v1666, %v2027
      %v2029 = vpop.f32.mrb[0].mxu0
      %v2030 = vadd.f32 %v1670, %v2029
      %v2031 = vpop.f32.mrb[0].mxu0
      %v2032 = vadd.f32 %v1666, %v2031
      %v2033 = vpop.f32.mrb[0].mxu0
      %v2034 = vadd.f32 %v1670, %v2033
      %2035 = vmatprep.mubr.bf16.mxu0 0
      %2036 = vmatmul.mubr.bf16.gmra.mrb[0].mxu0 %v1638
      %v2037 = vpop.f32.mrb[0].mxu0
      %v2038 = vadd.f32 %v1666, %v2037
      %v2039 = vpop.f32.mrb[0].mxu0
      %v2040 = vadd.f32 %v1670, %v2039
      %v2041 = vpop.f32.mrb[0].mxu0
      %v2042 = vadd.f32 %v1666, %v2041
      %v2043 = vpop.f32.mrb[0].mxu0
      %v2044 = vadd.f32 %v1670, %v2043
      %2045 = vmatprep.mubr.bf16.mxu0 0
      %2046 = vmatmul.mubr.bf16.gmra.mrb[0].mxu0 %v1639
      %v2047 = vpop.f32.mrb[0].mxu0
      %v2048 = vadd.f32 %v1666, %v2047
      %v2049 = vpop.f32.mrb[0].mxu0
      %v2050 = vadd.f32 %v1670, %v2049
      %v2051 = vpop.f32.mrb[0].mxu0
      %v2052 = vadd.f32 %v1666, %v2051
      %v2053 = vpop.f32.mrb[0].mxu0
      %v2054 = vadd.f32 %v1670, %v2053
      %2055 = vmatprep.mubr.bf16.mxu0 0
      %2056 = vmatmul.mubr.bf16.gmra.mrb[0].mxu0 %v1640
      %v2057 = vpop.f32.mrb[0].mxu0
      %v2058 = vadd.f32 %v1666, %v2057
      %v2059 = vpop.f32.mrb[0].mxu0
      %v2060 = vadd.f32 %v1670, %v2059
      %v2061 = vpop.f32.mrb[0].mxu0
      %v2062 = vadd.f32 %v1666, %v2061
      %v2063 = vpop.f32.mrb[0].mxu0
      %v2064 = vadd.f32 %v1670, %v2063
      %2065 = vmatprep.mubr.bf16.mxu0 0
      %2066 = vmatmul.mubr.bf16.gmra.mrb[0].mxu0 %v1641
      %v2067 = vpop.f32.mrb[0].mxu0
      %v2068 = vadd.f32 %v1666, %v2067
      %v2069 = vpop.f32.mrb[0].mxu0
      %v2070 = vadd.f32 %v1670, %v2069
      %v2071 = vpop.f32.mrb[0].mxu0
      %v2072 = vadd.f32 %v1666, %v2071
      %v2073 = vpop.f32.mrb[0].mxu0
      %v2074 = vadd.f32 %v1670, %v2073
      %2075 = vmatprep.mubr.bf16.mxu0 0
      %2076 = vmatmul.mubr.bf16.gmra.mrb[0].mxu0 %v1642
      %v2077 = vpop.f32.mrb[0].mxu0
      %v2078 = vadd.f32 %v1666, %v2077
      %v2079 = vpop.f32.mrb[0].mxu0
      %v2080 = vadd.f32 %v1670, %v2079
      %v2081 = vpop.f32.mrb[0].mxu0
      %v2082 = vadd.f32 %v1666, %v2081
      %v2083 = vpop.f32.mrb[0].mxu0
      %v2084 = vadd.f32 %v1670, %v2083
      %2085 = vmatprep.mubr.bf16.mxu0 0
      %2086 = vmatmul.mubr.bf16.gmra.mrb[0].mxu0 %v1643
      %v2087 = vpop.f32.mrb[0].mxu0
      %v2088 = vadd.f32 %v1666, %v2087
      %v2089 = vpop.f32.mrb[0].mxu0
      %v2090 = vadd.f32 %v1670, %v2089
      %v2091 = vpop.f32.mrb[0].mxu0
      %v2092 = vadd.f32 %v1666, %v2091
      %v2093 = vpop.f32.mrb[0].mxu0
      %v2094 = vadd.f32 %v1670, %v2093
      %2095 = vmatprep.mubr.bf16.mxu0 0
      %2096 = vmatmul.mubr.bf16.gmra.mrb[0].mxu0 %v1644
      %v2097 = vpop.f32.mrb[0].mxu0
      %v2098 = vadd.f32 %v1666, %v2097
      %v2099 = vpop.f32.mrb[0].mxu0
      %v2100 = vadd.f32 %v1670, %v2099
      %v2101 = vpop.f32.mrb[0].mxu0
      %v2102 = vadd.f32 %v1666, %v2101
      %v2103 = vpop.f32.mrb[0].mxu0
      %v2104 = vadd.f32 %v1670, %v2103
      %2105 = vdwg.mxu0
      %v2106 = vmax.f32 %v1788, 0.0
      %v2107 = vmax.f32 %v1790, 0.0
      %v2108 = vmax.f32 %v1792, 0.0
      %v2109 = vmax.f32 %v1794, 0.0
      %v2110 = vmax.f32 %v1798, 0.0
      %v2111 = vmax.f32 %v1800, 0.0
      %v2112 = vmax.f32 %v1802, 0.0
      %v2113 = vmax.f32 %v1804, 0.0
      %v2114 = vmax.f32 %v1808, 0.0
      %v2115 = vmax.f32 %v1810, 0.0
      %v2116 = vmax.f32 %v1812, 0.0
      %v2117 = vmax.f32 %v1814, 0.0
      %v2118 = vmax.f32 %v1818, 0.0
      %v2119 = vmax.f32 %v1820, 0.0
      %v2120 = vmax.f32 %v1822, 0.0
      %v2121 = vmax.f32 %v1824, 0.0
      %v2122 = vmax.f32 %v1828, 0.0
      %v2123 = vmax.f32 %v1830, 0.0
      %v2124 = vmax.f32 %v1832, 0.0
      %v2125 = vmax.f32 %v1834, 0.0
      %v2126 = vmax.f32 %v1838, 0.0
      %v2127 = vmax.f32 %v1840, 0.0
      %v2128 = vmax.f32 %v1842, 0.0
      %v2129 = vmax.f32 %v1844, 0.0
      %v2130 = vmax.f32 %v1848, 0.0
      %v2131 = vmax.f32 %v1850, 0.0
      %v2132 = vmax.f32 %v1852, 0.0
      %v2133 = vmax.f32 %v1854, 0.0
      %v2134 = vmax.f32 %v1858, 0.0
      %v2135 = vmax.f32 %v1860, 0.0
      %v2136 = vmax.f32 %v1862, 0.0
      %v2137 = vmax.f32 %v1864, 0.0
      %v2138 = vmax.f32 %v1868, 0.0
      %v2139 = vmax.f32 %v1870, 0.0
      %v2140 = vmax.f32 %v1872, 0.0
      %v2141 = vmax.f32 %v1874, 0.0
      %v2142 = vmax.f32 %v1878, 0.0
      %v2143 = vmax.f32 %v1880, 0.0
      %v2144 = vmax.f32 %v1882, 0.0
      %v2145 = vmax.f32 %v1884, 0.0
      %v2146 = vmax.f32 %v1888, 0.0
      %v2147 = vmax.f32 %v1890, 0.0
      %v2148 = vmax.f32 %v1892, 0.0
      %v2149 = vmax.f32 %v1894, 0.0
      %v2150 = vmax.f32 %v1898, 0.0
      %v2151 = vmax.f32 %v1900, 0.0
      %v2152 = vmax.f32 %v1902, 0.0
      %v2153 = vmax.f32 %v1904, 0.0
      %v2154 = vmax.f32 %v1908, 0.0
      %v2155 = vmax.f32 %v1910, 0.0
      %v2156 = vmax.f32 %v1912, 0.0
      %v2157 = vmax.f32 %v1914, 0.0
      %v2158 = vmax.f32 %v1918, 0.0
      %v2159 = vmax.f32 %v1920, 0.0
      %v2160 = vmax.f32 %v1922, 0.0
      %v2161 = vmax.f32 %v1924, 0.0
      %v2162 = vmax.f32 %v1928, 0.0
      %v2163 = vmax.f32 %v1930, 0.0
      %v2164 = vmax.f32 %v1932, 0.0
      %v2165 = vmax.f32 %v1934, 0.0
      %v2166 = vmax.f32 %v1938, 0.0
      %v2167 = vmax.f32 %v1940, 0.0
      %v2168 = vmax.f32 %v1942, 0.0
      %v2169 = vmax.f32 %v1944, 0.0
      %v2170 = vmax.f32 %v1948, 0.0
      %v2171 = vmax.f32 %v1950, 0.0
      %v2172 = vmax.f32 %v1952, 0.0
      %v2173 = vmax.f32 %v1954, 0.0
      %v2174 = vmax.f32 %v1958, 0.0
      %v2175 = vmax.f32 %v1960, 0.0
      %v2176 = vmax.f32 %v1962, 0.0
      %v2177 = vmax.f32 %v1964, 0.0
      %v2178 = vmax.f32 %v1968, 0.0
      %v2179 = vmax.f32 %v1970, 0.0
      %v2180 = vmax.f32 %v1972, 0.0
      %v2181 = vmax.f32 %v1974, 0.0
      %v2182 = vmax.f32 %v1978, 0.0
      %v2183 = vmax.f32 %v1980, 0.0
      %v2184 = vmax.f32 %v1982, 0.0
      %v2185 = vmax.f32 %v1984, 0.0
      %v2186 = vmax.f32 %v1988, 0.0
      %v2187 = vmax.f32 %v1990, 0.0
      %v2188 = vmax.f32 %v1992, 0.0
      %v2189 = vmax.f32 %v1994, 0.0
      %v2190 = vmax.f32 %v1998, 0.0
      %v2191 = vmax.f32 %v2000, 0.0
      %v2192 = vmax.f32 %v2002, 0.0
      %v2193 = vmax.f32 %v2004, 0.0
      %v2194 = vmax.f32 %v2008, 0.0
      %v2195 = vmax.f32 %v2010, 0.0
      %v2196 = vmax.f32 %v2012, 0.0
      %v2197 = vmax.f32 %v2014, 0.0
      %v2198 = vmax.f32 %v2018, 0.0
      %v2199 = vmax.f32 %v2020, 0.0
      %v2200 = vmax.f32 %v2022, 0.0
      %v2201 = vmax.f32 %v2024, 0.0
      %v2202 = vmax.f32 %v2028, 0.0
      %v2203 = vmax.f32 %v2030, 0.0
      %v2204 = vmax.f32 %v2032, 0.0
      %v2205 = vmax.f32 %v2034, 0.0
      %v2206 = vmax.f32 %v2038, 0.0
      %v2207 = vmax.f32 %v2040, 0.0
      %v2208 = vmax.f32 %v2042, 0.0
      %v2209 = vmax.f32 %v2044, 0.0
      %v2210 = vmax.f32 %v2048, 0.0
      %v2211 = vmax.f32 %v2050, 0.0
      %v2212 = vmax.f32 %v2052, 0.0
      %v2213 = vmax.f32 %v2054, 0.0
      %v2214 = vmax.f32 %v2058, 0.0
      %v2215 = vmax.f32 %v2060, 0.0
      %v2216 = vmax.f32 %v2062, 0.0
      %v2217 = vmax.f32 %v2064, 0.0
      %v2218 = vmax.f32 %v2068, 0.0
      %v2219 = vmax.f32 %v2070, 0.0
      %v2220 = vmax.f32 %v2072, 0.0
      %v2221 = vmax.f32 %v2074, 0.0
      %v2222 = vmax.f32 %v2078, 0.0
      %v2223 = vmax.f32 %v2080, 0.0
      %v2224 = vmax.f32 %v2082, 0.0
      %v2225 = vmax.f32 %v2084, 0.0
      %v2226 = vmax.f32 %v2088, 0.0
      %v2227 = vmax.f32 %v2090, 0.0
      %v2228 = vmax.f32 %v2092, 0.0
      %v2229 = vmax.f32 %v2094, 0.0
      %v2230 = vmax.f32 %v2098, 0.0
      %v2231 = vmax.f32 %v2100, 0.0
      %v2232 = vmax.f32 %v2102, 0.0
      %v2233 = vmax.f32 %v2104, 0.0
      %v2234 = vpack.c.bf16 %v2108, %v2106
      %v2235 = vpack.c.bf16 %v2109, %v2107
      %v2236 = vpack.c.bf16 %v2112, %v2110
      %v2237 = vpack.c.bf16 %v2113, %v2111
      %v2238 = vpack.c.bf16 %v2116, %v2114
      %v2239 = vpack.c.bf16 %v2117, %v2115
      %v2240 = vpack.c.bf16 %v2120, %v2118
      %v2241 = vpack.c.bf16 %v2121, %v2119
      %v2242 = vpack.c.bf16 %v2124, %v2122
      %v2243 = vpack.c.bf16 %v2125, %v2123
      %v2244 = vpack.c.bf16 %v2128, %v2126
      %v2245 = vpack.c.bf16 %v2129, %v2127
      %v2246 = vpack.c.bf16 %v2132, %v2130
      %v2247 = vpack.c.bf16 %v2133, %v2131
      %v2248 = vpack.c.bf16 %v2136, %v2134
      %v2249 = vpack.c.bf16 %v2137, %v2135
      %v2250 = vpack.c.bf16 %v2140, %v2138
      %v2251 = vpack.c.bf16 %v2141, %v2139
      %v2252 = vpack.c.bf16 %v2144, %v2142
      %v2253 = vpack.c.bf16 %v2145, %v2143
      %v2254 = vpack.c.bf16 %v2148, %v2146
      %v2255 = vpack.c.bf16 %v2149, %v2147
      %v2256 = vpack.c.bf16 %v2152, %v2150
      %v2257 = vpack.c.bf16 %v2153, %v2151
      %v2258 = vpack.c.bf16 %v2156, %v2154
      %v2259 = vpack.c.bf16 %v2157, %v2155
      %v2260 = vpack.c.bf16 %v2160, %v2158
      %v2261 = vpack.c.bf16 %v2161, %v2159
      %v2262 = vpack.c.bf16 %v2164, %v2162
      %v2263 = vpack.c.bf16 %v2165, %v2163
      %v2264 = vpack.c.bf16 %v2168, %v2166
      %v2265 = vpack.c.bf16 %v2169, %v2167
      %v2266 = vpack.c.bf16 %v2172, %v2170
      %v2267 = vpack.c.bf16 %v2173, %v2171
      %v2268 = vpack.c.bf16 %v2176, %v2174
      %v2269 = vpack.c.bf16 %v2177, %v2175
      %v2270 = vpack.c.bf16 %v2180, %v2178
      %v2271 = vpack.c.bf16 %v2181, %v2179
      %v2272 = vpack.c.bf16 %v2184, %v2182
      %v2273 = vpack.c.bf16 %v2185, %v2183
      %v2274 = vpack.c.bf16 %v2188, %v2186
      %v2275 = vpack.c.bf16 %v2189, %v2187
      %v2276 = vpack.c.bf16 %v2192, %v2190
      %v2277 = vpack.c.bf16 %v2193, %v2191
      %v2278 = vpack.c.bf16 %v2196, %v2194
      %v2279 = vpack.c.bf16 %v2197, %v2195
      %v2280 = vpack.c.bf16 %v2200, %v2198
      %v2281 = vpack.c.bf16 %v2201, %v2199
      %v2282 = vpack.c.bf16 %v2204, %v2202
      %v2283 = vpack.c.bf16 %v2205, %v2203
      %v2284 = vpack.c.bf16 %v2208, %v2206
      %v2285 = vpack.c.bf16 %v2209, %v2207
      %v2286 = vpack.c.bf16 %v2212, %v2210
      %v2287 = vpack.c.bf16 %v2213, %v2211
      %v2288 = vpack.c.bf16 %v2216, %v2214
      %v2289 = vpack.c.bf16 %v2217, %v2215
      %v2290 = vpack.c.bf16 %v2220, %v2218
      %v2291 = vpack.c.bf16 %v2221, %v2219
      %v2292 = vpack.c.bf16 %v2224, %v2222
      %v2293 = vpack.c.bf16 %v2225, %v2223
      %v2294 = vpack.c.bf16 %v2228, %v2226
      %v2295 = vpack.c.bf16 %v2229, %v2227
      %v2296 = vpack.c.bf16 %v2232, %v2230
      %v2297 = vpack.c.bf16 %v2233, %v2231
      %v2298 = vld [vmem:[%s11] sm:$0xf]
      %v2299 = vld [vmem:[%s11 + $0x4] sm:$0xf]
      %v2300 = vld [vmem:[%s11 + $0x8] sm:$0xf]
      %v2301 = vld [vmem:[%s11 + $0xc] sm:$0xf]
      %v2302 = vld [vmem:[%s11 + $0x10] sm:$0xf]
      %v2303 = vld [vmem:[%s11 + $0x14] sm:$0xf]
      %v2304 = vld [vmem:[%s11 + $0x18] sm:$0xf]
      %v2305 = vld [vmem:[%s11 + $0x1c] sm:$0xf]
      %v2306 = vld [vmem:[%s11 + $0x20] sm:$0xf]
      %v2307 = vld [vmem:[%s11 + $0x24] sm:$0xf]
      %v2308 = vld [vmem:[%s11 + $0x28] sm:$0xf]
      %v2309 = vld [vmem:[%s11 + $0x2c] sm:$0xf]
      %v2310 = vld [vmem:[%s11 + $0x30] sm:$0xf]
      %v2311 = vld [vmem:[%s11 + $0x34] sm:$0xf]
      %v2312 = vld [vmem:[%s11 + $0x38] sm:$0xf]
      %v2313 = vld [vmem:[%s11 + $0x3c] sm:$0xf]
      %v2314 = vld [vmem:[%s11 + $0x40] sm:$0xf]
      %v2315 = vld [vmem:[%s11 + $0x44] sm:$0xf]
      %v2316 = vld [vmem:[%s11 + $0x48] sm:$0xf]
      %v2317 = vld [vmem:[%s11 + $0x4c] sm:$0xf]
      %v2318 = vld [vmem:[%s11 + $0x50] sm:$0xf]
      %v2319 = vld [vmem:[%s11 + $0x54] sm:$0xf]
      %v2320 = vld [vmem:[%s11 + $0x58] sm:$0xf]
      %v2321 = vld [vmem:[%s11 + $0x5c] sm:$0xf]
      %v2322 = vld [vmem:[%s11 + $0x60] sm:$0xf]
      %v2323 = vld [vmem:[%s11 + $0x64] sm:$0xf]
      %v2324 = vld [vmem:[%s11 + $0x68] sm:$0xf]
      %v2325 = vld [vmem:[%s11 + $0x6c] sm:$0xf]
      %v2326 = vld [vmem:[%s11 + $0x70] sm:$0xf]
      %v2327 = vld [vmem:[%s11 + $0x74] sm:$0xf]
      %v2328 = vld [vmem:[%s11 + $0x78] sm:$0xf]
      %v2329 = vld [vmem:[%s11 + $0x7c] sm:$0xf]
      %v2330 = vld [vmem:[%s12] sm:$0x1]
      %v2332 = vlaneseq
      %v2333 = vshrl.u32 %v2332, 7
      %v2334 = vsub.s32 0, %v2333
      %v2335 = vrot.slane %v2330, %v2334
      %v2369 = vunpack.c.l.b16 %v2298
      %v2370 = vunpack.c.l.b16 %v2299
      %v2371 = vunpack.c.l.b16 %v2300
      %v2372 = vunpack.c.l.b16 %v2301
      %v2373 = vunpack.c.l.b16 %v2302
      %v2374 = vunpack.c.l.b16 %v2303
      %v2375 = vunpack.c.l.b16 %v2304
      %v2376 = vunpack.c.l.b16 %v2305
      %v2377 = vunpack.c.l.b16 %v2306
      %v2378 = vunpack.c.l.b16 %v2307
      %v2379 = vunpack.c.l.b16 %v2308
      %v2380 = vunpack.c.l.b16 %v2309
      %v2381 = vunpack.c.l.b16 %v2310
      %v2382 = vunpack.c.l.b16 %v2311
      %v2383 = vunpack.c.l.b16 %v2312
      %v2384 = vunpack.c.l.b16 %v2313
      %v2385 = vunpack.c.l.b16 %v2314
      %v2386 = vunpack.c.l.b16 %v2315
      %v2387 = vunpack.c.l.b16 %v2316
      %v2388 = vunpack.c.l.b16 %v2317
      %v2389 = vunpack.c.l.b16 %v2318
      %v2390 = vunpack.c.l.b16 %v2319
      %v2391 = vunpack.c.l.b16 %v2320
      %v2392 = vunpack.c.l.b16 %v2321
      %v2393 = vunpack.c.l.b16 %v2322
      %v2394 = vunpack.c.l.b16 %v2323
      %v2395 = vunpack.c.l.b16 %v2324
      %v2396 = vunpack.c.l.b16 %v2325
      %v2397 = vunpack.c.l.b16 %v2326
      %v2398 = vunpack.c.l.b16 %v2327
      %v2399 = vunpack.c.l.b16 %v2328
      %v2400 = vunpack.c.l.b16 %v2329
      %v2401 = vpack.c.b16 %v2370, %v2369
      %v2402 = vpack.c.b16 %v2372, %v2371
      %v2403 = vpack.c.b16 %v2374, %v2373
      %v2404 = vpack.c.b16 %v2376, %v2375
      %v2405 = vpack.c.b16 %v2378, %v2377
      %v2406 = vpack.c.b16 %v2380, %v2379
      %v2407 = vpack.c.b16 %v2382, %v2381
      %v2408 = vpack.c.b16 %v2384, %v2383
      %v2409 = vpack.c.b16 %v2386, %v2385
      %v2410 = vpack.c.b16 %v2388, %v2387
      %v2411 = vpack.c.b16 %v2390, %v2389
      %v2412 = vpack.c.b16 %v2392, %v2391
      %v2413 = vpack.c.b16 %v2394, %v2393
      %v2414 = vpack.c.b16 %v2396, %v2395
      %v2415 = vpack.c.b16 %v2398, %v2397
      %v2416 = vpack.c.b16 %v2400, %v2399
      %2433 = vmatprep.subr.bf16.mxu0 0
      %2434 = vmatpush1.bf16.msra.mxu0 %v2401
      %2435 = vmatprep.subr.bf16.mxu0 0
      %2436 = vmatpush1.bf16.msra.mxu0 %v2402
      %2437 = vmatprep.subr.bf16.mxu0 0
      %2438 = vmatpush1.bf16.msra.mxu0 %v2403
      %2439 = vmatprep.subr.bf16.mxu0 0
      %2440 = vmatpush1.bf16.msra.mxu0 %v2404
      %2441 = vmatprep.subr.bf16.mxu0 0
      %2442 = vmatpush1.bf16.msra.mxu0 %v2405
      %2443 = vmatprep.subr.bf16.mxu0 0
      %2444 = vmatpush1.bf16.msra.mxu0 %v2406
      %2445 = vmatprep.subr.bf16.mxu0 0
      %2446 = vmatpush1.bf16.msra.mxu0 %v2407
      %2447 = vmatprep.subr.bf16.mxu0 0
      %2448 = vmatpush1.bf16.msra.mxu0 %v2408
      %2449 = vmatprep.subr.bf16.mxu0 0
      %2450 = vmatpush1.bf16.msra.mxu0 %v2409
      %2451 = vmatprep.subr.bf16.mxu0 0
      %2452 = vmatpush1.bf16.msra.mxu0 %v2410
      %2453 = vmatprep.subr.bf16.mxu0 0
      %2454 = vmatpush1.bf16.msra.mxu0 %v2411
      %2455 = vmatprep.subr.bf16.mxu0 0
      %2456 = vmatpush1.bf16.msra.mxu0 %v2412
      %2457 = vmatprep.subr.bf16.mxu0 0
      %2458 = vmatpush1.bf16.msra.mxu0 %v2413
      %2459 = vmatprep.subr.bf16.mxu0 0
      %2460 = vmatpush1.bf16.msra.mxu0 %v2414
      %2461 = vmatprep.subr.bf16.mxu0 0
      %2462 = vmatpush1.bf16.msra.mxu0 %v2415
      %2463 = vmatprep.subr.bf16.mxu0 0
      %2464 = vmatpush1.bf16.msra.mxu0 %v2416
      %2465 = vmatprep.mubr.bf16.mxu0 %v2235
      %2466 = vmatmul.mubr.bf16.gmra.mrb[0].mxu0 %v2234
      %v2467 = vpop.f32.mrb[0].mxu0
      %v2468 = vadd.f32 %v2335, %v2467
      %v2469 = vpop.f32.mrb[0].mxu0
      %v2470 = vpop.f32.mrb[0].mxu0
      %v2471 = vadd.f32 %v2335, %v2470
      %v2472 = vpop.f32.mrb[0].mxu0
      %2473 = vmatprep.mubr.bf16.mxu0 %v2237
      %2474 = vmatmul.mubr.bf16.gmra.mrb[0].mxu0 %v2236
      %v2475 = vpop.f32.mrb[0].mxu0
      %v2476 = vadd.f32 %v2335, %v2475
      %v2477 = vpop.f32.mrb[0].mxu0
      %v2478 = vpop.f32.mrb[0].mxu0
      %v2479 = vadd.f32 %v2335, %v2478
      %v2480 = vpop.f32.mrb[0].mxu0
      %2481 = vmatprep.mubr.bf16.mxu0 %v2239
      %2482 = vmatmul.mubr.bf16.gmra.mrb[0].mxu0 %v2238
      %v2483 = vpop.f32.mrb[0].mxu0
      %v2484 = vadd.f32 %v2335, %v2483
      %v2485 = vpop.f32.mrb[0].mxu0
      %v2486 = vpop.f32.mrb[0].mxu0
      %v2487 = vadd.f32 %v2335, %v2486
      %v2488 = vpop.f32.mrb[0].mxu0
      %2489 = vmatprep.mubr.bf16.mxu0 %v2241
      %2490 = vmatmul.mubr.bf16.gmra.mrb[0].mxu0 %v2240
      %v2491 = vpop.f32.mrb[0].mxu0
      %v2492 = vadd.f32 %v2335, %v2491
      %v2493 = vpop.f32.mrb[0].mxu0
      %v2494 = vpop.f32.mrb[0].mxu0
      %v2495 = vadd.f32 %v2335, %v2494
      %v2496 = vpop.f32.mrb[0].mxu0
      %2497 = vmatprep.mubr.bf16.mxu0 %v2243
      %2498 = vmatmul.mubr.bf16.gmra.mrb[0].mxu0 %v2242
      %v2499 = vpop.f32.mrb[0].mxu0
      %v2500 = vadd.f32 %v2335, %v2499
      %v2501 = vpop.f32.mrb[0].mxu0
      %v2502 = vpop.f32.mrb[0].mxu0
      %v2503 = vadd.f32 %v2335, %v2502
      %v2504 = vpop.f32.mrb[0].mxu0
      %2505 = vmatprep.mubr.bf16.mxu0 %v2245
      %2506 = vmatmul.mubr.bf16.gmra.mrb[0].mxu0 %v2244
      %v2507 = vpop.f32.mrb[0].mxu0
      %v2508 = vadd.f32 %v2335, %v2507
      %v2509 = vpop.f32.mrb[0].mxu0
      %v2510 = vpop.f32.mrb[0].mxu0
      %v2511 = vadd.f32 %v2335, %v2510
      %v2512 = vpop.f32.mrb[0].mxu0
      %2513 = vmatprep.mubr.bf16.mxu0 %v2247
      %2514 = vmatmul.mubr.bf16.gmra.mrb[0].mxu0 %v2246
      %v2515 = vpop.f32.mrb[0].mxu0
      %v2516 = vadd.f32 %v2335, %v2515
      %v2517 = vpop.f32.mrb[0].mxu0
      %v2518 = vpop.f32.mrb[0].mxu0
      %v2519 = vadd.f32 %v2335, %v2518
      %v2520 = vpop.f32.mrb[0].mxu0
      %2521 = vmatprep.mubr.bf16.mxu0 %v2249
      %2522 = vmatmul.mubr.bf16.gmra.mrb[0].mxu0 %v2248
      %v2523 = vpop.f32.mrb[0].mxu0
      %v2524 = vadd.f32 %v2335, %v2523
      %v2525 = vpop.f32.mrb[0].mxu0
      %v2526 = vpop.f32.mrb[0].mxu0
      %v2527 = vadd.f32 %v2335, %v2526
      %v2528 = vpop.f32.mrb[0].mxu0
      %2529 = vmatprep.mubr.bf16.mxu0 %v2251
      %2530 = vmatmul.mubr.bf16.gmra.mrb[0].mxu0 %v2250
      %v2531 = vpop.f32.mrb[0].mxu0
      %v2532 = vadd.f32 %v2335, %v2531
      %v2533 = vpop.f32.mrb[0].mxu0
      %v2534 = vpop.f32.mrb[0].mxu0
      %v2535 = vadd.f32 %v2335, %v2534
      %v2536 = vpop.f32.mrb[0].mxu0
      %2537 = vmatprep.mubr.bf16.mxu0 %v2253
      %2538 = vmatmul.mubr.bf16.gmra.mrb[0].mxu0 %v2252
      %v2539 = vpop.f32.mrb[0].mxu0
      %v2540 = vadd.f32 %v2335, %v2539
      %v2541 = vpop.f32.mrb[0].mxu0
      %v2542 = vpop.f32.mrb[0].mxu0
      %v2543 = vadd.f32 %v2335, %v2542
      %v2544 = vpop.f32.mrb[0].mxu0
      %2545 = vmatprep.mubr.bf16.mxu0 %v2255
      %2546 = vmatmul.mubr.bf16.gmra.mrb[0].mxu0 %v2254
      %v2547 = vpop.f32.mrb[0].mxu0
      %v2548 = vadd.f32 %v2335, %v2547
      %v2549 = vpop.f32.mrb[0].mxu0
      %v2550 = vpop.f32.mrb[0].mxu0
      %v2551 = vadd.f32 %v2335, %v2550
      %v2552 = vpop.f32.mrb[0].mxu0
      %2553 = vmatprep.mubr.bf16.mxu0 %v2257
      %2554 = vmatmul.mubr.bf16.gmra.mrb[0].mxu0 %v2256
      %v2555 = vpop.f32.mrb[0].mxu0
      %v2556 = vadd.f32 %v2335, %v2555
      %v2557 = vpop.f32.mrb[0].mxu0
      %v2558 = vpop.f32.mrb[0].mxu0
      %v2559 = vadd.f32 %v2335, %v2558
      %v2560 = vpop.f32.mrb[0].mxu0
      %2561 = vmatprep.mubr.bf16.mxu0 %v2259
      %2562 = vmatmul.mubr.bf16.gmra.mrb[0].mxu0 %v2258
      %v2563 = vpop.f32.mrb[0].mxu0
      %v2564 = vadd.f32 %v2335, %v2563
      %v2565 = vpop.f32.mrb[0].mxu0
      %v2566 = vpop.f32.mrb[0].mxu0
      %v2567 = vadd.f32 %v2335, %v2566
      %v2568 = vpop.f32.mrb[0].mxu0
      %2569 = vmatprep.mubr.bf16.mxu0 %v2261
      %2570 = vmatmul.mubr.bf16.gmra.mrb[0].mxu0 %v2260
      %v2571 = vpop.f32.mrb[0].mxu0
      %v2572 = vadd.f32 %v2335, %v2571
      %v2573 = vpop.f32.mrb[0].mxu0
      %v2574 = vpop.f32.mrb[0].mxu0
      %v2575 = vadd.f32 %v2335, %v2574
      %v2576 = vpop.f32.mrb[0].mxu0
      %2577 = vmatprep.mubr.bf16.mxu0 %v2263
      %2578 = vmatmul.mubr.bf16.gmra.mrb[0].mxu0 %v2262
      %v2579 = vpop.f32.mrb[0].mxu0
      %v2580 = vadd.f32 %v2335, %v2579
      %v2581 = vpop.f32.mrb[0].mxu0
      %v2582 = vpop.f32.mrb[0].mxu0
      %v2583 = vadd.f32 %v2335, %v2582
      %v2584 = vpop.f32.mrb[0].mxu0
      %2585 = vmatprep.mubr.bf16.mxu0 %v2265
      %2586 = vmatmul.mubr.bf16.gmra.mrb[0].mxu0 %v2264
      %v2587 = vpop.f32.mrb[0].mxu0
      %v2588 = vadd.f32 %v2335, %v2587
      %v2589 = vpop.f32.mrb[0].mxu0
      %v2590 = vpop.f32.mrb[0].mxu0
      %v2591 = vadd.f32 %v2335, %v2590
      %v2592 = vpop.f32.mrb[0].mxu0
      %2593 = vmatprep.mubr.bf16.mxu0 %v2267
      %2594 = vmatmul.mubr.bf16.gmra.mrb[0].mxu0 %v2266
      %v2595 = vpop.f32.mrb[0].mxu0
      %v2596 = vadd.f32 %v2335, %v2595
      %v2597 = vpop.f32.mrb[0].mxu0
      %v2598 = vpop.f32.mrb[0].mxu0
      %v2599 = vadd.f32 %v2335, %v2598
      %v2600 = vpop.f32.mrb[0].mxu0
      %2601 = vmatprep.mubr.bf16.mxu0 %v2269
      %2602 = vmatmul.mubr.bf16.gmra.mrb[0].mxu0 %v2268
      %v2603 = vpop.f32.mrb[0].mxu0
      %v2604 = vadd.f32 %v2335, %v2603
      %v2605 = vpop.f32.mrb[0].mxu0
      %v2606 = vpop.f32.mrb[0].mxu0
      %v2607 = vadd.f32 %v2335, %v2606
      %v2608 = vpop.f32.mrb[0].mxu0
      %2609 = vmatprep.mubr.bf16.mxu0 %v2271
      %2610 = vmatmul.mubr.bf16.gmra.mrb[0].mxu0 %v2270
      %v2611 = vpop.f32.mrb[0].mxu0
      %v2612 = vadd.f32 %v2335, %v2611
      %v2613 = vpop.f32.mrb[0].mxu0
      %v2614 = vpop.f32.mrb[0].mxu0
      %v2615 = vadd.f32 %v2335, %v2614
      %v2616 = vpop.f32.mrb[0].mxu0
      %2617 = vmatprep.mubr.bf16.mxu0 %v2273
      %2618 = vmatmul.mubr.bf16.gmra.mrb[0].mxu0 %v2272
      %v2619 = vpop.f32.mrb[0].mxu0
      %v2620 = vadd.f32 %v2335, %v2619
      %v2621 = vpop.f32.mrb[0].mxu0
      %v2622 = vpop.f32.mrb[0].mxu0
      %v2623 = vadd.f32 %v2335, %v2622
      %v2624 = vpop.f32.mrb[0].mxu0
      %2625 = vmatprep.mubr.bf16.mxu0 %v2275
      %2626 = vmatmul.mubr.bf16.gmra.mrb[0].mxu0 %v2274
      %v2627 = vpop.f32.mrb[0].mxu0
      %v2628 = vadd.f32 %v2335, %v2627
      %v2629 = vpop.f32.mrb[0].mxu0
      %v2630 = vpop.f32.mrb[0].mxu0
      %v2631 = vadd.f32 %v2335, %v2630
      %v2632 = vpop.f32.mrb[0].mxu0
      %2633 = vmatprep.mubr.bf16.mxu0 %v2277
      %2634 = vmatmul.mubr.bf16.gmra.mrb[0].mxu0 %v2276
      %v2635 = vpop.f32.mrb[0].mxu0
      %v2636 = vadd.f32 %v2335, %v2635
      %v2637 = vpop.f32.mrb[0].mxu0
      %v2638 = vpop.f32.mrb[0].mxu0
      %v2639 = vadd.f32 %v2335, %v2638
      %v2640 = vpop.f32.mrb[0].mxu0
      %2641 = vmatprep.mubr.bf16.mxu0 %v2279
      %2642 = vmatmul.mubr.bf16.gmra.mrb[0].mxu0 %v2278
      %v2643 = vpop.f32.mrb[0].mxu0
      %v2644 = vadd.f32 %v2335, %v2643
      %v2645 = vpop.f32.mrb[0].mxu0
      %v2646 = vpop.f32.mrb[0].mxu0
      %v2647 = vadd.f32 %v2335, %v2646
      %v2648 = vpop.f32.mrb[0].mxu0
      %2649 = vmatprep.mubr.bf16.mxu0 %v2281
      %2650 = vmatmul.mubr.bf16.gmra.mrb[0].mxu0 %v2280
      %v2651 = vpop.f32.mrb[0].mxu0
      %v2652 = vadd.f32 %v2335, %v2651
      %v2653 = vpop.f32.mrb[0].mxu0
      %v2654 = vpop.f32.mrb[0].mxu0
      %v2655 = vadd.f32 %v2335, %v2654
      %v2656 = vpop.f32.mrb[0].mxu0
      %2657 = vmatprep.mubr.bf16.mxu0 %v2283
      %2658 = vmatmul.mubr.bf16.gmra.mrb[0].mxu0 %v2282
      %v2659 = vpop.f32.mrb[0].mxu0
      %v2660 = vadd.f32 %v2335, %v2659
      %v2661 = vpop.f32.mrb[0].mxu0
      %v2662 = vpop.f32.mrb[0].mxu0
      %v2663 = vadd.f32 %v2335, %v2662
      %v2664 = vpop.f32.mrb[0].mxu0
      %2665 = vmatprep.mubr.bf16.mxu0 %v2285
      %2666 = vmatmul.mubr.bf16.gmra.mrb[0].mxu0 %v2284
      %v2667 = vpop.f32.mrb[0].mxu0
      %v2668 = vadd.f32 %v2335, %v2667
      %v2669 = vpop.f32.mrb[0].mxu0
      %v2670 = vpop.f32.mrb[0].mxu0
      %v2671 = vadd.f32 %v2335, %v2670
      %v2672 = vpop.f32.mrb[0].mxu0
      %2673 = vmatprep.mubr.bf16.mxu0 %v2287
      %2674 = vmatmul.mubr.bf16.gmra.mrb[0].mxu0 %v2286
      %v2675 = vpop.f32.mrb[0].mxu0
      %v2676 = vadd.f32 %v2335, %v2675
      %v2677 = vpop.f32.mrb[0].mxu0
      %v2678 = vpop.f32.mrb[0].mxu0
      %v2679 = vadd.f32 %v2335, %v2678
      %v2680 = vpop.f32.mrb[0].mxu0
      %2681 = vmatprep.mubr.bf16.mxu0 %v2289
      %2682 = vmatmul.mubr.bf16.gmra.mrb[0].mxu0 %v2288
      %v2683 = vpop.f32.mrb[0].mxu0
      %v2684 = vadd.f32 %v2335, %v2683
      %v2685 = vpop.f32.mrb[0].mxu0
      %v2686 = vpop.f32.mrb[0].mxu0
      %v2687 = vadd.f32 %v2335, %v2686
      %v2688 = vpop.f32.mrb[0].mxu0
      %2689 = vmatprep.mubr.bf16.mxu0 %v2291
      %2690 = vmatmul.mubr.bf16.gmra.mrb[0].mxu0 %v2290
      %v2691 = vpop.f32.mrb[0].mxu0
      %v2692 = vadd.f32 %v2335, %v2691
      %v2693 = vpop.f32.mrb[0].mxu0
      %v2694 = vpop.f32.mrb[0].mxu0
      %v2695 = vadd.f32 %v2335, %v2694
      %v2696 = vpop.f32.mrb[0].mxu0
      %2697 = vmatprep.mubr.bf16.mxu0 %v2293
      %2698 = vmatmul.mubr.bf16.gmra.mrb[0].mxu0 %v2292
      %v2699 = vpop.f32.mrb[0].mxu0
      %v2700 = vadd.f32 %v2335, %v2699
      %v2701 = vpop.f32.mrb[0].mxu0
      %v2702 = vpop.f32.mrb[0].mxu0
      %v2703 = vadd.f32 %v2335, %v2702
      %v2704 = vpop.f32.mrb[0].mxu0
      %2705 = vmatprep.mubr.bf16.mxu0 %v2295
      %2706 = vmatmul.mubr.bf16.gmra.mrb[0].mxu0 %v2294
      %v2707 = vpop.f32.mrb[0].mxu0
      %v2708 = vadd.f32 %v2335, %v2707
      %v2709 = vpop.f32.mrb[0].mxu0
      %v2710 = vpop.f32.mrb[0].mxu0
      %v2711 = vadd.f32 %v2335, %v2710
      %v2712 = vpop.f32.mrb[0].mxu0
      %2713 = vmatprep.mubr.bf16.mxu0 %v2297
      %2714 = vmatmul.mubr.bf16.gmra.mrb[0].mxu0 %v2296
      %v2715 = vpop.f32.mrb[0].mxu0
      %v2716 = vadd.f32 %v2335, %v2715
      %v2717 = vpop.f32.mrb[0].mxu0
      %v2718 = vpop.f32.mrb[0].mxu0
      %v2719 = vadd.f32 %v2335, %v2718
      %v2720 = vpop.f32.mrb[0].mxu0
      %2721 = vdwg.mxu0
      %v2722 = vadd.f32 %v1549, %v2468
      %v2723 = vadd.f32 %v1550, %v2471
      %v2724 = vadd.f32 %v1551, %v2476
      %v2725 = vadd.f32 %v1552, %v2479
      %v2726 = vadd.f32 %v1553, %v2484
      %v2727 = vadd.f32 %v1554, %v2487
      %v2728 = vadd.f32 %v1555, %v2492
      %v2729 = vadd.f32 %v1556, %v2495
      %v2730 = vadd.f32 %v1557, %v2500
      %v2731 = vadd.f32 %v1558, %v2503
      %v2732 = vadd.f32 %v1559, %v2508
      %v2733 = vadd.f32 %v1560, %v2511
      %v2734 = vadd.f32 %v1561, %v2516
      %v2735 = vadd.f32 %v1562, %v2519
      %v2736 = vadd.f32 %v1563, %v2524
      %v2737 = vadd.f32 %v1564, %v2527
      %v2738 = vadd.f32 %v1565, %v2532
      %v2739 = vadd.f32 %v1566, %v2535
      %v2740 = vadd.f32 %v1567, %v2540
      %v2741 = vadd.f32 %v1568, %v2543
      %v2742 = vadd.f32 %v1569, %v2548
      %v2743 = vadd.f32 %v1570, %v2551
      %v2744 = vadd.f32 %v1571, %v2556
      %v2745 = vadd.f32 %v1572, %v2559
      %v2746 = vadd.f32 %v1573, %v2564
      %v2747 = vadd.f32 %v1574, %v2567
      %v2748 = vadd.f32 %v1575, %v2572
      %v2749 = vadd.f32 %v1576, %v2575
      %v2750 = vadd.f32 %v1577, %v2580
      %v2751 = vadd.f32 %v1578, %v2583
      %v2752 = vadd.f32 %v1579, %v2588
      %v2753 = vadd.f32 %v1580, %v2591
      %v2754 = vadd.f32 %v1581, %v2596
      %v2755 = vadd.f32 %v1582, %v2599
      %v2756 = vadd.f32 %v1583, %v2604
      %v2757 = vadd.f32 %v1584, %v2607
      %v2758 = vadd.f32 %v1585, %v2612
      %v2759 = vadd.f32 %v1586, %v2615
      %v2760 = vadd.f32 %v1587, %v2620
      %v2761 = vadd.f32 %v1588, %v2623
      %v2762 = vadd.f32 %v1589, %v2628
      %v2763 = vadd.f32 %v1590, %v2631
      %v2764 = vadd.f32 %v1591, %v2636
      %v2765 = vadd.f32 %v1592, %v2639
      %v2766 = vadd.f32 %v1593, %v2644
      %v2767 = vadd.f32 %v1594, %v2647
      %v2768 = vadd.f32 %v1595, %v2652
      %v2769 = vadd.f32 %v1596, %v2655
      %v2770 = vadd.f32 %v1597, %v2660
      %v2771 = vadd.f32 %v1598, %v2663
      %v2772 = vadd.f32 %v1599, %v2668
      %v2773 = vadd.f32 %v1600, %v2671
      %v2774 = vadd.f32 %v1601, %v2676
      %v2775 = vadd.f32 %v1602, %v2679
      %v2776 = vadd.f32 %v1603, %v2684
      %v2777 = vadd.f32 %v1604, %v2687
      %v2778 = vadd.f32 %v1605, %v2692
      %v2779 = vadd.f32 %v1606, %v2695
      %v2780 = vadd.f32 %v1607, %v2700
      %v2781 = vadd.f32 %v1608, %v2703
      %v2782 = vadd.f32 %v1609, %v2708
      %v2783 = vadd.f32 %v1610, %v2711
      %v2784 = vadd.f32 %v1611, %v2716
      %v2785 = vadd.f32 %v1612, %v2719
      %2786 = vst [vmem:[%s486] sm:$0xff] %v2722
      %2787 = vst [vmem:[%s486 + $0x8] sm:$0xff] %v2723
      %2788 = vst [vmem:[%s486 + $0x10] sm:$0xff] %v2724
      %2789 = vst [vmem:[%s486 + $0x18] sm:$0xff] %v2725
      %2790 = vst [vmem:[%s486 + $0x20] sm:$0xff] %v2726
      %2791 = vst [vmem:[%s486 + $0x28] sm:$0xff] %v2727
      %2792 = vst [vmem:[%s486 + $0x30] sm:$0xff] %v2728
      %2793 = vst [vmem:[%s486 + $0x38] sm:$0xff] %v2729
      %2794 = vst [vmem:[%s486 + $0x40] sm:$0xff] %v2730
      %2795 = vst [vmem:[%s486 + $0x48] sm:$0xff] %v2731
      %2796 = vst [vmem:[%s486 + $0x50] sm:$0xff] %v2732
      %2797 = vst [vmem:[%s486 + $0x58] sm:$0xff] %v2733
      %2798 = vst [vmem:[%s486 + $0x60] sm:$0xff] %v2734
      %2799 = vst [vmem:[%s486 + $0x68] sm:$0xff] %v2735
      %2800 = vst [vmem:[%s486 + $0x70] sm:$0xff] %v2736
      %2801 = vst [vmem:[%s486 + $0x78] sm:$0xff] %v2737
      %2802 = vst [vmem:[%s486 + $0x80] sm:$0xff] %v2738
      %2803 = vst [vmem:[%s486 + $0x88] sm:$0xff] %v2739
      %2804 = vst [vmem:[%s486 + $0x90] sm:$0xff] %v2740
      %2805 = vst [vmem:[%s486 + $0x98] sm:$0xff] %v2741
      %2806 = vst [vmem:[%s486 + $0xa0] sm:$0xff] %v2742
      %2807 = vst [vmem:[%s486 + $0xa8] sm:$0xff] %v2743
      %2808 = vst [vmem:[%s486 + $0xb0] sm:$0xff] %v2744
      %2809 = vst [vmem:[%s486 + $0xb8] sm:$0xff] %v2745
      %2810 = vst [vmem:[%s486 + $0xc0] sm:$0xff] %v2746
      %2811 = vst [vmem:[%s486 + $0xc8] sm:$0xff] %v2747
      %2812 = vst [vmem:[%s486 + $0xd0] sm:$0xff] %v2748
      %2813 = vst [vmem:[%s486 + $0xd8] sm:$0xff] %v2749
      %2814 = vst [vmem:[%s486 + $0xe0] sm:$0xff] %v2750
      %2815 = vst [vmem:[%s486 + $0xe8] sm:$0xff] %v2751
      %2816 = vst [vmem:[%s486 + $0xf0] sm:$0xff] %v2752
      %2817 = vst [vmem:[%s486 + $0xf8] sm:$0xff] %v2753
      %2818 = vst [vmem:[%s486 + $0x100] sm:$0xff] %v2754
      %2819 = vst [vmem:[%s486 + $0x108] sm:$0xff] %v2755
      %2820 = vst [vmem:[%s486 + $0x110] sm:$0xff] %v2756
      %2821 = vst [vmem:[%s486 + $0x118] sm:$0xff] %v2757
      %2822 = vst [vmem:[%s486 + $0x120] sm:$0xff] %v2758
      %2823 = vst [vmem:[%s486 + $0x128] sm:$0xff] %v2759
      %2824 = vst [vmem:[%s486 + $0x130] sm:$0xff] %v2760
      %2825 = vst [vmem:[%s486 + $0x138] sm:$0xff] %v2761
      %2826 = vst [vmem:[%s486 + $0x140] sm:$0xff] %v2762
      %2827 = vst [vmem:[%s486 + $0x148] sm:$0xff] %v2763
      %2828 = vst [vmem:[%s486 + $0x150] sm:$0xff] %v2764
      %2829 = vst [vmem:[%s486 + $0x158] sm:$0xff] %v2765
      %2830 = vst [vmem:[%s486 + $0x160] sm:$0xff] %v2766
      %2831 = vst [vmem:[%s486 + $0x168] sm:$0xff] %v2767
      %2832 = vst [vmem:[%s486 + $0x170] sm:$0xff] %v2768
      %2833 = vst [vmem:[%s486 + $0x178] sm:$0xff] %v2769
      %2834 = vst [vmem:[%s486 + $0x180] sm:$0xff] %v2770
      %2835 = vst [vmem:[%s486 + $0x188] sm:$0xff] %v2771
      %2836 = vst [vmem:[%s486 + $0x190] sm:$0xff] %v2772
      %2837 = vst [vmem:[%s486 + $0x198] sm:$0xff] %v2773
      %2838 = vst [vmem:[%s486 + $0x1a0] sm:$0xff] %v2774
      %2839 = vst [vmem:[%s486 + $0x1a8] sm:$0xff] %v2775
      %2840 = vst [vmem:[%s486 + $0x1b0] sm:$0xff] %v2776
      %2841 = vst [vmem:[%s486 + $0x1b8] sm:$0xff] %v2777
      %2842 = vst [vmem:[%s486 + $0x1c0] sm:$0xff] %v2778
      %2843 = vst [vmem:[%s486 + $0x1c8] sm:$0xff] %v2779
      %2844 = vst [vmem:[%s486 + $0x1d0] sm:$0xff] %v2780
      %2845 = vst [vmem:[%s486 + $0x1d8] sm:$0xff] %v2781
      %2846 = vst [vmem:[%s486 + $0x1e0] sm:$0xff] %v2782
      %2847 = vst [vmem:[%s486 + $0x1e8] sm:$0xff] %v2783
      %2848 = vst [vmem:[%s486 + $0x1f0] sm:$0xff] %v2784
      %2849 = vst [vmem:[%s486 + $0x1f8] sm:$0xff] %v2785
      %s2850 = smul.u32 64, %s24
      %p2851 = scmp.lt.s32.totalorder %s2850, 127
      %s2852 = scalar_select %p2851, %s2850, 127
      %s2853 = smul.addr %s2852, 8
      %s2854 = scalar_lea.vmem %s13, %s2853
      // Predicated region
      $region73: #{graph_transformer_layer.5} parent=71 // pred_check
        %p2855 = pneg %p330
      $region74: #{graph_transformer_layer.5} parent=71 // pred_check_branch
        %2857 = sbr.rel (%p2855) target = $region76
      $region75: #{graph_transformer_layer.5} parent=71 // pred_region
        %s2858 = smul.u32 64, %s24
      $region76: #{graph_transformer_layer.5} parent=71 // pred_fallthru
        _
    $region72: #{graph_transformer_layer.5} parent=5 // pred_fallthru
      _
    %p2859 = scmp.le.s32.totalorder 2, %s19
    // Predicated region
    $region77: #{graph_transformer_layer.5} parent=5 // pred_check
      %p2860 = pneg %p2859
    $region78: #{graph_transformer_layer.5} parent=5 // pred_check_branch
      %2862 = sbr.rel (%p2860) target = $region80
    $region79: #{graph_transformer_layer.5} parent=5 // pred_region
      %s2863 = ssub.s32 %s19, 2
      // Predicated region
      $region81: #{graph_transformer_layer.5} parent=79 // pred_check
        %p2864 = pneg %p336
      $region82: #{graph_transformer_layer.5} parent=79 // pred_check_branch
        %2866 = sbr.rel (%p2864) target = $region84
      $region83: #{graph_transformer_layer.5} parent=79 // pred_region
        %s2867 = smul.u32 64, %s25
        %p2868 = scmp.lt.s32.totalorder %s2867, 127
        %s2869 = scalar_select %p2868, %s2867, 127
        %s2870 = smul.addr %s2869, 8
        %s2871 = scalar_lea.vmem %s13, %s2870
      $region84: #{graph_transformer_layer.5} parent=79 // pred_fallthru
        _
    $region80: #{graph_transformer_layer.5} parent=5 // pred_fallthru
      _
  $region6: #{graph_transformer_layer.5} parent=0 // loop_footer
    %s23 = sadd.s32 1, %s19
  $region7: #{graph_transformer_layer.5} parent=0 // loop_footer_branch
    %18 = sbr.rel target = $region3
  $region8: #{graph_transformer_layer.5} parent=0 // loop_exit
    _

// kernel: graph_transformer_layer.4
$region0: #{graph_transformer_layer.4}
  #allocation0 [shape = 'u32[]', space=smem, size = 0x4, offset = 0x4, fixed_abs, tag = 'smem constant byte address 0x4 - core index']
  #allocation1 [shape = 'u32[144,128]{1,0:T(1,128)}', space=vmem, size = 0x12000, scoped, tag = 'internal scratch']
  %s0 = inlined_call_operand.vmem [shape: f32[2048,128], index: 0, kind: input, shape index: {}]
  %s1 = inlined_call_operand.vmem [shape: bf16[2048,256], index: 1, kind: input, shape index: {}]
  %s2 = inlined_call_operand.vmem [shape: bf16[2048,128], index: 2, kind: input, shape index: {}]
  %s3 = inlined_call_operand.vmem [shape: f32[1,128], index: 3, kind: input, shape index: {}]
  %s4 = inlined_call_operand.vmem [shape: f32[1,128], index: 4, kind: input, shape index: {}]
  %s5 = inlined_call_operand.vmem [shape: bf16[128,128], index: 5, kind: input, shape index: {}]
  %s6 = inlined_call_operand.vmem [shape: bf16[128,128], index: 6, kind: input, shape index: {}]
  %s7 = inlined_call_operand.vmem [shape: bf16[128,128], index: 7, kind: input, shape index: {}]
  %s8 = inlined_call_operand.vmem [shape: f32[1,128], index: 8, kind: input, shape index: {}]
  %s9 = inlined_call_operand.vmem [shape: f32[1,128], index: 9, kind: input, shape index: {}]
  %s10 = inlined_call_operand.vmem [shape: f32[1,128], index: 10, kind: input, shape index: {}]
  %s11 = inlined_call_operand.vmem [shape: bf16[128,256], index: 11, kind: input, shape index: {}]
  %s12 = inlined_call_operand.vmem [shape: f32[1,256], index: 12, kind: input, shape index: {}]
  %s13 = inlined_call_operand.vmem [shape: bf16[256,128], index: 13, kind: input, shape index: {}]
  %s14 = inlined_call_operand.vmem [shape: f32[1,128], index: 14, kind: input, shape index: {}]
  %s15 = inlined_call_operand.vmem [shape: f32[2048,128], index: 15, kind: output, shape index: {0}]
  %s16 = inlined_call_operand.vmem [shape: bf16[2048,128], index: 16, kind: output, shape index: {1}]
  %s17 = inlined_call_operand.vmem [shape: bf16[2048,128], index: 17, kind: output, shape index: {2}]
  %18 = xla_tuple %s15, %s16, %s17
  %s19 = sld [smem:[#allocation0]]
  $region109: #{graph_transformer_layer.4} parent=0
    _
  %s21 = ssub.s32 1, %s19
  %s22 = scalar_select 0, %s21, %s19
  loop: start=0, step=1, limit=6
  $region2: #{graph_transformer_layer.4} parent=0 // loop_pre_header
    _
  $region3: #{graph_transformer_layer.4} parent=0 // loop_header
    %s24 = sphi 0, %s28
    %p25 = scmp.ge.s32.totalorder %s24, 6
    %s34 = sphi 0, %s36
    %s37 = sphi 0, %s34
    %s38 = sphi 0, %s37
    %s54 = sphi 0, %s38
    %s60 = sphi 0, %s62
    %s63 = sphi 0, %s60
    %s64 = sphi 0, %s63
    %s80 = sphi 0, %s64
    %s86 = sphi 0, %s88
    %s89 = sphi 0, %s86
    %s90 = sphi 0, %s89
    %s106 = sphi 0, %s90
    %s110 = sphi 0, %s110
    %s112 = sphi 0, %s110
    %s113 = sphi 0, %s112
    %s127 = sphi 0, %s113
    %s131 = sphi 0, %s131
    %s133 = sphi 0, %s131
    %s134 = sphi 0, %s133
    %s148 = sphi 0, %s134
    %s152 = sphi 0, %s152
    %s154 = sphi 0, %s152
    %s155 = sphi 0, %s154
    %s169 = sphi 0, %s155
    %s173 = sphi 0, %s173
    %s175 = sphi 0, %s173
    %s176 = sphi 0, %s175
    %s190 = sphi 0, %s176
    %s194 = sphi 0, %s194
    %s196 = sphi 0, %s194
    %s197 = sphi 0, %s196
    %s211 = sphi 0, %s197
    %s215 = sphi 0, %s215
    %s217 = sphi 0, %s215
    %s218 = sphi 0, %s217
    %s232 = sphi 0, %s218
    %s236 = sphi 0, %s236
    %s238 = sphi 0, %s236
    %s239 = sphi 0, %s238
    %s253 = sphi 0, %s239
    %s257 = sphi 0, %s257
    %s259 = sphi 0, %s257
    %s260 = sphi 0, %s259
    %s274 = sphi 0, %s260
    %s278 = sphi 0, %s278
    %s280 = sphi 0, %s278
    %s281 = sphi 0, %s280
    %s295 = sphi 0, %s281
    %s299 = sphi 0, %s299
    %s301 = sphi 0, %s299
    %s302 = sphi 0, %s301
    %s316 = sphi 0, %s302
    %s320 = sphi 0, %s320
    %s322 = sphi 0, %s320
    %s323 = sphi 0, %s322
    %s337 = sphi 0, %s323
    %s341 = sphi 0, %s341
    %s343 = sphi 0, %s341
    %s344 = sphi 0, %s343
    %s358 = sphi 0, %s344
    %s364 = sphi 0, %s366
    %s367 = sphi 0, %s364
    %s368 = sphi 0, %s367
    %s384 = sphi 0, %s368
    %s390 = sphi 0, %s392
    %s393 = sphi 0, %s390
    %s394 = sphi 0, %s393
    %s410 = sphi 0, %s394
    %s416 = sphi 0, %s418
    %s419 = sphi 0, %s416
    %s420 = sphi 0, %s419
    %s436 = sphi 0, %s420
  $region4: #{graph_transformer_layer.4} parent=0 // loop_header_branch
    %27 = sbr.rel (%p25) target = $region8
  $region5: #{graph_transformer_layer.4} parent=0 // loop_body
    %s29 = ssub.s32 %s24, 1
    %s30 = ssub.s32 %s24, 2
    %s31 = sadd.s32 %s24, 1
    %s32 = ssub.s32 %s24, %s31
    %p33 = scmp.eq.s32.totalorder %s32, 0
    %s35 = sadd.s32 %s34, 1
    %s36 = scalar_select %p33, %s34, %s35
    %p39 = pneg %p33
    %p40 = scmp.eq.s32.totalorder %s24, 3
    %p41 = por %p39, %p40
    %p42 = scmp.ne.s32.totalorder %s34, %s37
    %p43 = scmp.eq.s32.totalorder %s24, 0
    %p44 = por %p42, %p43
    %p45 = scmp.ne.s32.totalorder %s34, %s37
    %p46 = scmp.eq.s32.totalorder %s29, 3
    %p47 = por %p45, %p46
    %p48 = scmp.ne.s32.totalorder %s37, %s38
    %p49 = scmp.eq.s32.totalorder %s29, 0
    %p50 = por %p48, %p49
    %p51 = scmp.ne.s32.totalorder %s37, %s38
    %p52 = scmp.eq.s32.totalorder %s30, 3
    %p53 = por %p51, %p52
    %p55 = scmp.ne.s32.totalorder %s38, %s54
    %p56 = scmp.eq.s32.totalorder %s30, 0
    %p57 = por %p55, %p56
    %s58 = ssub.s32 %s24, %s31
    %p59 = scmp.eq.s32.totalorder %s58, 0
    %s61 = sadd.s32 %s60, 1
    %s62 = scalar_select %p59, %s60, %s61
    %p65 = pneg %p59
    %p66 = scmp.eq.s32.totalorder %s24, 3
    %p67 = por %p65, %p66
    %p68 = scmp.ne.s32.totalorder %s60, %s63
    %p69 = scmp.eq.s32.totalorder %s24, 0
    %p70 = por %p68, %p69
    %p71 = scmp.ne.s32.totalorder %s60, %s63
    %p72 = scmp.eq.s32.totalorder %s29, 3
    %p73 = por %p71, %p72
    %p74 = scmp.ne.s32.totalorder %s63, %s64
    %p75 = scmp.eq.s32.totalorder %s29, 0
    %p76 = por %p74, %p75
    %p77 = scmp.ne.s32.totalorder %s63, %s64
    %p78 = scmp.eq.s32.totalorder %s30, 3
    %p79 = por %p77, %p78
    %p81 = scmp.ne.s32.totalorder %s64, %s80
    %p82 = scmp.eq.s32.totalorder %s30, 0
    %p83 = por %p81, %p82
    %s84 = ssub.s32 %s24, %s31
    %p85 = scmp.eq.s32.totalorder %s84, 0
    %s87 = sadd.s32 %s86, 1
    %s88 = scalar_select %p85, %s86, %s87
    %p91 = pneg %p85
    %p92 = scmp.eq.s32.totalorder %s24, 3
    %p93 = por %p91, %p92
    %p94 = scmp.ne.s32.totalorder %s86, %s89
    %p95 = scmp.eq.s32.totalorder %s24, 0
    %p96 = por %p94, %p95
    %p97 = scmp.ne.s32.totalorder %s86, %s89
    %p98 = scmp.eq.s32.totalorder %s29, 3
    %p99 = por %p97, %p98
    %p100 = scmp.ne.s32.totalorder %s89, %s90
    %p101 = scmp.eq.s32.totalorder %s29, 0
    %p102 = por %p100, %p101
    %p103 = scmp.ne.s32.totalorder %s89, %s90
    %p104 = scmp.eq.s32.totalorder %s30, 3
    %p105 = por %p103, %p104
    %p107 = scmp.ne.s32.totalorder %s90, %s106
    %p108 = scmp.eq.s32.totalorder %s30, 0
    %p109 = por %p107, %p108
    %s111 = sadd.s32 %s110, 1
    %p114 = scmp.eq.s32.totalorder %s24, 3
    %p115 = scmp.ne.s32.totalorder %s110, %s112
    %p116 = scmp.eq.s32.totalorder %s24, 0
    %p117 = por %p115, %p116
    %p118 = scmp.ne.s32.totalorder %s110, %s112
    %p119 = scmp.eq.s32.totalorder %s29, 3
    %p120 = por %p118, %p119
    %p121 = scmp.ne.s32.totalorder %s112, %s113
    %p122 = scmp.eq.s32.totalorder %s29, 0
    %p123 = por %p121, %p122
    %p124 = scmp.ne.s32.totalorder %s112, %s113
    %p125 = scmp.eq.s32.totalorder %s30, 3
    %p126 = por %p124, %p125
    %p128 = scmp.ne.s32.totalorder %s113, %s127
    %p129 = scmp.eq.s32.totalorder %s30, 0
    %p130 = por %p128, %p129
    %s132 = sadd.s32 %s131, 1
    %p135 = scmp.eq.s32.totalorder %s24, 3
    %p136 = scmp.ne.s32.totalorder %s131, %s133
    %p137 = scmp.eq.s32.totalorder %s24, 0
    %p138 = por %p136, %p137
    %p139 = scmp.ne.s32.totalorder %s131, %s133
    %p140 = scmp.eq.s32.totalorder %s29, 3
    %p141 = por %p139, %p140
    %p142 = scmp.ne.s32.totalorder %s133, %s134
    %p143 = scmp.eq.s32.totalorder %s29, 0
    %p144 = por %p142, %p143
    %p145 = scmp.ne.s32.totalorder %s133, %s134
    %p146 = scmp.eq.s32.totalorder %s30, 3
    %p147 = por %p145, %p146
    %p149 = scmp.ne.s32.totalorder %s134, %s148
    %p150 = scmp.eq.s32.totalorder %s30, 0
    %p151 = por %p149, %p150
    %s153 = sadd.s32 %s152, 1
    %p156 = scmp.eq.s32.totalorder %s24, 3
    %p157 = scmp.ne.s32.totalorder %s152, %s154
    %p158 = scmp.eq.s32.totalorder %s24, 0
    %p159 = por %p157, %p158
    %p160 = scmp.ne.s32.totalorder %s152, %s154
    %p161 = scmp.eq.s32.totalorder %s29, 3
    %p162 = por %p160, %p161
    %p163 = scmp.ne.s32.totalorder %s154, %s155
    %p164 = scmp.eq.s32.totalorder %s29, 0
    %p165 = por %p163, %p164
    %p166 = scmp.ne.s32.totalorder %s154, %s155
    %p167 = scmp.eq.s32.totalorder %s30, 3
    %p168 = por %p166, %p167
    %p170 = scmp.ne.s32.totalorder %s155, %s169
    %p171 = scmp.eq.s32.totalorder %s30, 0
    %p172 = por %p170, %p171
    %s174 = sadd.s32 %s173, 1
    %p177 = scmp.eq.s32.totalorder %s24, 3
    %p178 = scmp.ne.s32.totalorder %s173, %s175
    %p179 = scmp.eq.s32.totalorder %s24, 0
    %p180 = por %p178, %p179
    %p181 = scmp.ne.s32.totalorder %s173, %s175
    %p182 = scmp.eq.s32.totalorder %s29, 3
    %p183 = por %p181, %p182
    %p184 = scmp.ne.s32.totalorder %s175, %s176
    %p185 = scmp.eq.s32.totalorder %s29, 0
    %p186 = por %p184, %p185
    %p187 = scmp.ne.s32.totalorder %s175, %s176
    %p188 = scmp.eq.s32.totalorder %s30, 3
    %p189 = por %p187, %p188
    %p191 = scmp.ne.s32.totalorder %s176, %s190
    %p192 = scmp.eq.s32.totalorder %s30, 0
    %p193 = por %p191, %p192
    %s195 = sadd.s32 %s194, 1
    %p198 = scmp.eq.s32.totalorder %s24, 3
    %p199 = scmp.ne.s32.totalorder %s194, %s196
    %p200 = scmp.eq.s32.totalorder %s24, 0
    %p201 = por %p199, %p200
    %p202 = scmp.ne.s32.totalorder %s194, %s196
    %p203 = scmp.eq.s32.totalorder %s29, 3
    %p204 = por %p202, %p203
    %p205 = scmp.ne.s32.totalorder %s196, %s197
    %p206 = scmp.eq.s32.totalorder %s29, 0
    %p207 = por %p205, %p206
    %p208 = scmp.ne.s32.totalorder %s196, %s197
    %p209 = scmp.eq.s32.totalorder %s30, 3
    %p210 = por %p208, %p209
    %p212 = scmp.ne.s32.totalorder %s197, %s211
    %p213 = scmp.eq.s32.totalorder %s30, 0
    %p214 = por %p212, %p213
    %s216 = sadd.s32 %s215, 1
    %p219 = scmp.eq.s32.totalorder %s24, 3
    %p220 = scmp.ne.s32.totalorder %s215, %s217
    %p221 = scmp.eq.s32.totalorder %s24, 0
    %p222 = por %p220, %p221
    %p223 = scmp.ne.s32.totalorder %s215, %s217
    %p224 = scmp.eq.s32.totalorder %s29, 3
    %p225 = por %p223, %p224
    %p226 = scmp.ne.s32.totalorder %s217, %s218
    %p227 = scmp.eq.s32.totalorder %s29, 0
    %p228 = por %p226, %p227
    %p229 = scmp.ne.s32.totalorder %s217, %s218
    %p230 = scmp.eq.s32.totalorder %s30, 3
    %p231 = por %p229, %p230
    %p233 = scmp.ne.s32.totalorder %s218, %s232
    %p234 = scmp.eq.s32.totalorder %s30, 0
    %p235 = por %p233, %p234
    %s237 = sadd.s32 %s236, 1
    %p240 = scmp.eq.s32.totalorder %s24, 3
    %p241 = scmp.ne.s32.totalorder %s236, %s238
    %p242 = scmp.eq.s32.totalorder %s24, 0
    %p243 = por %p241, %p242
    %p244 = scmp.ne.s32.totalorder %s236, %s238
    %p245 = scmp.eq.s32.totalorder %s29, 3
    %p246 = por %p244, %p245
    %p247 = scmp.ne.s32.totalorder %s238, %s239
    %p248 = scmp.eq.s32.totalorder %s29, 0
    %p249 = por %p247, %p248
    %p250 = scmp.ne.s32.totalorder %s238, %s239
    %p251 = scmp.eq.s32.totalorder %s30, 3
    %p252 = por %p250, %p251
    %p254 = scmp.ne.s32.totalorder %s239, %s253
    %p255 = scmp.eq.s32.totalorder %s30, 0
    %p256 = por %p254, %p255
    %s258 = sadd.s32 %s257, 1
    %p261 = scmp.eq.s32.totalorder %s24, 3
    %p262 = scmp.ne.s32.totalorder %s257, %s259
    %p263 = scmp.eq.s32.totalorder %s24, 0
    %p264 = por %p262, %p263
    %p265 = scmp.ne.s32.totalorder %s257, %s259
    %p266 = scmp.eq.s32.totalorder %s29, 3
    %p267 = por %p265, %p266
    %p268 = scmp.ne.s32.totalorder %s259, %s260
    %p269 = scmp.eq.s32.totalorder %s29, 0
    %p270 = por %p268, %p269
    %p271 = scmp.ne.s32.totalorder %s259, %s260
    %p272 = scmp.eq.s32.totalorder %s30, 3
    %p273 = por %p271, %p272
    %p275 = scmp.ne.s32.totalorder %s260, %s274
    %p276 = scmp.eq.s32.totalorder %s30, 0
    %p277 = por %p275, %p276
    %s279 = sadd.s32 %s278, 1
    %p282 = scmp.eq.s32.totalorder %s24, 3
    %p283 = scmp.ne.s32.totalorder %s278, %s280
    %p284 = scmp.eq.s32.totalorder %s24, 0
    %p285 = por %p283, %p284
    %p286 = scmp.ne.s32.totalorder %s278, %s280
    %p287 = scmp.eq.s32.totalorder %s29, 3
    %p288 = por %p286, %p287
    %p289 = scmp.ne.s32.totalorder %s280, %s281
    %p290 = scmp.eq.s32.totalorder %s29, 0
    %p291 = por %p289, %p290
    %p292 = scmp.ne.s32.totalorder %s280, %s281
    %p293 = scmp.eq.s32.totalorder %s30, 3
    %p294 = por %p292, %p293
    %p296 = scmp.ne.s32.totalorder %s281, %s295
    %p297 = scmp.eq.s32.totalorder %s30, 0
    %p298 = por %p296, %p297
    %s300 = sadd.s32 %s299, 1
    %p303 = scmp.eq.s32.totalorder %s24, 3
    %p304 = scmp.ne.s32.totalorder %s299, %s301
    %p305 = scmp.eq.s32.totalorder %s24, 0
    %p306 = por %p304, %p305
    %p307 = scmp.ne.s32.totalorder %s299, %s301
    %p308 = scmp.eq.s32.totalorder %s29, 3
    %p309 = por %p307, %p308
    %p310 = scmp.ne.s32.totalorder %s301, %s302
    %p311 = scmp.eq.s32.totalorder %s29, 0
    %p312 = por %p310, %p311
    %p313 = scmp.ne.s32.totalorder %s301, %s302
    %p314 = scmp.eq.s32.totalorder %s30, 3
    %p315 = por %p313, %p314
    %p317 = scmp.ne.s32.totalorder %s302, %s316
    %p318 = scmp.eq.s32.totalorder %s30, 0
    %p319 = por %p317, %p318
    %s321 = sadd.s32 %s320, 1
    %p324 = scmp.eq.s32.totalorder %s24, 3
    %p325 = scmp.ne.s32.totalorder %s320, %s322
    %p326 = scmp.eq.s32.totalorder %s24, 0
    %p327 = por %p325, %p326
    %p328 = scmp.ne.s32.totalorder %s320, %s322
    %p329 = scmp.eq.s32.totalorder %s29, 3
    %p330 = por %p328, %p329
    %p331 = scmp.ne.s32.totalorder %s322, %s323
    %p332 = scmp.eq.s32.totalorder %s29, 0
    %p333 = por %p331, %p332
    %p334 = scmp.ne.s32.totalorder %s322, %s323
    %p335 = scmp.eq.s32.totalorder %s30, 3
    %p336 = por %p334, %p335
    %p338 = scmp.ne.s32.totalorder %s323, %s337
    %p339 = scmp.eq.s32.totalorder %s30, 0
    %p340 = por %p338, %p339
    %s342 = sadd.s32 %s341, 1
    %p345 = scmp.eq.s32.totalorder %s24, 3
    %p346 = scmp.ne.s32.totalorder %s341, %s343
    %p347 = scmp.eq.s32.totalorder %s24, 0
    %p348 = por %p346, %p347
    %p349 = scmp.ne.s32.totalorder %s341, %s343
    %p350 = scmp.eq.s32.totalorder %s29, 3
    %p351 = por %p349, %p350
    %p352 = scmp.ne.s32.totalorder %s343, %s344
    %p353 = scmp.eq.s32.totalorder %s29, 0
    %p354 = por %p352, %p353
    %p355 = scmp.ne.s32.totalorder %s343, %s344
    %p356 = scmp.eq.s32.totalorder %s30, 3
    %p357 = por %p355, %p356
    %p359 = scmp.ne.s32.totalorder %s344, %s358
    %p360 = scmp.eq.s32.totalorder %s30, 0
    %p361 = por %p359, %p360
    %s362 = ssub.s32 %s24, %s31
    %p363 = scmp.eq.s32.totalorder %s362, 0
    %s365 = sadd.s32 %s364, 1
    %s366 = scalar_select %p363, %s364, %s365
    %p369 = pneg %p363
    %p370 = scmp.eq.s32.totalorder %s24, 3
    %p371 = por %p369, %p370
    %p372 = scmp.ne.s32.totalorder %s364, %s367
    %p373 = scmp.eq.s32.totalorder %s24, 0
    %p374 = por %p372, %p373
    %p375 = scmp.ne.s32.totalorder %s364, %s367
    %p376 = scmp.eq.s32.totalorder %s29, 3
    %p377 = por %p375, %p376
    %p378 = scmp.ne.s32.totalorder %s367, %s368
    %p379 = scmp.eq.s32.totalorder %s29, 0
    %p380 = por %p378, %p379
    %p381 = scmp.ne.s32.totalorder %s367, %s368
    %p382 = scmp.eq.s32.totalorder %s30, 3
    %p383 = por %p381, %p382
    %p385 = scmp.ne.s32.totalorder %s368, %s384
    %p386 = scmp.eq.s32.totalorder %s30, 0
    %p387 = por %p385, %p386
    %s388 = ssub.s32 %s24, %s31
    %p389 = scmp.eq.s32.totalorder %s388, 0
    %s391 = sadd.s32 %s390, 1
    %s392 = scalar_select %p389, %s390, %s391
    %p395 = pneg %p389
    %p396 = scmp.eq.s32.totalorder %s24, 3
    %p397 = por %p395, %p396
    %p398 = scmp.ne.s32.totalorder %s390, %s393
    %p399 = scmp.eq.s32.totalorder %s24, 0
    %p400 = por %p398, %p399
    %p401 = scmp.ne.s32.totalorder %s390, %s393
    %p402 = scmp.eq.s32.totalorder %s29, 3
    %p403 = por %p401, %p402
    %p404 = scmp.ne.s32.totalorder %s393, %s394
    %p405 = scmp.eq.s32.totalorder %s29, 0
    %p406 = por %p404, %p405
    %p407 = scmp.ne.s32.totalorder %s393, %s394
    %p408 = scmp.eq.s32.totalorder %s30, 3
    %p409 = por %p407, %p408
    %p411 = scmp.ne.s32.totalorder %s394, %s410
    %p412 = scmp.eq.s32.totalorder %s30, 0
    %p413 = por %p411, %p412
    %s414 = ssub.s32 %s24, %s31
    %p415 = scmp.eq.s32.totalorder %s414, 0
    %s417 = sadd.s32 %s416, 1
    %s418 = scalar_select %p415, %s416, %s417
    %p421 = pneg %p415
    %p422 = scmp.eq.s32.totalorder %s24, 3
    %p423 = por %p421, %p422
    %p424 = scmp.ne.s32.totalorder %s416, %s419
    %p425 = scmp.eq.s32.totalorder %s24, 0
    %p426 = por %p424, %p425
    %p427 = scmp.ne.s32.totalorder %s416, %s419
    %p428 = scmp.eq.s32.totalorder %s29, 3
    %p429 = por %p427, %p428
    %p430 = scmp.ne.s32.totalorder %s419, %s420
    %p431 = scmp.eq.s32.totalorder %s29, 0
    %p432 = por %p430, %p431
    %p433 = scmp.ne.s32.totalorder %s419, %s420
    %p434 = scmp.eq.s32.totalorder %s30, 3
    %p435 = por %p433, %p434
    %p437 = scmp.ne.s32.totalorder %s420, %s436
    %p438 = scmp.eq.s32.totalorder %s30, 0
    %p439 = por %p437, %p438
    %p440 = scmp.le.s32.totalorder 1, %s24
    %p441 = scmp.lt.s32.totalorder %s24, 5
    %p442 = pnand %p440, %p441
    %p443 = pneg %p442
    // Predicated region
    $region9: #{graph_transformer_layer.4} parent=5 // pred_check
      _
    $region10: #{graph_transformer_layer.4} parent=5 // pred_check_branch
      %445 = sbr.rel (%p442) target = $region12
    $region11: #{graph_transformer_layer.4} parent=5 // pred_region
      %s446 = ssub.s32 %s24, 1
      // Predicated region
      $region13: #{graph_transformer_layer.4} parent=11 // pred_check
        %p447 = pneg %p123
      $region14: #{graph_transformer_layer.4} parent=11 // pred_check_branch
        %449 = sbr.rel (%p447) target = $region16
      $region15: #{graph_transformer_layer.4} parent=11 // pred_region
        _
      $region16: #{graph_transformer_layer.4} parent=11 // pred_fallthru
        _
      // Predicated region
      $region17: #{graph_transformer_layer.4} parent=11 // pred_check
        %p450 = pneg %p144
      $region18: #{graph_transformer_layer.4} parent=11 // pred_check_branch
        %452 = sbr.rel (%p450) target = $region20
      $region19: #{graph_transformer_layer.4} parent=11 // pred_region
        _
      $region20: #{graph_transformer_layer.4} parent=11 // pred_fallthru
        _
      // Predicated region
      $region21: #{graph_transformer_layer.4} parent=11 // pred_check
        %p453 = pneg %p165
      $region22: #{graph_transformer_layer.4} parent=11 // pred_check_branch
        %455 = sbr.rel (%p453) target = $region24
      $region23: #{graph_transformer_layer.4} parent=11 // pred_region
        _
      $region24: #{graph_transformer_layer.4} parent=11 // pred_fallthru
        _
      // Predicated region
      $region25: #{graph_transformer_layer.4} parent=11 // pred_check
        %p456 = pneg %p186
      $region26: #{graph_transformer_layer.4} parent=11 // pred_check_branch
        %458 = sbr.rel (%p456) target = $region28
      $region27: #{graph_transformer_layer.4} parent=11 // pred_region
        _
      $region28: #{graph_transformer_layer.4} parent=11 // pred_fallthru
        _
      // Predicated region
      $region29: #{graph_transformer_layer.4} parent=11 // pred_check
        %p459 = pneg %p207
      $region30: #{graph_transformer_layer.4} parent=11 // pred_check_branch
        %461 = sbr.rel (%p459) target = $region32
      $region31: #{graph_transformer_layer.4} parent=11 // pred_region
        _
      $region32: #{graph_transformer_layer.4} parent=11 // pred_fallthru
        _
      // Predicated region
      $region33: #{graph_transformer_layer.4} parent=11 // pred_check
        %p462 = pneg %p228
      $region34: #{graph_transformer_layer.4} parent=11 // pred_check_branch
        %464 = sbr.rel (%p462) target = $region36
      $region35: #{graph_transformer_layer.4} parent=11 // pred_region
        _
      $region36: #{graph_transformer_layer.4} parent=11 // pred_fallthru
        _
      // Predicated region
      $region37: #{graph_transformer_layer.4} parent=11 // pred_check
        %p465 = pneg %p249
      $region38: #{graph_transformer_layer.4} parent=11 // pred_check_branch
        %467 = sbr.rel (%p465) target = $region40
      $region39: #{graph_transformer_layer.4} parent=11 // pred_region
        _
      $region40: #{graph_transformer_layer.4} parent=11 // pred_fallthru
        _
      // Predicated region
      $region41: #{graph_transformer_layer.4} parent=11 // pred_check
        %p468 = pneg %p270
      $region42: #{graph_transformer_layer.4} parent=11 // pred_check_branch
        %470 = sbr.rel (%p468) target = $region44
      $region43: #{graph_transformer_layer.4} parent=11 // pred_region
        _
      $region44: #{graph_transformer_layer.4} parent=11 // pred_fallthru
        _
      // Predicated region
      $region45: #{graph_transformer_layer.4} parent=11 // pred_check
        %p471 = pneg %p291
      $region46: #{graph_transformer_layer.4} parent=11 // pred_check_branch
        %473 = sbr.rel (%p471) target = $region48
      $region47: #{graph_transformer_layer.4} parent=11 // pred_region
        _
      $region48: #{graph_transformer_layer.4} parent=11 // pred_fallthru
        _
      // Predicated region
      $region49: #{graph_transformer_layer.4} parent=11 // pred_check
        %p474 = pneg %p312
      $region50: #{graph_transformer_layer.4} parent=11 // pred_check_branch
        %476 = sbr.rel (%p474) target = $region52
      $region51: #{graph_transformer_layer.4} parent=11 // pred_region
        _
      $region52: #{graph_transformer_layer.4} parent=11 // pred_fallthru
        _
      // Predicated region
      $region53: #{graph_transformer_layer.4} parent=11 // pred_check
        %p477 = pneg %p333
      $region54: #{graph_transformer_layer.4} parent=11 // pred_check_branch
        %479 = sbr.rel (%p477) target = $region56
      $region55: #{graph_transformer_layer.4} parent=11 // pred_region
        _
      $region56: #{graph_transformer_layer.4} parent=11 // pred_fallthru
        _
      // Predicated region
      $region57: #{graph_transformer_layer.4} parent=11 // pred_check
        %p480 = pneg %p354
      $region58: #{graph_transformer_layer.4} parent=11 // pred_check_branch
        %482 = sbr.rel (%p480) target = $region60
      $region59: #{graph_transformer_layer.4} parent=11 // pred_region
        _
      $region60: #{graph_transformer_layer.4} parent=11 // pred_fallthru
        _
    $region12: #{graph_transformer_layer.4} parent=5 // pred_fallthru
      _
    %p483 = scmp.lt.s32.totalorder %s24, 4
    // Predicated region
    $region61: #{graph_transformer_layer.4} parent=5 // pred_check
      %p484 = pneg %p483
    $region62: #{graph_transformer_layer.4} parent=5 // pred_check_branch
      %486 = sbr.rel (%p484) target = $region64
    $region63: #{graph_transformer_layer.4} parent=5 // pred_region
      // Predicated region
      $region65: #{graph_transformer_layer.4} parent=63 // pred_check
        %p487 = pneg %p44
      $region66: #{graph_transformer_layer.4} parent=63 // pred_check_branch
        %489 = sbr.rel (%p487) target = $region68
      $region67: #{graph_transformer_layer.4} parent=63 // pred_region
        %s490 = smul.u32 64, %s24
        %p491 = scmp.lt.s32.totalorder %s490, 255
        %s492 = scalar_select %p491, %s490, 255
        %s493 = smul.addr %s492, 8
        %s494 = scalar_lea.vmem %s0, %s493
        %s495 = smul.u32 64, %s24
      $region68: #{graph_transformer_layer.4} parent=63 // pred_fallthru
        _
      // Predicated region
      $region69: #{graph_transformer_layer.4} parent=63 // pred_check
        %p496 = pneg %p70
      $region70: #{graph_transformer_layer.4} parent=63 // pred_check_branch
        %498 = sbr.rel (%p496) target = $region72
      $region71: #{graph_transformer_layer.4} parent=63 // pred_region
        %s499 = smul.u32 64, %s24
        %p500 = scmp.lt.s32.totalorder %s499, 255
        %s501 = scalar_select %p500, %s499, 255
        %s502 = smul.addr %s501, 2
        %s503 = smul.addr %s502, 4
        %s504 = scalar_lea.vmem %s1, %s503
        %s505 = smul.u32 64, %s24
      $region72: #{graph_transformer_layer.4} parent=63 // pred_fallthru
        _
      // Predicated region
      $region73: #{graph_transformer_layer.4} parent=63 // pred_check
        %p506 = pneg %p96
      $region74: #{graph_transformer_layer.4} parent=63 // pred_check_branch
        %508 = sbr.rel (%p506) target = $region76
      $region75: #{graph_transformer_layer.4} parent=63 // pred_region
        %s509 = smul.u32 64, %s24
        %p510 = scmp.lt.s32.totalorder %s509, 255
        %s511 = scalar_select %p510, %s509, 255
        %s512 = smul.addr %s511, 4
        %s513 = scalar_lea.vmem %s2, %s512
        %s514 = smul.u32 64, %s24
      $region76: #{graph_transformer_layer.4} parent=63 // pred_fallthru
        _
    $region64: #{graph_transformer_layer.4} parent=5 // pred_fallthru
      _
    %p515 = scmp.le.s32.totalorder 1, %s24
    %p516 = scmp.lt.s32.totalorder %s24, 5
    %p517 = pnand %p515, %p516
    %p518 = pneg %p517
    // Predicated region
    $region77: #{graph_transformer_layer.4} parent=5 // pred_check
      _
    $region78: #{graph_transformer_layer.4} parent=5 // pred_check_branch
      %520 = sbr.rel (%p517) target = $region80
    $region79: #{graph_transformer_layer.4} parent=5 // pred_region
      %s521 = ssub.s32 %s24, 1
      %s522 = smul.u32 64, %s29
      %p523 = scmp.lt.s32.totalorder %s522, 255
      %s524 = scalar_select %p523, %s522, 255
      %s525 = smul.addr %s524, 8
      %s526 = scalar_lea.vmem %s0, %s525
      %p527 = pneg %p50
      %p528 = pneg %p47
      %s529 = smul.u32 64, %s29
      %p530 = scmp.lt.s32.totalorder %s529, 255
      %s531 = scalar_select %p530, %s529, 255
      %s532 = smul.addr %s531, 2
      %s533 = smul.addr %s532, 4
      %s534 = scalar_lea.vmem %s1, %s533
      %p535 = pneg %p76
      %p536 = pneg %p73
      %s537 = smul.u32 64, %s29
      %p538 = scmp.lt.s32.totalorder %s537, 255
      %s539 = scalar_select %p538, %s537, 255
      %s540 = smul.addr %s539, 4
      %s541 = scalar_lea.vmem %s2, %s540
      %p542 = pneg %p102
      %p543 = pneg %p99
      %p544 = pneg %p123
      %p545 = pneg %p120
      %p546 = pneg %p144
      %p547 = pneg %p141
      %p548 = pneg %p165
      %p549 = pneg %p162
      %p550 = pneg %p186
      %p551 = pneg %p183
      %p552 = pneg %p207
      %p553 = pneg %p204
      %p554 = pneg %p228
      %p555 = pneg %p225
      %p556 = pneg %p249
      %p557 = pneg %p246
      %p558 = pneg %p270
      %p559 = pneg %p267
      %p560 = pneg %p291
      %p561 = pneg %p288
      %p562 = pneg %p312
      %p563 = pneg %p309
      %p564 = pneg %p333
      %p565 = pneg %p330
      %p566 = pneg %p354
      %p567 = pneg %p351
      %p568 = pneg %p380
      %p569 = pneg %p377
      %s570 = smul.u32 64, %s29
      %p571 = scmp.lt.s32.totalorder %s570, 255
      %s572 = scalar_select %p571, %s570, 255
      %s573 = smul.addr %s572, 8
      %s574 = scalar_lea.vmem %s15, %s573
      %p575 = pneg %p406
      %p576 = pneg %p403
      %s577 = smul.u32 64, %s29
      %p578 = scmp.lt.s32.totalorder %s577, 255
      %s579 = scalar_select %p578, %s577, 255
      %s580 = smul.addr %s579, 4
      %s581 = scalar_lea.vmem %s16, %s580
      %p582 = pneg %p432
      %p583 = pneg %p429
      %s584 = smul.u32 64, %s29
      %p585 = scmp.lt.s32.totalorder %s584, 255
      %s586 = scalar_select %p585, %s584, 255
      %s587 = smul.addr %s586, 4
      %s588 = scalar_lea.vmem %s17, %s587
      %s589 = smul.u32 64, %s29
      %p590 = scmp.lt.s32.totalorder %s589, 255
      %s591 = scalar_select %p590, %s589, 255
      %s592 = smul.addr %s591, 8
      %s593 = scalar_lea.vmem %s0, %s592
      %s594 = smul.u32 64, %s29
      %s595 = smul.u32 64, %s29
      %p596 = scmp.lt.s32.totalorder %s595, 255
      %s597 = scalar_select %p596, %s595, 255
      %s598 = smul.addr %s597, 2
      %s599 = smul.addr %s598, 4
      %s600 = scalar_lea.vmem %s1, %s599
      %s601 = smul.u32 64, %s29
      %s602 = smul.u32 64, %s29
      %p603 = scmp.lt.s32.totalorder %s602, 255
      %s604 = scalar_select %p603, %s602, 255
      %s605 = smul.addr %s604, 4
      %s606 = scalar_lea.vmem %s2, %s605
      %s607 = smul.u32 64, %s29
      %s608 = smul.u32 64, %s29
      %p609 = scmp.lt.s32.totalorder %s608, 255
      %s610 = scalar_select %p609, %s608, 255
      %s611 = smul.addr %s610, 8
      %s612 = scalar_lea.vmem %s15, %s611
      %s613 = smul.u32 64, %s29
      %s614 = smul.u32 64, %s29
      %p615 = scmp.lt.s32.totalorder %s614, 255
      %s616 = scalar_select %p615, %s614, 255
      %s617 = smul.addr %s616, 4
      %s618 = scalar_lea.vmem %s16, %s617
      %s619 = smul.u32 64, %s29
      %s620 = smul.u32 64, %s29
      %p621 = scmp.lt.s32.totalorder %s620, 255
      %s622 = scalar_select %p621, %s620, 255
      %s623 = smul.addr %s622, 4
      %s624 = scalar_lea.vmem %s17, %s623
      %s625 = smul.u32 64, %s29
      %v627 = vld [vmem:[%s593] sm:$0xff]
      %v628 = vld [vmem:[%s593 + $0x8] sm:$0xff]
      %v629 = vld [vmem:[%s593 + $0x10] sm:$0xff]
      %v630 = vld [vmem:[%s593 + $0x18] sm:$0xff]
      %v631 = vld [vmem:[%s593 + $0x20] sm:$0xff]
      %v632 = vld [vmem:[%s593 + $0x28] sm:$0xff]
      %v633 = vld [vmem:[%s593 + $0x30] sm:$0xff]
      %v634 = vld [vmem:[%s593 + $0x38] sm:$0xff]
      %v635 = vld [vmem:[%s593 + $0x40] sm:$0xff]
      %v636 = vld [vmem:[%s593 + $0x48] sm:$0xff]
      %v637 = vld [vmem:[%s593 + $0x50] sm:$0xff]
      %v638 = vld [vmem:[%s593 + $0x58] sm:$0xff]
      %v639 = vld [vmem:[%s593 + $0x60] sm:$0xff]
      %v640 = vld [vmem:[%s593 + $0x68] sm:$0xff]
      %v641 = vld [vmem:[%s593 + $0x70] sm:$0xff]
      %v642 = vld [vmem:[%s593 + $0x78] sm:$0xff]
      %v643 = vld [vmem:[%s593 + $0x80] sm:$0xff]
      %v644 = vld [vmem:[%s593 + $0x88] sm:$0xff]
      %v645 = vld [vmem:[%s593 + $0x90] sm:$0xff]
      %v646 = vld [vmem:[%s593 + $0x98] sm:$0xff]
      %v647 = vld [vmem:[%s593 + $0xa0] sm:$0xff]
      %v648 = vld [vmem:[%s593 + $0xa8] sm:$0xff]
      %v649 = vld [vmem:[%s593 + $0xb0] sm:$0xff]
      %v650 = vld [vmem:[%s593 + $0xb8] sm:$0xff]
      %v651 = vld [vmem:[%s593 + $0xc0] sm:$0xff]
      %v652 = vld [vmem:[%s593 + $0xc8] sm:$0xff]
      %v653 = vld [vmem:[%s593 + $0xd0] sm:$0xff]
      %v654 = vld [vmem:[%s593 + $0xd8] sm:$0xff]
      %v655 = vld [vmem:[%s593 + $0xe0] sm:$0xff]
      %v656 = vld [vmem:[%s593 + $0xe8] sm:$0xff]
      %v657 = vld [vmem:[%s593 + $0xf0] sm:$0xff]
      %v658 = vld [vmem:[%s593 + $0xf8] sm:$0xff]
      %v659 = vld [vmem:[%s593 + $0x100] sm:$0xff]
      %v660 = vld [vmem:[%s593 + $0x108] sm:$0xff]
      %v661 = vld [vmem:[%s593 + $0x110] sm:$0xff]
      %v662 = vld [vmem:[%s593 + $0x118] sm:$0xff]
      %v663 = vld [vmem:[%s593 + $0x120] sm:$0xff]
      %v664 = vld [vmem:[%s593 + $0x128] sm:$0xff]
      %v665 = vld [vmem:[%s593 + $0x130] sm:$0xff]
      %v666 = vld [vmem:[%s593 + $0x138] sm:$0xff]
      %v667 = vld [vmem:[%s593 + $0x140] sm:$0xff]
      %v668 = vld [vmem:[%s593 + $0x148] sm:$0xff]
      %v669 = vld [vmem:[%s593 + $0x150] sm:$0xff]
      %v670 = vld [vmem:[%s593 + $0x158] sm:$0xff]
      %v671 = vld [vmem:[%s593 + $0x160] sm:$0xff]
      %v672 = vld [vmem:[%s593 + $0x168] sm:$0xff]
      %v673 = vld [vmem:[%s593 + $0x170] sm:$0xff]
      %v674 = vld [vmem:[%s593 + $0x178] sm:$0xff]
      %v675 = vld [vmem:[%s593 + $0x180] sm:$0xff]
      %v676 = vld [vmem:[%s593 + $0x188] sm:$0xff]
      %v677 = vld [vmem:[%s593 + $0x190] sm:$0xff]
      %v678 = vld [vmem:[%s593 + $0x198] sm:$0xff]
      %v679 = vld [vmem:[%s593 + $0x1a0] sm:$0xff]
      %v680 = vld [vmem:[%s593 + $0x1a8] sm:$0xff]
      %v681 = vld [vmem:[%s593 + $0x1b0] sm:$0xff]
      %v682 = vld [vmem:[%s593 + $0x1b8] sm:$0xff]
      %v683 = vld [vmem:[%s593 + $0x1c0] sm:$0xff]
      %v684 = vld [vmem:[%s593 + $0x1c8] sm:$0xff]
      %v685 = vld [vmem:[%s593 + $0x1d0] sm:$0xff]
      %v686 = vld [vmem:[%s593 + $0x1d8] sm:$0xff]
      %v687 = vld [vmem:[%s593 + $0x1e0] sm:$0xff]
      %v688 = vld [vmem:[%s593 + $0x1e8] sm:$0xff]
      %v689 = vld [vmem:[%s593 + $0x1f0] sm:$0xff]
      %v690 = vld [vmem:[%s593 + $0x1f8] sm:$0xff]
      %v691 = vld [vmem:[%s3] sm:$0x1]
      %v693 = vlaneseq
      %v694 = vshrl.u32 %v693, 7
      %v695 = vsub.s32 0, %v694
      %v696 = vrot.slane %v691, %v695
      %v698 = vmul.f32 %v627, %v696
      %v699 = vmul.f32 %v628, %v696
      %v700 = vmul.f32 %v629, %v696
      %v701 = vmul.f32 %v630, %v696
      %v702 = vmul.f32 %v631, %v696
      %v703 = vmul.f32 %v632, %v696
      %v704 = vmul.f32 %v633, %v696
      %v705 = vmul.f32 %v634, %v696
      %v706 = vmul.f32 %v635, %v696
      %v707 = vmul.f32 %v636, %v696
      %v708 = vmul.f32 %v637, %v696
      %v709 = vmul.f32 %v638, %v696
      %v710 = vmul.f32 %v639, %v696
      %v711 = vmul.f32 %v640, %v696
      %v712 = vmul.f32 %v641, %v696
      %v713 = vmul.f32 %v642, %v696
      %v714 = vmul.f32 %v643, %v696
      %v715 = vmul.f32 %v644, %v696
      %v716 = vmul.f32 %v645, %v696
      %v717 = vmul.f32 %v646, %v696
      %v718 = vmul.f32 %v647, %v696
      %v719 = vmul.f32 %v648, %v696
      %v720 = vmul.f32 %v649, %v696
      %v721 = vmul.f32 %v650, %v696
      %v722 = vmul.f32 %v651, %v696
      %v723 = vmul.f32 %v652, %v696
      %v724 = vmul.f32 %v653, %v696
      %v725 = vmul.f32 %v654, %v696
      %v726 = vmul.f32 %v655, %v696
      %v727 = vmul.f32 %v656, %v696
      %v728 = vmul.f32 %v657, %v696
      %v729 = vmul.f32 %v658, %v696
      %v730 = vmul.f32 %v659, %v696
      %v731 = vmul.f32 %v660, %v696
      %v732 = vmul.f32 %v661, %v696
      %v733 = vmul.f32 %v662, %v696
      %v734 = vmul.f32 %v663, %v696
      %v735 = vmul.f32 %v664, %v696
      %v736 = vmul.f32 %v665, %v696
      %v737 = vmul.f32 %v666, %v696
      %v738 = vmul.f32 %v667, %v696
      %v739 = vmul.f32 %v668, %v696
      %v740 = vmul.f32 %v669, %v696
      %v741 = vmul.f32 %v670, %v696
      %v742 = vmul.f32 %v671, %v696
      %v743 = vmul.f32 %v672, %v696
      %v744 = vmul.f32 %v673, %v696
      %v745 = vmul.f32 %v674, %v696
      %v746 = vmul.f32 %v675, %v696
      %v747 = vmul.f32 %v676, %v696
      %v748 = vmul.f32 %v677, %v696
      %v749 = vmul.f32 %v678, %v696
      %v750 = vmul.f32 %v679, %v696
      %v751 = vmul.f32 %v680, %v696
      %v752 = vmul.f32 %v681, %v696
      %v753 = vmul.f32 %v682, %v696
      %v754 = vmul.f32 %v683, %v696
      %v755 = vmul.f32 %v684, %v696
      %v756 = vmul.f32 %v685, %v696
      %v757 = vmul.f32 %v686, %v696
      %v758 = vmul.f32 %v687, %v696
      %v759 = vmul.f32 %v688, %v696
      %v760 = vmul.f32 %v689, %v696
      %v761 = vmul.f32 %v690, %v696
      %v762 = vld [vmem:[%s4] sm:$0x1]
      %v764 = vlaneseq
      %v765 = vshrl.u32 %v764, 7
      %v766 = vsub.s32 0, %v765
      %v767 = vrot.slane %v762, %v766
      %v769 = vadd.f32 %v698, %v767
      %v770 = vadd.f32 %v699, %v767
      %v771 = vadd.f32 %v700, %v767
      %v772 = vadd.f32 %v701, %v767
      %v773 = vadd.f32 %v702, %v767
      %v774 = vadd.f32 %v703, %v767
      %v775 = vadd.f32 %v704, %v767
      %v776 = vadd.f32 %v705, %v767
      %v777 = vadd.f32 %v706, %v767
      %v778 = vadd.f32 %v707, %v767
      %v779 = vadd.f32 %v708, %v767
      %v780 = vadd.f32 %v709, %v767
      %v781 = vadd.f32 %v710, %v767
      %v782 = vadd.f32 %v711, %v767
      %v783 = vadd.f32 %v712, %v767
      %v784 = vadd.f32 %v713, %v767
      %v785 = vadd.f32 %v714, %v767
      %v786 = vadd.f32 %v715, %v767
      %v787 = vadd.f32 %v716, %v767
      %v788 = vadd.f32 %v717, %v767
      %v789 = vadd.f32 %v718, %v767
      %v790 = vadd.f32 %v719, %v767
      %v791 = vadd.f32 %v720, %v767
      %v792 = vadd.f32 %v721, %v767
      %v793 = vadd.f32 %v722, %v767
      %v794 = vadd.f32 %v723, %v767
      %v795 = vadd.f32 %v724, %v767
      %v796 = vadd.f32 %v725, %v767
      %v797 = vadd.f32 %v726, %v767
      %v798 = vadd.f32 %v727, %v767
      %v799 = vadd.f32 %v728, %v767
      %v800 = vadd.f32 %v729, %v767
      %v801 = vadd.f32 %v730, %v767
      %v802 = vadd.f32 %v731, %v767
      %v803 = vadd.f32 %v732, %v767
      %v804 = vadd.f32 %v733, %v767
      %v805 = vadd.f32 %v734, %v767
      %v806 = vadd.f32 %v735, %v767
      %v807 = vadd.f32 %v736, %v767
      %v808 = vadd.f32 %v737, %v767
      %v809 = vadd.f32 %v738, %v767
      %v810 = vadd.f32 %v739, %v767
      %v811 = vadd.f32 %v740, %v767
      %v812 = vadd.f32 %v741, %v767
      %v813 = vadd.f32 %v742, %v767
      %v814 = vadd.f32 %v743, %v767
      %v815 = vadd.f32 %v744, %v767
      %v816 = vadd.f32 %v745, %v767
      %v817 = vadd.f32 %v746, %v767
      %v818 = vadd.f32 %v747, %v767
      %v819 = vadd.f32 %v748, %v767
      %v820 = vadd.f32 %v749, %v767
      %v821 = vadd.f32 %v750, %v767
      %v822 = vadd.f32 %v751, %v767
      %v823 = vadd.f32 %v752, %v767
      %v824 = vadd.f32 %v753, %v767
      %v825 = vadd.f32 %v754, %v767
      %v826 = vadd.f32 %v755, %v767
      %v827 = vadd.f32 %v756, %v767
      %v828 = vadd.f32 %v757, %v767
      %v829 = vadd.f32 %v758, %v767
      %v830 = vadd.f32 %v759, %v767
      %v831 = vadd.f32 %v760, %v767
      %v832 = vadd.f32 %v761, %v767
      %v833 = vpack.c.bf16 %v770, %v769
      %v834 = vpack.c.bf16 %v772, %v771
      %v835 = vpack.c.bf16 %v774, %v773
      %v836 = vpack.c.bf16 %v776, %v775
      %v837 = vpack.c.bf16 %v778, %v777
      %v838 = vpack.c.bf16 %v780, %v779
      %v839 = vpack.c.bf16 %v782, %v781
      %v840 = vpack.c.bf16 %v784, %v783
      %v841 = vpack.c.bf16 %v786, %v785
      %v842 = vpack.c.bf16 %v788, %v787
      %v843 = vpack.c.bf16 %v790, %v789
      %v844 = vpack.c.bf16 %v792, %v791
      %v845 = vpack.c.bf16 %v794, %v793
      %v846 = vpack.c.bf16 %v796, %v795
      %v847 = vpack.c.bf16 %v798, %v797
      %v848 = vpack.c.bf16 %v800, %v799
      %v849 = vpack.c.bf16 %v802, %v801
      %v850 = vpack.c.bf16 %v804, %v803
      %v851 = vpack.c.bf16 %v806, %v805
      %v852 = vpack.c.bf16 %v808, %v807
      %v853 = vpack.c.bf16 %v810, %v809
      %v854 = vpack.c.bf16 %v812, %v811
      %v855 = vpack.c.bf16 %v814, %v813
      %v856 = vpack.c.bf16 %v816, %v815
      %v857 = vpack.c.bf16 %v818, %v817
      %v858 = vpack.c.bf16 %v820, %v819
      %v859 = vpack.c.bf16 %v822, %v821
      %v860 = vpack.c.bf16 %v824, %v823
      %v861 = vpack.c.bf16 %v826, %v825
      %v862 = vpack.c.bf16 %v828, %v827
      %v863 = vpack.c.bf16 %v830, %v829
      %v864 = vpack.c.bf16 %v832, %v831
      %v865 = vld [vmem:[%s5] sm:$0xf]
      %v866 = vld [vmem:[%s5 + $0x4] sm:$0xf]
      %v867 = vld [vmem:[%s5 + $0x8] sm:$0xf]
      %v868 = vld [vmem:[%s5 + $0xc] sm:$0xf]
      %v869 = vld [vmem:[%s5 + $0x10] sm:$0xf]
      %v870 = vld [vmem:[%s5 + $0x14] sm:$0xf]
      %v871 = vld [vmem:[%s5 + $0x18] sm:$0xf]
      %v872 = vld [vmem:[%s5 + $0x1c] sm:$0xf]
      %v873 = vld [vmem:[%s5 + $0x20] sm:$0xf]
      %v874 = vld [vmem:[%s5 + $0x24] sm:$0xf]
      %v875 = vld [vmem:[%s5 + $0x28] sm:$0xf]
      %v876 = vld [vmem:[%s5 + $0x2c] sm:$0xf]
      %v877 = vld [vmem:[%s5 + $0x30] sm:$0xf]
      %v878 = vld [vmem:[%s5 + $0x34] sm:$0xf]
      %v879 = vld [vmem:[%s5 + $0x38] sm:$0xf]
      %v880 = vld [vmem:[%s5 + $0x3c] sm:$0xf]
      %v897 = vunpack.c.l.b16 %v865
      %v898 = vunpack.c.l.b16 %v866
      %v899 = vunpack.c.l.b16 %v867
      %v900 = vunpack.c.l.b16 %v868
      %v901 = vunpack.c.l.b16 %v869
      %v902 = vunpack.c.l.b16 %v870
      %v903 = vunpack.c.l.b16 %v871
      %v904 = vunpack.c.l.b16 %v872
      %v905 = vunpack.c.l.b16 %v873
      %v906 = vunpack.c.l.b16 %v874
      %v907 = vunpack.c.l.b16 %v875
      %v908 = vunpack.c.l.b16 %v876
      %v909 = vunpack.c.l.b16 %v877
      %v910 = vunpack.c.l.b16 %v878
      %v911 = vunpack.c.l.b16 %v879
      %v912 = vunpack.c.l.b16 %v880
      %v913 = vpack.c.b16 %v898, %v897
      %v914 = vpack.c.b16 %v900, %v899
      %v915 = vpack.c.b16 %v902, %v901
      %v916 = vpack.c.b16 %v904, %v903
      %v917 = vpack.c.b16 %v906, %v905
      %v918 = vpack.c.b16 %v908, %v907
      %v919 = vpack.c.b16 %v910, %v909
      %v920 = vpack.c.b16 %v912, %v911
      %929 = vmatprep.subr.bf16.mxu0 0
      %930 = vmatpush1.bf16.msra.mxu0 %v913
      %931 = vmatprep.subr.bf16.mxu0 0
      %932 = vmatpush1.bf16.msra.mxu0 %v914
      %933 = vmatprep.subr.bf16.mxu0 0
      %934 = vmatpush1.bf16.msra.mxu0 %v915
      %935 = vmatprep.subr.bf16.mxu0 0
      %936 = vmatpush1.bf16.msra.mxu0 %v916
      %937 = vmatprep.subr.bf16.mxu0 0
      %938 = vmatpush1.bf16.msra.mxu0 %v917
      %939 = vmatprep.subr.bf16.mxu0 0
      %940 = vmatpush1.bf16.msra.mxu0 %v918
      %941 = vmatprep.subr.bf16.mxu0 0
      %942 = vmatpush1.bf16.msra.mxu0 %v919
      %943 = vmatprep.subr.bf16.mxu0 0
      %944 = vmatpush1.bf16.msra.mxu0 %v920
      %945 = vmatprep.subr.bf16.mxu0 0
      %946 = vmatpush1.bf16.msra.mxu0 0
      %947 = vmatprep.subr.bf16.mxu0 0
      %948 = vmatpush1.bf16.msra.mxu0 0
      %949 = vmatprep.subr.bf16.mxu0 0
      %950 = vmatpush1.bf16.msra.mxu0 0
      %951 = vmatprep.subr.bf16.mxu0 0
      %952 = vmatpush1.bf16.msra.mxu0 0
      %953 = vmatprep.subr.bf16.mxu0 0
      %954 = vmatpush1.bf16.msra.mxu0 0
      %955 = vmatprep.subr.bf16.mxu0 0
      %956 = vmatpush1.bf16.msra.mxu0 0
      %957 = vmatprep.subr.bf16.mxu0 0
      %958 = vmatpush1.bf16.msra.mxu0 0
      %959 = vmatprep.subr.bf16.mxu0 0
      %960 = vmatpush1.bf16.msra.mxu0 0
      %961 = vmatprep.mubr.bf16.mxu0 0
      %962 = vmatmul.mubr.bf16.gmra.mrb[0].mxu0 %v833
      %v963 = vpop.f32.mrb[0].mxu0
      %v964 = vadd.f32 0.0, %v963
      %v965 = vpop.f32.mrb[0].mxu0
      %v966 = vpop.f32.mrb[0].mxu0
      %v967 = vadd.f32 0.0, %v966
      %v968 = vpop.f32.mrb[0].mxu0
      %969 = vmatprep.mubr.bf16.mxu0 0
      %970 = vmatmul.mubr.bf16.gmra.mrb[0].mxu0 %v834
      %v971 = vpop.f32.mrb[0].mxu0
      %v972 = vadd.f32 0.0, %v971
      %v973 = vpop.f32.mrb[0].mxu0
      %v974 = vpop.f32.mrb[0].mxu0
      %v975 = vadd.f32 0.0, %v974
      %v976 = vpop.f32.mrb[0].mxu0
      %977 = vmatprep.mubr.bf16.mxu0 0
      %978 = vmatmul.mubr.bf16.gmra.mrb[0].mxu0 %v835
      %v979 = vpop.f32.mrb[0].mxu0
      %v980 = vadd.f32 0.0, %v979
      %v981 = vpop.f32.mrb[0].mxu0
      %v982 = vpop.f32.mrb[0].mxu0
      %v983 = vadd.f32 0.0, %v982
      %v984 = vpop.f32.mrb[0].mxu0
      %985 = vmatprep.mubr.bf16.mxu0 0
      %986 = vmatmul.mubr.bf16.gmra.mrb[0].mxu0 %v836
      %v987 = vpop.f32.mrb[0].mxu0
      %v988 = vadd.f32 0.0, %v987
      %v989 = vpop.f32.mrb[0].mxu0
      %v990 = vpop.f32.mrb[0].mxu0
      %v991 = vadd.f32 0.0, %v990
      %v992 = vpop.f32.mrb[0].mxu0
      %993 = vmatprep.mubr.bf16.mxu0 0
      %994 = vmatmul.mubr.bf16.gmra.mrb[0].mxu0 %v837
      %v995 = vpop.f32.mrb[0].mxu0
      %v996 = vadd.f32 0.0, %v995
      %v997 = vpop.f32.mrb[0].mxu0
      %v998 = vpop.f32.mrb[0].mxu0
      %v999 = vadd.f32 0.0, %v998
      %v1000 = vpop.f32.mrb[0].mxu0
      %1001 = vmatprep.mubr.bf16.mxu0 0
      %1002 = vmatmul.mubr.bf16.gmra.mrb[0].mxu0 %v838
      %v1003 = vpop.f32.mrb[0].mxu0
      %v1004 = vadd.f32 0.0, %v1003
      %v1005 = vpop.f32.mrb[0].mxu0
      %v1006 = vpop.f32.mrb[0].mxu0
      %v1007 = vadd.f32 0.0, %v1006
      %v1008 = vpop.f32.mrb[0].mxu0
      %1009 = vmatprep.mubr.bf16.mxu0 0
      %1010 = vmatmul.mubr.bf16.gmra.mrb[0].mxu0 %v839
      %v1011 = vpop.f32.mrb[0].mxu0
      %v1012 = vadd.f32 0.0, %v1011
      %v1013 = vpop.f32.mrb[0].mxu0
      %v1014 = vpop.f32.mrb[0].mxu0
      %v1015 = vadd.f32 0.0, %v1014
      %v1016 = vpop.f32.mrb[0].mxu0
      %1017 = vmatprep.mubr.bf16.mxu0 0
      %1018 = vmatmul.mubr.bf16.gmra.mrb[0].mxu0 %v840
      %v1019 = vpop.f32.mrb[0].mxu0
      %v1020 = vadd.f32 0.0, %v1019
      %v1021 = vpop.f32.mrb[0].mxu0
      %v1022 = vpop.f32.mrb[0].mxu0
      %v1023 = vadd.f32 0.0, %v1022
      %v1024 = vpop.f32.mrb[0].mxu0
      %1025 = vmatprep.mubr.bf16.mxu0 0
      %1026 = vmatmul.mubr.bf16.gmra.mrb[0].mxu0 %v841
      %v1027 = vpop.f32.mrb[0].mxu0
      %v1028 = vadd.f32 0.0, %v1027
      %v1029 = vpop.f32.mrb[0].mxu0
      %v1030 = vpop.f32.mrb[0].mxu0
      %v1031 = vadd.f32 0.0, %v1030
      %v1032 = vpop.f32.mrb[0].mxu0
      %1033 = vmatprep.mubr.bf16.mxu0 0
      %1034 = vmatmul.mubr.bf16.gmra.mrb[0].mxu0 %v842
      %v1035 = vpop.f32.mrb[0].mxu0
      %v1036 = vadd.f32 0.0, %v1035
      %v1037 = vpop.f32.mrb[0].mxu0
      %v1038 = vpop.f32.mrb[0].mxu0
      %v1039 = vadd.f32 0.0, %v1038
      %v1040 = vpop.f32.mrb[0].mxu0
      %1041 = vmatprep.mubr.bf16.mxu0 0
      %1042 = vmatmul.mubr.bf16.gmra.mrb[0].mxu0 %v843
      %v1043 = vpop.f32.mrb[0].mxu0
      %v1044 = vadd.f32 0.0, %v1043
      %v1045 = vpop.f32.mrb[0].mxu0
      %v1046 = vpop.f32.mrb[0].mxu0
      %v1047 = vadd.f32 0.0, %v1046
      %v1048 = vpop.f32.mrb[0].mxu0
      %1049 = vmatprep.mubr.bf16.mxu0 0
      %1050 = vmatmul.mubr.bf16.gmra.mrb[0].mxu0 %v844
      %v1051 = vpop.f32.mrb[0].mxu0
      %v1052 = vadd.f32 0.0, %v1051
      %v1053 = vpop.f32.mrb[0].mxu0
      %v1054 = vpop.f32.mrb[0].mxu0
      %v1055 = vadd.f32 0.0, %v1054
      %v1056 = vpop.f32.mrb[0].mxu0
      %1057 = vmatprep.mubr.bf16.mxu0 0
      %1058 = vmatmul.mubr.bf16.gmra.mrb[0].mxu0 %v845
      %v1059 = vpop.f32.mrb[0].mxu0
      %v1060 = vadd.f32 0.0, %v1059
      %v1061 = vpop.f32.mrb[0].mxu0
      %v1062 = vpop.f32.mrb[0].mxu0
      %v1063 = vadd.f32 0.0, %v1062
      %v1064 = vpop.f32.mrb[0].mxu0
      %1065 = vmatprep.mubr.bf16.mxu0 0
      %1066 = vmatmul.mubr.bf16.gmra.mrb[0].mxu0 %v846
      %v1067 = vpop.f32.mrb[0].mxu0
      %v1068 = vadd.f32 0.0, %v1067
      %v1069 = vpop.f32.mrb[0].mxu0
      %v1070 = vpop.f32.mrb[0].mxu0
      %v1071 = vadd.f32 0.0, %v1070
      %v1072 = vpop.f32.mrb[0].mxu0
      %1073 = vmatprep.mubr.bf16.mxu0 0
      %1074 = vmatmul.mubr.bf16.gmra.mrb[0].mxu0 %v847
      %v1075 = vpop.f32.mrb[0].mxu0
      %v1076 = vadd.f32 0.0, %v1075
      %v1077 = vpop.f32.mrb[0].mxu0
      %v1078 = vpop.f32.mrb[0].mxu0
      %v1079 = vadd.f32 0.0, %v1078
      %v1080 = vpop.f32.mrb[0].mxu0
      %1081 = vmatprep.mubr.bf16.mxu0 0
      %1082 = vmatmul.mubr.bf16.gmra.mrb[0].mxu0 %v848
      %v1083 = vpop.f32.mrb[0].mxu0
      %v1084 = vadd.f32 0.0, %v1083
      %v1085 = vpop.f32.mrb[0].mxu0
      %v1086 = vpop.f32.mrb[0].mxu0
      %v1087 = vadd.f32 0.0, %v1086
      %v1088 = vpop.f32.mrb[0].mxu0
      %1089 = vmatprep.mubr.bf16.mxu0 0
      %1090 = vmatmul.mubr.bf16.gmra.mrb[0].mxu0 %v849
      %v1091 = vpop.f32.mrb[0].mxu0
      %v1092 = vadd.f32 0.0, %v1091
      %v1093 = vpop.f32.mrb[0].mxu0
      %v1094 = vpop.f32.mrb[0].mxu0
      %v1095 = vadd.f32 0.0, %v1094
      %v1096 = vpop.f32.mrb[0].mxu0
      %1097 = vmatprep.mubr.bf16.mxu0 0
      %1098 = vmatmul.mubr.bf16.gmra.mrb[0].mxu0 %v850
      %v1099 = vpop.f32.mrb[0].mxu0
      %v1100 = vadd.f32 0.0, %v1099
      %v1101 = vpop.f32.mrb[0].mxu0
      %v1102 = vpop.f32.mrb[0].mxu0
      %v1103 = vadd.f32 0.0, %v1102
      %v1104 = vpop.f32.mrb[0].mxu0
      %1105 = vmatprep.mubr.bf16.mxu0 0
      %1106 = vmatmul.mubr.bf16.gmra.mrb[0].mxu0 %v851
      %v1107 = vpop.f32.mrb[0].mxu0
      %v1108 = vadd.f32 0.0, %v1107
      %v1109 = vpop.f32.mrb[0].mxu0
      %v1110 = vpop.f32.mrb[0].mxu0
      %v1111 = vadd.f32 0.0, %v1110
      %v1112 = vpop.f32.mrb[0].mxu0
      %1113 = vmatprep.mubr.bf16.mxu0 0
      %1114 = vmatmul.mubr.bf16.gmra.mrb[0].mxu0 %v852
      %v1115 = vpop.f32.mrb[0].mxu0
      %v1116 = vadd.f32 0.0, %v1115
      %v1117 = vpop.f32.mrb[0].mxu0
      %v1118 = vpop.f32.mrb[0].mxu0
      %v1119 = vadd.f32 0.0, %v1118
      %v1120 = vpop.f32.mrb[0].mxu0
      %1121 = vmatprep.mubr.bf16.mxu0 0
      %1122 = vmatmul.mubr.bf16.gmra.mrb[0].mxu0 %v853
      %v1123 = vpop.f32.mrb[0].mxu0
      %v1124 = vadd.f32 0.0, %v1123
      %v1125 = vpop.f32.mrb[0].mxu0
      %v1126 = vpop.f32.mrb[0].mxu0
      %v1127 = vadd.f32 0.0, %v1126
      %v1128 = vpop.f32.mrb[0].mxu0
      %1129 = vmatprep.mubr.bf16.mxu0 0
      %1130 = vmatmul.mubr.bf16.gmra.mrb[0].mxu0 %v854
      %v1131 = vpop.f32.mrb[0].mxu0
      %v1132 = vadd.f32 0.0, %v1131
      %v1133 = vpop.f32.mrb[0].mxu0
      %v1134 = vpop.f32.mrb[0].mxu0
      %v1135 = vadd.f32 0.0, %v1134
      %v1136 = vpop.f32.mrb[0].mxu0
      %1137 = vmatprep.mubr.bf16.mxu0 0
      %1138 = vmatmul.mubr.bf16.gmra.mrb[0].mxu0 %v855
      %v1139 = vpop.f32.mrb[0].mxu0
      %v1140 = vadd.f32 0.0, %v1139
      %v1141 = vpop.f32.mrb[0].mxu0
      %v1142 = vpop.f32.mrb[0].mxu0
      %v1143 = vadd.f32 0.0, %v1142
      %v1144 = vpop.f32.mrb[0].mxu0
      %1145 = vmatprep.mubr.bf16.mxu0 0
      %1146 = vmatmul.mubr.bf16.gmra.mrb[0].mxu0 %v856
      %v1147 = vpop.f32.mrb[0].mxu0
      %v1148 = vadd.f32 0.0, %v1147
      %v1149 = vpop.f32.mrb[0].mxu0
      %v1150 = vpop.f32.mrb[0].mxu0
      %v1151 = vadd.f32 0.0, %v1150
      %v1152 = vpop.f32.mrb[0].mxu0
      %1153 = vmatprep.mubr.bf16.mxu0 0
      %1154 = vmatmul.mubr.bf16.gmra.mrb[0].mxu0 %v857
      %v1155 = vpop.f32.mrb[0].mxu0
      %v1156 = vadd.f32 0.0, %v1155
      %v1157 = vpop.f32.mrb[0].mxu0
      %v1158 = vpop.f32.mrb[0].mxu0
      %v1159 = vadd.f32 0.0, %v1158
      %v1160 = vpop.f32.mrb[0].mxu0
      %1161 = vmatprep.mubr.bf16.mxu0 0
      %1162 = vmatmul.mubr.bf16.gmra.mrb[0].mxu0 %v858
      %v1163 = vpop.f32.mrb[0].mxu0
      %v1164 = vadd.f32 0.0, %v1163
      %v1165 = vpop.f32.mrb[0].mxu0
      %v1166 = vpop.f32.mrb[0].mxu0
      %v1167 = vadd.f32 0.0, %v1166
      %v1168 = vpop.f32.mrb[0].mxu0
      %1169 = vmatprep.mubr.bf16.mxu0 0
      %1170 = vmatmul.mubr.bf16.gmra.mrb[0].mxu0 %v859
      %v1171 = vpop.f32.mrb[0].mxu0
      %v1172 = vadd.f32 0.0, %v1171
      %v1173 = vpop.f32.mrb[0].mxu0
      %v1174 = vpop.f32.mrb[0].mxu0
      %v1175 = vadd.f32 0.0, %v1174
      %v1176 = vpop.f32.mrb[0].mxu0
      %1177 = vmatprep.mubr.bf16.mxu0 0
      %1178 = vmatmul.mubr.bf16.gmra.mrb[0].mxu0 %v860
      %v1179 = vpop.f32.mrb[0].mxu0
      %v1180 = vadd.f32 0.0, %v1179
      %v1181 = vpop.f32.mrb[0].mxu0
      %v1182 = vpop.f32.mrb[0].mxu0
      %v1183 = vadd.f32 0.0, %v1182
      %v1184 = vpop.f32.mrb[0].mxu0
      %1185 = vmatprep.mubr.bf16.mxu0 0
      %1186 = vmatmul.mubr.bf16.gmra.mrb[0].mxu0 %v861
      %v1187 = vpop.f32.mrb[0].mxu0
      %v1188 = vadd.f32 0.0, %v1187
      %v1189 = vpop.f32.mrb[0].mxu0
      %v1190 = vpop.f32.mrb[0].mxu0
      %v1191 = vadd.f32 0.0, %v1190
      %v1192 = vpop.f32.mrb[0].mxu0
      %1193 = vmatprep.mubr.bf16.mxu0 0
      %1194 = vmatmul.mubr.bf16.gmra.mrb[0].mxu0 %v862
      %v1195 = vpop.f32.mrb[0].mxu0
      %v1196 = vadd.f32 0.0, %v1195
      %v1197 = vpop.f32.mrb[0].mxu0
      %v1198 = vpop.f32.mrb[0].mxu0
      %v1199 = vadd.f32 0.0, %v1198
      %v1200 = vpop.f32.mrb[0].mxu0
      %1201 = vmatprep.mubr.bf16.mxu0 0
      %1202 = vmatmul.mubr.bf16.gmra.mrb[0].mxu0 %v863
      %v1203 = vpop.f32.mrb[0].mxu0
      %v1204 = vadd.f32 0.0, %v1203
      %v1205 = vpop.f32.mrb[0].mxu0
      %v1206 = vpop.f32.mrb[0].mxu0
      %v1207 = vadd.f32 0.0, %v1206
      %v1208 = vpop.f32.mrb[0].mxu0
      %1209 = vmatprep.mubr.bf16.mxu0 0
      %1210 = vmatmul.mubr.bf16.gmra.mrb[0].mxu0 %v864
      %v1211 = vpop.f32.mrb[0].mxu0
      %v1212 = vadd.f32 0.0, %v1211
      %v1213 = vpop.f32.mrb[0].mxu0
      %v1214 = vpop.f32.mrb[0].mxu0
      %v1215 = vadd.f32 0.0, %v1214
      %v1216 = vpop.f32.mrb[0].mxu0
      %1217 = vdwg.mxu0
      %v1218 = vld [vmem:[%s600] sm:$0xf]
      %v1219 = vld [vmem:[%s600 + $0x8] sm:$0xf]
      %v1220 = vld [vmem:[%s600 + $0x10] sm:$0xf]
      %v1221 = vld [vmem:[%s600 + $0x18] sm:$0xf]
      %v1222 = vld [vmem:[%s600 + $0x20] sm:$0xf]
      %v1223 = vld [vmem:[%s600 + $0x28] sm:$0xf]
      %v1224 = vld [vmem:[%s600 + $0x30] sm:$0xf]
      %v1225 = vld [vmem:[%s600 + $0x38] sm:$0xf]
      %v1226 = vld [vmem:[%s600 + $0x40] sm:$0xf]
      %v1227 = vld [vmem:[%s600 + $0x48] sm:$0xf]
      %v1228 = vld [vmem:[%s600 + $0x50] sm:$0xf]
      %v1229 = vld [vmem:[%s600 + $0x58] sm:$0xf]
      %v1230 = vld [vmem:[%s600 + $0x60] sm:$0xf]
      %v1231 = vld [vmem:[%s600 + $0x68] sm:$0xf]
      %v1232 = vld [vmem:[%s600 + $0x70] sm:$0xf]
      %v1233 = vld [vmem:[%s600 + $0x78] sm:$0xf]
      %v1234 = vld [vmem:[%s600 + $0x80] sm:$0xf]
      %v1235 = vld [vmem:[%s600 + $0x88] sm:$0xf]
      %v1236 = vld [vmem:[%s600 + $0x90] sm:$0xf]
      %v1237 = vld [vmem:[%s600 + $0x98] sm:$0xf]
      %v1238 = vld [vmem:[%s600 + $0xa0] sm:$0xf]
      %v1239 = vld [vmem:[%s600 + $0xa8] sm:$0xf]
      %v1240 = vld [vmem:[%s600 + $0xb0] sm:$0xf]
      %v1241 = vld [vmem:[%s600 + $0xb8] sm:$0xf]
      %v1242 = vld [vmem:[%s600 + $0xc0] sm:$0xf]
      %v1243 = vld [vmem:[%s600 + $0xc8] sm:$0xf]
      %v1244 = vld [vmem:[%s600 + $0xd0] sm:$0xf]
      %v1245 = vld [vmem:[%s600 + $0xd8] sm:$0xf]
      %v1246 = vld [vmem:[%s600 + $0xe0] sm:$0xf]
      %v1247 = vld [vmem:[%s600 + $0xe8] sm:$0xf]
      %v1248 = vld [vmem:[%s600 + $0xf0] sm:$0xf]
      %v1249 = vld [vmem:[%s600 + $0xf8] sm:$0xf]
      %v1250 = vld [vmem:[%s600 + $0x100] sm:$0xf]
      %v1251 = vld [vmem:[%s600 + $0x108] sm:$0xf]
      %v1252 = vld [vmem:[%s600 + $0x110] sm:$0xf]
      %v1253 = vld [vmem:[%s600 + $0x118] sm:$0xf]
      %v1254 = vld [vmem:[%s600 + $0x120] sm:$0xf]
      %v1255 = vld [vmem:[%s600 + $0x128] sm:$0xf]
      %v1256 = vld [vmem:[%s600 + $0x130] sm:$0xf]
      %v1257 = vld [vmem:[%s600 + $0x138] sm:$0xf]
      %v1258 = vld [vmem:[%s600 + $0x140] sm:$0xf]
      %v1259 = vld [vmem:[%s600 + $0x148] sm:$0xf]
      %v1260 = vld [vmem:[%s600 + $0x150] sm:$0xf]
      %v1261 = vld [vmem:[%s600 + $0x158] sm:$0xf]
      %v1262 = vld [vmem:[%s600 + $0x160] sm:$0xf]
      %v1263 = vld [vmem:[%s600 + $0x168] sm:$0xf]
      %v1264 = vld [vmem:[%s600 + $0x170] sm:$0xf]
      %v1265 = vld [vmem:[%s600 + $0x178] sm:$0xf]
      %v1266 = vld [vmem:[%s600 + $0x180] sm:$0xf]
      %v1267 = vld [vmem:[%s600 + $0x188] sm:$0xf]
      %v1268 = vld [vmem:[%s600 + $0x190] sm:$0xf]
      %v1269 = vld [vmem:[%s600 + $0x198] sm:$0xf]
      %v1270 = vld [vmem:[%s600 + $0x1a0] sm:$0xf]
      %v1271 = vld [vmem:[%s600 + $0x1a8] sm:$0xf]
      %v1272 = vld [vmem:[%s600 + $0x1b0] sm:$0xf]
      %v1273 = vld [vmem:[%s600 + $0x1b8] sm:$0xf]
      %v1274 = vld [vmem:[%s600 + $0x1c0] sm:$0xf]
      %v1275 = vld [vmem:[%s600 + $0x1c8] sm:$0xf]
      %v1276 = vld [vmem:[%s600 + $0x1d0] sm:$0xf]
      %v1277 = vld [vmem:[%s600 + $0x1d8] sm:$0xf]
      %v1278 = vld [vmem:[%s600 + $0x1e0] sm:$0xf]
      %v1279 = vld [vmem:[%s600 + $0x1e8] sm:$0xf]
      %v1280 = vld [vmem:[%s600 + $0x1f0] sm:$0xf]
      %v1281 = vld [vmem:[%s600 + $0x1f8] sm:$0xf]
      %v1282 = vunpack.c.l.bf16 %v1218
      %v1283 = vunpack.c.l.bf16 %v1219
      %v1284 = vunpack.c.l.bf16 %v1220
      %v1285 = vunpack.c.l.bf16 %v1221
      %v1286 = vunpack.c.l.bf16 %v1222
      %v1287 = vunpack.c.l.bf16 %v1223
      %v1288 = vunpack.c.l.bf16 %v1224
      %v1289 = vunpack.c.l.bf16 %v1225
      %v1290 = vunpack.c.l.bf16 %v1226
      %v1291 = vunpack.c.l.bf16 %v1227
      %v1292 = vunpack.c.l.bf16 %v1228
      %v1293 = vunpack.c.l.bf16 %v1229
      %v1294 = vunpack.c.l.bf16 %v1230
      %v1295 = vunpack.c.l.bf16 %v1231
      %v1296 = vunpack.c.l.bf16 %v1232
      %v1297 = vunpack.c.l.bf16 %v1233
      %v1298 = vunpack.c.l.bf16 %v1234
      %v1299 = vunpack.c.l.bf16 %v1235
      %v1300 = vunpack.c.l.bf16 %v1236
      %v1301 = vunpack.c.l.bf16 %v1237
      %v1302 = vunpack.c.l.bf16 %v1238
      %v1303 = vunpack.c.l.bf16 %v1239
      %v1304 = vunpack.c.l.bf16 %v1240
      %v1305 = vunpack.c.l.bf16 %v1241
      %v1306 = vunpack.c.l.bf16 %v1242
      %v1307 = vunpack.c.l.bf16 %v1243
      %v1308 = vunpack.c.l.bf16 %v1244
      %v1309 = vunpack.c.l.bf16 %v1245
      %v1310 = vunpack.c.l.bf16 %v1246
      %v1311 = vunpack.c.l.bf16 %v1247
      %v1312 = vunpack.c.l.bf16 %v1248
      %v1313 = vunpack.c.l.bf16 %v1249
      %v1314 = vunpack.c.l.bf16 %v1250
      %v1315 = vunpack.c.l.bf16 %v1251
      %v1316 = vunpack.c.l.bf16 %v1252
      %v1317 = vunpack.c.l.bf16 %v1253
      %v1318 = vunpack.c.l.bf16 %v1254
      %v1319 = vunpack.c.l.bf16 %v1255
      %v1320 = vunpack.c.l.bf16 %v1256
      %v1321 = vunpack.c.l.bf16 %v1257
      %v1322 = vunpack.c.l.bf16 %v1258
      %v1323 = vunpack.c.l.bf16 %v1259
      %v1324 = vunpack.c.l.bf16 %v1260
      %v1325 = vunpack.c.l.bf16 %v1261
      %v1326 = vunpack.c.l.bf16 %v1262
      %v1327 = vunpack.c.l.bf16 %v1263
      %v1328 = vunpack.c.l.bf16 %v1264
      %v1329 = vunpack.c.l.bf16 %v1265
      %v1330 = vunpack.c.l.bf16 %v1266
      %v1331 = vunpack.c.l.bf16 %v1267
      %v1332 = vunpack.c.l.bf16 %v1268
      %v1333 = vunpack.c.l.bf16 %v1269
      %v1334 = vunpack.c.l.bf16 %v1270
      %v1335 = vunpack.c.l.bf16 %v1271
      %v1336 = vunpack.c.l.bf16 %v1272
      %v1337 = vunpack.c.l.bf16 %v1273
      %v1338 = vunpack.c.l.bf16 %v1274
      %v1339 = vunpack.c.l.bf16 %v1275
      %v1340 = vunpack.c.l.bf16 %v1276
      %v1341 = vunpack.c.l.bf16 %v1277
      %v1342 = vunpack.c.l.bf16 %v1278
      %v1343 = vunpack.c.l.bf16 %v1279
      %v1344 = vunpack.c.l.bf16 %v1280
      %v1345 = vunpack.c.l.bf16 %v1281
      %v1346 = vld [vmem:[%s600 + $0x4] sm:$0xf]
      %v1347 = vld [vmem:[%s600 + $0xc] sm:$0xf]
      %v1348 = vld [vmem:[%s600 + $0x14] sm:$0xf]
      %v1349 = vld [vmem:[%s600 + $0x1c] sm:$0xf]
      %v1350 = vld [vmem:[%s600 + $0x24] sm:$0xf]
      %v1351 = vld [vmem:[%s600 + $0x2c] sm:$0xf]
      %v1352 = vld [vmem:[%s600 + $0x34] sm:$0xf]
      %v1353 = vld [vmem:[%s600 + $0x3c] sm:$0xf]
      %v1354 = vld [vmem:[%s600 + $0x44] sm:$0xf]
      %v1355 = vld [vmem:[%s600 + $0x4c] sm:$0xf]
      %v1356 = vld [vmem:[%s600 + $0x54] sm:$0xf]
      %v1357 = vld [vmem:[%s600 + $0x5c] sm:$0xf]
      %v1358 = vld [vmem:[%s600 + $0x64] sm:$0xf]
      %v1359 = vld [vmem:[%s600 + $0x6c] sm:$0xf]
      %v1360 = vld [vmem:[%s600 + $0x74] sm:$0xf]
      %v1361 = vld [vmem:[%s600 + $0x7c] sm:$0xf]
      %v1362 = vld [vmem:[%s600 + $0x84] sm:$0xf]
      %v1363 = vld [vmem:[%s600 + $0x8c] sm:$0xf]
      %v1364 = vld [vmem:[%s600 + $0x94] sm:$0xf]
      %v1365 = vld [vmem:[%s600 + $0x9c] sm:$0xf]
      %v1366 = vld [vmem:[%s600 + $0xa4] sm:$0xf]
      %v1367 = vld [vmem:[%s600 + $0xac] sm:$0xf]
      %v1368 = vld [vmem:[%s600 + $0xb4] sm:$0xf]
      %v1369 = vld [vmem:[%s600 + $0xbc] sm:$0xf]
      %v1370 = vld [vmem:[%s600 + $0xc4] sm:$0xf]
      %v1371 = vld [vmem:[%s600 + $0xcc] sm:$0xf]
      %v1372 = vld [vmem:[%s600 + $0xd4] sm:$0xf]
      %v1373 = vld [vmem:[%s600 + $0xdc] sm:$0xf]
      %v1374 = vld [vmem:[%s600 + $0xe4] sm:$0xf]
      %v1375 = vld [vmem:[%s600 + $0xec] sm:$0xf]
      %v1376 = vld [vmem:[%s600 + $0xf4] sm:$0xf]
      %v1377 = vld [vmem:[%s600 + $0xfc] sm:$0xf]
      %v1378 = vld [vmem:[%s600 + $0x104] sm:$0xf]
      %v1379 = vld [vmem:[%s600 + $0x10c] sm:$0xf]
      %v1380 = vld [vmem:[%s600 + $0x114] sm:$0xf]
      %v1381 = vld [vmem:[%s600 + $0x11c] sm:$0xf]
      %v1382 = vld [vmem:[%s600 + $0x124] sm:$0xf]
      %v1383 = vld [vmem:[%s600 + $0x12c] sm:$0xf]
      %v1384 = vld [vmem:[%s600 + $0x134] sm:$0xf]
      %v1385 = vld [vmem:[%s600 + $0x13c] sm:$0xf]
      %v1386 = vld [vmem:[%s600 + $0x144] sm:$0xf]
      %v1387 = vld [vmem:[%s600 + $0x14c] sm:$0xf]
      %v1388 = vld [vmem:[%s600 + $0x154] sm:$0xf]
      %v1389 = vld [vmem:[%s600 + $0x15c] sm:$0xf]
      %v1390 = vld [vmem:[%s600 + $0x164] sm:$0xf]
      %v1391 = vld [vmem:[%s600 + $0x16c] sm:$0xf]
      %v1392 = vld [vmem:[%s600 + $0x174] sm:$0xf]
      %v1393 = vld [vmem:[%s600 + $0x17c] sm:$0xf]
      %v1394 = vld [vmem:[%s600 + $0x184] sm:$0xf]
      %v1395 = vld [vmem:[%s600 + $0x18c] sm:$0xf]
      %v1396 = vld [vmem:[%s600 + $0x194] sm:$0xf]
      %v1397 = vld [vmem:[%s600 + $0x19c] sm:$0xf]
      %v1398 = vld [vmem:[%s600 + $0x1a4] sm:$0xf]
      %v1399 = vld [vmem:[%s600 + $0x1ac] sm:$0xf]
      %v1400 = vld [vmem:[%s600 + $0x1b4] sm:$0xf]
      %v1401 = vld [vmem:[%s600 + $0x1bc] sm:$0xf]
      %v1402 = vld [vmem:[%s600 + $0x1c4] sm:$0xf]
      %v1403 = vld [vmem:[%s600 + $0x1cc] sm:$0xf]
      %v1404 = vld [vmem:[%s600 + $0x1d4] sm:$0xf]
      %v1405 = vld [vmem:[%s600 + $0x1dc] sm:$0xf]
      %v1406 = vld [vmem:[%s600 + $0x1e4] sm:$0xf]
      %v1407 = vld [vmem:[%s600 + $0x1ec] sm:$0xf]
      %v1408 = vld [vmem:[%s600 + $0x1f4] sm:$0xf]
      %v1409 = vld [vmem:[%s600 + $0x1fc] sm:$0xf]
      %v1410 = vunpack.c.l.bf16 %v1346
      %v1411 = vunpack.c.l.bf16 %v1347
      %v1412 = vunpack.c.l.bf16 %v1348
      %v1413 = vunpack.c.l.bf16 %v1349
      %v1414 = vunpack.c.l.bf16 %v1350
      %v1415 = vunpack.c.l.bf16 %v1351
      %v1416 = vunpack.c.l.bf16 %v1352
      %v1417 = vunpack.c.l.bf16 %v1353
      %v1418 = vunpack.c.l.bf16 %v1354
      %v1419 = vunpack.c.l.bf16 %v1355
      %v1420 = vunpack.c.l.bf16 %v1356
      %v1421 = vunpack.c.l.bf16 %v1357
      %v1422 = vunpack.c.l.bf16 %v1358
      %v1423 = vunpack.c.l.bf16 %v1359
      %v1424 = vunpack.c.l.bf16 %v1360
      %v1425 = vunpack.c.l.bf16 %v1361
      %v1426 = vunpack.c.l.bf16 %v1362
      %v1427 = vunpack.c.l.bf16 %v1363
      %v1428 = vunpack.c.l.bf16 %v1364
      %v1429 = vunpack.c.l.bf16 %v1365
      %v1430 = vunpack.c.l.bf16 %v1366
      %v1431 = vunpack.c.l.bf16 %v1367
      %v1432 = vunpack.c.l.bf16 %v1368
      %v1433 = vunpack.c.l.bf16 %v1369
      %v1434 = vunpack.c.l.bf16 %v1370
      %v1435 = vunpack.c.l.bf16 %v1371
      %v1436 = vunpack.c.l.bf16 %v1372
      %v1437 = vunpack.c.l.bf16 %v1373
      %v1438 = vunpack.c.l.bf16 %v1374
      %v1439 = vunpack.c.l.bf16 %v1375
      %v1440 = vunpack.c.l.bf16 %v1376
      %v1441 = vunpack.c.l.bf16 %v1377
      %v1442 = vunpack.c.l.bf16 %v1378
      %v1443 = vunpack.c.l.bf16 %v1379
      %v1444 = vunpack.c.l.bf16 %v1380
      %v1445 = vunpack.c.l.bf16 %v1381
      %v1446 = vunpack.c.l.bf16 %v1382
      %v1447 = vunpack.c.l.bf16 %v1383
      %v1448 = vunpack.c.l.bf16 %v1384
      %v1449 = vunpack.c.l.bf16 %v1385
      %v1450 = vunpack.c.l.bf16 %v1386
      %v1451 = vunpack.c.l.bf16 %v1387
      %v1452 = vunpack.c.l.bf16 %v1388
      %v1453 = vunpack.c.l.bf16 %v1389
      %v1454 = vunpack.c.l.bf16 %v1390
      %v1455 = vunpack.c.l.bf16 %v1391
      %v1456 = vunpack.c.l.bf16 %v1392
      %v1457 = vunpack.c.l.bf16 %v1393
      %v1458 = vunpack.c.l.bf16 %v1394
      %v1459 = vunpack.c.l.bf16 %v1395
      %v1460 = vunpack.c.l.bf16 %v1396
      %v1461 = vunpack.c.l.bf16 %v1397
      %v1462 = vunpack.c.l.bf16 %v1398
      %v1463 = vunpack.c.l.bf16 %v1399
      %v1464 = vunpack.c.l.bf16 %v1400
      %v1465 = vunpack.c.l.bf16 %v1401
      %v1466 = vunpack.c.l.bf16 %v1402
      %v1467 = vunpack.c.l.bf16 %v1403
      %v1468 = vunpack.c.l.bf16 %v1404
      %v1469 = vunpack.c.l.bf16 %v1405
      %v1470 = vunpack.c.l.bf16 %v1406
      %v1471 = vunpack.c.l.bf16 %v1407
      %v1472 = vunpack.c.l.bf16 %v1408
      %v1473 = vunpack.c.l.bf16 %v1409
      %v1474 = vld [vmem:[%s606] sm:$0xf]
      %v1475 = vld [vmem:[%s606 + $0x4] sm:$0xf]
      %v1476 = vld [vmem:[%s606 + $0x8] sm:$0xf]
      %v1477 = vld [vmem:[%s606 + $0xc] sm:$0xf]
      %v1478 = vld [vmem:[%s606 + $0x10] sm:$0xf]
      %v1479 = vld [vmem:[%s606 + $0x14] sm:$0xf]
      %v1480 = vld [vmem:[%s606 + $0x18] sm:$0xf]
      %v1481 = vld [vmem:[%s606 + $0x1c] sm:$0xf]
      %v1482 = vld [vmem:[%s606 + $0x20] sm:$0xf]
      %v1483 = vld [vmem:[%s606 + $0x24] sm:$0xf]
      %v1484 = vld [vmem:[%s606 + $0x28] sm:$0xf]
      %v1485 = vld [vmem:[%s606 + $0x2c] sm:$0xf]
      %v1486 = vld [vmem:[%s606 + $0x30] sm:$0xf]
      %v1487 = vld [vmem:[%s606 + $0x34] sm:$0xf]
      %v1488 = vld [vmem:[%s606 + $0x38] sm:$0xf]
      %v1489 = vld [vmem:[%s606 + $0x3c] sm:$0xf]
      %v1490 = vld [vmem:[%s606 + $0x40] sm:$0xf]
      %v1491 = vld [vmem:[%s606 + $0x44] sm:$0xf]
      %v1492 = vld [vmem:[%s606 + $0x48] sm:$0xf]
      %v1493 = vld [vmem:[%s606 + $0x4c] sm:$0xf]
      %v1494 = vld [vmem:[%s606 + $0x50] sm:$0xf]
      %v1495 = vld [vmem:[%s606 + $0x54] sm:$0xf]
      %v1496 = vld [vmem:[%s606 + $0x58] sm:$0xf]
      %v1497 = vld [vmem:[%s606 + $0x5c] sm:$0xf]
      %v1498 = vld [vmem:[%s606 + $0x60] sm:$0xf]
      %v1499 = vld [vmem:[%s606 + $0x64] sm:$0xf]
      %v1500 = vld [vmem:[%s606 + $0x68] sm:$0xf]
      %v1501 = vld [vmem:[%s606 + $0x6c] sm:$0xf]
      %v1502 = vld [vmem:[%s606 + $0x70] sm:$0xf]
      %v1503 = vld [vmem:[%s606 + $0x74] sm:$0xf]
      %v1504 = vld [vmem:[%s606 + $0x78] sm:$0xf]
      %v1505 = vld [vmem:[%s606 + $0x7c] sm:$0xf]
      %v1506 = vld [vmem:[%s606 + $0x80] sm:$0xf]
      %v1507 = vld [vmem:[%s606 + $0x84] sm:$0xf]
      %v1508 = vld [vmem:[%s606 + $0x88] sm:$0xf]
      %v1509 = vld [vmem:[%s606 + $0x8c] sm:$0xf]
      %v1510 = vld [vmem:[%s606 + $0x90] sm:$0xf]
      %v1511 = vld [vmem:[%s606 + $0x94] sm:$0xf]
      %v1512 = vld [vmem:[%s606 + $0x98] sm:$0xf]
      %v1513 = vld [vmem:[%s606 + $0x9c] sm:$0xf]
      %v1514 = vld [vmem:[%s606 + $0xa0] sm:$0xf]
      %v1515 = vld [vmem:[%s606 + $0xa4] sm:$0xf]
      %v1516 = vld [vmem:[%s606 + $0xa8] sm:$0xf]
      %v1517 = vld [vmem:[%s606 + $0xac] sm:$0xf]
      %v1518 = vld [vmem:[%s606 + $0xb0] sm:$0xf]
      %v1519 = vld [vmem:[%s606 + $0xb4] sm:$0xf]
      %v1520 = vld [vmem:[%s606 + $0xb8] sm:$0xf]
      %v1521 = vld [vmem:[%s606 + $0xbc] sm:$0xf]
      %v1522 = vld [vmem:[%s606 + $0xc0] sm:$0xf]
      %v1523 = vld [vmem:[%s606 + $0xc4] sm:$0xf]
      %v1524 = vld [vmem:[%s606 + $0xc8] sm:$0xf]
      %v1525 = vld [vmem:[%s606 + $0xcc] sm:$0xf]
      %v1526 = vld [vmem:[%s606 + $0xd0] sm:$0xf]
      %v1527 = vld [vmem:[%s606 + $0xd4] sm:$0xf]
      %v1528 = vld [vmem:[%s606 + $0xd8] sm:$0xf]
      %v1529 = vld [vmem:[%s606 + $0xdc] sm:$0xf]
      %v1530 = vld [vmem:[%s606 + $0xe0] sm:$0xf]
      %v1531 = vld [vmem:[%s606 + $0xe4] sm:$0xf]
      %v1532 = vld [vmem:[%s606 + $0xe8] sm:$0xf]
      %v1533 = vld [vmem:[%s606 + $0xec] sm:$0xf]
      %v1534 = vld [vmem:[%s606 + $0xf0] sm:$0xf]
      %v1535 = vld [vmem:[%s606 + $0xf4] sm:$0xf]
      %v1536 = vld [vmem:[%s606 + $0xf8] sm:$0xf]
      %v1537 = vld [vmem:[%s606 + $0xfc] sm:$0xf]
      %v1538 = vunpack.c.l.bf16 %v1474
      %v1539 = vunpack.c.l.bf16 %v1475
      %v1540 = vunpack.c.l.bf16 %v1476
      %v1541 = vunpack.c.l.bf16 %v1477
      %v1542 = vunpack.c.l.bf16 %v1478
      %v1543 = vunpack.c.l.bf16 %v1479
      %v1544 = vunpack.c.l.bf16 %v1480
      %v1545 = vunpack.c.l.bf16 %v1481
      %v1546 = vunpack.c.l.bf16 %v1482
      %v1547 = vunpack.c.l.bf16 %v1483
      %v1548 = vunpack.c.l.bf16 %v1484
      %v1549 = vunpack.c.l.bf16 %v1485
      %v1550 = vunpack.c.l.bf16 %v1486
      %v1551 = vunpack.c.l.bf16 %v1487
      %v1552 = vunpack.c.l.bf16 %v1488
      %v1553 = vunpack.c.l.bf16 %v1489
      %v1554 = vunpack.c.l.bf16 %v1490
      %v1555 = vunpack.c.l.bf16 %v1491
      %v1556 = vunpack.c.l.bf16 %v1492
      %v1557 = vunpack.c.l.bf16 %v1493
      %v1558 = vunpack.c.l.bf16 %v1494
      %v1559 = vunpack.c.l.bf16 %v1495
      %v1560 = vunpack.c.l.bf16 %v1496
      %v1561 = vunpack.c.l.bf16 %v1497
      %v1562 = vunpack.c.l.bf16 %v1498
      %v1563 = vunpack.c.l.bf16 %v1499
      %v1564 = vunpack.c.l.bf16 %v1500
      %v1565 = vunpack.c.l.bf16 %v1501
      %v1566 = vunpack.c.l.bf16 %v1502
      %v1567 = vunpack.c.l.bf16 %v1503
      %v1568 = vunpack.c.l.bf16 %v1504
      %v1569 = vunpack.c.l.bf16 %v1505
      %v1570 = vunpack.c.l.bf16 %v1506
      %v1571 = vunpack.c.l.bf16 %v1507
      %v1572 = vunpack.c.l.bf16 %v1508
      %v1573 = vunpack.c.l.bf16 %v1509
      %v1574 = vunpack.c.l.bf16 %v1510
      %v1575 = vunpack.c.l.bf16 %v1511
      %v1576 = vunpack.c.l.bf16 %v1512
      %v1577 = vunpack.c.l.bf16 %v1513
      %v1578 = vunpack.c.l.bf16 %v1514
      %v1579 = vunpack.c.l.bf16 %v1515
      %v1580 = vunpack.c.l.bf16 %v1516
      %v1581 = vunpack.c.l.bf16 %v1517
      %v1582 = vunpack.c.l.bf16 %v1518
      %v1583 = vunpack.c.l.bf16 %v1519
      %v1584 = vunpack.c.l.bf16 %v1520
      %v1585 = vunpack.c.l.bf16 %v1521
      %v1586 = vunpack.c.l.bf16 %v1522
      %v1587 = vunpack.c.l.bf16 %v1523
      %v1588 = vunpack.c.l.bf16 %v1524
      %v1589 = vunpack.c.l.bf16 %v1525
      %v1590 = vunpack.c.l.bf16 %v1526
      %v1591 = vunpack.c.l.bf16 %v1527
      %v1592 = vunpack.c.l.bf16 %v1528
      %v1593 = vunpack.c.l.bf16 %v1529
      %v1594 = vunpack.c.l.bf16 %v1530
      %v1595 = vunpack.c.l.bf16 %v1531
      %v1596 = vunpack.c.l.bf16 %v1532
      %v1597 = vunpack.c.l.bf16 %v1533
      %v1598 = vunpack.c.l.bf16 %v1534
      %v1599 = vunpack.c.l.bf16 %v1535
      %v1600 = vunpack.c.l.bf16 %v1536
      %v1601 = vunpack.c.l.bf16 %v1537
      %v1602 = vmul.f32 %v1282, %v1538
      %v1603 = vmul.f32 %v1283, %v1539
      %v1604 = vmul.f32 %v1284, %v1540
      %v1605 = vmul.f32 %v1285, %v1541
      %v1606 = vmul.f32 %v1286, %v1542
      %v1607 = vmul.f32 %v1287, %v1543
      %v1608 = vmul.f32 %v1288, %v1544
      %v1609 = vmul.f32 %v1289, %v1545
      %v1610 = vmul.f32 %v1290, %v1546
      %v1611 = vmul.f32 %v1291, %v1547
      %v1612 = vmul.f32 %v1292, %v1548
      %v1613 = vmul.f32 %v1293, %v1549
      %v1614 = vmul.f32 %v1294, %v1550
      %v1615 = vmul.f32 %v1295, %v1551
      %v1616 = vmul.f32 %v1296, %v1552
      %v1617 = vmul.f32 %v1297, %v1553
      %v1618 = vmul.f32 %v1298, %v1554
      %v1619 = vmul.f32 %v1299, %v1555
      %v1620 = vmul.f32 %v1300, %v1556
      %v1621 = vmul.f32 %v1301, %v1557
      %v1622 = vmul.f32 %v1302, %v1558
      %v1623 = vmul.f32 %v1303, %v1559
      %v1624 = vmul.f32 %v1304, %v1560
      %v1625 = vmul.f32 %v1305, %v1561
      %v1626 = vmul.f32 %v1306, %v1562
      %v1627 = vmul.f32 %v1307, %v1563
      %v1628 = vmul.f32 %v1308, %v1564
      %v1629 = vmul.f32 %v1309, %v1565
      %v1630 = vmul.f32 %v1310, %v1566
      %v1631 = vmul.f32 %v1311, %v1567
      %v1632 = vmul.f32 %v1312, %v1568
      %v1633 = vmul.f32 %v1313, %v1569
      %v1634 = vmul.f32 %v1314, %v1570
      %v1635 = vmul.f32 %v1315, %v1571
      %v1636 = vmul.f32 %v1316, %v1572
      %v1637 = vmul.f32 %v1317, %v1573
      %v1638 = vmul.f32 %v1318, %v1574
      %v1639 = vmul.f32 %v1319, %v1575
      %v1640 = vmul.f32 %v1320, %v1576
      %v1641 = vmul.f32 %v1321, %v1577
      %v1642 = vmul.f32 %v1322, %v1578
      %v1643 = vmul.f32 %v1323, %v1579
      %v1644 = vmul.f32 %v1324, %v1580
      %v1645 = vmul.f32 %v1325, %v1581
      %v1646 = vmul.f32 %v1326, %v1582
      %v1647 = vmul.f32 %v1327, %v1583
      %v1648 = vmul.f32 %v1328, %v1584
      %v1649 = vmul.f32 %v1329, %v1585
      %v1650 = vmul.f32 %v1330, %v1586
      %v1651 = vmul.f32 %v1331, %v1587
      %v1652 = vmul.f32 %v1332, %v1588
      %v1653 = vmul.f32 %v1333, %v1589
      %v1654 = vmul.f32 %v1334, %v1590
      %v1655 = vmul.f32 %v1335, %v1591
      %v1656 = vmul.f32 %v1336, %v1592
      %v1657 = vmul.f32 %v1337, %v1593
      %v1658 = vmul.f32 %v1338, %v1594
      %v1659 = vmul.f32 %v1339, %v1595
      %v1660 = vmul.f32 %v1340, %v1596
      %v1661 = vmul.f32 %v1341, %v1597
      %v1662 = vmul.f32 %v1342, %v1598
      %v1663 = vmul.f32 %v1343, %v1599
      %v1664 = vmul.f32 %v1344, %v1600
      %v1665 = vmul.f32 %v1345, %v1601
      %v1666 = vmul.f32 %v1602, 0.25
      %v1667 = vmul.f32 %v1603, 0.25
      %v1668 = vmul.f32 %v1604, 0.25
      %v1669 = vmul.f32 %v1605, 0.25
      %v1670 = vmul.f32 %v1606, 0.25
      %v1671 = vmul.f32 %v1607, 0.25
      %v1672 = vmul.f32 %v1608, 0.25
      %v1673 = vmul.f32 %v1609, 0.25
      %v1674 = vmul.f32 %v1610, 0.25
      %v1675 = vmul.f32 %v1611, 0.25
      %v1676 = vmul.f32 %v1612, 0.25
      %v1677 = vmul.f32 %v1613, 0.25
      %v1678 = vmul.f32 %v1614, 0.25
      %v1679 = vmul.f32 %v1615, 0.25
      %v1680 = vmul.f32 %v1616, 0.25
      %v1681 = vmul.f32 %v1617, 0.25
      %v1682 = vmul.f32 %v1618, 0.25
      %v1683 = vmul.f32 %v1619, 0.25
      %v1684 = vmul.f32 %v1620, 0.25
      %v1685 = vmul.f32 %v1621, 0.25
      %v1686 = vmul.f32 %v1622, 0.25
      %v1687 = vmul.f32 %v1623, 0.25
      %v1688 = vmul.f32 %v1624, 0.25
      %v1689 = vmul.f32 %v1625, 0.25
      %v1690 = vmul.f32 %v1626, 0.25
      %v1691 = vmul.f32 %v1627, 0.25
      %v1692 = vmul.f32 %v1628, 0.25
      %v1693 = vmul.f32 %v1629, 0.25
      %v1694 = vmul.f32 %v1630, 0.25
      %v1695 = vmul.f32 %v1631, 0.25
      %v1696 = vmul.f32 %v1632, 0.25
      %v1697 = vmul.f32 %v1633, 0.25
      %v1698 = vmul.f32 %v1634, 0.25
      %v1699 = vmul.f32 %v1635, 0.25
      %v1700 = vmul.f32 %v1636, 0.25
      %v1701 = vmul.f32 %v1637, 0.25
      %v1702 = vmul.f32 %v1638, 0.25
      %v1703 = vmul.f32 %v1639, 0.25
      %v1704 = vmul.f32 %v1640, 0.25
      %v1705 = vmul.f32 %v1641, 0.25
      %v1706 = vmul.f32 %v1642, 0.25
      %v1707 = vmul.f32 %v1643, 0.25
      %v1708 = vmul.f32 %v1644, 0.25
      %v1709 = vmul.f32 %v1645, 0.25
      %v1710 = vmul.f32 %v1646, 0.25
      %v1711 = vmul.f32 %v1647, 0.25
      %v1712 = vmul.f32 %v1648, 0.25
      %v1713 = vmul.f32 %v1649, 0.25
      %v1714 = vmul.f32 %v1650, 0.25
      %v1715 = vmul.f32 %v1651, 0.25
      %v1716 = vmul.f32 %v1652, 0.25
      %v1717 = vmul.f32 %v1653, 0.25
      %v1718 = vmul.f32 %v1654, 0.25
      %v1719 = vmul.f32 %v1655, 0.25
      %v1720 = vmul.f32 %v1656, 0.25
      %v1721 = vmul.f32 %v1657, 0.25
      %v1722 = vmul.f32 %v1658, 0.25
      %v1723 = vmul.f32 %v1659, 0.25
      %v1724 = vmul.f32 %v1660, 0.25
      %v1725 = vmul.f32 %v1661, 0.25
      %v1726 = vmul.f32 %v1662, 0.25
      %v1727 = vmul.f32 %v1663, 0.25
      %v1728 = vmul.f32 %v1664, 0.25
      %v1729 = vmul.f32 %v1665, 0.25
      %v1730 = vmul.f32 %v1666, %v964
      %v1731 = vmul.f32 %v1667, %v967
      %v1732 = vmul.f32 %v1668, %v972
      %v1733 = vmul.f32 %v1669, %v975
      %v1734 = vmul.f32 %v1670, %v980
      %v1735 = vmul.f32 %v1671, %v983
      %v1736 = vmul.f32 %v1672, %v988
      %v1737 = vmul.f32 %v1673, %v991
      %v1738 = vmul.f32 %v1674, %v996
      %v1739 = vmul.f32 %v1675, %v999
      %v1740 = vmul.f32 %v1676, %v1004
      %v1741 = vmul.f32 %v1677, %v1007
      %v1742 = vmul.f32 %v1678, %v1012
      %v1743 = vmul.f32 %v1679, %v1015
      %v1744 = vmul.f32 %v1680, %v1020
      %v1745 = vmul.f32 %v1681, %v1023
      %v1746 = vmul.f32 %v1682, %v1028
      %v1747 = vmul.f32 %v1683, %v1031
      %v1748 = vmul.f32 %v1684, %v1036
      %v1749 = vmul.f32 %v1685, %v1039
      %v1750 = vmul.f32 %v1686, %v1044
      %v1751 = vmul.f32 %v1687, %v1047
      %v1752 = vmul.f32 %v1688, %v1052
      %v1753 = vmul.f32 %v1689, %v1055
      %v1754 = vmul.f32 %v1690, %v1060
      %v1755 = vmul.f32 %v1691, %v1063
      %v1756 = vmul.f32 %v1692, %v1068
      %v1757 = vmul.f32 %v1693, %v1071
      %v1758 = vmul.f32 %v1694, %v1076
      %v1759 = vmul.f32 %v1695, %v1079
      %v1760 = vmul.f32 %v1696, %v1084
      %v1761 = vmul.f32 %v1697, %v1087
      %v1762 = vmul.f32 %v1698, %v1092
      %v1763 = vmul.f32 %v1699, %v1095
      %v1764 = vmul.f32 %v1700, %v1100
      %v1765 = vmul.f32 %v1701, %v1103
      %v1766 = vmul.f32 %v1702, %v1108
      %v1767 = vmul.f32 %v1703, %v1111
      %v1768 = vmul.f32 %v1704, %v1116
      %v1769 = vmul.f32 %v1705, %v1119
      %v1770 = vmul.f32 %v1706, %v1124
      %v1771 = vmul.f32 %v1707, %v1127
      %v1772 = vmul.f32 %v1708, %v1132
      %v1773 = vmul.f32 %v1709, %v1135
      %v1774 = vmul.f32 %v1710, %v1140
      %v1775 = vmul.f32 %v1711, %v1143
      %v1776 = vmul.f32 %v1712, %v1148
      %v1777 = vmul.f32 %v1713, %v1151
      %v1778 = vmul.f32 %v1714, %v1156
      %v1779 = vmul.f32 %v1715, %v1159
      %v1780 = vmul.f32 %v1716, %v1164
      %v1781 = vmul.f32 %v1717, %v1167
      %v1782 = vmul.f32 %v1718, %v1172
      %v1783 = vmul.f32 %v1719, %v1175
      %v1784 = vmul.f32 %v1720, %v1180
      %v1785 = vmul.f32 %v1721, %v1183
      %v1786 = vmul.f32 %v1722, %v1188
      %v1787 = vmul.f32 %v1723, %v1191
      %v1788 = vmul.f32 %v1724, %v1196
      %v1789 = vmul.f32 %v1725, %v1199
      %v1790 = vmul.f32 %v1726, %v1204
      %v1791 = vmul.f32 %v1727, %v1207
      %v1792 = vmul.f32 %v1728, %v1212
      %v1793 = vmul.f32 %v1729, %v1215
      %v1794 = vpack.c.bf16 %v1731, %v1730
      %v1795 = vpack.c.bf16 %v1733, %v1732
      %v1796 = vpack.c.bf16 %v1735, %v1734
      %v1797 = vpack.c.bf16 %v1737, %v1736
      %v1798 = vpack.c.bf16 %v1739, %v1738
      %v1799 = vpack.c.bf16 %v1741, %v1740
      %v1800 = vpack.c.bf16 %v1743, %v1742
      %v1801 = vpack.c.bf16 %v1745, %v1744
      %v1802 = vpack.c.bf16 %v1747, %v1746
      %v1803 = vpack.c.bf16 %v1749, %v1748
      %v1804 = vpack.c.bf16 %v1751, %v1750
      %v1805 = vpack.c.bf16 %v1753, %v1752
      %v1806 = vpack.c.bf16 %v1755, %v1754
      %v1807 = vpack.c.bf16 %v1757, %v1756
      %v1808 = vpack.c.bf16 %v1759, %v1758
      %v1809 = vpack.c.bf16 %v1761, %v1760
      %v1810 = vpack.c.bf16 %v1763, %v1762
      %v1811 = vpack.c.bf16 %v1765, %v1764
      %v1812 = vpack.c.bf16 %v1767, %v1766
      %v1813 = vpack.c.bf16 %v1769, %v1768
      %v1814 = vpack.c.bf16 %v1771, %v1770
      %v1815 = vpack.c.bf16 %v1773, %v1772
      %v1816 = vpack.c.bf16 %v1775, %v1774
      %v1817 = vpack.c.bf16 %v1777, %v1776
      %v1818 = vpack.c.bf16 %v1779, %v1778
      %v1819 = vpack.c.bf16 %v1781, %v1780
      %v1820 = vpack.c.bf16 %v1783, %v1782
      %v1821 = vpack.c.bf16 %v1785, %v1784
      %v1822 = vpack.c.bf16 %v1787, %v1786
      %v1823 = vpack.c.bf16 %v1789, %v1788
      %v1824 = vpack.c.bf16 %v1791, %v1790
      %v1825 = vpack.c.bf16 %v1793, %v1792
      %v1826 = vld [vmem:[%s6] sm:$0xf]
      %v1827 = vld [vmem:[%s6 + $0x4] sm:$0xf]
      %v1828 = vld [vmem:[%s6 + $0x8] sm:$0xf]
      %v1829 = vld [vmem:[%s6 + $0xc] sm:$0xf]
      %v1830 = vld [vmem:[%s6 + $0x10] sm:$0xf]
      %v1831 = vld [vmem:[%s6 + $0x14] sm:$0xf]
      %v1832 = vld [vmem:[%s6 + $0x18] sm:$0xf]
      %v1833 = vld [vmem:[%s6 + $0x1c] sm:$0xf]
      %v1834 = vld [vmem:[%s6 + $0x20] sm:$0xf]
      %v1835 = vld [vmem:[%s6 + $0x24] sm:$0xf]
      %v1836 = vld [vmem:[%s6 + $0x28] sm:$0xf]
      %v1837 = vld [vmem:[%s6 + $0x2c] sm:$0xf]
      %v1838 = vld [vmem:[%s6 + $0x30] sm:$0xf]
      %v1839 = vld [vmem:[%s6 + $0x34] sm:$0xf]
      %v1840 = vld [vmem:[%s6 + $0x38] sm:$0xf]
      %v1841 = vld [vmem:[%s6 + $0x3c] sm:$0xf]
      %v1858 = vunpack.c.l.b16 %v1826
      %v1859 = vunpack.c.l.b16 %v1827
      %v1860 = vunpack.c.l.b16 %v1828
      %v1861 = vunpack.c.l.b16 %v1829
      %v1862 = vunpack.c.l.b16 %v1830
      %v1863 = vunpack.c.l.b16 %v1831
      %v1864 = vunpack.c.l.b16 %v1832
      %v1865 = vunpack.c.l.b16 %v1833
      %v1866 = vunpack.c.l.b16 %v1834
      %v1867 = vunpack.c.l.b16 %v1835
      %v1868 = vunpack.c.l.b16 %v1836
      %v1869 = vunpack.c.l.b16 %v1837
      %v1870 = vunpack.c.l.b16 %v1838
      %v1871 = vunpack.c.l.b16 %v1839
      %v1872 = vunpack.c.l.b16 %v1840
      %v1873 = vunpack.c.l.b16 %v1841
      %v1874 = vpack.c.b16 %v1859, %v1858
      %v1875 = vpack.c.b16 %v1861, %v1860
      %v1876 = vpack.c.b16 %v1863, %v1862
      %v1877 = vpack.c.b16 %v1865, %v1864
      %v1878 = vpack.c.b16 %v1867, %v1866
      %v1879 = vpack.c.b16 %v1869, %v1868
      %v1880 = vpack.c.b16 %v1871, %v1870
      %v1881 = vpack.c.b16 %v1873, %v1872
      %1890 = vmatprep.subr.bf16.mxu0 0
      %1891 = vmatpush1.bf16.msra.mxu0 %v1874
      %1892 = vmatprep.subr.bf16.mxu0 0
      %1893 = vmatpush1.bf16.msra.mxu0 %v1875
      %1894 = vmatprep.subr.bf16.mxu0 0
      %1895 = vmatpush1.bf16.msra.mxu0 %v1876
      %1896 = vmatprep.subr.bf16.mxu0 0
      %1897 = vmatpush1.bf16.msra.mxu0 %v1877
      %1898 = vmatprep.subr.bf16.mxu0 0
      %1899 = vmatpush1.bf16.msra.mxu0 %v1878
      %1900 = vmatprep.subr.bf16.mxu0 0
      %1901 = vmatpush1.bf16.msra.mxu0 %v1879
      %1902 = vmatprep.subr.bf16.mxu0 0
      %1903 = vmatpush1.bf16.msra.mxu0 %v1880
      %1904 = vmatprep.subr.bf16.mxu0 0
      %1905 = vmatpush1.bf16.msra.mxu0 %v1881
      %1906 = vmatprep.subr.bf16.mxu0 0
      %1907 = vmatpush1.bf16.msra.mxu0 0
      %1908 = vmatprep.subr.bf16.mxu0 0
      %1909 = vmatpush1.bf16.msra.mxu0 0
      %1910 = vmatprep.subr.bf16.mxu0 0
      %1911 = vmatpush1.bf16.msra.mxu0 0
      %1912 = vmatprep.subr.bf16.mxu0 0
      %1913 = vmatpush1.bf16.msra.mxu0 0
      %1914 = vmatprep.subr.bf16.mxu0 0
      %1915 = vmatpush1.bf16.msra.mxu0 0
      %1916 = vmatprep.subr.bf16.mxu0 0
      %1917 = vmatpush1.bf16.msra.mxu0 0
      %1918 = vmatprep.subr.bf16.mxu0 0
      %1919 = vmatpush1.bf16.msra.mxu0 0
      %1920 = vmatprep.subr.bf16.mxu0 0
      %1921 = vmatpush1.bf16.msra.mxu0 0
      %1922 = vmatprep.mubr.bf16.mxu0 0
      %1923 = vmatmul.mubr.bf16.gmra.mrb[0].mxu0 %v1794
      %v1924 = vpop.f32.mrb[0].mxu0
      %v1925 = vadd.f32 0.0, %v1924
      %v1926 = vpop.f32.mrb[0].mxu0
      %v1927 = vpop.f32.mrb[0].mxu0
      %v1928 = vadd.f32 0.0, %v1927
      %v1929 = vpop.f32.mrb[0].mxu0
      %1930 = vmatprep.mubr.bf16.mxu0 0
      %1931 = vmatmul.mubr.bf16.gmra.mrb[0].mxu0 %v1795
      %v1932 = vpop.f32.mrb[0].mxu0
      %v1933 = vadd.f32 0.0, %v1932
      %v1934 = vpop.f32.mrb[0].mxu0
      %v1935 = vpop.f32.mrb[0].mxu0
      %v1936 = vadd.f32 0.0, %v1935
      %v1937 = vpop.f32.mrb[0].mxu0
      %1938 = vmatprep.mubr.bf16.mxu0 0
      %1939 = vmatmul.mubr.bf16.gmra.mrb[0].mxu0 %v1796
      %v1940 = vpop.f32.mrb[0].mxu0
      %v1941 = vadd.f32 0.0, %v1940
      %v1942 = vpop.f32.mrb[0].mxu0
      %v1943 = vpop.f32.mrb[0].mxu0
      %v1944 = vadd.f32 0.0, %v1943
      %v1945 = vpop.f32.mrb[0].mxu0
      %1946 = vmatprep.mubr.bf16.mxu0 0
      %1947 = vmatmul.mubr.bf16.gmra.mrb[0].mxu0 %v1797
      %v1948 = vpop.f32.mrb[0].mxu0
      %v1949 = vadd.f32 0.0, %v1948
      %v1950 = vpop.f32.mrb[0].mxu0
      %v1951 = vpop.f32.mrb[0].mxu0
      %v1952 = vadd.f32 0.0, %v1951
      %v1953 = vpop.f32.mrb[0].mxu0
      %1954 = vmatprep.mubr.bf16.mxu0 0
      %1955 = vmatmul.mubr.bf16.gmra.mrb[0].mxu0 %v1798
      %v1956 = vpop.f32.mrb[0].mxu0
      %v1957 = vadd.f32 0.0, %v1956
      %v1958 = vpop.f32.mrb[0].mxu0
      %v1959 = vpop.f32.mrb[0].mxu0
      %v1960 = vadd.f32 0.0, %v1959
      %v1961 = vpop.f32.mrb[0].mxu0
      %1962 = vmatprep.mubr.bf16.mxu0 0
      %1963 = vmatmul.mubr.bf16.gmra.mrb[0].mxu0 %v1799
      %v1964 = vpop.f32.mrb[0].mxu0
      %v1965 = vadd.f32 0.0, %v1964
      %v1966 = vpop.f32.mrb[0].mxu0
      %v1967 = vpop.f32.mrb[0].mxu0
      %v1968 = vadd.f32 0.0, %v1967
      %v1969 = vpop.f32.mrb[0].mxu0
      %1970 = vmatprep.mubr.bf16.mxu0 0
      %1971 = vmatmul.mubr.bf16.gmra.mrb[0].mxu0 %v1800
      %v1972 = vpop.f32.mrb[0].mxu0
      %v1973 = vadd.f32 0.0, %v1972
      %v1974 = vpop.f32.mrb[0].mxu0
      %v1975 = vpop.f32.mrb[0].mxu0
      %v1976 = vadd.f32 0.0, %v1975
      %v1977 = vpop.f32.mrb[0].mxu0
      %1978 = vmatprep.mubr.bf16.mxu0 0
      %1979 = vmatmul.mubr.bf16.gmra.mrb[0].mxu0 %v1801
      %v1980 = vpop.f32.mrb[0].mxu0
      %v1981 = vadd.f32 0.0, %v1980
      %v1982 = vpop.f32.mrb[0].mxu0
      %v1983 = vpop.f32.mrb[0].mxu0
      %v1984 = vadd.f32 0.0, %v1983
      %v1985 = vpop.f32.mrb[0].mxu0
      %1986 = vmatprep.mubr.bf16.mxu0 0
      %1987 = vmatmul.mubr.bf16.gmra.mrb[0].mxu0 %v1802
      %v1988 = vpop.f32.mrb[0].mxu0
      %v1989 = vadd.f32 0.0, %v1988
      %v1990 = vpop.f32.mrb[0].mxu0
      %v1991 = vpop.f32.mrb[0].mxu0
      %v1992 = vadd.f32 0.0, %v1991
      %v1993 = vpop.f32.mrb[0].mxu0
      %1994 = vmatprep.mubr.bf16.mxu0 0
      %1995 = vmatmul.mubr.bf16.gmra.mrb[0].mxu0 %v1803
      %v1996 = vpop.f32.mrb[0].mxu0
      %v1997 = vadd.f32 0.0, %v1996
      %v1998 = vpop.f32.mrb[0].mxu0
      %v1999 = vpop.f32.mrb[0].mxu0
      %v2000 = vadd.f32 0.0, %v1999
      %v2001 = vpop.f32.mrb[0].mxu0
      %2002 = vmatprep.mubr.bf16.mxu0 0
      %2003 = vmatmul.mubr.bf16.gmra.mrb[0].mxu0 %v1804
      %v2004 = vpop.f32.mrb[0].mxu0
      %v2005 = vadd.f32 0.0, %v2004
      %v2006 = vpop.f32.mrb[0].mxu0
      %v2007 = vpop.f32.mrb[0].mxu0
      %v2008 = vadd.f32 0.0, %v2007
      %v2009 = vpop.f32.mrb[0].mxu0
      %2010 = vmatprep.mubr.bf16.mxu0 0
      %2011 = vmatmul.mubr.bf16.gmra.mrb[0].mxu0 %v1805
      %v2012 = vpop.f32.mrb[0].mxu0
      %v2013 = vadd.f32 0.0, %v2012
      %v2014 = vpop.f32.mrb[0].mxu0
      %v2015 = vpop.f32.mrb[0].mxu0
      %v2016 = vadd.f32 0.0, %v2015
      %v2017 = vpop.f32.mrb[0].mxu0
      %2018 = vmatprep.mubr.bf16.mxu0 0
      %2019 = vmatmul.mubr.bf16.gmra.mrb[0].mxu0 %v1806
      %v2020 = vpop.f32.mrb[0].mxu0
      %v2021 = vadd.f32 0.0, %v2020
      %v2022 = vpop.f32.mrb[0].mxu0
      %v2023 = vpop.f32.mrb[0].mxu0
      %v2024 = vadd.f32 0.0, %v2023
      %v2025 = vpop.f32.mrb[0].mxu0
      %2026 = vmatprep.mubr.bf16.mxu0 0
      %2027 = vmatmul.mubr.bf16.gmra.mrb[0].mxu0 %v1807
      %v2028 = vpop.f32.mrb[0].mxu0
      %v2029 = vadd.f32 0.0, %v2028
      %v2030 = vpop.f32.mrb[0].mxu0
      %v2031 = vpop.f32.mrb[0].mxu0
      %v2032 = vadd.f32 0.0, %v2031
      %v2033 = vpop.f32.mrb[0].mxu0
      %2034 = vmatprep.mubr.bf16.mxu0 0
      %2035 = vmatmul.mubr.bf16.gmra.mrb[0].mxu0 %v1808
      %v2036 = vpop.f32.mrb[0].mxu0
      %v2037 = vadd.f32 0.0, %v2036
      %v2038 = vpop.f32.mrb[0].mxu0
      %v2039 = vpop.f32.mrb[0].mxu0
      %v2040 = vadd.f32 0.0, %v2039
      %v2041 = vpop.f32.mrb[0].mxu0
      %2042 = vmatprep.mubr.bf16.mxu0 0
      %2043 = vmatmul.mubr.bf16.gmra.mrb[0].mxu0 %v1809
      %v2044 = vpop.f32.mrb[0].mxu0
      %v2045 = vadd.f32 0.0, %v2044
      %v2046 = vpop.f32.mrb[0].mxu0
      %v2047 = vpop.f32.mrb[0].mxu0
      %v2048 = vadd.f32 0.0, %v2047
      %v2049 = vpop.f32.mrb[0].mxu0
      %2050 = vmatprep.mubr.bf16.mxu0 0
      %2051 = vmatmul.mubr.bf16.gmra.mrb[0].mxu0 %v1810
      %v2052 = vpop.f32.mrb[0].mxu0
      %v2053 = vadd.f32 0.0, %v2052
      %v2054 = vpop.f32.mrb[0].mxu0
      %v2055 = vpop.f32.mrb[0].mxu0
      %v2056 = vadd.f32 0.0, %v2055
      %v2057 = vpop.f32.mrb[0].mxu0
      %2058 = vmatprep.mubr.bf16.mxu0 0
      %2059 = vmatmul.mubr.bf16.gmra.mrb[0].mxu0 %v1811
      %v2060 = vpop.f32.mrb[0].mxu0
      %v2061 = vadd.f32 0.0, %v2060
      %v2062 = vpop.f32.mrb[0].mxu0
      %v2063 = vpop.f32.mrb[0].mxu0
      %v2064 = vadd.f32 0.0, %v2063
      %v2065 = vpop.f32.mrb[0].mxu0
      %2066 = vmatprep.mubr.bf16.mxu0 0
      %2067 = vmatmul.mubr.bf16.gmra.mrb[0].mxu0 %v1812
      %v2068 = vpop.f32.mrb[0].mxu0
      %v2069 = vadd.f32 0.0, %v2068
      %v2070 = vpop.f32.mrb[0].mxu0
      %v2071 = vpop.f32.mrb[0].mxu0
      %v2072 = vadd.f32 0.0, %v2071
      %v2073 = vpop.f32.mrb[0].mxu0
      %2074 = vmatprep.mubr.bf16.mxu0 0
      %2075 = vmatmul.mubr.bf16.gmra.mrb[0].mxu0 %v1813
      %v2076 = vpop.f32.mrb[0].mxu0
      %v2077 = vadd.f32 0.0, %v2076
      %v2078 = vpop.f32.mrb[0].mxu0
      %v2079 = vpop.f32.mrb[0].mxu0
      %v2080 = vadd.f32 0.0, %v2079
      %v2081 = vpop.f32.mrb[0].mxu0
      %2082 = vmatprep.mubr.bf16.mxu0 0
      %2083 = vmatmul.mubr.bf16.gmra.mrb[0].mxu0 %v1814
      %v2084 = vpop.f32.mrb[0].mxu0
      %v2085 = vadd.f32 0.0, %v2084
      %v2086 = vpop.f32.mrb[0].mxu0
      %v2087 = vpop.f32.mrb[0].mxu0
      %v2088 = vadd.f32 0.0, %v2087
      %v2089 = vpop.f32.mrb[0].mxu0
      %2090 = vmatprep.mubr.bf16.mxu0 0
      %2091 = vmatmul.mubr.bf16.gmra.mrb[0].mxu0 %v1815
      %v2092 = vpop.f32.mrb[0].mxu0
      %v2093 = vadd.f32 0.0, %v2092
      %v2094 = vpop.f32.mrb[0].mxu0
      %v2095 = vpop.f32.mrb[0].mxu0
      %v2096 = vadd.f32 0.0, %v2095
      %v2097 = vpop.f32.mrb[0].mxu0
      %2098 = vmatprep.mubr.bf16.mxu0 0
      %2099 = vmatmul.mubr.bf16.gmra.mrb[0].mxu0 %v1816
      %v2100 = vpop.f32.mrb[0].mxu0
      %v2101 = vadd.f32 0.0, %v2100
      %v2102 = vpop.f32.mrb[0].mxu0
      %v2103 = vpop.f32.mrb[0].mxu0
      %v2104 = vadd.f32 0.0, %v2103
      %v2105 = vpop.f32.mrb[0].mxu0
      %2106 = vmatprep.mubr.bf16.mxu0 0
      %2107 = vmatmul.mubr.bf16.gmra.mrb[0].mxu0 %v1817
      %v2108 = vpop.f32.mrb[0].mxu0
      %v2109 = vadd.f32 0.0, %v2108
      %v2110 = vpop.f32.mrb[0].mxu0
      %v2111 = vpop.f32.mrb[0].mxu0
      %v2112 = vadd.f32 0.0, %v2111
      %v2113 = vpop.f32.mrb[0].mxu0
      %2114 = vmatprep.mubr.bf16.mxu0 0
      %2115 = vmatmul.mubr.bf16.gmra.mrb[0].mxu0 %v1818
      %v2116 = vpop.f32.mrb[0].mxu0
      %v2117 = vadd.f32 0.0, %v2116
      %v2118 = vpop.f32.mrb[0].mxu0
      %v2119 = vpop.f32.mrb[0].mxu0
      %v2120 = vadd.f32 0.0, %v2119
      %v2121 = vpop.f32.mrb[0].mxu0
      %2122 = vmatprep.mubr.bf16.mxu0 0
      %2123 = vmatmul.mubr.bf16.gmra.mrb[0].mxu0 %v1819
      %v2124 = vpop.f32.mrb[0].mxu0
      %v2125 = vadd.f32 0.0, %v2124
      %v2126 = vpop.f32.mrb[0].mxu0
      %v2127 = vpop.f32.mrb[0].mxu0
      %v2128 = vadd.f32 0.0, %v2127
      %v2129 = vpop.f32.mrb[0].mxu0
      %2130 = vmatprep.mubr.bf16.mxu0 0
      %2131 = vmatmul.mubr.bf16.gmra.mrb[0].mxu0 %v1820
      %v2132 = vpop.f32.mrb[0].mxu0
      %v2133 = vadd.f32 0.0, %v2132
      %v2134 = vpop.f32.mrb[0].mxu0
      %v2135 = vpop.f32.mrb[0].mxu0
      %v2136 = vadd.f32 0.0, %v2135
      %v2137 = vpop.f32.mrb[0].mxu0
      %2138 = vmatprep.mubr.bf16.mxu0 0
      %2139 = vmatmul.mubr.bf16.gmra.mrb[0].mxu0 %v1821
      %v2140 = vpop.f32.mrb[0].mxu0
      %v2141 = vadd.f32 0.0, %v2140
      %v2142 = vpop.f32.mrb[0].mxu0
      %v2143 = vpop.f32.mrb[0].mxu0
      %v2144 = vadd.f32 0.0, %v2143
      %v2145 = vpop.f32.mrb[0].mxu0
      %2146 = vmatprep.mubr.bf16.mxu0 0
      %2147 = vmatmul.mubr.bf16.gmra.mrb[0].mxu0 %v1822
      %v2148 = vpop.f32.mrb[0].mxu0
      %v2149 = vadd.f32 0.0, %v2148
      %v2150 = vpop.f32.mrb[0].mxu0
      %v2151 = vpop.f32.mrb[0].mxu0
      %v2152 = vadd.f32 0.0, %v2151
      %v2153 = vpop.f32.mrb[0].mxu0
      %2154 = vmatprep.mubr.bf16.mxu0 0
      %2155 = vmatmul.mubr.bf16.gmra.mrb[0].mxu0 %v1823
      %v2156 = vpop.f32.mrb[0].mxu0
      %v2157 = vadd.f32 0.0, %v2156
      %v2158 = vpop.f32.mrb[0].mxu0
      %v2159 = vpop.f32.mrb[0].mxu0
      %v2160 = vadd.f32 0.0, %v2159
      %v2161 = vpop.f32.mrb[0].mxu0
      %2162 = vmatprep.mubr.bf16.mxu0 0
      %2163 = vmatmul.mubr.bf16.gmra.mrb[0].mxu0 %v1824
      %v2164 = vpop.f32.mrb[0].mxu0
      %v2165 = vadd.f32 0.0, %v2164
      %v2166 = vpop.f32.mrb[0].mxu0
      %v2167 = vpop.f32.mrb[0].mxu0
      %v2168 = vadd.f32 0.0, %v2167
      %v2169 = vpop.f32.mrb[0].mxu0
      %2170 = vmatprep.mubr.bf16.mxu0 0
      %2171 = vmatmul.mubr.bf16.gmra.mrb[0].mxu0 %v1825
      %v2172 = vpop.f32.mrb[0].mxu0
      %v2173 = vadd.f32 0.0, %v2172
      %v2174 = vpop.f32.mrb[0].mxu0
      %v2175 = vpop.f32.mrb[0].mxu0
      %v2176 = vadd.f32 0.0, %v2175
      %v2177 = vpop.f32.mrb[0].mxu0
      %2178 = vdwg.mxu0
      %v2179 = vmax.f32 %v1925, -5.0
      %v2180 = vmax.f32 %v1928, -5.0
      %v2181 = vmax.f32 %v1933, -5.0
      %v2182 = vmax.f32 %v1936, -5.0
      %v2183 = vmax.f32 %v1941, -5.0
      %v2184 = vmax.f32 %v1944, -5.0
      %v2185 = vmax.f32 %v1949, -5.0
      %v2186 = vmax.f32 %v1952, -5.0
      %v2187 = vmax.f32 %v1957, -5.0
      %v2188 = vmax.f32 %v1960, -5.0
      %v2189 = vmax.f32 %v1965, -5.0
      %v2190 = vmax.f32 %v1968, -5.0
      %v2191 = vmax.f32 %v1973, -5.0
      %v2192 = vmax.f32 %v1976, -5.0
      %v2193 = vmax.f32 %v1981, -5.0
      %v2194 = vmax.f32 %v1984, -5.0
      %v2195 = vmax.f32 %v1989, -5.0
      %v2196 = vmax.f32 %v1992, -5.0
      %v2197 = vmax.f32 %v1997, -5.0
      %v2198 = vmax.f32 %v2000, -5.0
      %v2199 = vmax.f32 %v2005, -5.0
      %v2200 = vmax.f32 %v2008, -5.0
      %v2201 = vmax.f32 %v2013, -5.0
      %v2202 = vmax.f32 %v2016, -5.0
      %v2203 = vmax.f32 %v2021, -5.0
      %v2204 = vmax.f32 %v2024, -5.0
      %v2205 = vmax.f32 %v2029, -5.0
      %v2206 = vmax.f32 %v2032, -5.0
      %v2207 = vmax.f32 %v2037, -5.0
      %v2208 = vmax.f32 %v2040, -5.0
      %v2209 = vmax.f32 %v2045, -5.0
      %v2210 = vmax.f32 %v2048, -5.0
      %v2211 = vmax.f32 %v2053, -5.0
      %v2212 = vmax.f32 %v2056, -5.0
      %v2213 = vmax.f32 %v2061, -5.0
      %v2214 = vmax.f32 %v2064, -5.0
      %v2215 = vmax.f32 %v2069, -5.0
      %v2216 = vmax.f32 %v2072, -5.0
      %v2217 = vmax.f32 %v2077, -5.0
      %v2218 = vmax.f32 %v2080, -5.0
      %v2219 = vmax.f32 %v2085, -5.0
      %v2220 = vmax.f32 %v2088, -5.0
      %v2221 = vmax.f32 %v2093, -5.0
      %v2222 = vmax.f32 %v2096, -5.0
      %v2223 = vmax.f32 %v2101, -5.0
      %v2224 = vmax.f32 %v2104, -5.0
      %v2225 = vmax.f32 %v2109, -5.0
      %v2226 = vmax.f32 %v2112, -5.0
      %v2227 = vmax.f32 %v2117, -5.0
      %v2228 = vmax.f32 %v2120, -5.0
      %v2229 = vmax.f32 %v2125, -5.0
      %v2230 = vmax.f32 %v2128, -5.0
      %v2231 = vmax.f32 %v2133, -5.0
      %v2232 = vmax.f32 %v2136, -5.0
      %v2233 = vmax.f32 %v2141, -5.0
      %v2234 = vmax.f32 %v2144, -5.0
      %v2235 = vmax.f32 %v2149, -5.0
      %v2236 = vmax.f32 %v2152, -5.0
      %v2237 = vmax.f32 %v2157, -5.0
      %v2238 = vmax.f32 %v2160, -5.0
      %v2239 = vmax.f32 %v2165, -5.0
      %v2240 = vmax.f32 %v2168, -5.0
      %v2241 = vmax.f32 %v2173, -5.0
      %v2242 = vmax.f32 %v2176, -5.0
      %v2243 = vmin.f32 %v2179, 5.0
      %v2244 = vmin.f32 %v2180, 5.0
      %v2245 = vmin.f32 %v2181, 5.0
      %v2246 = vmin.f32 %v2182, 5.0
      %v2247 = vmin.f32 %v2183, 5.0
      %v2248 = vmin.f32 %v2184, 5.0
      %v2249 = vmin.f32 %v2185, 5.0
      %v2250 = vmin.f32 %v2186, 5.0
      %v2251 = vmin.f32 %v2187, 5.0
      %v2252 = vmin.f32 %v2188, 5.0
      %v2253 = vmin.f32 %v2189, 5.0
      %v2254 = vmin.f32 %v2190, 5.0
      %v2255 = vmin.f32 %v2191, 5.0
      %v2256 = vmin.f32 %v2192, 5.0
      %v2257 = vmin.f32 %v2193, 5.0
      %v2258 = vmin.f32 %v2194, 5.0
      %v2259 = vmin.f32 %v2195, 5.0
      %v2260 = vmin.f32 %v2196, 5.0
      %v2261 = vmin.f32 %v2197, 5.0
      %v2262 = vmin.f32 %v2198, 5.0
      %v2263 = vmin.f32 %v2199, 5.0
      %v2264 = vmin.f32 %v2200, 5.0
      %v2265 = vmin.f32 %v2201, 5.0
      %v2266 = vmin.f32 %v2202, 5.0
      %v2267 = vmin.f32 %v2203, 5.0
      %v2268 = vmin.f32 %v2204, 5.0
      %v2269 = vmin.f32 %v2205, 5.0
      %v2270 = vmin.f32 %v2206, 5.0
      %v2271 = vmin.f32 %v2207, 5.0
      %v2272 = vmin.f32 %v2208, 5.0
      %v2273 = vmin.f32 %v2209, 5.0
      %v2274 = vmin.f32 %v2210, 5.0
      %v2275 = vmin.f32 %v2211, 5.0
      %v2276 = vmin.f32 %v2212, 5.0
      %v2277 = vmin.f32 %v2213, 5.0
      %v2278 = vmin.f32 %v2214, 5.0
      %v2279 = vmin.f32 %v2215, 5.0
      %v2280 = vmin.f32 %v2216, 5.0
      %v2281 = vmin.f32 %v2217, 5.0
      %v2282 = vmin.f32 %v2218, 5.0
      %v2283 = vmin.f32 %v2219, 5.0
      %v2284 = vmin.f32 %v2220, 5.0
      %v2285 = vmin.f32 %v2221, 5.0
      %v2286 = vmin.f32 %v2222, 5.0
      %v2287 = vmin.f32 %v2223, 5.0
      %v2288 = vmin.f32 %v2224, 5.0
      %v2289 = vmin.f32 %v2225, 5.0
      %v2290 = vmin.f32 %v2226, 5.0
      %v2291 = vmin.f32 %v2227, 5.0
      %v2292 = vmin.f32 %v2228, 5.0
      %v2293 = vmin.f32 %v2229, 5.0
      %v2294 = vmin.f32 %v2230, 5.0
      %v2295 = vmin.f32 %v2231, 5.0
      %v2296 = vmin.f32 %v2232, 5.0
      %v2297 = vmin.f32 %v2233, 5.0
      %v2298 = vmin.f32 %v2234, 5.0
      %v2299 = vmin.f32 %v2235, 5.0
      %v2300 = vmin.f32 %v2236, 5.0
      %v2301 = vmin.f32 %v2237, 5.0
      %v2302 = vmin.f32 %v2238, 5.0
      %v2303 = vmin.f32 %v2239, 5.0
      %v2304 = vmin.f32 %v2240, 5.0
      %v2305 = vmin.f32 %v2241, 5.0
      %v2306 = vmin.f32 %v2242, 5.0
      %v2307 = vmul.f32 %v2243, 1.442695
      %v2308 = vpow.pop %v2307
      %v2309 = vmul.f32 %v2244, 1.442695
      %v2310 = vpow.pop %v2309
      %v2311 = vmul.f32 %v2245, 1.442695
      %v2312 = vpow.pop %v2311
      %v2313 = vmul.f32 %v2246, 1.442695
      %v2314 = vpow.pop %v2313
      %v2315 = vmul.f32 %v2247, 1.442695
      %v2316 = vpow.pop %v2315
      %v2317 = vmul.f32 %v2248, 1.442695
      %v2318 = vpow.pop %v2317
      %v2319 = vmul.f32 %v2249, 1.442695
      %v2320 = vpow.pop %v2319
      %v2321 = vmul.f32 %v2250, 1.442695
      %v2322 = vpow.pop %v2321
      %v2323 = vmul.f32 %v2251, 1.442695
      %v2324 = vpow.pop %v2323
      %v2325 = vmul.f32 %v2252, 1.442695
      %v2326 = vpow.pop %v2325
      %v2327 = vmul.f32 %v2253, 1.442695
      %v2328 = vpow.pop %v2327
      %v2329 = vmul.f32 %v2254, 1.442695
      %v2330 = vpow.pop %v2329
      %v2331 = vmul.f32 %v2255, 1.442695
      %v2332 = vpow.pop %v2331
      %v2333 = vmul.f32 %v2256, 1.442695
      %v2334 = vpow.pop %v2333
      %v2335 = vmul.f32 %v2257, 1.442695
      %v2336 = vpow.pop %v2335
      %v2337 = vmul.f32 %v2258, 1.442695
      %v2338 = vpow.pop %v2337
      %v2339 = vmul.f32 %v2259, 1.442695
      %v2340 = vpow.pop %v2339
      %v2341 = vmul.f32 %v2260, 1.442695
      %v2342 = vpow.pop %v2341
      %v2343 = vmul.f32 %v2261, 1.442695
      %v2344 = vpow.pop %v2343
      %v2345 = vmul.f32 %v2262, 1.442695
      %v2346 = vpow.pop %v2345
      %v2347 = vmul.f32 %v2263, 1.442695
      %v2348 = vpow.pop %v2347
      %v2349 = vmul.f32 %v2264, 1.442695
      %v2350 = vpow.pop %v2349
      %v2351 = vmul.f32 %v2265, 1.442695
      %v2352 = vpow.pop %v2351
      %v2353 = vmul.f32 %v2266, 1.442695
      %v2354 = vpow.pop %v2353
      %v2355 = vmul.f32 %v2267, 1.442695
      %v2356 = vpow.pop %v2355
      %v2357 = vmul.f32 %v2268, 1.442695
      %v2358 = vpow.pop %v2357
      %v2359 = vmul.f32 %v2269, 1.442695
      %v2360 = vpow.pop %v2359
      %v2361 = vmul.f32 %v2270, 1.442695
      %v2362 = vpow.pop %v2361
      %v2363 = vmul.f32 %v2271, 1.442695
      %v2364 = vpow.pop %v2363
      %v2365 = vmul.f32 %v2272, 1.442695
      %v2366 = vpow.pop %v2365
      %v2367 = vmul.f32 %v2273, 1.442695
      %v2368 = vpow.pop %v2367
      %v2369 = vmul.f32 %v2274, 1.442695
      %v2370 = vpow.pop %v2369
      %v2371 = vmul.f32 %v2275, 1.442695
      %v2372 = vpow.pop %v2371
      %v2373 = vmul.f32 %v2276, 1.442695
      %v2374 = vpow.pop %v2373
      %v2375 = vmul.f32 %v2277, 1.442695
      %v2376 = vpow.pop %v2375
      %v2377 = vmul.f32 %v2278, 1.442695
      %v2378 = vpow.pop %v2377
      %v2379 = vmul.f32 %v2279, 1.442695
      %v2380 = vpow.pop %v2379
      %v2381 = vmul.f32 %v2280, 1.442695
      %v2382 = vpow.pop %v2381
      %v2383 = vmul.f32 %v2281, 1.442695
      %v2384 = vpow.pop %v2383
      %v2385 = vmul.f32 %v2282, 1.442695
      %v2386 = vpow.pop %v2385
      %v2387 = vmul.f32 %v2283, 1.442695
      %v2388 = vpow.pop %v2387
      %v2389 = vmul.f32 %v2284, 1.442695
      %v2390 = vpow.pop %v2389
      %v2391 = vmul.f32 %v2285, 1.442695
      %v2392 = vpow.pop %v2391
      %v2393 = vmul.f32 %v2286, 1.442695
      %v2394 = vpow.pop %v2393
      %v2395 = vmul.f32 %v2287, 1.442695
      %v2396 = vpow.pop %v2395
      %v2397 = vmul.f32 %v2288, 1.442695
      %v2398 = vpow.pop %v2397
      %v2399 = vmul.f32 %v2289, 1.442695
      %v2400 = vpow.pop %v2399
      %v2401 = vmul.f32 %v2290, 1.442695
      %v2402 = vpow.pop %v2401
      %v2403 = vmul.f32 %v2291, 1.442695
      %v2404 = vpow.pop %v2403
      %v2405 = vmul.f32 %v2292, 1.442695
      %v2406 = vpow.pop %v2405
      %v2407 = vmul.f32 %v2293, 1.442695
      %v2408 = vpow.pop %v2407
      %v2409 = vmul.f32 %v2294, 1.442695
      %v2410 = vpow.pop %v2409
      %v2411 = vmul.f32 %v2295, 1.442695
      %v2412 = vpow.pop %v2411
      %v2413 = vmul.f32 %v2296, 1.442695
      %v2414 = vpow.pop %v2413
      %v2415 = vmul.f32 %v2297, 1.442695
      %v2416 = vpow.pop %v2415
      %v2417 = vmul.f32 %v2298, 1.442695
      %v2418 = vpow.pop %v2417
      %v2419 = vmul.f32 %v2299, 1.442695
      %v2420 = vpow.pop %v2419
      %v2421 = vmul.f32 %v2300, 1.442695
      %v2422 = vpow.pop %v2421
      %v2423 = vmul.f32 %v2301, 1.442695
      %v2424 = vpow.pop %v2423
      %v2425 = vmul.f32 %v2302, 1.442695
      %v2426 = vpow.pop %v2425
      %v2427 = vmul.f32 %v2303, 1.442695
      %v2428 = vpow.pop %v2427
      %v2429 = vmul.f32 %v2304, 1.442695
      %v2430 = vpow.pop %v2429
      %v2431 = vmul.f32 %v2305, 1.442695
      %v2432 = vpow.pop %v2431
      %v2433 = vmul.f32 %v2306, 1.442695
      %v2434 = vpow.pop %v2433
      %s2435 = smul.u32 %s29, 512
      %v2436 = vlaneseq
      %v2437 = vshrl.u32 %v2436, 7
      %v2438 = vadd.s32 %v2437, 8
      %v2439 = vadd.s32 %v2437, 16
      %v2440 = vadd.s32 %v2437, 24
      %v2441 = vadd.s32 %v2437, 32
      %v2442 = vadd.s32 %v2437, 40
      %v2443 = vadd.s32 %v2437, 48
      %v2444 = vadd.s32 %v2437, 56
      %v2445 = vadd.s32 %v2437, 64
      %v2446 = vadd.s32 %v2437, 72
      %v2447 = vadd.s32 %v2437, 80
      %v2448 = vadd.s32 %v2437, 88
      %v2449 = vadd.s32 %v2437, 96
      %v2450 = vadd.s32 %v2437, 104
      %v2451 = vadd.s32 %v2437, 112
      %v2452 = vadd.s32 %v2437, 120
      %v2453 = vadd.s32 %v2437, 128
      %v2454 = vadd.s32 %v2437, 136
      %v2455 = vadd.s32 %v2437, 144
      %v2456 = vadd.s32 %v2437, 152
      %v2457 = vadd.s32 %v2437, 160
      %v2458 = vadd.s32 %v2437, 168
      %v2459 = vadd.s32 %v2437, 176
      %v2460 = vadd.s32 %v2437, 184
      %v2461 = vadd.s32 %v2437, 192
      %v2462 = vadd.s32 %v2437, 200
      %v2463 = vadd.s32 %v2437, 208
      %v2464 = vadd.s32 %v2437, 216
      %v2465 = vadd.s32 %v2437, 224
      %v2466 = vadd.s32 %v2437, 232
      %v2467 = vadd.s32 %v2437, 240
      %v2468 = vadd.s32 %v2437, 248
      %v2469 = vadd.s32 %v2437, 256
      %v2470 = vadd.s32 %v2437, 264
      %v2471 = vadd.s32 %v2437, 272
      %v2472 = vadd.s32 %v2437, 280
      %v2473 = vadd.s32 %v2437, 288
      %v2474 = vadd.s32 %v2437, 296
      %v2475 = vadd.s32 %v2437, 304
      %v2476 = vadd.s32 %v2437, 312
      %v2477 = vadd.s32 %v2437, 320
      %v2478 = vadd.s32 %v2437, 328
      %v2479 = vadd.s32 %v2437, 336
      %v2480 = vadd.s32 %v2437, 344
      %v2481 = vadd.s32 %v2437, 352
      %v2482 = vadd.s32 %v2437, 360
      %v2483 = vadd.s32 %v2437, 368
      %v2484 = vadd.s32 %v2437, 376
      %v2485 = vadd.s32 %v2437, 384
      %v2486 = vadd.s32 %v2437, 392
      %v2487 = vadd.s32 %v2437, 400
      %v2488 = vadd.s32 %v2437, 408
      %v2489 = vadd.s32 %v2437, 416
      %v2490 = vadd.s32 %v2437, 424
      %v2491 = vadd.s32 %v2437, 432
      %v2492 = vadd.s32 %v2437, 440
      %v2493 = vadd.s32 %v2437, 448
      %v2494 = vadd.s32 %v2437, 456
      %v2495 = vadd.s32 %v2437, 464
      %v2496 = vadd.s32 %v2437, 472
      %v2497 = vadd.s32 %v2437, 480
      %v2498 = vadd.s32 %v2437, 488
      %v2499 = vadd.s32 %v2437, 496
      %v2500 = vadd.s32 %v2437, 504
      %v2501 = vstv %s2435
      %v2502 = vadd.s32 %v2501, %v2437
      %v2503 = vadd.s32 %v2501, %v2438
      %v2504 = vadd.s32 %v2501, %v2439
      %v2505 = vadd.s32 %v2501, %v2440
      %v2506 = vadd.s32 %v2501, %v2441
      %v2507 = vadd.s32 %v2501, %v2442
      %v2508 = vadd.s32 %v2501, %v2443
      %v2509 = vadd.s32 %v2501, %v2444
      %v2510 = vadd.s32 %v2501, %v2445
      %v2511 = vadd.s32 %v2501, %v2446
      %v2512 = vadd.s32 %v2501, %v2447
      %v2513 = vadd.s32 %v2501, %v2448
      %v2514 = vadd.s32 %v2501, %v2449
      %v2515 = vadd.s32 %v2501, %v2450
      %v2516 = vadd.s32 %v2501, %v2451
      %v2517 = vadd.s32 %v2501, %v2452
      %v2518 = vadd.s32 %v2501, %v2453
      %v2519 = vadd.s32 %v2501, %v2454
      %v2520 = vadd.s32 %v2501, %v2455
      %v2521 = vadd.s32 %v2501, %v2456
      %v2522 = vadd.s32 %v2501, %v2457
      %v2523 = vadd.s32 %v2501, %v2458
      %v2524 = vadd.s32 %v2501, %v2459
      %v2525 = vadd.s32 %v2501, %v2460
      %v2526 = vadd.s32 %v2501, %v2461
      %v2527 = vadd.s32 %v2501, %v2462
      %v2528 = vadd.s32 %v2501, %v2463
      %v2529 = vadd.s32 %v2501, %v2464
      %v2530 = vadd.s32 %v2501, %v2465
      %v2531 = vadd.s32 %v2501, %v2466
      %v2532 = vadd.s32 %v2501, %v2467
      %v2533 = vadd.s32 %v2501, %v2468
      %v2534 = vadd.s32 %v2501, %v2469
      %v2535 = vadd.s32 %v2501, %v2470
      %v2536 = vadd.s32 %v2501, %v2471
      %v2537 = vadd.s32 %v2501, %v2472
      %v2538 = vadd.s32 %v2501, %v2473
      %v2539 = vadd.s32 %v2501, %v2474
      %v2540 = vadd.s32 %v2501, %v2475
      %v2541 = vadd.s32 %v2501, %v2476
      %v2542 = vadd.s32 %v2501, %v2477
      %v2543 = vadd.s32 %v2501, %v2478
      %v2544 = vadd.s32 %v2501, %v2479
      %v2545 = vadd.s32 %v2501, %v2480
      %v2546 = vadd.s32 %v2501, %v2481
      %v2547 = vadd.s32 %v2501, %v2482
      %v2548 = vadd.s32 %v2501, %v2483
      %v2549 = vadd.s32 %v2501, %v2484
      %v2550 = vadd.s32 %v2501, %v2485
      %v2551 = vadd.s32 %v2501, %v2486
      %v2552 = vadd.s32 %v2501, %v2487
      %v2553 = vadd.s32 %v2501, %v2488
      %v2554 = vadd.s32 %v2501, %v2489
      %v2555 = vadd.s32 %v2501, %v2490
      %v2556 = vadd.s32 %v2501, %v2491
      %v2557 = vadd.s32 %v2501, %v2492
      %v2558 = vadd.s32 %v2501, %v2493
      %v2559 = vadd.s32 %v2501, %v2494
      %v2560 = vadd.s32 %v2501, %v2495
      %v2561 = vadd.s32 %v2501, %v2496
      %v2562 = vadd.s32 %v2501, %v2497
      %v2563 = vadd.s32 %v2501, %v2498
      %v2564 = vadd.s32 %v2501, %v2499
      %v2565 = vadd.s32 %v2501, %v2500
      %vm2566 = vcmp.lt.s32.totalorder %v2502, 2000
      %vm2567 = vcmp.lt.s32.totalorder %v2503, 2000
      %vm2568 = vcmp.lt.s32.totalorder %v2504, 2000
      %vm2569 = vcmp.lt.s32.totalorder %v2505, 2000
      %vm2570 = vcmp.lt.s32.totalorder %v2506, 2000
      %vm2571 = vcmp.lt.s32.totalorder %v2507, 2000
      %vm2572 = vcmp.lt.s32.totalorder %v2508, 2000
      %vm2573 = vcmp.lt.s32.totalorder %v2509, 2000
      %vm2574 = vcmp.lt.s32.totalorder %v2510, 2000
      %vm2575 = vcmp.lt.s32.totalorder %v2511, 2000
      %vm2576 = vcmp.lt.s32.totalorder %v2512, 2000
      %vm2577 = vcmp.lt.s32.totalorder %v2513, 2000
      %vm2578 = vcmp.lt.s32.totalorder %v2514, 2000
      %vm2579 = vcmp.lt.s32.totalorder %v2515, 2000
      %vm2580 = vcmp.lt.s32.totalorder %v2516, 2000
      %vm2581 = vcmp.lt.s32.totalorder %v2517, 2000
      %vm2582 = vcmp.lt.s32.totalorder %v2518, 2000
      %vm2583 = vcmp.lt.s32.totalorder %v2519, 2000
      %vm2584 = vcmp.lt.s32.totalorder %v2520, 2000
      %vm2585 = vcmp.lt.s32.totalorder %v2521, 2000
      %vm2586 = vcmp.lt.s32.totalorder %v2522, 2000
      %vm2587 = vcmp.lt.s32.totalorder %v2523, 2000
      %vm2588 = vcmp.lt.s32.totalorder %v2524, 2000
      %vm2589 = vcmp.lt.s32.totalorder %v2525, 2000
      %vm2590 = vcmp.lt.s32.totalorder %v2526, 2000
      %vm2591 = vcmp.lt.s32.totalorder %v2527, 2000
      %vm2592 = vcmp.lt.s32.totalorder %v2528, 2000
      %vm2593 = vcmp.lt.s32.totalorder %v2529, 2000
      %vm2594 = vcmp.lt.s32.totalorder %v2530, 2000
      %vm2595 = vcmp.lt.s32.totalorder %v2531, 2000
      %vm2596 = vcmp.lt.s32.totalorder %v2532, 2000
      %vm2597 = vcmp.lt.s32.totalorder %v2533, 2000
      %vm2598 = vcmp.lt.s32.totalorder %v2534, 2000
      %vm2599 = vcmp.lt.s32.totalorder %v2535, 2000
      %vm2600 = vcmp.lt.s32.totalorder %v2536, 2000
      %vm2601 = vcmp.lt.s32.totalorder %v2537, 2000
      %vm2602 = vcmp.lt.s32.totalorder %v2538, 2000
      %vm2603 = vcmp.lt.s32.totalorder %v2539, 2000
      %vm2604 = vcmp.lt.s32.totalorder %v2540, 2000
      %vm2605 = vcmp.lt.s32.totalorder %v2541, 2000
      %vm2606 = vcmp.lt.s32.totalorder %v2542, 2000
      %vm2607 = vcmp.lt.s32.totalorder %v2543, 2000
      %vm2608 = vcmp.lt.s32.totalorder %v2544, 2000
      %vm2609 = vcmp.lt.s32.totalorder %v2545, 2000
      %vm2610 = vcmp.lt.s32.totalorder %v2546, 2000
      %vm2611 = vcmp.lt.s32.totalorder %v2547, 2000
      %vm2612 = vcmp.lt.s32.totalorder %v2548, 2000
      %vm2613 = vcmp.lt.s32.totalorder %v2549, 2000
      %vm2614 = vcmp.lt.s32.totalorder %v2550, 2000
      %vm2615 = vcmp.lt.s32.totalorder %v2551, 2000
      %vm2616 = vcmp.lt.s32.totalorder %v2552, 2000
      %vm2617 = vcmp.lt.s32.totalorder %v2553, 2000
      %vm2618 = vcmp.lt.s32.totalorder %v2554, 2000
      %vm2619 = vcmp.lt.s32.totalorder %v2555, 2000
      %vm2620 = vcmp.lt.s32.totalorder %v2556, 2000
      %vm2621 = vcmp.lt.s32.totalorder %v2557, 2000
      %vm2622 = vcmp.lt.s32.totalorder %v2558, 2000
      %vm2623 = vcmp.lt.s32.totalorder %v2559, 2000
      %vm2624 = vcmp.lt.s32.totalorder %v2560, 2000
      %vm2625 = vcmp.lt.s32.totalorder %v2561, 2000
      %vm2626 = vcmp.lt.s32.totalorder %v2562, 2000
      %vm2627 = vcmp.lt.s32.totalorder %v2563, 2000
      %vm2628 = vcmp.lt.s32.totalorder %v2564, 2000
      %vm2629 = vcmp.lt.s32.totalorder %v2565, 2000
      %v2630 = vsel %vm2566, 1, 0
      %v2631 = vsel %vm2567, 1, 0
      %v2632 = vsel %vm2568, 1, 0
      %v2633 = vsel %vm2569, 1, 0
      %v2634 = vsel %vm2570, 1, 0
      %v2635 = vsel %vm2571, 1, 0
      %v2636 = vsel %vm2572, 1, 0
      %v2637 = vsel %vm2573, 1, 0
      %v2638 = vsel %vm2574, 1, 0
      %v2639 = vsel %vm2575, 1, 0
      %v2640 = vsel %vm2576, 1, 0
      %v2641 = vsel %vm2577, 1, 0
      %v2642 = vsel %vm2578, 1, 0
      %v2643 = vsel %vm2579, 1, 0
      %v2644 = vsel %vm2580, 1, 0
      %v2645 = vsel %vm2581, 1, 0
      %v2646 = vsel %vm2582, 1, 0
      %v2647 = vsel %vm2583, 1, 0
      %v2648 = vsel %vm2584, 1, 0
      %v2649 = vsel %vm2585, 1, 0
      %v2650 = vsel %vm2586, 1, 0
      %v2651 = vsel %vm2587, 1, 0
      %v2652 = vsel %vm2588, 1, 0
      %v2653 = vsel %vm2589, 1, 0
      %v2654 = vsel %vm2590, 1, 0
      %v2655 = vsel %vm2591, 1, 0
      %v2656 = vsel %vm2592, 1, 0
      %v2657 = vsel %vm2593, 1, 0
      %v2658 = vsel %vm2594, 1, 0
      %v2659 = vsel %vm2595, 1, 0
      %v2660 = vsel %vm2596, 1, 0
      %v2661 = vsel %vm2597, 1, 0
      %v2662 = vsel %vm2598, 1, 0
      %v2663 = vsel %vm2599, 1, 0
      %v2664 = vsel %vm2600, 1, 0
      %v2665 = vsel %vm2601, 1, 0
      %v2666 = vsel %vm2602, 1, 0
      %v2667 = vsel %vm2603, 1, 0
      %v2668 = vsel %vm2604, 1, 0
      %v2669 = vsel %vm2605, 1, 0
      %v2670 = vsel %vm2606, 1, 0
      %v2671 = vsel %vm2607, 1, 0
      %v2672 = vsel %vm2608, 1, 0
      %v2673 = vsel %vm2609, 1, 0
      %v2674 = vsel %vm2610, 1, 0
      %v2675 = vsel %vm2611, 1, 0
      %v2676 = vsel %vm2612, 1, 0
      %v2677 = vsel %vm2613, 1, 0
      %v2678 = vsel %vm2614, 1, 0
      %v2679 = vsel %vm2615, 1, 0
      %v2680 = vsel %vm2616, 1, 0
      %v2681 = vsel %vm2617, 1, 0
      %v2682 = vsel %vm2618, 1, 0
      %v2683 = vsel %vm2619, 1, 0
      %v2684 = vsel %vm2620, 1, 0
      %v2685 = vsel %vm2621, 1, 0
      %v2686 = vsel %vm2622, 1, 0
      %v2687 = vsel %vm2623, 1, 0
      %v2688 = vsel %vm2624, 1, 0
      %v2689 = vsel %vm2625, 1, 0
      %v2690 = vsel %vm2626, 1, 0
      %v2691 = vsel %vm2627, 1, 0
      %v2692 = vsel %vm2628, 1, 0
      %v2693 = vsel %vm2629, 1, 0
      %v2694 = vcvt.s32.f32 %v2630
      %v2695 = vcvt.s32.f32 %v2631
      %v2696 = vcvt.s32.f32 %v2632
      %v2697 = vcvt.s32.f32 %v2633
      %v2698 = vcvt.s32.f32 %v2634
      %v2699 = vcvt.s32.f32 %v2635
      %v2700 = vcvt.s32.f32 %v2636
      %v2701 = vcvt.s32.f32 %v2637
      %v2702 = vcvt.s32.f32 %v2638
      %v2703 = vcvt.s32.f32 %v2639
      %v2704 = vcvt.s32.f32 %v2640
      %v2705 = vcvt.s32.f32 %v2641
      %v2706 = vcvt.s32.f32 %v2642
      %v2707 = vcvt.s32.f32 %v2643
      %v2708 = vcvt.s32.f32 %v2644
      %v2709 = vcvt.s32.f32 %v2645
      %v2710 = vcvt.s32.f32 %v2646
      %v2711 = vcvt.s32.f32 %v2647
      %v2712 = vcvt.s32.f32 %v2648
      %v2713 = vcvt.s32.f32 %v2649
      %v2714 = vcvt.s32.f32 %v2650
      %v2715 = vcvt.s32.f32 %v2651
      %v2716 = vcvt.s32.f32 %v2652
      %v2717 = vcvt.s32.f32 %v2653
      %v2718 = vcvt.s32.f32 %v2654
      %v2719 = vcvt.s32.f32 %v2655
      %v2720 = vcvt.s32.f32 %v2656
      %v2721 = vcvt.s32.f32 %v2657
      %v2722 = vcvt.s32.f32 %v2658
      %v2723 = vcvt.s32.f32 %v2659
      %v2724 = vcvt.s32.f32 %v2660
      %v2725 = vcvt.s32.f32 %v2661
      %v2726 = vcvt.s32.f32 %v2662
      %v2727 = vcvt.s32.f32 %v2663
      %v2728 = vcvt.s32.f32 %v2664
      %v2729 = vcvt.s32.f32 %v2665
      %v2730 = vcvt.s32.f32 %v2666
      %v2731 = vcvt.s32.f32 %v2667
      %v2732 = vcvt.s32.f32 %v2668
      %v2733 = vcvt.s32.f32 %v2669
      %v2734 = vcvt.s32.f32 %v2670
      %v2735 = vcvt.s32.f32 %v2671
      %v2736 = vcvt.s32.f32 %v2672
      %v2737 = vcvt.s32.f32 %v2673
      %v2738 = vcvt.s32.f32 %v2674
      %v2739 = vcvt.s32.f32 %v2675
      %v2740 = vcvt.s32.f32 %v2676
      %v2741 = vcvt.s32.f32 %v2677
      %v2742 = vcvt.s32.f32 %v2678
      %v2743 = vcvt.s32.f32 %v2679
      %v2744 = vcvt.s32.f32 %v2680
      %v2745 = vcvt.s32.f32 %v2681
      %v2746 = vcvt.s32.f32 %v2682
      %v2747 = vcvt.s32.f32 %v2683
      %v2748 = vcvt.s32.f32 %v2684
      %v2749 = vcvt.s32.f32 %v2685
      %v2750 = vcvt.s32.f32 %v2686
      %v2751 = vcvt.s32.f32 %v2687
      %v2752 = vcvt.s32.f32 %v2688
      %v2753 = vcvt.s32.f32 %v2689
      %v2754 = vcvt.s32.f32 %v2690
      %v2755 = vcvt.s32.f32 %v2691
      %v2756 = vcvt.s32.f32 %v2692
      %v2757 = vcvt.s32.f32 %v2693
      %v2758 = vmul.f32 %v2308, %v2694
      %v2759 = vmul.f32 %v2310, %v2695
      %v2760 = vmul.f32 %v2312, %v2696
      %v2761 = vmul.f32 %v2314, %v2697
      %v2762 = vmul.f32 %v2316, %v2698
      %v2763 = vmul.f32 %v2318, %v2699
      %v2764 = vmul.f32 %v2320, %v2700
      %v2765 = vmul.f32 %v2322, %v2701
      %v2766 = vmul.f32 %v2324, %v2702
      %v2767 = vmul.f32 %v2326, %v2703
      %v2768 = vmul.f32 %v2328, %v2704
      %v2769 = vmul.f32 %v2330, %v2705
      %v2770 = vmul.f32 %v2332, %v2706
      %v2771 = vmul.f32 %v2334, %v2707
      %v2772 = vmul.f32 %v2336, %v2708
      %v2773 = vmul.f32 %v2338, %v2709
      %v2774 = vmul.f32 %v2340, %v2710
      %v2775 = vmul.f32 %v2342, %v2711
      %v2776 = vmul.f32 %v2344, %v2712
      %v2777 = vmul.f32 %v2346, %v2713
      %v2778 = vmul.f32 %v2348, %v2714
      %v2779 = vmul.f32 %v2350, %v2715
      %v2780 = vmul.f32 %v2352, %v2716
      %v2781 = vmul.f32 %v2354, %v2717
      %v2782 = vmul.f32 %v2356, %v2718
      %v2783 = vmul.f32 %v2358, %v2719
      %v2784 = vmul.f32 %v2360, %v2720
      %v2785 = vmul.f32 %v2362, %v2721
      %v2786 = vmul.f32 %v2364, %v2722
      %v2787 = vmul.f32 %v2366, %v2723
      %v2788 = vmul.f32 %v2368, %v2724
      %v2789 = vmul.f32 %v2370, %v2725
      %v2790 = vmul.f32 %v2372, %v2726
      %v2791 = vmul.f32 %v2374, %v2727
      %v2792 = vmul.f32 %v2376, %v2728
      %v2793 = vmul.f32 %v2378, %v2729
      %v2794 = vmul.f32 %v2380, %v2730
      %v2795 = vmul.f32 %v2382, %v2731
      %v2796 = vmul.f32 %v2384, %v2732
      %v2797 = vmul.f32 %v2386, %v2733
      %v2798 = vmul.f32 %v2388, %v2734
      %v2799 = vmul.f32 %v2390, %v2735
      %v2800 = vmul.f32 %v2392, %v2736
      %v2801 = vmul.f32 %v2394, %v2737
      %v2802 = vmul.f32 %v2396, %v2738
      %v2803 = vmul.f32 %v2398, %v2739
      %v2804 = vmul.f32 %v2400, %v2740
      %v2805 = vmul.f32 %v2402, %v2741
      %v2806 = vmul.f32 %v2404, %v2742
      %v2807 = vmul.f32 %v2406, %v2743
      %v2808 = vmul.f32 %v2408, %v2744
      %v2809 = vmul.f32 %v2410, %v2745
      %v2810 = vmul.f32 %v2412, %v2746
      %v2811 = vmul.f32 %v2414, %v2747
      %v2812 = vmul.f32 %v2416, %v2748
      %v2813 = vmul.f32 %v2418, %v2749
      %v2814 = vmul.f32 %v2420, %v2750
      %v2815 = vmul.f32 %v2422, %v2751
      %v2816 = vmul.f32 %v2424, %v2752
      %v2817 = vmul.f32 %v2426, %v2753
      %v2818 = vmul.f32 %v2428, %v2754
      %v2819 = vmul.f32 %v2430, %v2755
      %v2820 = vmul.f32 %v2432, %v2756
      %v2821 = vmul.f32 %v2434, %v2757
      %v2822 = vpack.c.bf16 %v2759, %v2758
      %v2823 = vpack.c.bf16 %v2761, %v2760
      %v2824 = vpack.c.bf16 %v2763, %v2762
      %v2825 = vpack.c.bf16 %v2765, %v2764
      %v2826 = vpack.c.bf16 %v2767, %v2766
      %v2827 = vpack.c.bf16 %v2769, %v2768
      %v2828 = vpack.c.bf16 %v2771, %v2770
      %v2829 = vpack.c.bf16 %v2773, %v2772
      %v2830 = vpack.c.bf16 %v2775, %v2774
      %v2831 = vpack.c.bf16 %v2777, %v2776
      %v2832 = vpack.c.bf16 %v2779, %v2778
      %v2833 = vpack.c.bf16 %v2781, %v2780
      %v2834 = vpack.c.bf16 %v2783, %v2782
      %v2835 = vpack.c.bf16 %v2785, %v2784
      %v2836 = vpack.c.bf16 %v2787, %v2786
      %v2837 = vpack.c.bf16 %v2789, %v2788
      %v2838 = vpack.c.bf16 %v2791, %v2790
      %v2839 = vpack.c.bf16 %v2793, %v2792
      %v2840 = vpack.c.bf16 %v2795, %v2794
      %v2841 = vpack.c.bf16 %v2797, %v2796
      %v2842 = vpack.c.bf16 %v2799, %v2798
      %v2843 = vpack.c.bf16 %v2801, %v2800
      %v2844 = vpack.c.bf16 %v2803, %v2802
      %v2845 = vpack.c.bf16 %v2805, %v2804
      %v2846 = vpack.c.bf16 %v2807, %v2806
      %v2847 = vpack.c.bf16 %v2809, %v2808
      %v2848 = vpack.c.bf16 %v2811, %v2810
      %v2849 = vpack.c.bf16 %v2813, %v2812
      %v2850 = vpack.c.bf16 %v2815, %v2814
      %v2851 = vpack.c.bf16 %v2817, %v2816
      %v2852 = vpack.c.bf16 %v2819, %v2818
      %v2853 = vpack.c.bf16 %v2821, %v2820
      %v2886 = vunpack.c.l.b16 %v2822
      %v2887 = vunpack.c.h.b16 %v2822
      %v2888 = vunpack.c.l.b16 %v2823
      %v2889 = vunpack.c.h.b16 %v2823
      %v2890 = vunpack.c.l.b16 %v2824
      %v2891 = vunpack.c.h.b16 %v2824
      %v2892 = vunpack.c.l.b16 %v2825
      %v2893 = vunpack.c.h.b16 %v2825
      %v2894 = vunpack.c.l.b16 %v2826
      %v2895 = vunpack.c.h.b16 %v2826
      %v2896 = vunpack.c.l.b16 %v2827
      %v2897 = vunpack.c.h.b16 %v2827
      %v2898 = vunpack.c.l.b16 %v2828
      %v2899 = vunpack.c.h.b16 %v2828
      %v2900 = vunpack.c.l.b16 %v2829
      %v2901 = vunpack.c.h.b16 %v2829
      %v2902 = vunpack.c.l.b16 %v2830
      %v2903 = vunpack.c.h.b16 %v2830
      %v2904 = vunpack.c.l.b16 %v2831
      %v2905 = vunpack.c.h.b16 %v2831
      %v2906 = vunpack.c.l.b16 %v2832
      %v2907 = vunpack.c.h.b16 %v2832
      %v2908 = vunpack.c.l.b16 %v2833
      %v2909 = vunpack.c.h.b16 %v2833
      %v2910 = vunpack.c.l.b16 %v2834
      %v2911 = vunpack.c.h.b16 %v2834
      %v2912 = vunpack.c.l.b16 %v2835
      %v2913 = vunpack.c.h.b16 %v2835
      %v2914 = vunpack.c.l.b16 %v2836
      %v2915 = vunpack.c.h.b16 %v2836
      %v2916 = vunpack.c.l.b16 %v2837
      %v2917 = vunpack.c.h.b16 %v2837
      %v2918 = vunpack.c.l.b16 %v2838
      %v2919 = vunpack.c.h.b16 %v2838
      %v2920 = vunpack.c.l.b16 %v2839
      %v2921 = vunpack.c.h.b16 %v2839
      %v2922 = vunpack.c.l.b16 %v2840
      %v2923 = vunpack.c.h.b16 %v2840
      %v2924 = vunpack.c.l.b16 %v2841
      %v2925 = vunpack.c.h.b16 %v2841
      %v2926 = vunpack.c.l.b16 %v2842
      %v2927 = vunpack.c.h.b16 %v2842
      %v2928 = vunpack.c.l.b16 %v2843
      %v2929 = vunpack.c.h.b16 %v2843
      %v2930 = vunpack.c.l.b16 %v2844
      %v2931 = vunpack.c.h.b16 %v2844
      %v2932 = vunpack.c.l.b16 %v2845
      %v2933 = vunpack.c.h.b16 %v2845
      %v2934 = vunpack.c.l.b16 %v2846
      %v2935 = vunpack.c.h.b16 %v2846
      %v2936 = vunpack.c.l.b16 %v2847
      %v2937 = vunpack.c.h.b16 %v2847
      %v2938 = vunpack.c.l.b16 %v2848
      %v2939 = vunpack.c.h.b16 %v2848
      %v2940 = vunpack.c.l.b16 %v2849
      %v2941 = vunpack.c.h.b16 %v2849
      %v2942 = vunpack.c.l.b16 %v2850
      %v2943 = vunpack.c.h.b16 %v2850
      %v2944 = vunpack.c.l.b16 %v2851
      %v2945 = vunpack.c.h.b16 %v2851
      %v2946 = vunpack.c.l.b16 %v2852
      %v2947 = vunpack.c.h.b16 %v2852
      %v2948 = vunpack.c.l.b16 %v2853
      %v2949 = vunpack.c.h.b16 %v2853
      %v2950 = vpack.c.b16 %v2886, %v2886
      %v2951 = vpack.c.b16 %v2887, %v2887
      %v2952 = vpack.c.b16 %v2888, %v2888
      %v2953 = vpack.c.b16 %v2889, %v2889
      %v2954 = vpack.c.b16 %v2890, %v2890
      %v2955 = vpack.c.b16 %v2891, %v2891
      %v2956 = vpack.c.b16 %v2892, %v2892
      %v2957 = vpack.c.b16 %v2893, %v2893
      %v2958 = vpack.c.b16 %v2894, %v2894
      %v2959 = vpack.c.b16 %v2895, %v2895
      %v2960 = vpack.c.b16 %v2896, %v2896
      %v2961 = vpack.c.b16 %v2897, %v2897
      %v2962 = vpack.c.b16 %v2898, %v2898
      %v2963 = vpack.c.b16 %v2899, %v2899
      %v2964 = vpack.c.b16 %v2900, %v2900
      %v2965 = vpack.c.b16 %v2901, %v2901
      %v2966 = vpack.c.b16 %v2902, %v2902
      %v2967 = vpack.c.b16 %v2903, %v2903
      %v2968 = vpack.c.b16 %v2904, %v2904
      %v2969 = vpack.c.b16 %v2905, %v2905
      %v2970 = vpack.c.b16 %v2906, %v2906
      %v2971 = vpack.c.b16 %v2907, %v2907
      %v2972 = vpack.c.b16 %v2908, %v2908
      %v2973 = vpack.c.b16 %v2909, %v2909
      %v2974 = vpack.c.b16 %v2910, %v2910
      %v2975 = vpack.c.b16 %v2911, %v2911
      %v2976 = vpack.c.b16 %v2912, %v2912
      %v2977 = vpack.c.b16 %v2913, %v2913
      %v2978 = vpack.c.b16 %v2914, %v2914
      %v2979 = vpack.c.b16 %v2915, %v2915
      %v2980 = vpack.c.b16 %v2916, %v2916
      %v2981 = vpack.c.b16 %v2917, %v2917
      %v2982 = vpack.c.b16 %v2918, %v2918
      %v2983 = vpack.c.b16 %v2919, %v2919
      %v2984 = vpack.c.b16 %v2920, %v2920
      %v2985 = vpack.c.b16 %v2921, %v2921
      %v2986 = vpack.c.b16 %v2922, %v2922
      %v2987 = vpack.c.b16 %v2923, %v2923
      %v2988 = vpack.c.b16 %v2924, %v2924
      %v2989 = vpack.c.b16 %v2925, %v2925
      %v2990 = vpack.c.b16 %v2926, %v2926
      %v2991 = vpack.c.b16 %v2927, %v2927
      %v2992 = vpack.c.b16 %v2928, %v2928
      %v2993 = vpack.c.b16 %v2929, %v2929
      %v2994 = vpack.c.b16 %v2930, %v2930
      %v2995 = vpack.c.b16 %v2931, %v2931
      %v2996 = vpack.c.b16 %v2932, %v2932
      %v2997 = vpack.c.b16 %v2933, %v2933
      %v2998 = vpack.c.b16 %v2934, %v2934
      %v2999 = vpack.c.b16 %v2935, %v2935
      %v3000 = vpack.c.b16 %v2936, %v2936
      %v3001 = vpack.c.b16 %v2937, %v2937
      %v3002 = vpack.c.b16 %v2938, %v2938
      %v3003 = vpack.c.b16 %v2939, %v2939
      %v3004 = vpack.c.b16 %v2940, %v2940
      %v3005 = vpack.c.b16 %v2941, %v2941
      %v3006 = vpack.c.b16 %v2942, %v2942
      %v3007 = vpack.c.b16 %v2943, %v2943
      %v3008 = vpack.c.b16 %v2944, %v2944
      %v3009 = vpack.c.b16 %v2945, %v2945
      %v3010 = vpack.c.b16 %v2946, %v2946
      %v3011 = vpack.c.b16 %v2947, %v2947
      %v3012 = vpack.c.b16 %v2948, %v2948
      %v3013 = vpack.c.b16 %v2949, %v2949
      %3078 = vst [vmem:[%s624] sm:$0xf] %v2950
      %3079 = vst [vmem:[%s624 + $0x4] sm:$0xf] %v2951
      %3080 = vst [vmem:[%s624 + $0x8] sm:$0xf] %v2952
      %3081 = vst [vmem:[%s624 + $0xc] sm:$0xf] %v2953
      %3082 = vst [vmem:[%s624 + $0x10] sm:$0xf] %v2954
      %3083 = vst [vmem:[%s624 + $0x14] sm:$0xf] %v2955
      %3084 = vst [vmem:[%s624 + $0x18] sm:$0xf] %v2956
      %3085 = vst [vmem:[%s624 + $0x1c] sm:$0xf] %v2957
      %3086 = vst [vmem:[%s624 + $0x20] sm:$0xf] %v2958
      %3087 = vst [vmem:[%s624 + $0x24] sm:$0xf] %v2959
      %3088 = vst [vmem:[%s624 + $0x28] sm:$0xf] %v2960
      %3089 = vst [vmem:[%s624 + $0x2c] sm:$0xf] %v2961
      %3090 = vst [vmem:[%s624 + $0x30] sm:$0xf] %v2962
      %3091 = vst [vmem:[%s624 + $0x34] sm:$0xf] %v2963
      %3092 = vst [vmem:[%s624 + $0x38] sm:$0xf] %v2964
      %3093 = vst [vmem:[%s624 + $0x3c] sm:$0xf] %v2965
      %3094 = vst [vmem:[%s624 + $0x40] sm:$0xf] %v2966
      %3095 = vst [vmem:[%s624 + $0x44] sm:$0xf] %v2967
      %3096 = vst [vmem:[%s624 + $0x48] sm:$0xf] %v2968
      %3097 = vst [vmem:[%s624 + $0x4c] sm:$0xf] %v2969
      %3098 = vst [vmem:[%s624 + $0x50] sm:$0xf] %v2970
      %3099 = vst [vmem:[%s624 + $0x54] sm:$0xf] %v2971
      %3100 = vst [vmem:[%s624 + $0x58] sm:$0xf] %v2972
      %3101 = vst [vmem:[%s624 + $0x5c] sm:$0xf] %v2973
      %3102 = vst [vmem:[%s624 + $0x60] sm:$0xf] %v2974
      %3103 = vst [vmem:[%s624 + $0x64] sm:$0xf] %v2975
      %3104 = vst [vmem:[%s624 + $0x68] sm:$0xf] %v2976
      %3105 = vst [vmem:[%s624 + $0x6c] sm:$0xf] %v2977
      %3106 = vst [vmem:[%s624 + $0x70] sm:$0xf] %v2978
      %3107 = vst [vmem:[%s624 + $0x74] sm:$0xf] %v2979
      %3108 = vst [vmem:[%s624 + $0x78] sm:$0xf] %v2980
      %3109 = vst [vmem:[%s624 + $0x7c] sm:$0xf] %v2981
      %3110 = vst [vmem:[%s624 + $0x80] sm:$0xf] %v2982
      %3111 = vst [vmem:[%s624 + $0x84] sm:$0xf] %v2983
      %3112 = vst [vmem:[%s624 + $0x88] sm:$0xf] %v2984
      %3113 = vst [vmem:[%s624 + $0x8c] sm:$0xf] %v2985
      %3114 = vst [vmem:[%s624 + $0x90] sm:$0xf] %v2986
      %3115 = vst [vmem:[%s624 + $0x94] sm:$0xf] %v2987
      %3116 = vst [vmem:[%s624 + $0x98] sm:$0xf] %v2988
      %3117 = vst [vmem:[%s624 + $0x9c] sm:$0xf] %v2989
      %3118 = vst [vmem:[%s624 + $0xa0] sm:$0xf] %v2990
      %3119 = vst [vmem:[%s624 + $0xa4] sm:$0xf] %v2991
      %3120 = vst [vmem:[%s624 + $0xa8] sm:$0xf] %v2992
      %3121 = vst [vmem:[%s624 + $0xac] sm:$0xf] %v2993
      %3122 = vst [vmem:[%s624 + $0xb0] sm:$0xf] %v2994
      %3123 = vst [vmem:[%s624 + $0xb4] sm:$0xf] %v2995
      %3124 = vst [vmem:[%s624 + $0xb8] sm:$0xf] %v2996
      %3125 = vst [vmem:[%s624 + $0xbc] sm:$0xf] %v2997
      %3126 = vst [vmem:[%s624 + $0xc0] sm:$0xf] %v2998
      %3127 = vst [vmem:[%s624 + $0xc4] sm:$0xf] %v2999
      %3128 = vst [vmem:[%s624 + $0xc8] sm:$0xf] %v3000
      %3129 = vst [vmem:[%s624 + $0xcc] sm:$0xf] %v3001
      %3130 = vst [vmem:[%s624 + $0xd0] sm:$0xf] %v3002
      %3131 = vst [vmem:[%s624 + $0xd4] sm:$0xf] %v3003
      %3132 = vst [vmem:[%s624 + $0xd8] sm:$0xf] %v3004
      %3133 = vst [vmem:[%s624 + $0xdc] sm:$0xf] %v3005
      %3134 = vst [vmem:[%s624 + $0xe0] sm:$0xf] %v3006
      %3135 = vst [vmem:[%s624 + $0xe4] sm:$0xf] %v3007
      %3136 = vst [vmem:[%s624 + $0xe8] sm:$0xf] %v3008
      %3137 = vst [vmem:[%s624 + $0xec] sm:$0xf] %v3009
      %3138 = vst [vmem:[%s624 + $0xf0] sm:$0xf] %v3010
      %3139 = vst [vmem:[%s624 + $0xf4] sm:$0xf] %v3011
      %3140 = vst [vmem:[%s624 + $0xf8] sm:$0xf] %v3012
      %3141 = vst [vmem:[%s624 + $0xfc] sm:$0xf] %v3013
      %v3142 = vmul.f32 %v2308, %v1410
      %v3143 = vmul.f32 %v2310, %v1411
      %v3144 = vmul.f32 %v2312, %v1412
      %v3145 = vmul.f32 %v2314, %v1413
      %v3146 = vmul.f32 %v2316, %v1414
      %v3147 = vmul.f32 %v2318, %v1415
      %v3148 = vmul.f32 %v2320, %v1416
      %v3149 = vmul.f32 %v2322, %v1417
      %v3150 = vmul.f32 %v2324, %v1418
      %v3151 = vmul.f32 %v2326, %v1419
      %v3152 = vmul.f32 %v2328, %v1420
      %v3153 = vmul.f32 %v2330, %v1421
      %v3154 = vmul.f32 %v2332, %v1422
      %v3155 = vmul.f32 %v2334, %v1423
      %v3156 = vmul.f32 %v2336, %v1424
      %v3157 = vmul.f32 %v2338, %v1425
      %v3158 = vmul.f32 %v2340, %v1426
      %v3159 = vmul.f32 %v2342, %v1427
      %v3160 = vmul.f32 %v2344, %v1428
      %v3161 = vmul.f32 %v2346, %v1429
      %v3162 = vmul.f32 %v2348, %v1430
      %v3163 = vmul.f32 %v2350, %v1431
      %v3164 = vmul.f32 %v2352, %v1432
      %v3165 = vmul.f32 %v2354, %v1433
      %v3166 = vmul.f32 %v2356, %v1434
      %v3167 = vmul.f32 %v2358, %v1435
      %v3168 = vmul.f32 %v2360, %v1436
      %v3169 = vmul.f32 %v2362, %v1437
      %v3170 = vmul.f32 %v2364, %v1438
      %v3171 = vmul.f32 %v2366, %v1439
      %v3172 = vmul.f32 %v2368, %v1440
      %v3173 = vmul.f32 %v2370, %v1441
      %v3174 = vmul.f32 %v2372, %v1442
      %v3175 = vmul.f32 %v2374, %v1443
      %v3176 = vmul.f32 %v2376, %v1444
      %v3177 = vmul.f32 %v2378, %v1445
      %v3178 = vmul.f32 %v2380, %v1446
      %v3179 = vmul.f32 %v2382, %v1447
      %v3180 = vmul.f32 %v2384, %v1448
      %v3181 = vmul.f32 %v2386, %v1449
      %v3182 = vmul.f32 %v2388, %v1450
      %v3183 = vmul.f32 %v2390, %v1451
      %v3184 = vmul.f32 %v2392, %v1452
      %v3185 = vmul.f32 %v2394, %v1453
      %v3186 = vmul.f32 %v2396, %v1454
      %v3187 = vmul.f32 %v2398, %v1455
      %v3188 = vmul.f32 %v2400, %v1456
      %v3189 = vmul.f32 %v2402, %v1457
      %v3190 = vmul.f32 %v2404, %v1458
      %v3191 = vmul.f32 %v2406, %v1459
      %v3192 = vmul.f32 %v2408, %v1460
      %v3193 = vmul.f32 %v2410, %v1461
      %v3194 = vmul.f32 %v2412, %v1462
      %v3195 = vmul.f32 %v2414, %v1463
      %v3196 = vmul.f32 %v2416, %v1464
      %v3197 = vmul.f32 %v2418, %v1465
      %v3198 = vmul.f32 %v2420, %v1466
      %v3199 = vmul.f32 %v2422, %v1467
      %v3200 = vmul.f32 %v2424, %v1468
      %v3201 = vmul.f32 %v2426, %v1469
      %v3202 = vmul.f32 %v2428, %v1470
      %v3203 = vmul.f32 %v2430, %v1471
      %v3204 = vmul.f32 %v2432, %v1472
      %v3205 = vmul.f32 %v2434, %v1473
      %v3206 = vmul.f32 %v3142, %v2694
      %v3207 = vmul.f32 %v3143, %v2695
      %v3208 = vmul.f32 %v3144, %v2696
      %v3209 = vmul.f32 %v3145, %v2697
      %v3210 = vmul.f32 %v3146, %v2698
      %v3211 = vmul.f32 %v3147, %v2699
      %v3212 = vmul.f32 %v3148, %v2700
      %v3213 = vmul.f32 %v3149, %v2701
      %v3214 = vmul.f32 %v3150, %v2702
      %v3215 = vmul.f32 %v3151, %v2703
      %v3216 = vmul.f32 %v3152, %v2704
      %v3217 = vmul.f32 %v3153, %v2705
      %v3218 = vmul.f32 %v3154, %v2706
      %v3219 = vmul.f32 %v3155, %v2707
      %v3220 = vmul.f32 %v3156, %v2708
      %v3221 = vmul.f32 %v3157, %v2709
      %v3222 = vmul.f32 %v3158, %v2710
      %v3223 = vmul.f32 %v3159, %v2711
      %v3224 = vmul.f32 %v3160, %v2712
      %v3225 = vmul.f32 %v3161, %v2713
      %v3226 = vmul.f32 %v3162, %v2714
      %v3227 = vmul.f32 %v3163, %v2715
      %v3228 = vmul.f32 %v3164, %v2716
      %v3229 = vmul.f32 %v3165, %v2717
      %v3230 = vmul.f32 %v3166, %v2718
      %v3231 = vmul.f32 %v3167, %v2719
      %v3232 = vmul.f32 %v3168, %v2720
      %v3233 = vmul.f32 %v3169, %v2721
      %v3234 = vmul.f32 %v3170, %v2722
      %v3235 = vmul.f32 %v3171, %v2723
      %v3236 = vmul.f32 %v3172, %v2724
      %v3237 = vmul.f32 %v3173, %v2725
      %v3238 = vmul.f32 %v3174, %v2726
      %v3239 = vmul.f32 %v3175, %v2727
      %v3240 = vmul.f32 %v3176, %v2728
      %v3241 = vmul.f32 %v3177, %v2729
      %v3242 = vmul.f32 %v3178, %v2730
      %v3243 = vmul.f32 %v3179, %v2731
      %v3244 = vmul.f32 %v3180, %v2732
      %v3245 = vmul.f32 %v3181, %v2733
      %v3246 = vmul.f32 %v3182, %v2734
      %v3247 = vmul.f32 %v3183, %v2735
      %v3248 = vmul.f32 %v3184, %v2736
      %v3249 = vmul.f32 %v3185, %v2737
      %v3250 = vmul.f32 %v3186, %v2738
      %v3251 = vmul.f32 %v3187, %v2739
      %v3252 = vmul.f32 %v3188, %v2740
      %v3253 = vmul.f32 %v3189, %v2741
      %v3254 = vmul.f32 %v3190, %v2742
      %v3255 = vmul.f32 %v3191, %v2743
      %v3256 = vmul.f32 %v3192, %v2744
      %v3257 = vmul.f32 %v3193, %v2745
      %v3258 = vmul.f32 %v3194, %v2746
      %v3259 = vmul.f32 %v3195, %v2747
      %v3260 = vmul.f32 %v3196, %v2748
      %v3261 = vmul.f32 %v3197, %v2749
      %v3262 = vmul.f32 %v3198, %v2750
      %v3263 = vmul.f32 %v3199, %v2751
      %v3264 = vmul.f32 %v3200, %v2752
      %v3265 = vmul.f32 %v3201, %v2753
      %v3266 = vmul.f32 %v3202, %v2754
      %v3267 = vmul.f32 %v3203, %v2755
      %v3268 = vmul.f32 %v3204, %v2756
      %v3269 = vmul.f32 %v3205, %v2757
      %v3270 = vpack.c.bf16 %v3207, %v3206
      %v3271 = vpack.c.bf16 %v3209, %v3208
      %v3272 = vpack.c.bf16 %v3211, %v3210
      %v3273 = vpack.c.bf16 %v3213, %v3212
      %v3274 = vpack.c.bf16 %v3215, %v3214
      %v3275 = vpack.c.bf16 %v3217, %v3216
      %v3276 = vpack.c.bf16 %v3219, %v3218
      %v3277 = vpack.c.bf16 %v3221, %v3220
      %v3278 = vpack.c.bf16 %v3223, %v3222
      %v3279 = vpack.c.bf16 %v3225, %v3224
      %v3280 = vpack.c.bf16 %v3227, %v3226
      %v3281 = vpack.c.bf16 %v3229, %v3228
      %v3282 = vpack.c.bf16 %v3231, %v3230
      %v3283 = vpack.c.bf16 %v3233, %v3232
      %v3284 = vpack.c.bf16 %v3235, %v3234
      %v3285 = vpack.c.bf16 %v3237, %v3236
      %v3286 = vpack.c.bf16 %v3239, %v3238
      %v3287 = vpack.c.bf16 %v3241, %v3240
      %v3288 = vpack.c.bf16 %v3243, %v3242
      %v3289 = vpack.c.bf16 %v3245, %v3244
      %v3290 = vpack.c.bf16 %v3247, %v3246
      %v3291 = vpack.c.bf16 %v3249, %v3248
      %v3292 = vpack.c.bf16 %v3251, %v3250
      %v3293 = vpack.c.bf16 %v3253, %v3252
      %v3294 = vpack.c.bf16 %v3255, %v3254
      %v3295 = vpack.c.bf16 %v3257, %v3256
      %v3296 = vpack.c.bf16 %v3259, %v3258
      %v3297 = vpack.c.bf16 %v3261, %v3260
      %v3298 = vpack.c.bf16 %v3263, %v3262
      %v3299 = vpack.c.bf16 %v3265, %v3264
      %v3300 = vpack.c.bf16 %v3267, %v3266
      %v3301 = vpack.c.bf16 %v3269, %v3268
      %v3334 = vunpack.c.l.b16 %v3270
      %v3335 = vunpack.c.h.b16 %v3270
      %v3336 = vunpack.c.l.b16 %v3271
      %v3337 = vunpack.c.h.b16 %v3271
      %v3338 = vunpack.c.l.b16 %v3272
      %v3339 = vunpack.c.h.b16 %v3272
      %v3340 = vunpack.c.l.b16 %v3273
      %v3341 = vunpack.c.h.b16 %v3273
      %v3342 = vunpack.c.l.b16 %v3274
      %v3343 = vunpack.c.h.b16 %v3274
      %v3344 = vunpack.c.l.b16 %v3275
      %v3345 = vunpack.c.h.b16 %v3275
      %v3346 = vunpack.c.l.b16 %v3276
      %v3347 = vunpack.c.h.b16 %v3276
      %v3348 = vunpack.c.l.b16 %v3277
      %v3349 = vunpack.c.h.b16 %v3277
      %v3350 = vunpack.c.l.b16 %v3278
      %v3351 = vunpack.c.h.b16 %v3278
      %v3352 = vunpack.c.l.b16 %v3279
      %v3353 = vunpack.c.h.b16 %v3279
      %v3354 = vunpack.c.l.b16 %v3280
      %v3355 = vunpack.c.h.b16 %v3280
      %v3356 = vunpack.c.l.b16 %v3281
      %v3357 = vunpack.c.h.b16 %v3281
      %v3358 = vunpack.c.l.b16 %v3282
      %v3359 = vunpack.c.h.b16 %v3282
      %v3360 = vunpack.c.l.b16 %v3283
      %v3361 = vunpack.c.h.b16 %v3283
      %v3362 = vunpack.c.l.b16 %v3284
      %v3363 = vunpack.c.h.b16 %v3284
      %v3364 = vunpack.c.l.b16 %v3285
      %v3365 = vunpack.c.h.b16 %v3285
      %v3366 = vunpack.c.l.b16 %v3286
      %v3367 = vunpack.c.h.b16 %v3286
      %v3368 = vunpack.c.l.b16 %v3287
      %v3369 = vunpack.c.h.b16 %v3287
      %v3370 = vunpack.c.l.b16 %v3288
      %v3371 = vunpack.c.h.b16 %v3288
      %v3372 = vunpack.c.l.b16 %v3289
      %v3373 = vunpack.c.h.b16 %v3289
      %v3374 = vunpack.c.l.b16 %v3290
      %v3375 = vunpack.c.h.b16 %v3290
      %v3376 = vunpack.c.l.b16 %v3291
      %v3377 = vunpack.c.h.b16 %v3291
      %v3378 = vunpack.c.l.b16 %v3292
      %v3379 = vunpack.c.h.b16 %v3292
      %v3380 = vunpack.c.l.b16 %v3293
      %v3381 = vunpack.c.h.b16 %v3293
      %v3382 = vunpack.c.l.b16 %v3294
      %v3383 = vunpack.c.h.b16 %v3294
      %v3384 = vunpack.c.l.b16 %v3295
      %v3385 = vunpack.c.h.b16 %v3295
      %v3386 = vunpack.c.l.b16 %v3296
      %v3387 = vunpack.c.h.b16 %v3296
      %v3388 = vunpack.c.l.b16 %v3297
      %v3389 = vunpack.c.h.b16 %v3297
      %v3390 = vunpack.c.l.b16 %v3298
      %v3391 = vunpack.c.h.b16 %v3298
      %v3392 = vunpack.c.l.b16 %v3299
      %v3393 = vunpack.c.h.b16 %v3299
      %v3394 = vunpack.c.l.b16 %v3300
      %v3395 = vunpack.c.h.b16 %v3300
      %v3396 = vunpack.c.l.b16 %v3301
      %v3397 = vunpack.c.h.b16 %v3301
      %v3398 = vpack.c.b16 %v3334, %v3334
      %v3399 = vpack.c.b16 %v3335, %v3335
      %v3400 = vpack.c.b16 %v3336, %v3336
      %v3401 = vpack.c.b16 %v3337, %v3337
      %v3402 = vpack.c.b16 %v3338, %v3338
      %v3403 = vpack.c.b16 %v3339, %v3339
      %v3404 = vpack.c.b16 %v3340, %v3340
      %v3405 = vpack.c.b16 %v3341, %v3341
      %v3406 = vpack.c.b16 %v3342, %v3342
      %v3407 = vpack.c.b16 %v3343, %v3343
      %v3408 = vpack.c.b16 %v3344, %v3344
      %v3409 = vpack.c.b16 %v3345, %v3345
      %v3410 = vpack.c.b16 %v3346, %v3346
      %v3411 = vpack.c.b16 %v3347, %v3347
      %v3412 = vpack.c.b16 %v3348, %v3348
      %v3413 = vpack.c.b16 %v3349, %v3349
      %v3414 = vpack.c.b16 %v3350, %v3350
      %v3415 = vpack.c.b16 %v3351, %v3351
      %v3416 = vpack.c.b16 %v3352, %v3352
      %v3417 = vpack.c.b16 %v3353, %v3353
      %v3418 = vpack.c.b16 %v3354, %v3354
      %v3419 = vpack.c.b16 %v3355, %v3355
      %v3420 = vpack.c.b16 %v3356, %v3356
      %v3421 = vpack.c.b16 %v3357, %v3357
      %v3422 = vpack.c.b16 %v3358, %v3358
      %v3423 = vpack.c.b16 %v3359, %v3359
      %v3424 = vpack.c.b16 %v3360, %v3360
      %v3425 = vpack.c.b16 %v3361, %v3361
      %v3426 = vpack.c.b16 %v3362, %v3362
      %v3427 = vpack.c.b16 %v3363, %v3363
      %v3428 = vpack.c.b16 %v3364, %v3364
      %v3429 = vpack.c.b16 %v3365, %v3365
      %v3430 = vpack.c.b16 %v3366, %v3366
      %v3431 = vpack.c.b16 %v3367, %v3367
      %v3432 = vpack.c.b16 %v3368, %v3368
      %v3433 = vpack.c.b16 %v3369, %v3369
      %v3434 = vpack.c.b16 %v3370, %v3370
      %v3435 = vpack.c.b16 %v3371, %v3371
      %v3436 = vpack.c.b16 %v3372, %v3372
      %v3437 = vpack.c.b16 %v3373, %v3373
      %v3438 = vpack.c.b16 %v3374, %v3374
      %v3439 = vpack.c.b16 %v3375, %v3375
      %v3440 = vpack.c.b16 %v3376, %v3376
      %v3441 = vpack.c.b16 %v3377, %v3377
      %v3442 = vpack.c.b16 %v3378, %v3378
      %v3443 = vpack.c.b16 %v3379, %v3379
      %v3444 = vpack.c.b16 %v3380, %v3380
      %v3445 = vpack.c.b16 %v3381, %v3381
      %v3446 = vpack.c.b16 %v3382, %v3382
      %v3447 = vpack.c.b16 %v3383, %v3383
      %v3448 = vpack.c.b16 %v3384, %v3384
      %v3449 = vpack.c.b16 %v3385, %v3385
      %v3450 = vpack.c.b16 %v3386, %v3386
      %v3451 = vpack.c.b16 %v3387, %v3387
      %v3452 = vpack.c.b16 %v3388, %v3388
      %v3453 = vpack.c.b16 %v3389, %v3389
      %v3454 = vpack.c.b16 %v3390, %v3390
      %v3455 = vpack.c.b16 %v3391, %v3391
      %v3456 = vpack.c.b16 %v3392, %v3392
      %v3457 = vpack.c.b16 %v3393, %v3393
      %v3458 = vpack.c.b16 %v3394, %v3394
      %v3459 = vpack.c.b16 %v3395, %v3395
      %v3460 = vpack.c.b16 %v3396, %v3396
      %v3461 = vpack.c.b16 %v3397, %v3397
      %3526 = vst [vmem:[%s618] sm:$0xf] %v3398
      %3527 = vst [vmem:[%s618 + $0x4] sm:$0xf] %v3399
      %3528 = vst [vmem:[%s618 + $0x8] sm:$0xf] %v3400
      %3529 = vst [vmem:[%s618 + $0xc] sm:$0xf] %v3401
      %3530 = vst [vmem:[%s618 + $0x10] sm:$0xf] %v3402
      %3531 = vst [vmem:[%s618 + $0x14] sm:$0xf] %v3403
      %3532 = vst [vmem:[%s618 + $0x18] sm:$0xf] %v3404
      %3533 = vst [vmem:[%s618 + $0x1c] sm:$0xf] %v3405
      %3534 = vst [vmem:[%s618 + $0x20] sm:$0xf] %v3406
      %3535 = vst [vmem:[%s618 + $0x24] sm:$0xf] %v3407
      %3536 = vst [vmem:[%s618 + $0x28] sm:$0xf] %v3408
      %3537 = vst [vmem:[%s618 + $0x2c] sm:$0xf] %v3409
      %3538 = vst [vmem:[%s618 + $0x30] sm:$0xf] %v3410
      %3539 = vst [vmem:[%s618 + $0x34] sm:$0xf] %v3411
      %3540 = vst [vmem:[%s618 + $0x38] sm:$0xf] %v3412
      %3541 = vst [vmem:[%s618 + $0x3c] sm:$0xf] %v3413
      %3542 = vst [vmem:[%s618 + $0x40] sm:$0xf] %v3414
      %3543 = vst [vmem:[%s618 + $0x44] sm:$0xf] %v3415
      %3544 = vst [vmem:[%s618 + $0x48] sm:$0xf] %v3416
      %3545 = vst [vmem:[%s618 + $0x4c] sm:$0xf] %v3417
      %3546 = vst [vmem:[%s618 + $0x50] sm:$0xf] %v3418
      %3547 = vst [vmem:[%s618 + $0x54] sm:$0xf] %v3419
      %3548 = vst [vmem:[%s618 + $0x58] sm:$0xf] %v3420
      %3549 = vst [vmem:[%s618 + $0x5c] sm:$0xf] %v3421
      %3550 = vst [vmem:[%s618 + $0x60] sm:$0xf] %v3422
      %3551 = vst [vmem:[%s618 + $0x64] sm:$0xf] %v3423
      %3552 = vst [vmem:[%s618 + $0x68] sm:$0xf] %v3424
      %3553 = vst [vmem:[%s618 + $0x6c] sm:$0xf] %v3425
      %3554 = vst [vmem:[%s618 + $0x70] sm:$0xf] %v3426
      %3555 = vst [vmem:[%s618 + $0x74] sm:$0xf] %v3427
      %3556 = vst [vmem:[%s618 + $0x78] sm:$0xf] %v3428
      %3557 = vst [vmem:[%s618 + $0x7c] sm:$0xf] %v3429
      %3558 = vst [vmem:[%s618 + $0x80] sm:$0xf] %v3430
      %3559 = vst [vmem:[%s618 + $0x84] sm:$0xf] %v3431
      %3560 = vst [vmem:[%s618 + $0x88] sm:$0xf] %v3432
      %3561 = vst [vmem:[%s618 + $0x8c] sm:$0xf] %v3433
      %3562 = vst [vmem:[%s618 + $0x90] sm:$0xf] %v3434
      %3563 = vst [vmem:[%s618 + $0x94] sm:$0xf] %v3435
      %3564 = vst [vmem:[%s618 + $0x98] sm:$0xf] %v3436
      %3565 = vst [vmem:[%s618 + $0x9c] sm:$0xf] %v3437
      %3566 = vst [vmem:[%s618 + $0xa0] sm:$0xf] %v3438
      %3567 = vst [vmem:[%s618 + $0xa4] sm:$0xf] %v3439
      %3568 = vst [vmem:[%s618 + $0xa8] sm:$0xf] %v3440
      %3569 = vst [vmem:[%s618 + $0xac] sm:$0xf] %v3441
      %3570 = vst [vmem:[%s618 + $0xb0] sm:$0xf] %v3442
      %3571 = vst [vmem:[%s618 + $0xb4] sm:$0xf] %v3443
      %3572 = vst [vmem:[%s618 + $0xb8] sm:$0xf] %v3444
      %3573 = vst [vmem:[%s618 + $0xbc] sm:$0xf] %v3445
      %3574 = vst [vmem:[%s618 + $0xc0] sm:$0xf] %v3446
      %3575 = vst [vmem:[%s618 + $0xc4] sm:$0xf] %v3447
      %3576 = vst [vmem:[%s618 + $0xc8] sm:$0xf] %v3448
      %3577 = vst [vmem:[%s618 + $0xcc] sm:$0xf] %v3449
      %3578 = vst [vmem:[%s618 + $0xd0] sm:$0xf] %v3450
      %3579 = vst [vmem:[%s618 + $0xd4] sm:$0xf] %v3451
      %3580 = vst [vmem:[%s618 + $0xd8] sm:$0xf] %v3452
      %3581 = vst [vmem:[%s618 + $0xdc] sm:$0xf] %v3453
      %3582 = vst [vmem:[%s618 + $0xe0] sm:$0xf] %v3454
      %3583 = vst [vmem:[%s618 + $0xe4] sm:$0xf] %v3455
      %3584 = vst [vmem:[%s618 + $0xe8] sm:$0xf] %v3456
      %3585 = vst [vmem:[%s618 + $0xec] sm:$0xf] %v3457
      %3586 = vst [vmem:[%s618 + $0xf0] sm:$0xf] %v3458
      %3587 = vst [vmem:[%s618 + $0xf4] sm:$0xf] %v3459
      %3588 = vst [vmem:[%s618 + $0xf8] sm:$0xf] %v3460
      %3589 = vst [vmem:[%s618 + $0xfc] sm:$0xf] %v3461
      %v3590 = vld [vmem:[%s7] sm:$0xf]
      %v3591 = vld [vmem:[%s7 + $0x4] sm:$0xf]
      %v3592 = vld [vmem:[%s7 + $0x8] sm:$0xf]
      %v3593 = vld [vmem:[%s7 + $0xc] sm:$0xf]
      %v3594 = vld [vmem:[%s7 + $0x10] sm:$0xf]
      %v3595 = vld [vmem:[%s7 + $0x14] sm:$0xf]
      %v3596 = vld [vmem:[%s7 + $0x18] sm:$0xf]
      %v3597 = vld [vmem:[%s7 + $0x1c] sm:$0xf]
      %v3598 = vld [vmem:[%s7 + $0x20] sm:$0xf]
      %v3599 = vld [vmem:[%s7 + $0x24] sm:$0xf]
      %v3600 = vld [vmem:[%s7 + $0x28] sm:$0xf]
      %v3601 = vld [vmem:[%s7 + $0x2c] sm:$0xf]
      %v3602 = vld [vmem:[%s7 + $0x30] sm:$0xf]
      %v3603 = vld [vmem:[%s7 + $0x34] sm:$0xf]
      %v3604 = vld [vmem:[%s7 + $0x38] sm:$0xf]
      %v3605 = vld [vmem:[%s7 + $0x3c] sm:$0xf]
      %v3606 = vld [vmem:[%s8] sm:$0x1]
      %v3608 = vlaneseq
      %v3609 = vshrl.u32 %v3608, 7
      %v3610 = vsub.s32 0, %v3609
      %v3611 = vrot.slane %v3606, %v3610
      %v3629 = vunpack.c.l.b16 %v3590
      %v3630 = vunpack.c.l.b16 %v3591
      %v3631 = vunpack.c.l.b16 %v3592
      %v3632 = vunpack.c.l.b16 %v3593
      %v3633 = vunpack.c.l.b16 %v3594
      %v3634 = vunpack.c.l.b16 %v3595
      %v3635 = vunpack.c.l.b16 %v3596
      %v3636 = vunpack.c.l.b16 %v3597
      %v3637 = vunpack.c.l.b16 %v3598
      %v3638 = vunpack.c.l.b16 %v3599
      %v3639 = vunpack.c.l.b16 %v3600
      %v3640 = vunpack.c.l.b16 %v3601
      %v3641 = vunpack.c.l.b16 %v3602
      %v3642 = vunpack.c.l.b16 %v3603
      %v3643 = vunpack.c.l.b16 %v3604
      %v3644 = vunpack.c.l.b16 %v3605
      %v3645 = vpack.c.b16 %v3630, %v3629
      %v3646 = vpack.c.b16 %v3632, %v3631
      %v3647 = vpack.c.b16 %v3634, %v3633
      %v3648 = vpack.c.b16 %v3636, %v3635
      %v3649 = vpack.c.b16 %v3638, %v3637
      %v3650 = vpack.c.b16 %v3640, %v3639
      %v3651 = vpack.c.b16 %v3642, %v3641
      %v3652 = vpack.c.b16 %v3644, %v3643
      %3661 = vmatprep.subr.bf16.mxu0 0
      %3662 = vmatpush1.bf16.msra.mxu0 %v3645
      %3663 = vmatprep.subr.bf16.mxu0 0
      %3664 = vmatpush1.bf16.msra.mxu0 %v3646
      %3665 = vmatprep.subr.bf16.mxu0 0
      %3666 = vmatpush1.bf16.msra.mxu0 %v3647
      %3667 = vmatprep.subr.bf16.mxu0 0
      %3668 = vmatpush1.bf16.msra.mxu0 %v3648
      %3669 = vmatprep.subr.bf16.mxu0 0
      %3670 = vmatpush1.bf16.msra.mxu0 %v3649
      %3671 = vmatprep.subr.bf16.mxu0 0
      %3672 = vmatpush1.bf16.msra.mxu0 %v3650
      %3673 = vmatprep.subr.bf16.mxu0 0
      %3674 = vmatpush1.bf16.msra.mxu0 %v3651
      %3675 = vmatprep.subr.bf16.mxu0 0
      %3676 = vmatpush1.bf16.msra.mxu0 %v3652
      %3677 = vmatprep.subr.bf16.mxu0 0
      %3678 = vmatpush1.bf16.msra.mxu0 0
      %3679 = vmatprep.subr.bf16.mxu0 0
      %3680 = vmatpush1.bf16.msra.mxu0 0
      %3681 = vmatprep.subr.bf16.mxu0 0
      %3682 = vmatpush1.bf16.msra.mxu0 0
      %3683 = vmatprep.subr.bf16.mxu0 0
      %3684 = vmatpush1.bf16.msra.mxu0 0
      %3685 = vmatprep.subr.bf16.mxu0 0
      %3686 = vmatpush1.bf16.msra.mxu0 0
      %3687 = vmatprep.subr.bf16.mxu0 0
      %3688 = vmatpush1.bf16.msra.mxu0 0
      %3689 = vmatprep.subr.bf16.mxu0 0
      %3690 = vmatpush1.bf16.msra.mxu0 0
      %3691 = vmatprep.subr.bf16.mxu0 0
      %3692 = vmatpush1.bf16.msra.mxu0 0
      %3693 = vmatprep.mubr.bf16.mxu0 0
      %3694 = vmatmul.mubr.bf16.gmra.mrb[0].mxu0 %v1794
      %v3695 = vpop.f32.mrb[0].mxu0
      %v3696 = vadd.f32 %v3611, %v3695
      %v3697 = vpop.f32.mrb[0].mxu0
      %v3698 = vpop.f32.mrb[0].mxu0
      %v3699 = vadd.f32 %v3611, %v3698
      %v3700 = vpop.f32.mrb[0].mxu0
      %3701 = vmatprep.mubr.bf16.mxu0 0
      %3702 = vmatmul.mubr.bf16.gmra.mrb[0].mxu0 %v1795
      %v3703 = vpop.f32.mrb[0].mxu0
      %v3704 = vadd.f32 %v3611, %v3703
      %v3705 = vpop.f32.mrb[0].mxu0
      %v3706 = vpop.f32.mrb[0].mxu0
      %v3707 = vadd.f32 %v3611, %v3706
      %v3708 = vpop.f32.mrb[0].mxu0
      %3709 = vmatprep.mubr.bf16.mxu0 0
      %3710 = vmatmul.mubr.bf16.gmra.mrb[0].mxu0 %v1796
      %v3711 = vpop.f32.mrb[0].mxu0
      %v3712 = vadd.f32 %v3611, %v3711
      %v3713 = vpop.f32.mrb[0].mxu0
      %v3714 = vpop.f32.mrb[0].mxu0
      %v3715 = vadd.f32 %v3611, %v3714
      %v3716 = vpop.f32.mrb[0].mxu0
      %3717 = vmatprep.mubr.bf16.mxu0 0
      %3718 = vmatmul.mubr.bf16.gmra.mrb[0].mxu0 %v1797
      %v3719 = vpop.f32.mrb[0].mxu0
      %v3720 = vadd.f32 %v3611, %v3719
      %v3721 = vpop.f32.mrb[0].mxu0
      %v3722 = vpop.f32.mrb[0].mxu0
      %v3723 = vadd.f32 %v3611, %v3722
      %v3724 = vpop.f32.mrb[0].mxu0
      %3725 = vmatprep.mubr.bf16.mxu0 0
      %3726 = vmatmul.mubr.bf16.gmra.mrb[0].mxu0 %v1798
      %v3727 = vpop.f32.mrb[0].mxu0
      %v3728 = vadd.f32 %v3611, %v3727
      %v3729 = vpop.f32.mrb[0].mxu0
      %v3730 = vpop.f32.mrb[0].mxu0
      %v3731 = vadd.f32 %v3611, %v3730
      %v3732 = vpop.f32.mrb[0].mxu0
      %3733 = vmatprep.mubr.bf16.mxu0 0
      %3734 = vmatmul.mubr.bf16.gmra.mrb[0].mxu0 %v1799
      %v3735 = vpop.f32.mrb[0].mxu0
      %v3736 = vadd.f32 %v3611, %v3735
      %v3737 = vpop.f32.mrb[0].mxu0
      %v3738 = vpop.f32.mrb[0].mxu0
      %v3739 = vadd.f32 %v3611, %v3738
      %v3740 = vpop.f32.mrb[0].mxu0
      %3741 = vmatprep.mubr.bf16.mxu0 0
      %3742 = vmatmul.mubr.bf16.gmra.mrb[0].mxu0 %v1800
      %v3743 = vpop.f32.mrb[0].mxu0
      %v3744 = vadd.f32 %v3611, %v3743
      %v3745 = vpop.f32.mrb[0].mxu0
      %v3746 = vpop.f32.mrb[0].mxu0
      %v3747 = vadd.f32 %v3611, %v3746
      %v3748 = vpop.f32.mrb[0].mxu0
      %3749 = vmatprep.mubr.bf16.mxu0 0
      %3750 = vmatmul.mubr.bf16.gmra.mrb[0].mxu0 %v1801
      %v3751 = vpop.f32.mrb[0].mxu0
      %v3752 = vadd.f32 %v3611, %v3751
      %v3753 = vpop.f32.mrb[0].mxu0
      %v3754 = vpop.f32.mrb[0].mxu0
      %v3755 = vadd.f32 %v3611, %v3754
      %v3756 = vpop.f32.mrb[0].mxu0
      %3757 = vmatprep.mubr.bf16.mxu0 0
      %3758 = vmatmul.mubr.bf16.gmra.mrb[0].mxu0 %v1802
      %v3759 = vpop.f32.mrb[0].mxu0
      %v3760 = vadd.f32 %v3611, %v3759
      %v3761 = vpop.f32.mrb[0].mxu0
      %v3762 = vpop.f32.mrb[0].mxu0
      %v3763 = vadd.f32 %v3611, %v3762
      %v3764 = vpop.f32.mrb[0].mxu0
      %3765 = vmatprep.mubr.bf16.mxu0 0
      %3766 = vmatmul.mubr.bf16.gmra.mrb[0].mxu0 %v1803
      %v3767 = vpop.f32.mrb[0].mxu0
      %v3768 = vadd.f32 %v3611, %v3767
      %v3769 = vpop.f32.mrb[0].mxu0
      %v3770 = vpop.f32.mrb[0].mxu0
      %v3771 = vadd.f32 %v3611, %v3770
      %v3772 = vpop.f32.mrb[0].mxu0
      %3773 = vmatprep.mubr.bf16.mxu0 0
      %3774 = vmatmul.mubr.bf16.gmra.mrb[0].mxu0 %v1804
      %v3775 = vpop.f32.mrb[0].mxu0
      %v3776 = vadd.f32 %v3611, %v3775
      %v3777 = vpop.f32.mrb[0].mxu0
      %v3778 = vpop.f32.mrb[0].mxu0
      %v3779 = vadd.f32 %v3611, %v3778
      %v3780 = vpop.f32.mrb[0].mxu0
      %3781 = vmatprep.mubr.bf16.mxu0 0
      %3782 = vmatmul.mubr.bf16.gmra.mrb[0].mxu0 %v1805
      %v3783 = vpop.f32.mrb[0].mxu0
      %v3784 = vadd.f32 %v3611, %v3783
      %v3785 = vpop.f32.mrb[0].mxu0
      %v3786 = vpop.f32.mrb[0].mxu0
      %v3787 = vadd.f32 %v3611, %v3786
      %v3788 = vpop.f32.mrb[0].mxu0
      %3789 = vmatprep.mubr.bf16.mxu0 0
      %3790 = vmatmul.mubr.bf16.gmra.mrb[0].mxu0 %v1806
      %v3791 = vpop.f32.mrb[0].mxu0
      %v3792 = vadd.f32 %v3611, %v3791
      %v3793 = vpop.f32.mrb[0].mxu0
      %v3794 = vpop.f32.mrb[0].mxu0
      %v3795 = vadd.f32 %v3611, %v3794
      %v3796 = vpop.f32.mrb[0].mxu0
      %3797 = vmatprep.mubr.bf16.mxu0 0
      %3798 = vmatmul.mubr.bf16.gmra.mrb[0].mxu0 %v1807
      %v3799 = vpop.f32.mrb[0].mxu0
      %v3800 = vadd.f32 %v3611, %v3799
      %v3801 = vpop.f32.mrb[0].mxu0
      %v3802 = vpop.f32.mrb[0].mxu0
      %v3803 = vadd.f32 %v3611, %v3802
      %v3804 = vpop.f32.mrb[0].mxu0
      %3805 = vmatprep.mubr.bf16.mxu0 0
      %3806 = vmatmul.mubr.bf16.gmra.mrb[0].mxu0 %v1808
      %v3807 = vpop.f32.mrb[0].mxu0
      %v3808 = vadd.f32 %v3611, %v3807
      %v3809 = vpop.f32.mrb[0].mxu0
      %v3810 = vpop.f32.mrb[0].mxu0
      %v3811 = vadd.f32 %v3611, %v3810
      %v3812 = vpop.f32.mrb[0].mxu0
      %3813 = vmatprep.mubr.bf16.mxu0 0
      %3814 = vmatmul.mubr.bf16.gmra.mrb[0].mxu0 %v1809
      %v3815 = vpop.f32.mrb[0].mxu0
      %v3816 = vadd.f32 %v3611, %v3815
      %v3817 = vpop.f32.mrb[0].mxu0
      %v3818 = vpop.f32.mrb[0].mxu0
      %v3819 = vadd.f32 %v3611, %v3818
      %v3820 = vpop.f32.mrb[0].mxu0
      %3821 = vmatprep.mubr.bf16.mxu0 0
      %3822 = vmatmul.mubr.bf16.gmra.mrb[0].mxu0 %v1810
      %v3823 = vpop.f32.mrb[0].mxu0
      %v3824 = vadd.f32 %v3611, %v3823
      %v3825 = vpop.f32.mrb[0].mxu0
      %v3826 = vpop.f32.mrb[0].mxu0
      %v3827 = vadd.f32 %v3611, %v3826
      %v3828 = vpop.f32.mrb[0].mxu0
      %3829 = vmatprep.mubr.bf16.mxu0 0
      %3830 = vmatmul.mubr.bf16.gmra.mrb[0].mxu0 %v1811
      %v3831 = vpop.f32.mrb[0].mxu0
      %v3832 = vadd.f32 %v3611, %v3831
      %v3833 = vpop.f32.mrb[0].mxu0
      %v3834 = vpop.f32.mrb[0].mxu0
      %v3835 = vadd.f32 %v3611, %v3834
      %v3836 = vpop.f32.mrb[0].mxu0
      %3837 = vmatprep.mubr.bf16.mxu0 0
      %3838 = vmatmul.mubr.bf16.gmra.mrb[0].mxu0 %v1812
      %v3839 = vpop.f32.mrb[0].mxu0
      %v3840 = vadd.f32 %v3611, %v3839
      %v3841 = vpop.f32.mrb[0].mxu0
      %v3842 = vpop.f32.mrb[0].mxu0
      %v3843 = vadd.f32 %v3611, %v3842
      %v3844 = vpop.f32.mrb[0].mxu0
      %3845 = vmatprep.mubr.bf16.mxu0 0
      %3846 = vmatmul.mubr.bf16.gmra.mrb[0].mxu0 %v1813
      %v3847 = vpop.f32.mrb[0].mxu0
      %v3848 = vadd.f32 %v3611, %v3847
      %v3849 = vpop.f32.mrb[0].mxu0
      %v3850 = vpop.f32.mrb[0].mxu0
      %v3851 = vadd.f32 %v3611, %v3850
      %v3852 = vpop.f32.mrb[0].mxu0
      %3853 = vmatprep.mubr.bf16.mxu0 0
      %3854 = vmatmul.mubr.bf16.gmra.mrb[0].mxu0 %v1814
      %v3855 = vpop.f32.mrb[0].mxu0
      %v3856 = vadd.f32 %v3611, %v3855
      %v3857 = vpop.f32.mrb[0].mxu0
      %v3858 = vpop.f32.mrb[0].mxu0
      %v3859 = vadd.f32 %v3611, %v3858
      %v3860 = vpop.f32.mrb[0].mxu0
      %3861 = vmatprep.mubr.bf16.mxu0 0
      %3862 = vmatmul.mubr.bf16.gmra.mrb[0].mxu0 %v1815
      %v3863 = vpop.f32.mrb[0].mxu0
      %v3864 = vadd.f32 %v3611, %v3863
      %v3865 = vpop.f32.mrb[0].mxu0
      %v3866 = vpop.f32.mrb[0].mxu0
      %v3867 = vadd.f32 %v3611, %v3866
      %v3868 = vpop.f32.mrb[0].mxu0
      %3869 = vmatprep.mubr.bf16.mxu0 0
      %3870 = vmatmul.mubr.bf16.gmra.mrb[0].mxu0 %v1816
      %v3871 = vpop.f32.mrb[0].mxu0
      %v3872 = vadd.f32 %v3611, %v3871
      %v3873 = vpop.f32.mrb[0].mxu0
      %v3874 = vpop.f32.mrb[0].mxu0
      %v3875 = vadd.f32 %v3611, %v3874
      %v3876 = vpop.f32.mrb[0].mxu0
      %3877 = vmatprep.mubr.bf16.mxu0 0
      %3878 = vmatmul.mubr.bf16.gmra.mrb[0].mxu0 %v1817
      %v3879 = vpop.f32.mrb[0].mxu0
      %v3880 = vadd.f32 %v3611, %v3879
      %v3881 = vpop.f32.mrb[0].mxu0
      %v3882 = vpop.f32.mrb[0].mxu0
      %v3883 = vadd.f32 %v3611, %v3882
      %v3884 = vpop.f32.mrb[0].mxu0
      %3885 = vmatprep.mubr.bf16.mxu0 0
      %3886 = vmatmul.mubr.bf16.gmra.mrb[0].mxu0 %v1818
      %v3887 = vpop.f32.mrb[0].mxu0
      %v3888 = vadd.f32 %v3611, %v3887
      %v3889 = vpop.f32.mrb[0].mxu0
      %v3890 = vpop.f32.mrb[0].mxu0
      %v3891 = vadd.f32 %v3611, %v3890
      %v3892 = vpop.f32.mrb[0].mxu0
      %3893 = vmatprep.mubr.bf16.mxu0 0
      %3894 = vmatmul.mubr.bf16.gmra.mrb[0].mxu0 %v1819
      %v3895 = vpop.f32.mrb[0].mxu0
      %v3896 = vadd.f32 %v3611, %v3895
      %v3897 = vpop.f32.mrb[0].mxu0
      %v3898 = vpop.f32.mrb[0].mxu0
      %v3899 = vadd.f32 %v3611, %v3898
      %v3900 = vpop.f32.mrb[0].mxu0
      %3901 = vmatprep.mubr.bf16.mxu0 0
      %3902 = vmatmul.mubr.bf16.gmra.mrb[0].mxu0 %v1820
      %v3903 = vpop.f32.mrb[0].mxu0
      %v3904 = vadd.f32 %v3611, %v3903
      %v3905 = vpop.f32.mrb[0].mxu0
      %v3906 = vpop.f32.mrb[0].mxu0
      %v3907 = vadd.f32 %v3611, %v3906
      %v3908 = vpop.f32.mrb[0].mxu0
      %3909 = vmatprep.mubr.bf16.mxu0 0
      %3910 = vmatmul.mubr.bf16.gmra.mrb[0].mxu0 %v1821
      %v3911 = vpop.f32.mrb[0].mxu0
      %v3912 = vadd.f32 %v3611, %v3911
      %v3913 = vpop.f32.mrb[0].mxu0
      %v3914 = vpop.f32.mrb[0].mxu0
      %v3915 = vadd.f32 %v3611, %v3914
      %v3916 = vpop.f32.mrb[0].mxu0
      %3917 = vmatprep.mubr.bf16.mxu0 0
      %3918 = vmatmul.mubr.bf16.gmra.mrb[0].mxu0 %v1822
      %v3919 = vpop.f32.mrb[0].mxu0
      %v3920 = vadd.f32 %v3611, %v3919
      %v3921 = vpop.f32.mrb[0].mxu0
      %v3922 = vpop.f32.mrb[0].mxu0
      %v3923 = vadd.f32 %v3611, %v3922
      %v3924 = vpop.f32.mrb[0].mxu0
      %3925 = vmatprep.mubr.bf16.mxu0 0
      %3926 = vmatmul.mubr.bf16.gmra.mrb[0].mxu0 %v1823
      %v3927 = vpop.f32.mrb[0].mxu0
      %v3928 = vadd.f32 %v3611, %v3927
      %v3929 = vpop.f32.mrb[0].mxu0
      %v3930 = vpop.f32.mrb[0].mxu0
      %v3931 = vadd.f32 %v3611, %v3930
      %v3932 = vpop.f32.mrb[0].mxu0
      %3933 = vmatprep.mubr.bf16.mxu0 0
      %3934 = vmatmul.mubr.bf16.gmra.mrb[0].mxu0 %v1824
      %v3935 = vpop.f32.mrb[0].mxu0
      %v3936 = vadd.f32 %v3611, %v3935
      %v3937 = vpop.f32.mrb[0].mxu0
      %v3938 = vpop.f32.mrb[0].mxu0
      %v3939 = vadd.f32 %v3611, %v3938
      %v3940 = vpop.f32.mrb[0].mxu0
      %3941 = vmatprep.mubr.bf16.mxu0 0
      %3942 = vmatmul.mubr.bf16.gmra.mrb[0].mxu0 %v1825
      %v3943 = vpop.f32.mrb[0].mxu0
      %v3944 = vadd.f32 %v3611, %v3943
      %v3945 = vpop.f32.mrb[0].mxu0
      %v3946 = vpop.f32.mrb[0].mxu0
      %v3947 = vadd.f32 %v3611, %v3946
      %v3948 = vpop.f32.mrb[0].mxu0
      %3949 = vdwg.mxu0
      %v3950 = vadd.f32 %v769, %v3696
      %v3951 = vadd.f32 %v770, %v3699
      %v3952 = vadd.f32 %v771, %v3704
      %v3953 = vadd.f32 %v772, %v3707
      %v3954 = vadd.f32 %v773, %v3712
      %v3955 = vadd.f32 %v774, %v3715
      %v3956 = vadd.f32 %v775, %v3720
      %v3957 = vadd.f32 %v776, %v3723
      %v3958 = vadd.f32 %v777, %v3728
      %v3959 = vadd.f32 %v778, %v3731
      %v3960 = vadd.f32 %v779, %v3736
      %v3961 = vadd.f32 %v780, %v3739
      %v3962 = vadd.f32 %v781, %v3744
      %v3963 = vadd.f32 %v782, %v3747
      %v3964 = vadd.f32 %v783, %v3752
      %v3965 = vadd.f32 %v784, %v3755
      %v3966 = vadd.f32 %v785, %v3760
      %v3967 = vadd.f32 %v786, %v3763
      %v3968 = vadd.f32 %v787, %v3768
      %v3969 = vadd.f32 %v788, %v3771
      %v3970 = vadd.f32 %v789, %v3776
      %v3971 = vadd.f32 %v790, %v3779
      %v3972 = vadd.f32 %v791, %v3784
      %v3973 = vadd.f32 %v792, %v3787
      %v3974 = vadd.f32 %v793, %v3792
      %v3975 = vadd.f32 %v794, %v3795
      %v3976 = vadd.f32 %v795, %v3800
      %v3977 = vadd.f32 %v796, %v3803
      %v3978 = vadd.f32 %v797, %v3808
      %v3979 = vadd.f32 %v798, %v3811
      %v3980 = vadd.f32 %v799, %v3816
      %v3981 = vadd.f32 %v800, %v3819
      %v3982 = vadd.f32 %v801, %v3824
      %v3983 = vadd.f32 %v802, %v3827
      %v3984 = vadd.f32 %v803, %v3832
      %v3985 = vadd.f32 %v804, %v3835
      %v3986 = vadd.f32 %v805, %v3840
      %v3987 = vadd.f32 %v806, %v3843
      %v3988 = vadd.f32 %v807, %v3848
      %v3989 = vadd.f32 %v808, %v3851
      %v3990 = vadd.f32 %v809, %v3856
      %v3991 = vadd.f32 %v810, %v3859
      %v3992 = vadd.f32 %v811, %v3864
      %v3993 = vadd.f32 %v812, %v3867
      %v3994 = vadd.f32 %v813, %v3872
      %v3995 = vadd.f32 %v814, %v3875
      %v3996 = vadd.f32 %v815, %v3880
      %v3997 = vadd.f32 %v816, %v3883
      %v3998 = vadd.f32 %v817, %v3888
      %v3999 = vadd.f32 %v818, %v3891
      %v4000 = vadd.f32 %v819, %v3896
      %v4001 = vadd.f32 %v820, %v3899
      %v4002 = vadd.f32 %v821, %v3904
      %v4003 = vadd.f32 %v822, %v3907
      %v4004 = vadd.f32 %v823, %v3912
      %v4005 = vadd.f32 %v824, %v3915
      %v4006 = vadd.f32 %v825, %v3920
      %v4007 = vadd.f32 %v826, %v3923
      %v4008 = vadd.f32 %v827, %v3928
      %v4009 = vadd.f32 %v828, %v3931
      %v4010 = vadd.f32 %v829, %v3936
      %v4011 = vadd.f32 %v830, %v3939
      %v4012 = vadd.f32 %v831, %v3944
      %v4013 = vadd.f32 %v832, %v3947
      %v4014 = vld [vmem:[%s9] sm:$0x1]
      %v4016 = vlaneseq
      %v4017 = vshrl.u32 %v4016, 7
      %v4018 = vsub.s32 0, %v4017
      %v4019 = vrot.slane %v4014, %v4018
      %v4021 = vmul.f32 %v3950, %v4019
      %v4022 = vmul.f32 %v3951, %v4019
      %v4023 = vmul.f32 %v3952, %v4019
      %v4024 = vmul.f32 %v3953, %v4019
      %v4025 = vmul.f32 %v3954, %v4019
      %v4026 = vmul.f32 %v3955, %v4019
      %v4027 = vmul.f32 %v3956, %v4019
      %v4028 = vmul.f32 %v3957, %v4019
      %v4029 = vmul.f32 %v3958, %v4019
      %v4030 = vmul.f32 %v3959, %v4019
      %v4031 = vmul.f32 %v3960, %v4019
      %v4032 = vmul.f32 %v3961, %v4019
      %v4033 = vmul.f32 %v3962, %v4019
      %v4034 = vmul.f32 %v3963, %v4019
      %v4035 = vmul.f32 %v3964, %v4019
      %v4036 = vmul.f32 %v3965, %v4019
      %v4037 = vmul.f32 %v3966, %v4019
      %v4038 = vmul.f32 %v3967, %v4019
      %v4039 = vmul.f32 %v3968, %v4019
      %v4040 = vmul.f32 %v3969, %v4019
      %v4041 = vmul.f32 %v3970, %v4019
      %v4042 = vmul.f32 %v3971, %v4019
      %v4043 = vmul.f32 %v3972, %v4019
      %v4044 = vmul.f32 %v3973, %v4019
      %v4045 = vmul.f32 %v3974, %v4019
      %v4046 = vmul.f32 %v3975, %v4019
      %v4047 = vmul.f32 %v3976, %v4019
      %v4048 = vmul.f32 %v3977, %v4019
      %v4049 = vmul.f32 %v3978, %v4019
      %v4050 = vmul.f32 %v3979, %v4019
      %v4051 = vmul.f32 %v3980, %v4019
      %v4052 = vmul.f32 %v3981, %v4019
      %v4053 = vmul.f32 %v3982, %v4019
      %v4054 = vmul.f32 %v3983, %v4019
      %v4055 = vmul.f32 %v3984, %v4019
      %v4056 = vmul.f32 %v3985, %v4019
      %v4057 = vmul.f32 %v3986, %v4019
      %v4058 = vmul.f32 %v3987, %v4019
      %v4059 = vmul.f32 %v3988, %v4019
      %v4060 = vmul.f32 %v3989, %v4019
      %v4061 = vmul.f32 %v3990, %v4019
      %v4062 = vmul.f32 %v3991, %v4019
      %v4063 = vmul.f32 %v3992, %v4019
      %v4064 = vmul.f32 %v3993, %v4019
      %v4065 = vmul.f32 %v3994, %v4019
      %v4066 = vmul.f32 %v3995, %v4019
      %v4067 = vmul.f32 %v3996, %v4019
      %v4068 = vmul.f32 %v3997, %v4019
      %v4069 = vmul.f32 %v3998, %v4019
      %v4070 = vmul.f32 %v3999, %v4019
      %v4071 = vmul.f32 %v4000, %v4019
      %v4072 = vmul.f32 %v4001, %v4019
      %v4073 = vmul.f32 %v4002, %v4019
      %v4074 = vmul.f32 %v4003, %v4019
      %v4075 = vmul.f32 %v4004, %v4019
      %v4076 = vmul.f32 %v4005, %v4019
      %v4077 = vmul.f32 %v4006, %v4019
      %v4078 = vmul.f32 %v4007, %v4019
      %v4079 = vmul.f32 %v4008, %v4019
      %v4080 = vmul.f32 %v4009, %v4019
      %v4081 = vmul.f32 %v4010, %v4019
      %v4082 = vmul.f32 %v4011, %v4019
      %v4083 = vmul.f32 %v4012, %v4019
      %v4084 = vmul.f32 %v4013, %v4019
      %v4085 = vld [vmem:[%s10] sm:$0x1]
      %v4087 = vlaneseq
      %v4088 = vshrl.u32 %v4087, 7
      %v4089 = vsub.s32 0, %v4088
      %v4090 = vrot.slane %v4085, %v4089
      %v4092 = vadd.f32 %v4021, %v4090
      %v4093 = vadd.f32 %v4022, %v4090
      %v4094 = vadd.f32 %v4023, %v4090
      %v4095 = vadd.f32 %v4024, %v4090
      %v4096 = vadd.f32 %v4025, %v4090
      %v4097 = vadd.f32 %v4026, %v4090
      %v4098 = vadd.f32 %v4027, %v4090
      %v4099 = vadd.f32 %v4028, %v4090
      %v4100 = vadd.f32 %v4029, %v4090
      %v4101 = vadd.f32 %v4030, %v4090
      %v4102 = vadd.f32 %v4031, %v4090
      %v4103 = vadd.f32 %v4032, %v4090
      %v4104 = vadd.f32 %v4033, %v4090
      %v4105 = vadd.f32 %v4034, %v4090
      %v4106 = vadd.f32 %v4035, %v4090
      %v4107 = vadd.f32 %v4036, %v4090
      %v4108 = vadd.f32 %v4037, %v4090
      %v4109 = vadd.f32 %v4038, %v4090
      %v4110 = vadd.f32 %v4039, %v4090
      %v4111 = vadd.f32 %v4040, %v4090
      %v4112 = vadd.f32 %v4041, %v4090
      %v4113 = vadd.f32 %v4042, %v4090
      %v4114 = vadd.f32 %v4043, %v4090
      %v4115 = vadd.f32 %v4044, %v4090
      %v4116 = vadd.f32 %v4045, %v4090
      %v4117 = vadd.f32 %v4046, %v4090
      %v4118 = vadd.f32 %v4047, %v4090
      %v4119 = vadd.f32 %v4048, %v4090
      %v4120 = vadd.f32 %v4049, %v4090
      %v4121 = vadd.f32 %v4050, %v4090
      %v4122 = vadd.f32 %v4051, %v4090
      %v4123 = vadd.f32 %v4052, %v4090
      %v4124 = vadd.f32 %v4053, %v4090
      %v4125 = vadd.f32 %v4054, %v4090
      %v4126 = vadd.f32 %v4055, %v4090
      %v4127 = vadd.f32 %v4056, %v4090
      %v4128 = vadd.f32 %v4057, %v4090
      %v4129 = vadd.f32 %v4058, %v4090
      %v4130 = vadd.f32 %v4059, %v4090
      %v4131 = vadd.f32 %v4060, %v4090
      %v4132 = vadd.f32 %v4061, %v4090
      %v4133 = vadd.f32 %v4062, %v4090
      %v4134 = vadd.f32 %v4063, %v4090
      %v4135 = vadd.f32 %v4064, %v4090
      %v4136 = vadd.f32 %v4065, %v4090
      %v4137 = vadd.f32 %v4066, %v4090
      %v4138 = vadd.f32 %v4067, %v4090
      %v4139 = vadd.f32 %v4068, %v4090
      %v4140 = vadd.f32 %v4069, %v4090
      %v4141 = vadd.f32 %v4070, %v4090
      %v4142 = vadd.f32 %v4071, %v4090
      %v4143 = vadd.f32 %v4072, %v4090
      %v4144 = vadd.f32 %v4073, %v4090
      %v4145 = vadd.f32 %v4074, %v4090
      %v4146 = vadd.f32 %v4075, %v4090
      %v4147 = vadd.f32 %v4076, %v4090
      %v4148 = vadd.f32 %v4077, %v4090
      %v4149 = vadd.f32 %v4078, %v4090
      %v4150 = vadd.f32 %v4079, %v4090
      %v4151 = vadd.f32 %v4080, %v4090
      %v4152 = vadd.f32 %v4081, %v4090
      %v4153 = vadd.f32 %v4082, %v4090
      %v4154 = vadd.f32 %v4083, %v4090
      %v4155 = vadd.f32 %v4084, %v4090
      %v4156 = vpack.c.bf16 %v4093, %v4092
      %v4157 = vpack.c.bf16 %v4095, %v4094
      %v4158 = vpack.c.bf16 %v4097, %v4096
      %v4159 = vpack.c.bf16 %v4099, %v4098
      %v4160 = vpack.c.bf16 %v4101, %v4100
      %v4161 = vpack.c.bf16 %v4103, %v4102
      %v4162 = vpack.c.bf16 %v4105, %v4104
      %v4163 = vpack.c.bf16 %v4107, %v4106
      %v4164 = vpack.c.bf16 %v4109, %v4108
      %v4165 = vpack.c.bf16 %v4111, %v4110
      %v4166 = vpack.c.bf16 %v4113, %v4112
      %v4167 = vpack.c.bf16 %v4115, %v4114
      %v4168 = vpack.c.bf16 %v4117, %v4116
      %v4169 = vpack.c.bf16 %v4119, %v4118
      %v4170 = vpack.c.bf16 %v4121, %v4120
      %v4171 = vpack.c.bf16 %v4123, %v4122
      %v4172 = vpack.c.bf16 %v4125, %v4124
      %v4173 = vpack.c.bf16 %v4127, %v4126
      %v4174 = vpack.c.bf16 %v4129, %v4128
      %v4175 = vpack.c.bf16 %v4131, %v4130
      %v4176 = vpack.c.bf16 %v4133, %v4132
      %v4177 = vpack.c.bf16 %v4135, %v4134
      %v4178 = vpack.c.bf16 %v4137, %v4136
      %v4179 = vpack.c.bf16 %v4139, %v4138
      %v4180 = vpack.c.bf16 %v4141, %v4140
      %v4181 = vpack.c.bf16 %v4143, %v4142
      %v4182 = vpack.c.bf16 %v4145, %v4144
      %v4183 = vpack.c.bf16 %v4147, %v4146
      %v4184 = vpack.c.bf16 %v4149, %v4148
      %v4185 = vpack.c.bf16 %v4151, %v4150
      %v4186 = vpack.c.bf16 %v4153, %v4152
      %v4187 = vpack.c.bf16 %v4155, %v4154
      %v4188 = vld [vmem:[%s11] sm:$0xff]
      %v4189 = vld [vmem:[%s11 + $0x8] sm:$0xff]
      %v4190 = vld [vmem:[%s11 + $0x10] sm:$0xff]
      %v4191 = vld [vmem:[%s11 + $0x18] sm:$0xff]
      %v4192 = vld [vmem:[%s11 + $0x20] sm:$0xff]
      %v4193 = vld [vmem:[%s11 + $0x28] sm:$0xff]
      %v4194 = vld [vmem:[%s11 + $0x30] sm:$0xff]
      %v4195 = vld [vmem:[%s11 + $0x38] sm:$0xff]
      %v4196 = vld [vmem:[%s11 + $0x40] sm:$0xff]
      %v4197 = vld [vmem:[%s11 + $0x48] sm:$0xff]
      %v4198 = vld [vmem:[%s11 + $0x50] sm:$0xff]
      %v4199 = vld [vmem:[%s11 + $0x58] sm:$0xff]
      %v4200 = vld [vmem:[%s11 + $0x60] sm:$0xff]
      %v4201 = vld [vmem:[%s11 + $0x68] sm:$0xff]
      %v4202 = vld [vmem:[%s11 + $0x70] sm:$0xff]
      %v4203 = vld [vmem:[%s11 + $0x78] sm:$0xff]
      %v4204 = vld [vmem:[%s12] sm:$0x3]
      %v4206 = vlaneseq
      %v4207 = vshrl.u32 %v4206, 7
      %v4208 = vsub.s32 0, %v4207
      %v4209 = vrot.slane %v4204, %v4208
      %v4210 = vlaneseq
      %v4211 = vshrl.u32 %v4210, 7
      %v4212 = vsub.s32 1, %v4211
      %v4213 = vrot.slane %v4204, %v4212
      %v4232 = vunpack.c.l.b16 %v4188
      %v4233 = vunpack.c.h.b16 %v4188
      %v4234 = vunpack.c.l.b16 %v4189
      %v4235 = vunpack.c.h.b16 %v4189
      %v4236 = vunpack.c.l.b16 %v4190
      %v4237 = vunpack.c.h.b16 %v4190
      %v4238 = vunpack.c.l.b16 %v4191
      %v4239 = vunpack.c.h.b16 %v4191
      %v4240 = vunpack.c.l.b16 %v4192
      %v4241 = vunpack.c.h.b16 %v4192
      %v4242 = vunpack.c.l.b16 %v4193
      %v4243 = vunpack.c.h.b16 %v4193
      %v4244 = vunpack.c.l.b16 %v4194
      %v4245 = vunpack.c.h.b16 %v4194
      %v4246 = vunpack.c.l.b16 %v4195
      %v4247 = vunpack.c.h.b16 %v4195
      %v4248 = vunpack.c.l.b16 %v4196
      %v4249 = vunpack.c.h.b16 %v4196
      %v4250 = vunpack.c.l.b16 %v4197
      %v4251 = vunpack.c.h.b16 %v4197
      %v4252 = vunpack.c.l.b16 %v4198
      %v4253 = vunpack.c.h.b16 %v4198
      %v4254 = vunpack.c.l.b16 %v4199
      %v4255 = vunpack.c.h.b16 %v4199
      %v4256 = vunpack.c.l.b16 %v4200
      %v4257 = vunpack.c.h.b16 %v4200
      %v4258 = vunpack.c.l.b16 %v4201
      %v4259 = vunpack.c.h.b16 %v4201
      %v4260 = vunpack.c.l.b16 %v4202
      %v4261 = vunpack.c.h.b16 %v4202
      %v4262 = vunpack.c.l.b16 %v4203
      %v4263 = vunpack.c.h.b16 %v4203
      %v4264 = vpack.c.b16 %v4234, %v4232
      %v4265 = vpack.c.b16 %v4235, %v4233
      %v4266 = vpack.c.b16 %v4238, %v4236
      %v4267 = vpack.c.b16 %v4239, %v4237
      %v4268 = vpack.c.b16 %v4242, %v4240
      %v4269 = vpack.c.b16 %v4243, %v4241
      %v4270 = vpack.c.b16 %v4246, %v4244
      %v4271 = vpack.c.b16 %v4247, %v4245
      %v4272 = vpack.c.b16 %v4250, %v4248
      %v4273 = vpack.c.b16 %v4251, %v4249
      %v4274 = vpack.c.b16 %v4254, %v4252
      %v4275 = vpack.c.b16 %v4255, %v4253
      %v4276 = vpack.c.b16 %v4258, %v4256
      %v4277 = vpack.c.b16 %v4259, %v4257
      %v4278 = vpack.c.b16 %v4262, %v4260
      %v4279 = vpack.c.b16 %v4263, %v4261
      %4296 = vmatprep.subr.bf16.mxu0 %v4265
      %4297 = vmatpush1.bf16.msra.mxu0 %v4264
      %4298 = vmatprep.subr.bf16.mxu0 %v4267
      %4299 = vmatpush1.bf16.msra.mxu0 %v4266
      %4300 = vmatprep.subr.bf16.mxu0 %v4269
      %4301 = vmatpush1.bf16.msra.mxu0 %v4268
      %4302 = vmatprep.subr.bf16.mxu0 %v4271
      %4303 = vmatpush1.bf16.msra.mxu0 %v4270
      %4304 = vmatprep.subr.bf16.mxu0 %v4273
      %4305 = vmatpush1.bf16.msra.mxu0 %v4272
      %4306 = vmatprep.subr.bf16.mxu0 %v4275
      %4307 = vmatpush1.bf16.msra.mxu0 %v4274
      %4308 = vmatprep.subr.bf16.mxu0 %v4277
      %4309 = vmatpush1.bf16.msra.mxu0 %v4276
      %4310 = vmatprep.subr.bf16.mxu0 %v4279
      %4311 = vmatpush1.bf16.msra.mxu0 %v4278
      %4312 = vmatprep.subr.bf16.mxu0 0
      %4313 = vmatpush1.bf16.msra.mxu0 0
      %4314 = vmatprep.subr.bf16.mxu0 0
      %4315 = vmatpush1.bf16.msra.mxu0 0
      %4316 = vmatprep.subr.bf16.mxu0 0
      %4317 = vmatpush1.bf16.msra.mxu0 0
      %4318 = vmatprep.subr.bf16.mxu0 0
      %4319 = vmatpush1.bf16.msra.mxu0 0
      %4320 = vmatprep.subr.bf16.mxu0 0
      %4321 = vmatpush1.bf16.msra.mxu0 0
      %4322 = vmatprep.subr.bf16.mxu0 0
      %4323 = vmatpush1.bf16.msra.mxu0 0
      %4324 = vmatprep.subr.bf16.mxu0 0
      %4325 = vmatpush1.bf16.msra.mxu0 0
      %4326 = vmatprep.subr.bf16.mxu0 0
      %4327 = vmatpush1.bf16.msra.mxu0 0
      %4328 = vmatprep.mubr.bf16.mxu0 0
      %4329 = vmatmul.mubr.bf16.gmra.mrb[0].mxu0 %v4156
      %v4330 = vpop.f32.mrb[0].mxu0
      %v4331 = vadd.f32 %v4209, %v4330
      %v4332 = vpop.f32.mrb[0].mxu0
      %v4333 = vadd.f32 %v4213, %v4332
      %v4334 = vpop.f32.mrb[0].mxu0
      %v4335 = vadd.f32 %v4209, %v4334
      %v4336 = vpop.f32.mrb[0].mxu0
      %v4337 = vadd.f32 %v4213, %v4336
      %4338 = vmatprep.mubr.bf16.mxu0 0
      %4339 = vmatmul.mubr.bf16.gmra.mrb[0].mxu0 %v4157
      %v4340 = vpop.f32.mrb[0].mxu0
      %v4341 = vadd.f32 %v4209, %v4340
      %v4342 = vpop.f32.mrb[0].mxu0
      %v4343 = vadd.f32 %v4213, %v4342
      %v4344 = vpop.f32.mrb[0].mxu0
      %v4345 = vadd.f32 %v4209, %v4344
      %v4346 = vpop.f32.mrb[0].mxu0
      %v4347 = vadd.f32 %v4213, %v4346
      %4348 = vmatprep.mubr.bf16.mxu0 0
      %4349 = vmatmul.mubr.bf16.gmra.mrb[0].mxu0 %v4158
      %v4350 = vpop.f32.mrb[0].mxu0
      %v4351 = vadd.f32 %v4209, %v4350
      %v4352 = vpop.f32.mrb[0].mxu0
      %v4353 = vadd.f32 %v4213, %v4352
      %v4354 = vpop.f32.mrb[0].mxu0
      %v4355 = vadd.f32 %v4209, %v4354
      %v4356 = vpop.f32.mrb[0].mxu0
      %v4357 = vadd.f32 %v4213, %v4356
      %4358 = vmatprep.mubr.bf16.mxu0 0
      %4359 = vmatmul.mubr.bf16.gmra.mrb[0].mxu0 %v4159
      %v4360 = vpop.f32.mrb[0].mxu0
      %v4361 = vadd.f32 %v4209, %v4360
      %v4362 = vpop.f32.mrb[0].mxu0
      %v4363 = vadd.f32 %v4213, %v4362
      %v4364 = vpop.f32.mrb[0].mxu0
      %v4365 = vadd.f32 %v4209, %v4364
      %v4366 = vpop.f32.mrb[0].mxu0
      %v4367 = vadd.f32 %v4213, %v4366
      %4368 = vmatprep.mubr.bf16.mxu0 0
      %4369 = vmatmul.mubr.bf16.gmra.mrb[0].mxu0 %v4160
      %v4370 = vpop.f32.mrb[0].mxu0
      %v4371 = vadd.f32 %v4209, %v4370
      %v4372 = vpop.f32.mrb[0].mxu0
      %v4373 = vadd.f32 %v4213, %v4372
      %v4374 = vpop.f32.mrb[0].mxu0
      %v4375 = vadd.f32 %v4209, %v4374
      %v4376 = vpop.f32.mrb[0].mxu0
      %v4377 = vadd.f32 %v4213, %v4376
      %4378 = vmatprep.mubr.bf16.mxu0 0
      %4379 = vmatmul.mubr.bf16.gmra.mrb[0].mxu0 %v4161
      %v4380 = vpop.f32.mrb[0].mxu0
      %v4381 = vadd.f32 %v4209, %v4380
      %v4382 = vpop.f32.mrb[0].mxu0
      %v4383 = vadd.f32 %v4213, %v4382
      %v4384 = vpop.f32.mrb[0].mxu0
      %v4385 = vadd.f32 %v4209, %v4384
      %v4386 = vpop.f32.mrb[0].mxu0
      %v4387 = vadd.f32 %v4213, %v4386
      %4388 = vmatprep.mubr.bf16.mxu0 0
      %4389 = vmatmul.mubr.bf16.gmra.mrb[0].mxu0 %v4162
      %v4390 = vpop.f32.mrb[0].mxu0
      %v4391 = vadd.f32 %v4209, %v4390
      %v4392 = vpop.f32.mrb[0].mxu0
      %v4393 = vadd.f32 %v4213, %v4392
      %v4394 = vpop.f32.mrb[0].mxu0
      %v4395 = vadd.f32 %v4209, %v4394
      %v4396 = vpop.f32.mrb[0].mxu0
      %v4397 = vadd.f32 %v4213, %v4396
      %4398 = vmatprep.mubr.bf16.mxu0 0
      %4399 = vmatmul.mubr.bf16.gmra.mrb[0].mxu0 %v4163
      %v4400 = vpop.f32.mrb[0].mxu0
      %v4401 = vadd.f32 %v4209, %v4400
      %v4402 = vpop.f32.mrb[0].mxu0
      %v4403 = vadd.f32 %v4213, %v4402
      %v4404 = vpop.f32.mrb[0].mxu0
      %v4405 = vadd.f32 %v4209, %v4404
      %v4406 = vpop.f32.mrb[0].mxu0
      %v4407 = vadd.f32 %v4213, %v4406
      %4408 = vmatprep.mubr.bf16.mxu0 0
      %4409 = vmatmul.mubr.bf16.gmra.mrb[0].mxu0 %v4164
      %v4410 = vpop.f32.mrb[0].mxu0
      %v4411 = vadd.f32 %v4209, %v4410
      %v4412 = vpop.f32.mrb[0].mxu0
      %v4413 = vadd.f32 %v4213, %v4412
      %v4414 = vpop.f32.mrb[0].mxu0
      %v4415 = vadd.f32 %v4209, %v4414
      %v4416 = vpop.f32.mrb[0].mxu0
      %v4417 = vadd.f32 %v4213, %v4416
      %4418 = vmatprep.mubr.bf16.mxu0 0
      %4419 = vmatmul.mubr.bf16.gmra.mrb[0].mxu0 %v4165
      %v4420 = vpop.f32.mrb[0].mxu0
      %v4421 = vadd.f32 %v4209, %v4420
      %v4422 = vpop.f32.mrb[0].mxu0
      %v4423 = vadd.f32 %v4213, %v4422
      %v4424 = vpop.f32.mrb[0].mxu0
      %v4425 = vadd.f32 %v4209, %v4424
      %v4426 = vpop.f32.mrb[0].mxu0
      %v4427 = vadd.f32 %v4213, %v4426
      %4428 = vmatprep.mubr.bf16.mxu0 0
      %4429 = vmatmul.mubr.bf16.gmra.mrb[0].mxu0 %v4166
      %v4430 = vpop.f32.mrb[0].mxu0
      %v4431 = vadd.f32 %v4209, %v4430
      %v4432 = vpop.f32.mrb[0].mxu0
      %v4433 = vadd.f32 %v4213, %v4432
      %v4434 = vpop.f32.mrb[0].mxu0
      %v4435 = vadd.f32 %v4209, %v4434
      %v4436 = vpop.f32.mrb[0].mxu0
      %v4437 = vadd.f32 %v4213, %v4436
      %4438 = vmatprep.mubr.bf16.mxu0 0
      %4439 = vmatmul.mubr.bf16.gmra.mrb[0].mxu0 %v4167
      %v4440 = vpop.f32.mrb[0].mxu0
      %v4441 = vadd.f32 %v4209, %v4440
      %v4442 = vpop.f32.mrb[0].mxu0
      %v4443 = vadd.f32 %v4213, %v4442
      %v4444 = vpop.f32.mrb[0].mxu0
      %v4445 = vadd.f32 %v4209, %v4444
      %v4446 = vpop.f32.mrb[0].mxu0
      %v4447 = vadd.f32 %v4213, %v4446
      %4448 = vmatprep.mubr.bf16.mxu0 0
      %4449 = vmatmul.mubr.bf16.gmra.mrb[0].mxu0 %v4168
      %v4450 = vpop.f32.mrb[0].mxu0
      %v4451 = vadd.f32 %v4209, %v4450
      %v4452 = vpop.f32.mrb[0].mxu0
      %v4453 = vadd.f32 %v4213, %v4452
      %v4454 = vpop.f32.mrb[0].mxu0
      %v4455 = vadd.f32 %v4209, %v4454
      %v4456 = vpop.f32.mrb[0].mxu0
      %v4457 = vadd.f32 %v4213, %v4456
      %4458 = vmatprep.mubr.bf16.mxu0 0
      %4459 = vmatmul.mubr.bf16.gmra.mrb[0].mxu0 %v4169
      %v4460 = vpop.f32.mrb[0].mxu0
      %v4461 = vadd.f32 %v4209, %v4460
      %v4462 = vpop.f32.mrb[0].mxu0
      %v4463 = vadd.f32 %v4213, %v4462
      %v4464 = vpop.f32.mrb[0].mxu0
      %v4465 = vadd.f32 %v4209, %v4464
      %v4466 = vpop.f32.mrb[0].mxu0
      %v4467 = vadd.f32 %v4213, %v4466
      %4468 = vmatprep.mubr.bf16.mxu0 0
      %4469 = vmatmul.mubr.bf16.gmra.mrb[0].mxu0 %v4170
      %v4470 = vpop.f32.mrb[0].mxu0
      %v4471 = vadd.f32 %v4209, %v4470
      %v4472 = vpop.f32.mrb[0].mxu0
      %v4473 = vadd.f32 %v4213, %v4472
      %v4474 = vpop.f32.mrb[0].mxu0
      %v4475 = vadd.f32 %v4209, %v4474
      %v4476 = vpop.f32.mrb[0].mxu0
      %v4477 = vadd.f32 %v4213, %v4476
      %4478 = vmatprep.mubr.bf16.mxu0 0
      %4479 = vmatmul.mubr.bf16.gmra.mrb[0].mxu0 %v4171
      %v4480 = vpop.f32.mrb[0].mxu0
      %v4481 = vadd.f32 %v4209, %v4480
      %v4482 = vpop.f32.mrb[0].mxu0
      %v4483 = vadd.f32 %v4213, %v4482
      %v4484 = vpop.f32.mrb[0].mxu0
      %v4485 = vadd.f32 %v4209, %v4484
      %v4486 = vpop.f32.mrb[0].mxu0
      %v4487 = vadd.f32 %v4213, %v4486
      %4488 = vmatprep.mubr.bf16.mxu0 0
      %4489 = vmatmul.mubr.bf16.gmra.mrb[0].mxu0 %v4172
      %v4490 = vpop.f32.mrb[0].mxu0
      %v4491 = vadd.f32 %v4209, %v4490
      %v4492 = vpop.f32.mrb[0].mxu0
      %v4493 = vadd.f32 %v4213, %v4492
      %v4494 = vpop.f32.mrb[0].mxu0
      %v4495 = vadd.f32 %v4209, %v4494
      %v4496 = vpop.f32.mrb[0].mxu0
      %v4497 = vadd.f32 %v4213, %v4496
      %4498 = vmatprep.mubr.bf16.mxu0 0
      %4499 = vmatmul.mubr.bf16.gmra.mrb[0].mxu0 %v4173
      %v4500 = vpop.f32.mrb[0].mxu0
      %v4501 = vadd.f32 %v4209, %v4500
      %v4502 = vpop.f32.mrb[0].mxu0
      %v4503 = vadd.f32 %v4213, %v4502
      %v4504 = vpop.f32.mrb[0].mxu0
      %v4505 = vadd.f32 %v4209, %v4504
      %v4506 = vpop.f32.mrb[0].mxu0
      %v4507 = vadd.f32 %v4213, %v4506
      %4508 = vmatprep.mubr.bf16.mxu0 0
      %4509 = vmatmul.mubr.bf16.gmra.mrb[0].mxu0 %v4174
      %v4510 = vpop.f32.mrb[0].mxu0
      %v4511 = vadd.f32 %v4209, %v4510
      %v4512 = vpop.f32.mrb[0].mxu0
      %v4513 = vadd.f32 %v4213, %v4512
      %v4514 = vpop.f32.mrb[0].mxu0
      %v4515 = vadd.f32 %v4209, %v4514
      %v4516 = vpop.f32.mrb[0].mxu0
      %v4517 = vadd.f32 %v4213, %v4516
      %4518 = vmatprep.mubr.bf16.mxu0 0
      %4519 = vmatmul.mubr.bf16.gmra.mrb[0].mxu0 %v4175
      %v4520 = vpop.f32.mrb[0].mxu0
      %v4521 = vadd.f32 %v4209, %v4520
      %v4522 = vpop.f32.mrb[0].mxu0
      %v4523 = vadd.f32 %v4213, %v4522
      %v4524 = vpop.f32.mrb[0].mxu0
      %v4525 = vadd.f32 %v4209, %v4524
      %v4526 = vpop.f32.mrb[0].mxu0
      %v4527 = vadd.f32 %v4213, %v4526
      %4528 = vmatprep.mubr.bf16.mxu0 0
      %4529 = vmatmul.mubr.bf16.gmra.mrb[0].mxu0 %v4176
      %v4530 = vpop.f32.mrb[0].mxu0
      %v4531 = vadd.f32 %v4209, %v4530
      %v4532 = vpop.f32.mrb[0].mxu0
      %v4533 = vadd.f32 %v4213, %v4532
      %v4534 = vpop.f32.mrb[0].mxu0
      %v4535 = vadd.f32 %v4209, %v4534
      %v4536 = vpop.f32.mrb[0].mxu0
      %v4537 = vadd.f32 %v4213, %v4536
      %4538 = vmatprep.mubr.bf16.mxu0 0
      %4539 = vmatmul.mubr.bf16.gmra.mrb[0].mxu0 %v4177
      %v4540 = vpop.f32.mrb[0].mxu0
      %v4541 = vadd.f32 %v4209, %v4540
      %v4542 = vpop.f32.mrb[0].mxu0
      %v4543 = vadd.f32 %v4213, %v4542
      %v4544 = vpop.f32.mrb[0].mxu0
      %v4545 = vadd.f32 %v4209, %v4544
      %v4546 = vpop.f32.mrb[0].mxu0
      %v4547 = vadd.f32 %v4213, %v4546
      %4548 = vmatprep.mubr.bf16.mxu0 0
      %4549 = vmatmul.mubr.bf16.gmra.mrb[0].mxu0 %v4178
      %v4550 = vpop.f32.mrb[0].mxu0
      %v4551 = vadd.f32 %v4209, %v4550
      %v4552 = vpop.f32.mrb[0].mxu0
      %v4553 = vadd.f32 %v4213, %v4552
      %v4554 = vpop.f32.mrb[0].mxu0
      %v4555 = vadd.f32 %v4209, %v4554
      %v4556 = vpop.f32.mrb[0].mxu0
      %v4557 = vadd.f32 %v4213, %v4556
      %4558 = vmatprep.mubr.bf16.mxu0 0
      %4559 = vmatmul.mubr.bf16.gmra.mrb[0].mxu0 %v4179
      %v4560 = vpop.f32.mrb[0].mxu0
      %v4561 = vadd.f32 %v4209, %v4560
      %v4562 = vpop.f32.mrb[0].mxu0
      %v4563 = vadd.f32 %v4213, %v4562
      %v4564 = vpop.f32.mrb[0].mxu0
      %v4565 = vadd.f32 %v4209, %v4564
      %v4566 = vpop.f32.mrb[0].mxu0
      %v4567 = vadd.f32 %v4213, %v4566
      %4568 = vmatprep.mubr.bf16.mxu0 0
      %4569 = vmatmul.mubr.bf16.gmra.mrb[0].mxu0 %v4180
      %v4570 = vpop.f32.mrb[0].mxu0
      %v4571 = vadd.f32 %v4209, %v4570
      %v4572 = vpop.f32.mrb[0].mxu0
      %v4573 = vadd.f32 %v4213, %v4572
      %v4574 = vpop.f32.mrb[0].mxu0
      %v4575 = vadd.f32 %v4209, %v4574
      %v4576 = vpop.f32.mrb[0].mxu0
      %v4577 = vadd.f32 %v4213, %v4576
      %4578 = vmatprep.mubr.bf16.mxu0 0
      %4579 = vmatmul.mubr.bf16.gmra.mrb[0].mxu0 %v4181
      %v4580 = vpop.f32.mrb[0].mxu0
      %v4581 = vadd.f32 %v4209, %v4580
      %v4582 = vpop.f32.mrb[0].mxu0
      %v4583 = vadd.f32 %v4213, %v4582
      %v4584 = vpop.f32.mrb[0].mxu0
      %v4585 = vadd.f32 %v4209, %v4584
      %v4586 = vpop.f32.mrb[0].mxu0
      %v4587 = vadd.f32 %v4213, %v4586
      %4588 = vmatprep.mubr.bf16.mxu0 0
      %4589 = vmatmul.mubr.bf16.gmra.mrb[0].mxu0 %v4182
      %v4590 = vpop.f32.mrb[0].mxu0
      %v4591 = vadd.f32 %v4209, %v4590
      %v4592 = vpop.f32.mrb[0].mxu0
      %v4593 = vadd.f32 %v4213, %v4592
      %v4594 = vpop.f32.mrb[0].mxu0
      %v4595 = vadd.f32 %v4209, %v4594
      %v4596 = vpop.f32.mrb[0].mxu0
      %v4597 = vadd.f32 %v4213, %v4596
      %4598 = vmatprep.mubr.bf16.mxu0 0
      %4599 = vmatmul.mubr.bf16.gmra.mrb[0].mxu0 %v4183
      %v4600 = vpop.f32.mrb[0].mxu0
      %v4601 = vadd.f32 %v4209, %v4600
      %v4602 = vpop.f32.mrb[0].mxu0
      %v4603 = vadd.f32 %v4213, %v4602
      %v4604 = vpop.f32.mrb[0].mxu0
      %v4605 = vadd.f32 %v4209, %v4604
      %v4606 = vpop.f32.mrb[0].mxu0
      %v4607 = vadd.f32 %v4213, %v4606
      %4608 = vmatprep.mubr.bf16.mxu0 0
      %4609 = vmatmul.mubr.bf16.gmra.mrb[0].mxu0 %v4184
      %v4610 = vpop.f32.mrb[0].mxu0
      %v4611 = vadd.f32 %v4209, %v4610
      %v4612 = vpop.f32.mrb[0].mxu0
      %v4613 = vadd.f32 %v4213, %v4612
      %v4614 = vpop.f32.mrb[0].mxu0
      %v4615 = vadd.f32 %v4209, %v4614
      %v4616 = vpop.f32.mrb[0].mxu0
      %v4617 = vadd.f32 %v4213, %v4616
      %4618 = vmatprep.mubr.bf16.mxu0 0
      %4619 = vmatmul.mubr.bf16.gmra.mrb[0].mxu0 %v4185
      %v4620 = vpop.f32.mrb[0].mxu0
      %v4621 = vadd.f32 %v4209, %v4620
      %v4622 = vpop.f32.mrb[0].mxu0
      %v4623 = vadd.f32 %v4213, %v4622
      %v4624 = vpop.f32.mrb[0].mxu0
      %v4625 = vadd.f32 %v4209, %v4624
      %v4626 = vpop.f32.mrb[0].mxu0
      %v4627 = vadd.f32 %v4213, %v4626
      %4628 = vmatprep.mubr.bf16.mxu0 0
      %4629 = vmatmul.mubr.bf16.gmra.mrb[0].mxu0 %v4186
      %v4630 = vpop.f32.mrb[0].mxu0
      %v4631 = vadd.f32 %v4209, %v4630
      %v4632 = vpop.f32.mrb[0].mxu0
      %v4633 = vadd.f32 %v4213, %v4632
      %v4634 = vpop.f32.mrb[0].mxu0
      %v4635 = vadd.f32 %v4209, %v4634
      %v4636 = vpop.f32.mrb[0].mxu0
      %v4637 = vadd.f32 %v4213, %v4636
      %4638 = vmatprep.mubr.bf16.mxu0 0
      %4639 = vmatmul.mubr.bf16.gmra.mrb[0].mxu0 %v4187
      %v4640 = vpop.f32.mrb[0].mxu0
      %v4641 = vadd.f32 %v4209, %v4640
      %v4642 = vpop.f32.mrb[0].mxu0
      %v4643 = vadd.f32 %v4213, %v4642
      %v4644 = vpop.f32.mrb[0].mxu0
      %v4645 = vadd.f32 %v4209, %v4644
      %v4646 = vpop.f32.mrb[0].mxu0
      %v4647 = vadd.f32 %v4213, %v4646
      %4648 = vdwg.mxu0
      %v4649 = vmax.f32 %v4331, 0.0
      %v4650 = vmax.f32 %v4333, 0.0
      %v4651 = vmax.f32 %v4335, 0.0
      %v4652 = vmax.f32 %v4337, 0.0
      %v4653 = vmax.f32 %v4341, 0.0
      %v4654 = vmax.f32 %v4343, 0.0
      %v4655 = vmax.f32 %v4345, 0.0
      %v4656 = vmax.f32 %v4347, 0.0
      %v4657 = vmax.f32 %v4351, 0.0
      %v4658 = vmax.f32 %v4353, 0.0
      %v4659 = vmax.f32 %v4355, 0.0
      %v4660 = vmax.f32 %v4357, 0.0
      %v4661 = vmax.f32 %v4361, 0.0
      %v4662 = vmax.f32 %v4363, 0.0
      %v4663 = vmax.f32 %v4365, 0.0
      %v4664 = vmax.f32 %v4367, 0.0
      %v4665 = vmax.f32 %v4371, 0.0
      %v4666 = vmax.f32 %v4373, 0.0
      %v4667 = vmax.f32 %v4375, 0.0
      %v4668 = vmax.f32 %v4377, 0.0
      %v4669 = vmax.f32 %v4381, 0.0
      %v4670 = vmax.f32 %v4383, 0.0
      %v4671 = vmax.f32 %v4385, 0.0
      %v4672 = vmax.f32 %v4387, 0.0
      %v4673 = vmax.f32 %v4391, 0.0
      %v4674 = vmax.f32 %v4393, 0.0
      %v4675 = vmax.f32 %v4395, 0.0
      %v4676 = vmax.f32 %v4397, 0.0
      %v4677 = vmax.f32 %v4401, 0.0
      %v4678 = vmax.f32 %v4403, 0.0
      %v4679 = vmax.f32 %v4405, 0.0
      %v4680 = vmax.f32 %v4407, 0.0
      %v4681 = vmax.f32 %v4411, 0.0
      %v4682 = vmax.f32 %v4413, 0.0
      %v4683 = vmax.f32 %v4415, 0.0
      %v4684 = vmax.f32 %v4417, 0.0
      %v4685 = vmax.f32 %v4421, 0.0
      %v4686 = vmax.f32 %v4423, 0.0
      %v4687 = vmax.f32 %v4425, 0.0
      %v4688 = vmax.f32 %v4427, 0.0
      %v4689 = vmax.f32 %v4431, 0.0
      %v4690 = vmax.f32 %v4433, 0.0
      %v4691 = vmax.f32 %v4435, 0.0
      %v4692 = vmax.f32 %v4437, 0.0
      %v4693 = vmax.f32 %v4441, 0.0
      %v4694 = vmax.f32 %v4443, 0.0
      %v4695 = vmax.f32 %v4445, 0.0
      %v4696 = vmax.f32 %v4447, 0.0
      %v4697 = vmax.f32 %v4451, 0.0
      %v4698 = vmax.f32 %v4453, 0.0
      %v4699 = vmax.f32 %v4455, 0.0
      %v4700 = vmax.f32 %v4457, 0.0
      %v4701 = vmax.f32 %v4461, 0.0
      %v4702 = vmax.f32 %v4463, 0.0
      %v4703 = vmax.f32 %v4465, 0.0
      %v4704 = vmax.f32 %v4467, 0.0
      %v4705 = vmax.f32 %v4471, 0.0
      %v4706 = vmax.f32 %v4473, 0.0
      %v4707 = vmax.f32 %v4475, 0.0
      %v4708 = vmax.f32 %v4477, 0.0
      %v4709 = vmax.f32 %v4481, 0.0
      %v4710 = vmax.f32 %v4483, 0.0
      %v4711 = vmax.f32 %v4485, 0.0
      %v4712 = vmax.f32 %v4487, 0.0
      %v4713 = vmax.f32 %v4491, 0.0
      %v4714 = vmax.f32 %v4493, 0.0
      %v4715 = vmax.f32 %v4495, 0.0
      %v4716 = vmax.f32 %v4497, 0.0
      %v4717 = vmax.f32 %v4501, 0.0
      %v4718 = vmax.f32 %v4503, 0.0
      %v4719 = vmax.f32 %v4505, 0.0
      %v4720 = vmax.f32 %v4507, 0.0
      %v4721 = vmax.f32 %v4511, 0.0
      %v4722 = vmax.f32 %v4513, 0.0
      %v4723 = vmax.f32 %v4515, 0.0
      %v4724 = vmax.f32 %v4517, 0.0
      %v4725 = vmax.f32 %v4521, 0.0
      %v4726 = vmax.f32 %v4523, 0.0
      %v4727 = vmax.f32 %v4525, 0.0
      %v4728 = vmax.f32 %v4527, 0.0
      %v4729 = vmax.f32 %v4531, 0.0
      %v4730 = vmax.f32 %v4533, 0.0
      %v4731 = vmax.f32 %v4535, 0.0
      %v4732 = vmax.f32 %v4537, 0.0
      %v4733 = vmax.f32 %v4541, 0.0
      %v4734 = vmax.f32 %v4543, 0.0
      %v4735 = vmax.f32 %v4545, 0.0
      %v4736 = vmax.f32 %v4547, 0.0
      %v4737 = vmax.f32 %v4551, 0.0
      %v4738 = vmax.f32 %v4553, 0.0
      %v4739 = vmax.f32 %v4555, 0.0
      %v4740 = vmax.f32 %v4557, 0.0
      %v4741 = vmax.f32 %v4561, 0.0
      %v4742 = vmax.f32 %v4563, 0.0
      %v4743 = vmax.f32 %v4565, 0.0
      %v4744 = vmax.f32 %v4567, 0.0
      %v4745 = vmax.f32 %v4571, 0.0
      %v4746 = vmax.f32 %v4573, 0.0
      %v4747 = vmax.f32 %v4575, 0.0
      %v4748 = vmax.f32 %v4577, 0.0
      %v4749 = vmax.f32 %v4581, 0.0
      %v4750 = vmax.f32 %v4583, 0.0
      %v4751 = vmax.f32 %v4585, 0.0
      %v4752 = vmax.f32 %v4587, 0.0
      %v4753 = vmax.f32 %v4591, 0.0
      %v4754 = vmax.f32 %v4593, 0.0
      %v4755 = vmax.f32 %v4595, 0.0
      %v4756 = vmax.f32 %v4597, 0.0
      %v4757 = vmax.f32 %v4601, 0.0
      %v4758 = vmax.f32 %v4603, 0.0
      %v4759 = vmax.f32 %v4605, 0.0
      %v4760 = vmax.f32 %v4607, 0.0
      %v4761 = vmax.f32 %v4611, 0.0
      %v4762 = vmax.f32 %v4613, 0.0
      %v4763 = vmax.f32 %v4615, 0.0
      %v4764 = vmax.f32 %v4617, 0.0
      %v4765 = vmax.f32 %v4621, 0.0
      %v4766 = vmax.f32 %v4623, 0.0
      %v4767 = vmax.f32 %v4625, 0.0
      %v4768 = vmax.f32 %v4627, 0.0
      %v4769 = vmax.f32 %v4631, 0.0
      %v4770 = vmax.f32 %v4633, 0.0
      %v4771 = vmax.f32 %v4635, 0.0
      %v4772 = vmax.f32 %v4637, 0.0
      %v4773 = vmax.f32 %v4641, 0.0
      %v4774 = vmax.f32 %v4643, 0.0
      %v4775 = vmax.f32 %v4645, 0.0
      %v4776 = vmax.f32 %v4647, 0.0
      %v4777 = vpack.c.bf16 %v4651, %v4649
      %v4778 = vpack.c.bf16 %v4652, %v4650
      %v4779 = vpack.c.bf16 %v4655, %v4653
      %v4780 = vpack.c.bf16 %v4656, %v4654
      %v4781 = vpack.c.bf16 %v4659, %v4657
      %v4782 = vpack.c.bf16 %v4660, %v4658
      %v4783 = vpack.c.bf16 %v4663, %v4661
      %v4784 = vpack.c.bf16 %v4664, %v4662
      %v4785 = vpack.c.bf16 %v4667, %v4665
      %v4786 = vpack.c.bf16 %v4668, %v4666
      %v4787 = vpack.c.bf16 %v4671, %v4669
      %v4788 = vpack.c.bf16 %v4672, %v4670
      %v4789 = vpack.c.bf16 %v4675, %v4673
      %v4790 = vpack.c.bf16 %v4676, %v4674
      %v4791 = vpack.c.bf16 %v4679, %v4677
      %v4792 = vpack.c.bf16 %v4680, %v4678
      %v4793 = vpack.c.bf16 %v4683, %v4681
      %v4794 = vpack.c.bf16 %v4684, %v4682
      %v4795 = vpack.c.bf16 %v4687, %v4685
      %v4796 = vpack.c.bf16 %v4688, %v4686
      %v4797 = vpack.c.bf16 %v4691, %v4689
      %v4798 = vpack.c.bf16 %v4692, %v4690
      %v4799 = vpack.c.bf16 %v4695, %v4693
      %v4800 = vpack.c.bf16 %v4696, %v4694
      %v4801 = vpack.c.bf16 %v4699, %v4697
      %v4802 = vpack.c.bf16 %v4700, %v4698
      %v4803 = vpack.c.bf16 %v4703, %v4701
      %v4804 = vpack.c.bf16 %v4704, %v4702
      %v4805 = vpack.c.bf16 %v4707, %v4705
      %v4806 = vpack.c.bf16 %v4708, %v4706
      %v4807 = vpack.c.bf16 %v4711, %v4709
      %v4808 = vpack.c.bf16 %v4712, %v4710
      %v4809 = vpack.c.bf16 %v4715, %v4713
      %v4810 = vpack.c.bf16 %v4716, %v4714
      %v4811 = vpack.c.bf16 %v4719, %v4717
      %v4812 = vpack.c.bf16 %v4720, %v4718
      %v4813 = vpack.c.bf16 %v4723, %v4721
      %v4814 = vpack.c.bf16 %v4724, %v4722
      %v4815 = vpack.c.bf16 %v4727, %v4725
      %v4816 = vpack.c.bf16 %v4728, %v4726
      %v4817 = vpack.c.bf16 %v4731, %v4729
      %v4818 = vpack.c.bf16 %v4732, %v4730
      %v4819 = vpack.c.bf16 %v4735, %v4733
      %v4820 = vpack.c.bf16 %v4736, %v4734
      %v4821 = vpack.c.bf16 %v4739, %v4737
      %v4822 = vpack.c.bf16 %v4740, %v4738
      %v4823 = vpack.c.bf16 %v4743, %v4741
      %v4824 = vpack.c.bf16 %v4744, %v4742
      %v4825 = vpack.c.bf16 %v4747, %v4745
      %v4826 = vpack.c.bf16 %v4748, %v4746
      %v4827 = vpack.c.bf16 %v4751, %v4749
      %v4828 = vpack.c.bf16 %v4752, %v4750
      %v4829 = vpack.c.bf16 %v4755, %v4753
      %v4830 = vpack.c.bf16 %v4756, %v4754
      %v4831 = vpack.c.bf16 %v4759, %v4757
      %v4832 = vpack.c.bf16 %v4760, %v4758
      %v4833 = vpack.c.bf16 %v4763, %v4761
      %v4834 = vpack.c.bf16 %v4764, %v4762
      %v4835 = vpack.c.bf16 %v4767, %v4765
      %v4836 = vpack.c.bf16 %v4768, %v4766
      %v4837 = vpack.c.bf16 %v4771, %v4769
      %v4838 = vpack.c.bf16 %v4772, %v4770
      %v4839 = vpack.c.bf16 %v4775, %v4773
      %v4840 = vpack.c.bf16 %v4776, %v4774
      %v4841 = vld [vmem:[%s13] sm:$0xf]
      %v4842 = vld [vmem:[%s13 + $0x4] sm:$0xf]
      %v4843 = vld [vmem:[%s13 + $0x8] sm:$0xf]
      %v4844 = vld [vmem:[%s13 + $0xc] sm:$0xf]
      %v4845 = vld [vmem:[%s13 + $0x10] sm:$0xf]
      %v4846 = vld [vmem:[%s13 + $0x14] sm:$0xf]
      %v4847 = vld [vmem:[%s13 + $0x18] sm:$0xf]
      %v4848 = vld [vmem:[%s13 + $0x1c] sm:$0xf]
      %v4849 = vld [vmem:[%s13 + $0x20] sm:$0xf]
      %v4850 = vld [vmem:[%s13 + $0x24] sm:$0xf]
      %v4851 = vld [vmem:[%s13 + $0x28] sm:$0xf]
      %v4852 = vld [vmem:[%s13 + $0x2c] sm:$0xf]
      %v4853 = vld [vmem:[%s13 + $0x30] sm:$0xf]
      %v4854 = vld [vmem:[%s13 + $0x34] sm:$0xf]
      %v4855 = vld [vmem:[%s13 + $0x38] sm:$0xf]
      %v4856 = vld [vmem:[%s13 + $0x3c] sm:$0xf]
      %v4857 = vld [vmem:[%s13 + $0x40] sm:$0xf]
      %v4858 = vld [vmem:[%s13 + $0x44] sm:$0xf]
      %v4859 = vld [vmem:[%s13 + $0x48] sm:$0xf]
      %v4860 = vld [vmem:[%s13 + $0x4c] sm:$0xf]
      %v4861 = vld [vmem:[%s13 + $0x50] sm:$0xf]
      %v4862 = vld [vmem:[%s13 + $0x54] sm:$0xf]
      %v4863 = vld [vmem:[%s13 + $0x58] sm:$0xf]
      %v4864 = vld [vmem:[%s13 + $0x5c] sm:$0xf]
      %v4865 = vld [vmem:[%s13 + $0x60] sm:$0xf]
      %v4866 = vld [vmem:[%s13 + $0x64] sm:$0xf]
      %v4867 = vld [vmem:[%s13 + $0x68] sm:$0xf]
      %v4868 = vld [vmem:[%s13 + $0x6c] sm:$0xf]
      %v4869 = vld [vmem:[%s13 + $0x70] sm:$0xf]
      %v4870 = vld [vmem:[%s13 + $0x74] sm:$0xf]
      %v4871 = vld [vmem:[%s13 + $0x78] sm:$0xf]
      %v4872 = vld [vmem:[%s13 + $0x7c] sm:$0xf]
      %v4873 = vld [vmem:[%s14] sm:$0x1]
      %v4875 = vlaneseq
      %v4876 = vshrl.u32 %v4875, 7
      %v4877 = vsub.s32 0, %v4876
      %v4878 = vrot.slane %v4873, %v4877
      %v4912 = vunpack.c.l.b16 %v4841
      %v4913 = vunpack.c.l.b16 %v4842
      %v4914 = vunpack.c.l.b16 %v4843
      %v4915 = vunpack.c.l.b16 %v4844
      %v4916 = vunpack.c.l.b16 %v4845
      %v4917 = vunpack.c.l.b16 %v4846
      %v4918 = vunpack.c.l.b16 %v4847
      %v4919 = vunpack.c.l.b16 %v4848
      %v4920 = vunpack.c.l.b16 %v4849
      %v4921 = vunpack.c.l.b16 %v4850
      %v4922 = vunpack.c.l.b16 %v4851
      %v4923 = vunpack.c.l.b16 %v4852
      %v4924 = vunpack.c.l.b16 %v4853
      %v4925 = vunpack.c.l.b16 %v4854
      %v4926 = vunpack.c.l.b16 %v4855
      %v4927 = vunpack.c.l.b16 %v4856
      %v4928 = vunpack.c.l.b16 %v4857
      %v4929 = vunpack.c.l.b16 %v4858
      %v4930 = vunpack.c.l.b16 %v4859
      %v4931 = vunpack.c.l.b16 %v4860
      %v4932 = vunpack.c.l.b16 %v4861
      %v4933 = vunpack.c.l.b16 %v4862
      %v4934 = vunpack.c.l.b16 %v4863
      %v4935 = vunpack.c.l.b16 %v4864
      %v4936 = vunpack.c.l.b16 %v4865
      %v4937 = vunpack.c.l.b16 %v4866
      %v4938 = vunpack.c.l.b16 %v4867
      %v4939 = vunpack.c.l.b16 %v4868
      %v4940 = vunpack.c.l.b16 %v4869
      %v4941 = vunpack.c.l.b16 %v4870
      %v4942 = vunpack.c.l.b16 %v4871
      %v4943 = vunpack.c.l.b16 %v4872
      %v4944 = vpack.c.b16 %v4913, %v4912
      %v4945 = vpack.c.b16 %v4915, %v4914
      %v4946 = vpack.c.b16 %v4917, %v4916
      %v4947 = vpack.c.b16 %v4919, %v4918
      %v4948 = vpack.c.b16 %v4921, %v4920
      %v4949 = vpack.c.b16 %v4923, %v4922
      %v4950 = vpack.c.b16 %v4925, %v4924
      %v4951 = vpack.c.b16 %v4927, %v4926
      %v4952 = vpack.c.b16 %v4929, %v4928
      %v4953 = vpack.c.b16 %v4931, %v4930
      %v4954 = vpack.c.b16 %v4933, %v4932
      %v4955 = vpack.c.b16 %v4935, %v4934
      %v4956 = vpack.c.b16 %v4937, %v4936
      %v4957 = vpack.c.b16 %v4939, %v4938
      %v4958 = vpack.c.b16 %v4941, %v4940
      %v4959 = vpack.c.b16 %v4943, %v4942
      %4976 = vmatprep.subr.bf16.mxu0 0
      %4977 = vmatpush1.bf16.msra.mxu0 %v4944
      %4978 = vmatprep.subr.bf16.mxu0 0
      %4979 = vmatpush1.bf16.msra.mxu0 %v4945
      %4980 = vmatprep.subr.bf16.mxu0 0
      %4981 = vmatpush1.bf16.msra.mxu0 %v4946
      %4982 = vmatprep.subr.bf16.mxu0 0
      %4983 = vmatpush1.bf16.msra.mxu0 %v4947
      %4984 = vmatprep.subr.bf16.mxu0 0
      %4985 = vmatpush1.bf16.msra.mxu0 %v4948
      %4986 = vmatprep.subr.bf16.mxu0 0
      %4987 = vmatpush1.bf16.msra.mxu0 %v4949
      %4988 = vmatprep.subr.bf16.mxu0 0
      %4989 = vmatpush1.bf16.msra.mxu0 %v4950
      %4990 = vmatprep.subr.bf16.mxu0 0
      %4991 = vmatpush1.bf16.msra.mxu0 %v4951
      %4992 = vmatprep.subr.bf16.mxu0 0
      %4993 = vmatpush1.bf16.msra.mxu0 %v4952
      %4994 = vmatprep.subr.bf16.mxu0 0
      %4995 = vmatpush1.bf16.msra.mxu0 %v4953
      %4996 = vmatprep.subr.bf16.mxu0 0
      %4997 = vmatpush1.bf16.msra.mxu0 %v4954
      %4998 = vmatprep.subr.bf16.mxu0 0
      %4999 = vmatpush1.bf16.msra.mxu0 %v4955
      %5000 = vmatprep.subr.bf16.mxu0 0
      %5001 = vmatpush1.bf16.msra.mxu0 %v4956
      %5002 = vmatprep.subr.bf16.mxu0 0
      %5003 = vmatpush1.bf16.msra.mxu0 %v4957
      %5004 = vmatprep.subr.bf16.mxu0 0
      %5005 = vmatpush1.bf16.msra.mxu0 %v4958
      %5006 = vmatprep.subr.bf16.mxu0 0
      %5007 = vmatpush1.bf16.msra.mxu0 %v4959
      %5008 = vmatprep.mubr.bf16.mxu0 %v4778
      %5009 = vmatmul.mubr.bf16.gmra.mrb[0].mxu0 %v4777
      %v5010 = vpop.f32.mrb[0].mxu0
      %v5011 = vadd.f32 %v4878, %v5010
      %v5012 = vpop.f32.mrb[0].mxu0
      %v5013 = vpop.f32.mrb[0].mxu0
      %v5014 = vadd.f32 %v4878, %v5013
      %v5015 = vpop.f32.mrb[0].mxu0
      %5016 = vmatprep.mubr.bf16.mxu0 %v4780
      %5017 = vmatmul.mubr.bf16.gmra.mrb[0].mxu0 %v4779
      %v5018 = vpop.f32.mrb[0].mxu0
      %v5019 = vadd.f32 %v4878, %v5018
      %v5020 = vpop.f32.mrb[0].mxu0
      %v5021 = vpop.f32.mrb[0].mxu0
      %v5022 = vadd.f32 %v4878, %v5021
      %v5023 = vpop.f32.mrb[0].mxu0
      %5024 = vmatprep.mubr.bf16.mxu0 %v4782
      %5025 = vmatmul.mubr.bf16.gmra.mrb[0].mxu0 %v4781
      %v5026 = vpop.f32.mrb[0].mxu0
      %v5027 = vadd.f32 %v4878, %v5026
      %v5028 = vpop.f32.mrb[0].mxu0
      %v5029 = vpop.f32.mrb[0].mxu0
      %v5030 = vadd.f32 %v4878, %v5029
      %v5031 = vpop.f32.mrb[0].mxu0
      %5032 = vmatprep.mubr.bf16.mxu0 %v4784
      %5033 = vmatmul.mubr.bf16.gmra.mrb[0].mxu0 %v4783
      %v5034 = vpop.f32.mrb[0].mxu0
      %v5035 = vadd.f32 %v4878, %v5034
      %v5036 = vpop.f32.mrb[0].mxu0
      %v5037 = vpop.f32.mrb[0].mxu0
      %v5038 = vadd.f32 %v4878, %v5037
      %v5039 = vpop.f32.mrb[0].mxu0
      %5040 = vmatprep.mubr.bf16.mxu0 %v4786
      %5041 = vmatmul.mubr.bf16.gmra.mrb[0].mxu0 %v4785
      %v5042 = vpop.f32.mrb[0].mxu0
      %v5043 = vadd.f32 %v4878, %v5042
      %v5044 = vpop.f32.mrb[0].mxu0
      %v5045 = vpop.f32.mrb[0].mxu0
      %v5046 = vadd.f32 %v4878, %v5045
      %v5047 = vpop.f32.mrb[0].mxu0
      %5048 = vmatprep.mubr.bf16.mxu0 %v4788
      %5049 = vmatmul.mubr.bf16.gmra.mrb[0].mxu0 %v4787
      %v5050 = vpop.f32.mrb[0].mxu0
      %v5051 = vadd.f32 %v4878, %v5050
      %v5052 = vpop.f32.mrb[0].mxu0
      %v5053 = vpop.f32.mrb[0].mxu0
      %v5054 = vadd.f32 %v4878, %v5053
      %v5055 = vpop.f32.mrb[0].mxu0
      %5056 = vmatprep.mubr.bf16.mxu0 %v4790
      %5057 = vmatmul.mubr.bf16.gmra.mrb[0].mxu0 %v4789
      %v5058 = vpop.f32.mrb[0].mxu0
      %v5059 = vadd.f32 %v4878, %v5058
      %v5060 = vpop.f32.mrb[0].mxu0
      %v5061 = vpop.f32.mrb[0].mxu0
      %v5062 = vadd.f32 %v4878, %v5061
      %v5063 = vpop.f32.mrb[0].mxu0
      %5064 = vmatprep.mubr.bf16.mxu0 %v4792
      %5065 = vmatmul.mubr.bf16.gmra.mrb[0].mxu0 %v4791
      %v5066 = vpop.f32.mrb[0].mxu0
      %v5067 = vadd.f32 %v4878, %v5066
      %v5068 = vpop.f32.mrb[0].mxu0
      %v5069 = vpop.f32.mrb[0].mxu0
      %v5070 = vadd.f32 %v4878, %v5069
      %v5071 = vpop.f32.mrb[0].mxu0
      %5072 = vmatprep.mubr.bf16.mxu0 %v4794
      %5073 = vmatmul.mubr.bf16.gmra.mrb[0].mxu0 %v4793
      %v5074 = vpop.f32.mrb[0].mxu0
      %v5075 = vadd.f32 %v4878, %v5074
      %v5076 = vpop.f32.mrb[0].mxu0
      %v5077 = vpop.f32.mrb[0].mxu0
      %v5078 = vadd.f32 %v4878, %v5077
      %v5079 = vpop.f32.mrb[0].mxu0
      %5080 = vmatprep.mubr.bf16.mxu0 %v4796
      %5081 = vmatmul.mubr.bf16.gmra.mrb[0].mxu0 %v4795
      %v5082 = vpop.f32.mrb[0].mxu0
      %v5083 = vadd.f32 %v4878, %v5082
      %v5084 = vpop.f32.mrb[0].mxu0
      %v5085 = vpop.f32.mrb[0].mxu0
      %v5086 = vadd.f32 %v4878, %v5085
      %v5087 = vpop.f32.mrb[0].mxu0
      %5088 = vmatprep.mubr.bf16.mxu0 %v4798
      %5089 = vmatmul.mubr.bf16.gmra.mrb[0].mxu0 %v4797
      %v5090 = vpop.f32.mrb[0].mxu0
      %v5091 = vadd.f32 %v4878, %v5090
      %v5092 = vpop.f32.mrb[0].mxu0
      %v5093 = vpop.f32.mrb[0].mxu0
      %v5094 = vadd.f32 %v4878, %v5093
      %v5095 = vpop.f32.mrb[0].mxu0
      %5096 = vmatprep.mubr.bf16.mxu0 %v4800
      %5097 = vmatmul.mubr.bf16.gmra.mrb[0].mxu0 %v4799
      %v5098 = vpop.f32.mrb[0].mxu0
      %v5099 = vadd.f32 %v4878, %v5098
      %v5100 = vpop.f32.mrb[0].mxu0
      %v5101 = vpop.f32.mrb[0].mxu0
      %v5102 = vadd.f32 %v4878, %v5101
      %v5103 = vpop.f32.mrb[0].mxu0
      %5104 = vmatprep.mubr.bf16.mxu0 %v4802
      %5105 = vmatmul.mubr.bf16.gmra.mrb[0].mxu0 %v4801
      %v5106 = vpop.f32.mrb[0].mxu0
      %v5107 = vadd.f32 %v4878, %v5106
      %v5108 = vpop.f32.mrb[0].mxu0
      %v5109 = vpop.f32.mrb[0].mxu0
      %v5110 = vadd.f32 %v4878, %v5109
      %v5111 = vpop.f32.mrb[0].mxu0
      %5112 = vmatprep.mubr.bf16.mxu0 %v4804
      %5113 = vmatmul.mubr.bf16.gmra.mrb[0].mxu0 %v4803
      %v5114 = vpop.f32.mrb[0].mxu0
      %v5115 = vadd.f32 %v4878, %v5114
      %v5116 = vpop.f32.mrb[0].mxu0
      %v5117 = vpop.f32.mrb[0].mxu0
      %v5118 = vadd.f32 %v4878, %v5117
      %v5119 = vpop.f32.mrb[0].mxu0
      %5120 = vmatprep.mubr.bf16.mxu0 %v4806
      %5121 = vmatmul.mubr.bf16.gmra.mrb[0].mxu0 %v4805
      %v5122 = vpop.f32.mrb[0].mxu0
      %v5123 = vadd.f32 %v4878, %v5122
      %v5124 = vpop.f32.mrb[0].mxu0
      %v5125 = vpop.f32.mrb[0].mxu0
      %v5126 = vadd.f32 %v4878, %v5125
      %v5127 = vpop.f32.mrb[0].mxu0
      %5128 = vmatprep.mubr.bf16.mxu0 %v4808
      %5129 = vmatmul.mubr.bf16.gmra.mrb[0].mxu0 %v4807
      %v5130 = vpop.f32.mrb[0].mxu0
      %v5131 = vadd.f32 %v4878, %v5130
      %v5132 = vpop.f32.mrb[0].mxu0
      %v5133 = vpop.f32.mrb[0].mxu0
      %v5134 = vadd.f32 %v4878, %v5133
      %v5135 = vpop.f32.mrb[0].mxu0
      %5136 = vmatprep.mubr.bf16.mxu0 %v4810
      %5137 = vmatmul.mubr.bf16.gmra.mrb[0].mxu0 %v4809
      %v5138 = vpop.f32.mrb[0].mxu0
      %v5139 = vadd.f32 %v4878, %v5138
      %v5140 = vpop.f32.mrb[0].mxu0
      %v5141 = vpop.f32.mrb[0].mxu0
      %v5142 = vadd.f32 %v4878, %v5141
      %v5143 = vpop.f32.mrb[0].mxu0
      %5144 = vmatprep.mubr.bf16.mxu0 %v4812
      %5145 = vmatmul.mubr.bf16.gmra.mrb[0].mxu0 %v4811
      %v5146 = vpop.f32.mrb[0].mxu0
      %v5147 = vadd.f32 %v4878, %v5146
      %v5148 = vpop.f32.mrb[0].mxu0
      %v5149 = vpop.f32.mrb[0].mxu0
      %v5150 = vadd.f32 %v4878, %v5149
      %v5151 = vpop.f32.mrb[0].mxu0
      %5152 = vmatprep.mubr.bf16.mxu0 %v4814
      %5153 = vmatmul.mubr.bf16.gmra.mrb[0].mxu0 %v4813
      %v5154 = vpop.f32.mrb[0].mxu0
      %v5155 = vadd.f32 %v4878, %v5154
      %v5156 = vpop.f32.mrb[0].mxu0
      %v5157 = vpop.f32.mrb[0].mxu0
      %v5158 = vadd.f32 %v4878, %v5157
      %v5159 = vpop.f32.mrb[0].mxu0
      %5160 = vmatprep.mubr.bf16.mxu0 %v4816
      %5161 = vmatmul.mubr.bf16.gmra.mrb[0].mxu0 %v4815
      %v5162 = vpop.f32.mrb[0].mxu0
      %v5163 = vadd.f32 %v4878, %v5162
      %v5164 = vpop.f32.mrb[0].mxu0
      %v5165 = vpop.f32.mrb[0].mxu0
      %v5166 = vadd.f32 %v4878, %v5165
      %v5167 = vpop.f32.mrb[0].mxu0
      %5168 = vmatprep.mubr.bf16.mxu0 %v4818
      %5169 = vmatmul.mubr.bf16.gmra.mrb[0].mxu0 %v4817
      %v5170 = vpop.f32.mrb[0].mxu0
      %v5171 = vadd.f32 %v4878, %v5170
      %v5172 = vpop.f32.mrb[0].mxu0
      %v5173 = vpop.f32.mrb[0].mxu0
      %v5174 = vadd.f32 %v4878, %v5173
      %v5175 = vpop.f32.mrb[0].mxu0
      %5176 = vmatprep.mubr.bf16.mxu0 %v4820
      %5177 = vmatmul.mubr.bf16.gmra.mrb[0].mxu0 %v4819
      %v5178 = vpop.f32.mrb[0].mxu0
      %v5179 = vadd.f32 %v4878, %v5178
      %v5180 = vpop.f32.mrb[0].mxu0
      %v5181 = vpop.f32.mrb[0].mxu0
      %v5182 = vadd.f32 %v4878, %v5181
      %v5183 = vpop.f32.mrb[0].mxu0
      %5184 = vmatprep.mubr.bf16.mxu0 %v4822
      %5185 = vmatmul.mubr.bf16.gmra.mrb[0].mxu0 %v4821
      %v5186 = vpop.f32.mrb[0].mxu0
      %v5187 = vadd.f32 %v4878, %v5186
      %v5188 = vpop.f32.mrb[0].mxu0
      %v5189 = vpop.f32.mrb[0].mxu0
      %v5190 = vadd.f32 %v4878, %v5189
      %v5191 = vpop.f32.mrb[0].mxu0
      %5192 = vmatprep.mubr.bf16.mxu0 %v4824
      %5193 = vmatmul.mubr.bf16.gmra.mrb[0].mxu0 %v4823
      %v5194 = vpop.f32.mrb[0].mxu0
      %v5195 = vadd.f32 %v4878, %v5194
      %v5196 = vpop.f32.mrb[0].mxu0
      %v5197 = vpop.f32.mrb[0].mxu0
      %v5198 = vadd.f32 %v4878, %v5197
      %v5199 = vpop.f32.mrb[0].mxu0
      %5200 = vmatprep.mubr.bf16.mxu0 %v4826
      %5201 = vmatmul.mubr.bf16.gmra.mrb[0].mxu0 %v4825
      %v5202 = vpop.f32.mrb[0].mxu0
      %v5203 = vadd.f32 %v4878, %v5202
      %v5204 = vpop.f32.mrb[0].mxu0
      %v5205 = vpop.f32.mrb[0].mxu0
      %v5206 = vadd.f32 %v4878, %v5205
      %v5207 = vpop.f32.mrb[0].mxu0
      %5208 = vmatprep.mubr.bf16.mxu0 %v4828
      %5209 = vmatmul.mubr.bf16.gmra.mrb[0].mxu0 %v4827
      %v5210 = vpop.f32.mrb[0].mxu0
      %v5211 = vadd.f32 %v4878, %v5210
      %v5212 = vpop.f32.mrb[0].mxu0
      %v5213 = vpop.f32.mrb[0].mxu0
      %v5214 = vadd.f32 %v4878, %v5213
      %v5215 = vpop.f32.mrb[0].mxu0
      %5216 = vmatprep.mubr.bf16.mxu0 %v4830
      %5217 = vmatmul.mubr.bf16.gmra.mrb[0].mxu0 %v4829
      %v5218 = vpop.f32.mrb[0].mxu0
      %v5219 = vadd.f32 %v4878, %v5218
      %v5220 = vpop.f32.mrb[0].mxu0
      %v5221 = vpop.f32.mrb[0].mxu0
      %v5222 = vadd.f32 %v4878, %v5221
      %v5223 = vpop.f32.mrb[0].mxu0
      %5224 = vmatprep.mubr.bf16.mxu0 %v4832
      %5225 = vmatmul.mubr.bf16.gmra.mrb[0].mxu0 %v4831
      %v5226 = vpop.f32.mrb[0].mxu0
      %v5227 = vadd.f32 %v4878, %v5226
      %v5228 = vpop.f32.mrb[0].mxu0
      %v5229 = vpop.f32.mrb[0].mxu0
      %v5230 = vadd.f32 %v4878, %v5229
      %v5231 = vpop.f32.mrb[0].mxu0
      %5232 = vmatprep.mubr.bf16.mxu0 %v4834
      %5233 = vmatmul.mubr.bf16.gmra.mrb[0].mxu0 %v4833
      %v5234 = vpop.f32.mrb[0].mxu0
      %v5235 = vadd.f32 %v4878, %v5234
      %v5236 = vpop.f32.mrb[0].mxu0
      %v5237 = vpop.f32.mrb[0].mxu0
      %v5238 = vadd.f32 %v4878, %v5237
      %v5239 = vpop.f32.mrb[0].mxu0
      %5240 = vmatprep.mubr.bf16.mxu0 %v4836
      %5241 = vmatmul.mubr.bf16.gmra.mrb[0].mxu0 %v4835
      %v5242 = vpop.f32.mrb[0].mxu0
      %v5243 = vadd.f32 %v4878, %v5242
      %v5244 = vpop.f32.mrb[0].mxu0
      %v5245 = vpop.f32.mrb[0].mxu0
      %v5246 = vadd.f32 %v4878, %v5245
      %v5247 = vpop.f32.mrb[0].mxu0
      %5248 = vmatprep.mubr.bf16.mxu0 %v4838
      %5249 = vmatmul.mubr.bf16.gmra.mrb[0].mxu0 %v4837
      %v5250 = vpop.f32.mrb[0].mxu0
      %v5251 = vadd.f32 %v4878, %v5250
      %v5252 = vpop.f32.mrb[0].mxu0
      %v5253 = vpop.f32.mrb[0].mxu0
      %v5254 = vadd.f32 %v4878, %v5253
      %v5255 = vpop.f32.mrb[0].mxu0
      %5256 = vmatprep.mubr.bf16.mxu0 %v4840
      %5257 = vmatmul.mubr.bf16.gmra.mrb[0].mxu0 %v4839
      %v5258 = vpop.f32.mrb[0].mxu0
      %v5259 = vadd.f32 %v4878, %v5258
      %v5260 = vpop.f32.mrb[0].mxu0
      %v5261 = vpop.f32.mrb[0].mxu0
      %v5262 = vadd.f32 %v4878, %v5261
      %v5263 = vpop.f32.mrb[0].mxu0
      %5264 = vdwg.mxu0
      %v5265 = vadd.f32 %v4092, %v5011
      %v5266 = vadd.f32 %v4093, %v5014
      %v5267 = vadd.f32 %v4094, %v5019
      %v5268 = vadd.f32 %v4095, %v5022
      %v5269 = vadd.f32 %v4096, %v5027
      %v5270 = vadd.f32 %v4097, %v5030
      %v5271 = vadd.f32 %v4098, %v5035
      %v5272 = vadd.f32 %v4099, %v5038
      %v5273 = vadd.f32 %v4100, %v5043
      %v5274 = vadd.f32 %v4101, %v5046
      %v5275 = vadd.f32 %v4102, %v5051
      %v5276 = vadd.f32 %v4103, %v5054
      %v5277 = vadd.f32 %v4104, %v5059
      %v5278 = vadd.f32 %v4105, %v5062
      %v5279 = vadd.f32 %v4106, %v5067
      %v5280 = vadd.f32 %v4107, %v5070
      %v5281 = vadd.f32 %v4108, %v5075
      %v5282 = vadd.f32 %v4109, %v5078
      %v5283 = vadd.f32 %v4110, %v5083
      %v5284 = vadd.f32 %v4111, %v5086
      %v5285 = vadd.f32 %v4112, %v5091
      %v5286 = vadd.f32 %v4113, %v5094
      %v5287 = vadd.f32 %v4114, %v5099
      %v5288 = vadd.f32 %v4115, %v5102
      %v5289 = vadd.f32 %v4116, %v5107
      %v5290 = vadd.f32 %v4117, %v5110
      %v5291 = vadd.f32 %v4118, %v5115
      %v5292 = vadd.f32 %v4119, %v5118
      %v5293 = vadd.f32 %v4120, %v5123
      %v5294 = vadd.f32 %v4121, %v5126
      %v5295 = vadd.f32 %v4122, %v5131
      %v5296 = vadd.f32 %v4123, %v5134
      %v5297 = vadd.f32 %v4124, %v5139
      %v5298 = vadd.f32 %v4125, %v5142
      %v5299 = vadd.f32 %v4126, %v5147
      %v5300 = vadd.f32 %v4127, %v5150
      %v5301 = vadd.f32 %v4128, %v5155
      %v5302 = vadd.f32 %v4129, %v5158
      %v5303 = vadd.f32 %v4130, %v5163
      %v5304 = vadd.f32 %v4131, %v5166
      %v5305 = vadd.f32 %v4132, %v5171
      %v5306 = vadd.f32 %v4133, %v5174
      %v5307 = vadd.f32 %v4134, %v5179
      %v5308 = vadd.f32 %v4135, %v5182
      %v5309 = vadd.f32 %v4136, %v5187
      %v5310 = vadd.f32 %v4137, %v5190
      %v5311 = vadd.f32 %v4138, %v5195
      %v5312 = vadd.f32 %v4139, %v5198
      %v5313 = vadd.f32 %v4140, %v5203
      %v5314 = vadd.f32 %v4141, %v5206
      %v5315 = vadd.f32 %v4142, %v5211
      %v5316 = vadd.f32 %v4143, %v5214
      %v5317 = vadd.f32 %v4144, %v5219
      %v5318 = vadd.f32 %v4145, %v5222
      %v5319 = vadd.f32 %v4146, %v5227
      %v5320 = vadd.f32 %v4147, %v5230
      %v5321 = vadd.f32 %v4148, %v5235
      %v5322 = vadd.f32 %v4149, %v5238
      %v5323 = vadd.f32 %v4150, %v5243
      %v5324 = vadd.f32 %v4151, %v5246
      %v5325 = vadd.f32 %v4152, %v5251
      %v5326 = vadd.f32 %v4153, %v5254
      %v5327 = vadd.f32 %v4154, %v5259
      %v5328 = vadd.f32 %v4155, %v5262
      %5329 = vst [vmem:[%s612] sm:$0xff] %v5265
      %5330 = vst [vmem:[%s612 + $0x8] sm:$0xff] %v5266
      %5331 = vst [vmem:[%s612 + $0x10] sm:$0xff] %v5267
      %5332 = vst [vmem:[%s612 + $0x18] sm:$0xff] %v5268
      %5333 = vst [vmem:[%s612 + $0x20] sm:$0xff] %v5269
      %5334 = vst [vmem:[%s612 + $0x28] sm:$0xff] %v5270
      %5335 = vst [vmem:[%s612 + $0x30] sm:$0xff] %v5271
      %5336 = vst [vmem:[%s612 + $0x38] sm:$0xff] %v5272
      %5337 = vst [vmem:[%s612 + $0x40] sm:$0xff] %v5273
      %5338 = vst [vmem:[%s612 + $0x48] sm:$0xff] %v5274
      %5339 = vst [vmem:[%s612 + $0x50] sm:$0xff] %v5275
      %5340 = vst [vmem:[%s612 + $0x58] sm:$0xff] %v5276
      %5341 = vst [vmem:[%s612 + $0x60] sm:$0xff] %v5277
      %5342 = vst [vmem:[%s612 + $0x68] sm:$0xff] %v5278
      %5343 = vst [vmem:[%s612 + $0x70] sm:$0xff] %v5279
      %5344 = vst [vmem:[%s612 + $0x78] sm:$0xff] %v5280
      %5345 = vst [vmem:[%s612 + $0x80] sm:$0xff] %v5281
      %5346 = vst [vmem:[%s612 + $0x88] sm:$0xff] %v5282
      %5347 = vst [vmem:[%s612 + $0x90] sm:$0xff] %v5283
      %5348 = vst [vmem:[%s612 + $0x98] sm:$0xff] %v5284
      %5349 = vst [vmem:[%s612 + $0xa0] sm:$0xff] %v5285
      %5350 = vst [vmem:[%s612 + $0xa8] sm:$0xff] %v5286
      %5351 = vst [vmem:[%s612 + $0xb0] sm:$0xff] %v5287
      %5352 = vst [vmem:[%s612 + $0xb8] sm:$0xff] %v5288
      %5353 = vst [vmem:[%s612 + $0xc0] sm:$0xff] %v5289
      %5354 = vst [vmem:[%s612 + $0xc8] sm:$0xff] %v5290
      %5355 = vst [vmem:[%s612 + $0xd0] sm:$0xff] %v5291
      %5356 = vst [vmem:[%s612 + $0xd8] sm:$0xff] %v5292
      %5357 = vst [vmem:[%s612 + $0xe0] sm:$0xff] %v5293
      %5358 = vst [vmem:[%s612 + $0xe8] sm:$0xff] %v5294
      %5359 = vst [vmem:[%s612 + $0xf0] sm:$0xff] %v5295
      %5360 = vst [vmem:[%s612 + $0xf8] sm:$0xff] %v5296
      %5361 = vst [vmem:[%s612 + $0x100] sm:$0xff] %v5297
      %5362 = vst [vmem:[%s612 + $0x108] sm:$0xff] %v5298
      %5363 = vst [vmem:[%s612 + $0x110] sm:$0xff] %v5299
      %5364 = vst [vmem:[%s612 + $0x118] sm:$0xff] %v5300
      %5365 = vst [vmem:[%s612 + $0x120] sm:$0xff] %v5301
      %5366 = vst [vmem:[%s612 + $0x128] sm:$0xff] %v5302
      %5367 = vst [vmem:[%s612 + $0x130] sm:$0xff] %v5303
      %5368 = vst [vmem:[%s612 + $0x138] sm:$0xff] %v5304
      %5369 = vst [vmem:[%s612 + $0x140] sm:$0xff] %v5305
      %5370 = vst [vmem:[%s612 + $0x148] sm:$0xff] %v5306
      %5371 = vst [vmem:[%s612 + $0x150] sm:$0xff] %v5307
      %5372 = vst [vmem:[%s612 + $0x158] sm:$0xff] %v5308
      %5373 = vst [vmem:[%s612 + $0x160] sm:$0xff] %v5309
      %5374 = vst [vmem:[%s612 + $0x168] sm:$0xff] %v5310
      %5375 = vst [vmem:[%s612 + $0x170] sm:$0xff] %v5311
      %5376 = vst [vmem:[%s612 + $0x178] sm:$0xff] %v5312
      %5377 = vst [vmem:[%s612 + $0x180] sm:$0xff] %v5313
      %5378 = vst [vmem:[%s612 + $0x188] sm:$0xff] %v5314
      %5379 = vst [vmem:[%s612 + $0x190] sm:$0xff] %v5315
      %5380 = vst [vmem:[%s612 + $0x198] sm:$0xff] %v5316
      %5381 = vst [vmem:[%s612 + $0x1a0] sm:$0xff] %v5317
      %5382 = vst [vmem:[%s612 + $0x1a8] sm:$0xff] %v5318
      %5383 = vst [vmem:[%s612 + $0x1b0] sm:$0xff] %v5319
      %5384 = vst [vmem:[%s612 + $0x1b8] sm:$0xff] %v5320
      %5385 = vst [vmem:[%s612 + $0x1c0] sm:$0xff] %v5321
      %5386 = vst [vmem:[%s612 + $0x1c8] sm:$0xff] %v5322
      %5387 = vst [vmem:[%s612 + $0x1d0] sm:$0xff] %v5323
      %5388 = vst [vmem:[%s612 + $0x1d8] sm:$0xff] %v5324
      %5389 = vst [vmem:[%s612 + $0x1e0] sm:$0xff] %v5325
      %5390 = vst [vmem:[%s612 + $0x1e8] sm:$0xff] %v5326
      %5391 = vst [vmem:[%s612 + $0x1f0] sm:$0xff] %v5327
      %5392 = vst [vmem:[%s612 + $0x1f8] sm:$0xff] %v5328
      %s5393 = smul.u32 64, %s29
      %p5394 = scmp.lt.s32.totalorder %s5393, 255
      %s5395 = scalar_select %p5394, %s5393, 255
      %s5396 = smul.addr %s5395, 8
      %s5397 = scalar_lea.vmem %s15, %s5396
      %s5398 = smul.u32 64, %s29
      %p5399 = scmp.lt.s32.totalorder %s5398, 255
      %s5400 = scalar_select %p5399, %s5398, 255
      %s5401 = smul.addr %s5400, 4
      %s5402 = scalar_lea.vmem %s16, %s5401
      %s5403 = smul.u32 64, %s29
      %p5404 = scmp.lt.s32.totalorder %s5403, 255
      %s5405 = scalar_select %p5404, %s5403, 255
      %s5406 = smul.addr %s5405, 4
      %s5407 = scalar_lea.vmem %s17, %s5406
      // Predicated region
      $region81: #{graph_transformer_layer.4} parent=79 // pred_check
        %p5408 = pneg %p377
      $region82: #{graph_transformer_layer.4} parent=79 // pred_check_branch
        %5410 = sbr.rel (%p5408) target = $region84
      $region83: #{graph_transformer_layer.4} parent=79 // pred_region
        %s5411 = smul.u32 64, %s29
      $region84: #{graph_transformer_layer.4} parent=79 // pred_fallthru
        _
      // Predicated region
      $region85: #{graph_transformer_layer.4} parent=79 // pred_check
        %p5412 = pneg %p403
      $region86: #{graph_transformer_layer.4} parent=79 // pred_check_branch
        %5414 = sbr.rel (%p5412) target = $region88
      $region87: #{graph_transformer_layer.4} parent=79 // pred_region
        %s5415 = smul.u32 64, %s29
      $region88: #{graph_transformer_layer.4} parent=79 // pred_fallthru
        _
      // Predicated region
      $region89: #{graph_transformer_layer.4} parent=79 // pred_check
        %p5416 = pneg %p429
      $region90: #{graph_transformer_layer.4} parent=79 // pred_check_branch
        %5418 = sbr.rel (%p5416) target = $region92
      $region91: #{graph_transformer_layer.4} parent=79 // pred_region
        %s5419 = smul.u32 64, %s29
      $region92: #{graph_transformer_layer.4} parent=79 // pred_fallthru
        _
    $region80: #{graph_transformer_layer.4} parent=5 // pred_fallthru
      _
    %p5420 = scmp.le.s32.totalorder 2, %s24
    // Predicated region
    $region93: #{graph_transformer_layer.4} parent=5 // pred_check
      %p5421 = pneg %p5420
    $region94: #{graph_transformer_layer.4} parent=5 // pred_check_branch
      %5423 = sbr.rel (%p5421) target = $region96
    $region95: #{graph_transformer_layer.4} parent=5 // pred_region
      %s5424 = ssub.s32 %s24, 2
      // Predicated region
      $region97: #{graph_transformer_layer.4} parent=95 // pred_check
        %p5425 = pneg %p383
      $region98: #{graph_transformer_layer.4} parent=95 // pred_check_branch
        %5427 = sbr.rel (%p5425) target = $region100
      $region99: #{graph_transformer_layer.4} parent=95 // pred_region
        %s5428 = smul.u32 64, %s30
        %p5429 = scmp.lt.s32.totalorder %s5428, 255
        %s5430 = scalar_select %p5429, %s5428, 255
        %s5431 = smul.addr %s5430, 8
        %s5432 = scalar_lea.vmem %s15, %s5431
      $region100: #{graph_transformer_layer.4} parent=95 // pred_fallthru
        _
      // Predicated region
      $region101: #{graph_transformer_layer.4} parent=95 // pred_check
        %p5433 = pneg %p409
      $region102: #{graph_transformer_layer.4} parent=95 // pred_check_branch
        %5435 = sbr.rel (%p5433) target = $region104
      $region103: #{graph_transformer_layer.4} parent=95 // pred_region
        %s5436 = smul.u32 64, %s30
        %p5437 = scmp.lt.s32.totalorder %s5436, 255
        %s5438 = scalar_select %p5437, %s5436, 255
        %s5439 = smul.addr %s5438, 4
        %s5440 = scalar_lea.vmem %s16, %s5439
      $region104: #{graph_transformer_layer.4} parent=95 // pred_fallthru
        _
      // Predicated region
      $region105: #{graph_transformer_layer.4} parent=95 // pred_check
        %p5441 = pneg %p435
      $region106: #{graph_transformer_layer.4} parent=95 // pred_check_branch
        %5443 = sbr.rel (%p5441) target = $region108
      $region107: #{graph_transformer_layer.4} parent=95 // pred_region
        %s5444 = smul.u32 64, %s30
        %p5445 = scmp.lt.s32.totalorder %s5444, 255
        %s5446 = scalar_select %p5445, %s5444, 255
        %s5447 = smul.addr %s5446, 4
        %s5448 = scalar_lea.vmem %s17, %s5447
      $region108: #{graph_transformer_layer.4} parent=95 // pred_fallthru
        _
    $region96: #{graph_transformer_layer.4} parent=5 // pred_fallthru
      _
  $region6: #{graph_transformer_layer.4} parent=0 // loop_footer
    %s28 = sadd.s32 1, %s24
  $region7: #{graph_transformer_layer.4} parent=0 // loop_footer_branch
    %23 = sbr.rel target = $region3
  $region8: #{graph_transformer_layer.4} parent=0 // loop_exit
    _

</llo_original>
